<compile_context>
chip_gen: v7x
topology: tpu7x:2x2x1
jax: 0.10.0
libtpu: 0.0.40
codegen_flags: <defaults>
</compile_context>

<pallas_src>
import functools

import jax
import jax.numpy as jnp
import numpy as np
from jax.experimental import pallas as pl
from jax.experimental.pallas import tpu as pltpu

BN_EPS = 1e-5
NEG_SLOPE = 0.2


# ---------------------------------------------------------------------------
# Pallas kernel: fused 4-tap conv-matmul (+bias, +activation / +BN partial
# sums) for `block_n` images per grid step.
#   x_ref : [block_n, R_in, 4*Cin]  phase-decomposed, flattened, zero-padded
#   w_ref : [4, 4*Cin, Co]          per-tap weight slabs (bf16), VMEM-resident
#   b_ref : [1, Co]                 conv bias (f32), VMEM-resident
#   out_refs:
#     o_ref               [block_n, M_out, Co]  with M_out = Ho*(Wo+1)
#     (mode == "bn")      sum_ref, ssq_ref : [1, 1, Co]  masked per-channel
#                         sum / sum-of-squares over this block's valid outputs
# ---------------------------------------------------------------------------
def _conv_tap_kernel(x_ref, w_ref, b_ref, *out_refs, ho, wo, mode, block_n):
    o_ref = out_refs[0]
    m_out = ho * (wo + 1)
    co = o_ref.shape[-1]

    if mode == "bn":
        row = jax.lax.broadcasted_iota(jnp.int32, (m_out, 1), 0)
        valid = (row % (wo + 1)) != wo          # mask the junk column
        sum_acc = jnp.zeros((1, co), jnp.float32)
        ssq_acc = jnp.zeros((1, co), jnp.float32)

    for img in range(block_n):                  # static unroll over the block
        x = x_ref[img]                          # [R_in, 4*Cin] bf16
        acc = jnp.zeros((m_out, co), jnp.float32)
        for a in range(2):                      # 4 static taps -> 4 MXU dots
            for b in range(2):
                off = a * (wo + 1) + b          # static, contiguous slice
                acc = acc + jnp.dot(x[off:off + m_out, :], w_ref[2 * a + b],
                                    preferred_element_type=jnp.float32)
        z = acc + b_ref[...]                    # [M_out, Co] f32

        if mode == "leaky":
            z = jnp.where(z >= 0, z, NEG_SLOPE * z)
            o_ref[img] = z.astype(o_ref.dtype)
        else:  # "bn": emit pre-BN output + masked batch-stat partial sums
            o_ref[img] = z.astype(o_ref.dtype)
            zm = jnp.where(valid, z, 0.0)
            sum_acc = sum_acc + jnp.sum(zm, axis=0, keepdims=True)
            ssq_acc = ssq_acc + jnp.sum(zm * zm, axis=0, keepdims=True)

    if mode == "bn":
        out_refs[1][0] = sum_acc
        out_refs[2][0] = ssq_acc


# ---------------------------------------------------------------------------
# XLA glue (single fused rearrangement pass per layer, no duplication in HBM)
# ---------------------------------------------------------------------------
def _build_phase_input(a_nhwc):
    """Space-to-depth rearrangement for a 4x4/s2/p1 conv.

    Returns x : [N, (Ho+2)*(Wo+1), 4*C] (bf16) and (Ho, Wo).
    Row r = h'*(Wo+1)+w' holds padded_input[2h'+p, 2w'+q, c] at channel
    (2p+q)*C + c.  The trailing Wo+1 zero rows give the in-kernel tap slices
    headroom; total bytes ~= input bytes (no im2col duplication).
    """
    n, h, w, c = a_nhwc.shape
    ho, wo = h // 2, w // 2
    ap = jnp.pad(a_nhwc, ((0, 0), (1, 1), (1, 1), (0, 0)))
    phases = [ap[:, p::2, q::2, :] for p in range(2) for q in range(2)]
    x = jnp.concatenate(phases, axis=-1)             # [N, Ho+1, Wo+1, 4C]
    x = x.reshape(n, (ho + 1) * (wo + 1), 4 * c)
    x = jnp.pad(x, ((0, 0), (0, wo + 1), (0, 0)))
    return x.astype(jnp.bfloat16), ho, wo


def _conv_weight_taps(w_oihw, cout_pad):
    """[Cout,Cin,4,4] -> [4 taps (a,b), 4*Cin (p,q,c), Cout_pad] in bf16."""
    o, c, _, _ = w_oihw.shape
    w6 = w_oihw.reshape(o, c, 2, 2, 2, 2)            # [o, c, a, p, b, q]
    w6 = jnp.transpose(w6, (2, 4, 3, 5, 1, 0))       # [a, b, p, q, c, o]
    w2 = w6.reshape(4, 4 * c, o)
    if cout_pad > o:
        w2 = jnp.pad(w2, ((0, 0), (0, 0), (0, cout_pad - o)))
    return w2.astype(jnp.bfloat16)


def _pick_block_n(n, in_bytes_per_img, out_bytes_per_img):
    """Images per grid step: VMEM-budgeted divisor of n, keeping >=2 steps."""
    budget = 24 * 1024 * 1024                        # headroom under 32 MiB
    per_img = 2 * (in_bytes_per_img + out_bytes_per_img)   # double-buffered
    cap = max(1, min(8, budget // max(per_img, 1)))  # bound unroll code size
    if n >= 2:
        cap = min(cap, max(1, n // 2))               # keep megacore sharding
    best = 1
    for d in range(1, min(cap, n) + 1):
        if n % d == 0:
            best = d
    return best


def _conv_s2_layer(a_nhwc, w_oihw, bias, *, mode, cout_pad=None):
    """One 4x4/stride-2/pad-1 conv layer as a Pallas call.

    mode == "leaky": fused conv + bias + LeakyReLU (bf16 output).
    mode == "bn"   : conv + bias (f32 output) + masked per-block sum/sumsq
                     for cross-block (training-mode) BatchNorm statistics.
    Returns (z, sums, ssqs, ho, wo);  sums/ssqs are None for "leaky".
    """
    n = a_nhwc.shape[0]
    cout = w_oihw.shape[0]
    co = cout_pad if cout_pad is not None else cout

    x, ho, wo = _build_phase_input(a_nhwc)
    w2 = _conv_weight_taps(w_oihw, co)
    b = jnp.pad(bias, (0, co - cout)).reshape(1, co).astype(jnp.float32)

    r_in, c4 = x.shape[1], x.shape[2]
    m_out = ho * (wo + 1)
    out_dtype = jnp.bfloat16 if mode == "leaky" else jnp.float32
    out_itemsize = 2 if mode == "leaky" else 4

    block_n = _pick_block_n(n, r_in * c4 * 2, m_out * co * out_itemsize)
    n_blocks = n // block_n

    out_shapes = [jax.ShapeDtypeStruct((n, m_out, co), out_dtype)]
    o_specs = [pl.BlockSpec((block_n, m_out, co), lambda i: (i, 0, 0))]
    if mode == "bn":
        out_shapes += [jax.ShapeDtypeStruct((n_blocks, 1, co), jnp.float32)] * 2
        o_specs += [pl.BlockSpec((1, 1, co), lambda i: (i, 0, 0))] * 2

    outs = pl.pallas_call(
        functools.partial(_conv_tap_kernel, ho=ho, wo=wo, mode=mode,
                          block_n=block_n),
        grid=(n_blocks,),                            # block_n images per step
        in_specs=[
            pl.BlockSpec((block_n, r_in, c4), lambda i: (i, 0, 0)),  # pipelined
            pl.BlockSpec((4, c4, co), lambda i: (0, 0, 0)),          # weights resident
            pl.BlockSpec((1, co), lambda i: (0, 0)),                 # bias resident
        ],
        out_specs=o_specs if mode == "bn" else o_specs[0],
        out_shape=out_shapes if mode == "bn" else out_shapes[0],
        compiler_params=pltpu.CompilerParams(
            dimension_semantics=("parallel",),       # megacore sharding on v7x
            vmem_limit_bytes=32 * 1024 * 1024),
    )(x, w2, b)

    if mode == "bn":
        z, sums, ssqs = outs
    else:
        z, sums, ssqs = outs, None, None
    return z, sums, ssqs, ho, wo


def _bn_leaky_from_stats(z, sums, ssqs, gamma, beta, ho, wo):
    """Training-mode BN (batch stats over N*Ho*Wo, biased var) + LeakyReLU.

    Applied to the kernel's pre-BN output as a per-channel affine; it is pure
    elementwise XLA that fuses into the next layer's phase rearrangement, so
    the activation makes no extra HBM round trip.  The junk column is dropped.
    """
    n, _, co = z.shape
    zv = z.reshape(n, ho, wo + 1, co)[:, :, :wo, :]
    cnt = n * ho * wo
    mean = jnp.sum(sums, axis=(0, 1)) / cnt
    var = jnp.maximum(jnp.sum(ssqs, axis=(0, 1)) / cnt - mean * mean, 0.0)
    scale = gamma * jax.lax.rsqrt(var + BN_EPS)
    shift = beta - mean * scale
    y = zv * scale + shift
    return jnp.where(y >= 0, y, NEG_SLOPE * y)


# ---------------------------------------------------------------------------
# Full discriminator forward (input/output NCHW, like PyTorch)
# ---------------------------------------------------------------------------
def discriminator_forward(x_nchw, params):
    # NCHW -> NHWC once at the boundary; fuses with layer 1's rearrangement.
    x = jnp.transpose(x_nchw, (0, 2, 3, 1)).astype(jnp.float32)
    n = x.shape[0]

    # layer 1: Conv(3->64) + LeakyReLU.  Cout zero-padded to 128 so the kernel
    # stores are lane-dense; pad channels are sliced off here (fused with the
    # layer-2 rearrangement pass).
    z1, _, _, ho1, wo1 = _conv_s2_layer(x, params["w1"], params["b1"],
                                        mode="leaky", cout_pad=128)
    a1 = z1.reshape(n, ho1, wo1 + 1, 128)[:, :, :wo1, :64]

    # layer 2: Conv(64->128) + BatchNorm + LeakyReLU (two-pass BN).
    z2, s2, q2, ho2, wo2 = _conv_s2_layer(a1, params["w2"], params["b2"], mode="bn")
    a2 = _bn_leaky_from_stats(z2, s2, q2, params["g2"], params["be2"], ho2, wo2)

    # layer 3: Conv(128->256) + BatchNorm + LeakyReLU.
    z3, s3, q3, ho3, wo3 = _conv_s2_layer(a2, params["w3"], params["b3"], mode="bn")
    a3 = _bn_leaky_from_stats(z3, s3, q3, params["g3"], params["be3"], ho3, wo3)

    # layer 4: Conv(256->1, 4x4 valid) + Sigmoid — tiny matvec, plain XLA.
    y = jax.lax.conv_general_dilated(
        a3.astype(jnp.float32), params["w4"], (1, 1), "VALID",
        dimension_numbers=("NHWC", "OIHW", "NHWC"))
    y = jax.nn.sigmoid(y + params["b4"][None, None, None, :])
    return jnp.transpose(y, (0, 3, 1, 2))            # NHWC -> NCHW


# ---------------------------------------------------------------------------
# Pure-JAX f32 reference (lax.conv path) for correctness check
# ---------------------------------------------------------------------------
def reference_forward(x, p):
    def conv(x, w, b, stride, pad):
        y = jax.lax.conv_general_dilated(
            x, w, (stride, stride), [(pad, pad), (pad, pad)],
            dimension_numbers=("NCHW", "OIHW", "NCHW"))
        return y + b[None, :, None, None]

    def bn(x, g, be):
        mu = jnp.mean(x, axis=(0, 2, 3), keepdims=True)
        var = jnp.mean((x - mu) ** 2, axis=(0, 2, 3), keepdims=True)
        return (g[None, :, None, None] * (x - mu) * jax.lax.rsqrt(var + BN_EPS)
                + be[None, :, None, None])

    def lrelu(x):
        return jnp.where(x >= 0, x, NEG_SLOPE * x)

    x = lrelu(conv(x, p["w1"], p["b1"], 2, 1))
    x = lrelu(bn(conv(x, p["w2"], p["b2"], 2, 1), p["g2"], p["be2"]))
    x = lrelu(bn(conv(x, p["w3"], p["b3"], 2, 1), p["g3"], p["be3"]))
    x = jax.nn.sigmoid(conv(x, p["w4"], p["b4"], 1, 0))
    return x


def init_params(key):
    ks = jax.random.split(key, 8)
    def w(k, shape):  # DCGAN-style N(0, 0.02) init, deterministic
        return 0.02 * jax.random.normal(k, shape, dtype=jnp.float32)
    return {
        "w1": w(ks[0], (64, 3, 4, 4)),   "b1": w(ks[1], (64,)),
        "w2": w(ks[2], (128, 64, 4, 4)), "b2": w(ks[3], (128,)),
        "g2": jnp.ones((128,), jnp.float32), "be2": jnp.zeros((128,), jnp.float32),
        "w3": w(ks[4], (256, 128, 4, 4)), "b3": w(ks[5], (256,)),
        "g3": jnp.ones((256,), jnp.float32), "be3": jnp.zeros((256,), jnp.float32),
        "w4": w(ks[6], (1, 256, 4, 4)),  "b4": w(ks[7], (1,)),
    }


if __name__ == "__main__":
    key = jax.random.PRNGKey(0)
    kx, kp = jax.random.split(key)
    # 32x32 input -> 16 -> 8 -> 4 -> final 4x4 valid conv -> 1x1 output.
    # batch=4 exercises the multi-image-per-grid-step path (block_n=2, grid=2).
    x = jax.random.normal(kx, (4, 3, 32, 32), dtype=jnp.float32)
    params = init_params(kp)

    fwd = jax.jit(discriminator_forward)
    out = jax.block_until_ready(fwd(x, params))
    assert out.shape == (4, 1, 1, 1), out.shape

    ref = jax.block_until_ready(reference_forward(x, params))
    # bf16 MXU operands -> modestly relaxed tolerance vs the f32 reference.
    np.testing.assert_allclose(np.asarray(out), np.asarray(ref),
                               atol=2e-2, rtol=2e-2)

    print("KERNEL_OK")
</pallas_src>

<mosaic_0001>
module attributes {stable_mosaic.version = 11 : i64} {
  func.func @_conv_tap_kernel(%arg0: i32, %arg1: memref<2x306x12xbf16, #tpu.memory_space<vmem>>, %arg2: memref<4x12x128xbf16, #tpu.memory_space<vmem>>, %arg3: memref<1x128xf32, #tpu.memory_space<vmem>>, %arg4: memref<2x272x128xbf16, #tpu.memory_space<vmem>>) attributes {dimension_semantics = [#tpu.dimension_semantics<parallel>], iteration_bounds = array<i64: 2>, scalar_prefetch = 0 : i64, scratch_operands = 0 : i64, tpu.core_type = #tpu.core_type<tc>, window_params = [{transform_indices = @transform_0, window_bounds = array<i64: 2, 306, 12>}, {pipeline_mode = #tpu.pipeline_mode<synchronous>, transform_indices = @transform_1, window_bounds = array<i64: 4, 12, 128>}, {pipeline_mode = #tpu.pipeline_mode<synchronous>, transform_indices = @transform_2, window_bounds = array<i64: 1, 128>}, {transform_indices = @transform_3, window_bounds = array<i64: 2, 272, 128>}]} {
    %c0 = arith.constant 0 : index
    %c0_0 = arith.constant 0 : index
    %c0_1 = arith.constant 0 : index
    %0 = vector.load %arg1[%c0, %c0_0, %c0_1] : memref<2x306x12xbf16, #tpu.memory_space<vmem>>, vector<1x306x12xbf16>
    %1 = vector.shape_cast %0 : vector<1x306x12xbf16> to vector<306x12xbf16>
    %cst = arith.constant 0.000000e+00 : f32
    %2 = vector.broadcast %cst : f32 to vector<272x128xf32>
    %3 = vector.extract_strided_slice %1 {offsets = [0, 0], sizes = [272, 12], strides = [1, 1]} : vector<306x12xbf16> to vector<272x12xbf16>
    %c0_2 = arith.constant 0 : index
    %c0_3 = arith.constant 0 : index
    %c0_4 = arith.constant 0 : index
    %4 = vector.load %arg2[%c0_2, %c0_3, %c0_4] : memref<4x12x128xbf16, #tpu.memory_space<vmem>>, vector<1x12x128xbf16>
    %5 = vector.shape_cast %4 : vector<1x12x128xbf16> to vector<12x128xbf16>
    %cst_5 = arith.constant dense<0.000000e+00> : vector<272x128xf32>
    %6 = tpu.matmul %3, %5, %cst_5 {dimension_numbers = #tpu.dot_dimension_numbers<[1], [0], [0], [1], [0, 0, 1, 1], [], []>} : vector<272x12xbf16>, vector<12x128xbf16>, vector<272x128xf32> -> vector<272x128xf32>
    %7 = arith.addf %2, %6 : vector<272x128xf32>
    %8 = vector.extract_strided_slice %1 {offsets = [1, 0], sizes = [272, 12], strides = [1, 1]} : vector<306x12xbf16> to vector<272x12xbf16>
    %c1 = arith.constant 1 : index
    %c0_6 = arith.constant 0 : index
    %c0_7 = arith.constant 0 : index
    %9 = vector.load %arg2[%c1, %c0_6, %c0_7] : memref<4x12x128xbf16, #tpu.memory_space<vmem>>, vector<1x12x128xbf16>
    %10 = vector.shape_cast %9 : vector<1x12x128xbf16> to vector<12x128xbf16>
    %cst_8 = arith.constant dense<0.000000e+00> : vector<272x128xf32>
    %11 = tpu.matmul %8, %10, %cst_8 {dimension_numbers = #tpu.dot_dimension_numbers<[1], [0], [0], [1], [0, 0, 1, 1], [], []>} : vector<272x12xbf16>, vector<12x128xbf16>, vector<272x128xf32> -> vector<272x128xf32>
    %12 = arith.addf %7, %11 : vector<272x128xf32>
    %13 = vector.extract_strided_slice %1 {offsets = [17, 0], sizes = [272, 12], strides = [1, 1]} : vector<306x12xbf16> to vector<272x12xbf16>
    %c2 = arith.constant 2 : index
    %c0_9 = arith.constant 0 : index
    %c0_10 = arith.constant 0 : index
    %14 = vector.load %arg2[%c2, %c0_9, %c0_10] : memref<4x12x128xbf16, #tpu.memory_space<vmem>>, vector<1x12x128xbf16>
    %15 = vector.shape_cast %14 : vector<1x12x128xbf16> to vector<12x128xbf16>
    %cst_11 = arith.constant dense<0.000000e+00> : vector<272x128xf32>
    %16 = tpu.matmul %13, %15, %cst_11 {dimension_numbers = #tpu.dot_dimension_numbers<[1], [0], [0], [1], [0, 0, 1, 1], [], []>} : vector<272x12xbf16>, vector<12x128xbf16>, vector<272x128xf32> -> vector<272x128xf32>
    %17 = arith.addf %12, %16 : vector<272x128xf32>
    %18 = vector.extract_strided_slice %1 {offsets = [18, 0], sizes = [272, 12], strides = [1, 1]} : vector<306x12xbf16> to vector<272x12xbf16>
    %c3 = arith.constant 3 : index
    %c0_12 = arith.constant 0 : index
    %c0_13 = arith.constant 0 : index
    %19 = vector.load %arg2[%c3, %c0_12, %c0_13] : memref<4x12x128xbf16, #tpu.memory_space<vmem>>, vector<1x12x128xbf16>
    %20 = vector.shape_cast %19 : vector<1x12x128xbf16> to vector<12x128xbf16>
    %cst_14 = arith.constant dense<0.000000e+00> : vector<272x128xf32>
    %21 = tpu.matmul %18, %20, %cst_14 {dimension_numbers = #tpu.dot_dimension_numbers<[1], [0], [0], [1], [0, 0, 1, 1], [], []>} : vector<272x12xbf16>, vector<12x128xbf16>, vector<272x128xf32> -> vector<272x128xf32>
    %22 = arith.addf %17, %21 : vector<272x128xf32>
    %c0_15 = arith.constant 0 : index
    %c0_16 = arith.constant 0 : index
    %23 = vector.load %arg3[%c0_15, %c0_16] : memref<1x128xf32, #tpu.memory_space<vmem>>, vector<1x128xf32>
    %24 = vector.broadcast %23 : vector<1x128xf32> to vector<272x128xf32>
    %25 = arith.addf %22, %24 : vector<272x128xf32>
    %cst_17 = arith.constant 0.000000e+00 : f32
    %26 = vector.broadcast %cst_17 : f32 to vector<272x128xf32>
    %27 = arith.cmpf oge, %25, %26 : vector<272x128xf32>
    %cst_18 = arith.constant 2.000000e-01 : f32
    %28 = vector.broadcast %cst_18 : f32 to vector<272x128xf32>
    %29 = arith.mulf %28, %25 : vector<272x128xf32>
    %30 = arith.select %27, %25, %29 : vector<272x128xi1>, vector<272x128xf32>
    %31 = arith.truncf %30 : vector<272x128xf32> to vector<272x128xbf16>
    %c0_19 = arith.constant 0 : index
    %c0_20 = arith.constant 0 : index
    %c0_21 = arith.constant 0 : index
    %32 = vector.load %arg4[%c0_19, %c0_20, %c0_21] : memref<2x272x128xbf16, #tpu.memory_space<vmem>>, vector<1x272x128xbf16>
    %33 = vector.shape_cast %32 : vector<1x272x128xbf16> to vector<272x128xbf16>
    %34 = vector.shape_cast %31 : vector<272x128xbf16> to vector<1x272x128xbf16>
    tpu.vector_store %arg4[%c0_19, %c0_20, %c0_21], %34 {strides = array<i32>} : memref<2x272x128xbf16, #tpu.memory_space<vmem>>, vector<1x272x128xbf16>,
    %c1_22 = arith.constant 1 : index
    %c0_23 = arith.constant 0 : index
    %c0_24 = arith.constant 0 : index
    %35 = vector.load %arg1[%c1_22, %c0_23, %c0_24] : memref<2x306x12xbf16, #tpu.memory_space<vmem>>, vector<1x306x12xbf16>
    %36 = vector.shape_cast %35 : vector<1x306x12xbf16> to vector<306x12xbf16>
    %cst_25 = arith.constant 0.000000e+00 : f32
    %37 = vector.broadcast %cst_25 : f32 to vector<272x128xf32>
    %38 = vector.extract_strided_slice %36 {offsets = [0, 0], sizes = [272, 12], strides = [1, 1]} : vector<306x12xbf16> to vector<272x12xbf16>
    %c0_26 = arith.constant 0 : index
    %c0_27 = arith.constant 0 : index
    %c0_28 = arith.constant 0 : index
    %39 = vector.load %arg2[%c0_26, %c0_27, %c0_28] : memref<4x12x128xbf16, #tpu.memory_space<vmem>>, vector<1x12x128xbf16>
    %40 = vector.shape_cast %39 : vector<1x12x128xbf16> to vector<12x128xbf16>
    %cst_29 = arith.constant dense<0.000000e+00> : vector<272x128xf32>
    %41 = tpu.matmul %38, %40, %cst_29 {dimension_numbers = #tpu.dot_dimension_numbers<[1], [0], [0], [1], [0, 0, 1, 1], [], []>} : vector<272x12xbf16>, vector<12x128xbf16>, vector<272x128xf32> -> vector<272x128xf32>
    %42 = arith.addf %37, %41 : vector<272x128xf32>
    %43 = vector.extract_strided_slice %36 {offsets = [1, 0], sizes = [272, 12], strides = [1, 1]} : vector<306x12xbf16> to vector<272x12xbf16>
    %c1_30 = arith.constant 1 : index
    %c0_31 = arith.constant 0 : index
    %c0_32 = arith.constant 0 : index
    %44 = vector.load %arg2[%c1_30, %c0_31, %c0_32] : memref<4x12x128xbf16, #tpu.memory_space<vmem>>, vector<1x12x128xbf16>
    %45 = vector.shape_cast %44 : vector<1x12x128xbf16> to vector<12x128xbf16>
    %cst_33 = arith.constant dense<0.000000e+00> : vector<272x128xf32>
    %46 = tpu.matmul %43, %45, %cst_33 {dimension_numbers = #tpu.dot_dimension_numbers<[1], [0], [0], [1], [0, 0, 1, 1], [], []>} : vector<272x12xbf16>, vector<12x128xbf16>, vector<272x128xf32> -> vector<272x128xf32>
    %47 = arith.addf %42, %46 : vector<272x128xf32>
    %48 = vector.extract_strided_slice %36 {offsets = [17, 0], sizes = [272, 12], strides = [1, 1]} : vector<306x12xbf16> to vector<272x12xbf16>
    %c2_34 = arith.constant 2 : index
    %c0_35 = arith.constant 0 : index
    %c0_36 = arith.constant 0 : index
    %49 = vector.load %arg2[%c2_34, %c0_35, %c0_36] : memref<4x12x128xbf16, #tpu.memory_space<vmem>>, vector<1x12x128xbf16>
    %50 = vector.shape_cast %49 : vector<1x12x128xbf16> to vector<12x128xbf16>
    %cst_37 = arith.constant dense<0.000000e+00> : vector<272x128xf32>
    %51 = tpu.matmul %48, %50, %cst_37 {dimension_numbers = #tpu.dot_dimension_numbers<[1], [0], [0], [1], [0, 0, 1, 1], [], []>} : vector<272x12xbf16>, vector<12x128xbf16>, vector<272x128xf32> -> vector<272x128xf32>
    %52 = arith.addf %47, %51 : vector<272x128xf32>
    %53 = vector.extract_strided_slice %36 {offsets = [18, 0], sizes = [272, 12], strides = [1, 1]} : vector<306x12xbf16> to vector<272x12xbf16>
    %c3_38 = arith.constant 3 : index
    %c0_39 = arith.constant 0 : index
    %c0_40 = arith.constant 0 : index
    %54 = vector.load %arg2[%c3_38, %c0_39, %c0_40] : memref<4x12x128xbf16, #tpu.memory_space<vmem>>, vector<1x12x128xbf16>
    %55 = vector.shape_cast %54 : vector<1x12x128xbf16> to vector<12x128xbf16>
    %cst_41 = arith.constant dense<0.000000e+00> : vector<272x128xf32>
    %56 = tpu.matmul %53, %55, %cst_41 {dimension_numbers = #tpu.dot_dimension_numbers<[1], [0], [0], [1], [0, 0, 1, 1], [], []>} : vector<272x12xbf16>, vector<12x128xbf16>, vector<272x128xf32> -> vector<272x128xf32>
    %57 = arith.addf %52, %56 : vector<272x128xf32>
    %c0_42 = arith.constant 0 : index
    %c0_43 = arith.constant 0 : index
    %58 = vector.load %arg3[%c0_42, %c0_43] : memref<1x128xf32, #tpu.memory_space<vmem>>, vector<1x128xf32>
    %59 = vector.broadcast %58 : vector<1x128xf32> to vector<272x128xf32>
    %60 = arith.addf %57, %59 : vector<272x128xf32>
    %cst_44 = arith.constant 0.000000e+00 : f32
    %61 = vector.broadcast %cst_44 : f32 to vector<272x128xf32>
    %62 = arith.cmpf oge, %60, %61 : vector<272x128xf32>
    %cst_45 = arith.constant 2.000000e-01 : f32
    %63 = vector.broadcast %cst_45 : f32 to vector<272x128xf32>
    %64 = arith.mulf %63, %60 : vector<272x128xf32>
    %65 = arith.select %62, %60, %64 : vector<272x128xi1>, vector<272x128xf32>
    %66 = arith.truncf %65 : vector<272x128xf32> to vector<272x128xbf16>
    %c1_46 = arith.constant 1 : index
    %c0_47 = arith.constant 0 : index
    %c0_48 = arith.constant 0 : index
    %67 = vector.load %arg4[%c1_46, %c0_47, %c0_48] : memref<2x272x128xbf16, #tpu.memory_space<vmem>>, vector<1x272x128xbf16>
    %68 = vector.shape_cast %67 : vector<1x272x128xbf16> to vector<272x128xbf16>
    %69 = vector.shape_cast %66 : vector<272x128xbf16> to vector<1x272x128xbf16>
    tpu.vector_store %arg4[%c1_46, %c0_47, %c0_48], %69 {strides = array<i32>} : memref<2x272x128xbf16, #tpu.memory_space<vmem>>, vector<1x272x128xbf16>,
    return
  }
  func.func @transform_0(%arg0: i32) -> (i32, i32, i32) {
    %c0_i32 = arith.constant 0 : i32
    %c0_i32_0 = arith.constant 0 : i32
    %c0_i32_1 = arith.constant 0 : i32
    return %arg0, %c0_i32, %c0_i32_0 : i32, i32, i32
  }
  func.func @transform_1(%arg0: i32) -> (i32, i32, i32) {
    %c0_i32 = arith.constant 0 : i32
    %c0_i32_0 = arith.constant 0 : i32
    %c0_i32_1 = arith.constant 0 : i32
    %c0_i32_2 = arith.constant 0 : i32
    return %c0_i32, %c0_i32_0, %c0_i32_1 : i32, i32, i32
  }
  func.func @transform_2(%arg0: i32) -> (i32, i32) {
    %c0_i32 = arith.constant 0 : i32
    %c0_i32_0 = arith.constant 0 : i32
    %c0_i32_1 = arith.constant 0 : i32
    return %c0_i32, %c0_i32_0 : i32, i32
  }
  func.func @transform_3(%arg0: i32) -> (i32, i32, i32) {
    %c0_i32 = arith.constant 0 : i32
    %c0_i32_0 = arith.constant 0 : i32
    %c0_i32_1 = arith.constant 0 : i32
    return %arg0, %c0_i32, %c0_i32_0 : i32, i32, i32
  }
}

module attributes {stable_mosaic.version = 11 : i64} {
  func.func @_conv_tap_kernel(%arg0: i32, %arg1: memref<2x90x256xbf16, #tpu.memory_space<vmem>>, %arg2: memref<4x256x128xbf16, #tpu.memory_space<vmem>>, %arg3: memref<1x128xf32, #tpu.memory_space<vmem>>, %arg4: memref<2x72x128xf32, #tpu.memory_space<vmem>>, %arg5: memref<1x1x128xf32, #tpu.memory_space<vmem>>, %arg6: memref<1x1x128xf32, #tpu.memory_space<vmem>>) attributes {dimension_semantics = [#tpu.dimension_semantics<parallel>], iteration_bounds = array<i64: 2>, scalar_prefetch = 0 : i64, scratch_operands = 0 : i64, tpu.core_type = #tpu.core_type<tc>, window_params = [{transform_indices = @transform_0, window_bounds = array<i64: 2, 90, 256>}, {pipeline_mode = #tpu.pipeline_mode<synchronous>, transform_indices = @transform_1, window_bounds = array<i64: 4, 256, 128>}, {pipeline_mode = #tpu.pipeline_mode<synchronous>, transform_indices = @transform_2, window_bounds = array<i64: 1, 128>}, {transform_indices = @transform_3, window_bounds = array<i64: 2, 72, 128>}, {transform_indices = @transform_4, window_bounds = array<i64: 1, 1, 128>}, {transform_indices = @transform_5, window_bounds = array<i64: 1, 1, 128>}]} {
    %0 = tpu.iota {dimensions = array<i32: 0>} : vector<72x1xi32>
    %c9_i32 = arith.constant 9 : i32
    %c0_i32 = arith.constant 0 : i32
    %1 = arith.cmpi eq, %c9_i32, %c0_i32 : i32
    %c1_i32 = arith.constant 1 : i32
    %2 = arith.select %1, %c1_i32, %c9_i32 : i32
    %3 = vector.broadcast %2 : i32 to vector<72x1xi32>
    %4 = arith.remsi %0, %3 : vector<72x1xi32>
    %c0_i32_0 = arith.constant 0 : i32
    %5 = vector.broadcast %c0_i32_0 : i32 to vector<72x1xi32>
    %6 = arith.cmpi ne, %4, %5 : vector<72x1xi32>
    %c0_i32_1 = arith.constant 0 : i32
    %7 = vector.broadcast %c0_i32_1 : i32 to vector<72x1xi32>
    %8 = arith.cmpi slt, %4, %7 : vector<72x1xi32>
    %c0_i32_2 = arith.constant 0 : i32
    %9 = arith.cmpi slt, %2, %c0_i32_2 : i32
    %10 = vector.broadcast %9 : i1 to vector<72x1xi1>
    %11 = vector.broadcast %10 : vector<72x1xi1> to vector<72x1xi1>
    %12 = arith.xori %8, %11 : vector<72x1xi1>
    %13 = arith.andi %12, %6 : vector<72x1xi1>
    %14 = vector.broadcast %2 : i32 to vector<72x1xi32>
    %15 = arith.addi %4, %14 : vector<72x1xi32>
    %16 = arith.select %13, %15, %4 : vector<72x1xi1>, vector<72x1xi32>
    %c8_i32 = arith.constant 8 : i32
    %17 = vector.broadcast %c8_i32 : i32 to vector<72x1xi32>
    %18 = arith.cmpi ne, %16, %17 : vector<72x1xi32>
    %cst = arith.constant 0.000000e+00 : f32
    %19 = vector.broadcast %cst : f32 to vector<1x128xf32>
    %cst_3 = arith.constant 0.000000e+00 : f32
    %20 = vector.broadcast %cst_3 : f32 to vector<1x128xf32>
    %c0 = arith.constant 0 : index
    %c0_4 = arith.constant 0 : index
    %c0_5 = arith.constant 0 : index
    %21 = vector.load %arg1[%c0, %c0_4, %c0_5] : memref<2x90x256xbf16, #tpu.memory_space<vmem>>, vector<1x90x256xbf16>
    %22 = vector.shape_cast %21 : vector<1x90x256xbf16> to vector<90x256xbf16>
    %cst_6 = arith.constant 0.000000e+00 : f32
    %23 = vector.broadcast %cst_6 : f32 to vector<72x128xf32>
    %24 = vector.extract_strided_slice %22 {offsets = [0, 0], sizes = [72, 256], strides = [1, 1]} : vector<90x256xbf16> to vector<72x256xbf16>
    %c0_7 = arith.constant 0 : index
    %c0_8 = arith.constant 0 : index
    %c0_9 = arith.constant 0 : index
    %25 = vector.load %arg2[%c0_7, %c0_8, %c0_9] : memref<4x256x128xbf16, #tpu.memory_space<vmem>>, vector<1x256x128xbf16>
    %26 = vector.shape_cast %25 : vector<1x256x128xbf16> to vector<256x128xbf16>
    %cst_10 = arith.constant dense<0.000000e+00> : vector<72x128xf32>
    %27 = tpu.matmul %24, %26, %cst_10 {dimension_numbers = #tpu.dot_dimension_numbers<[1], [0], [0], [1], [0, 0, 1, 1], [], []>} : vector<72x256xbf16>, vector<256x128xbf16>, vector<72x128xf32> -> vector<72x128xf32>
    %28 = arith.addf %23, %27 : vector<72x128xf32>
    %29 = vector.extract_strided_slice %22 {offsets = [1, 0], sizes = [72, 256], strides = [1, 1]} : vector<90x256xbf16> to vector<72x256xbf16>
    %c1 = arith.constant 1 : index
    %c0_11 = arith.constant 0 : index
    %c0_12 = arith.constant 0 : index
    %30 = vector.load %arg2[%c1, %c0_11, %c0_12] : memref<4x256x128xbf16, #tpu.memory_space<vmem>>, vector<1x256x128xbf16>
    %31 = vector.shape_cast %30 : vector<1x256x128xbf16> to vector<256x128xbf16>
    %cst_13 = arith.constant dense<0.000000e+00> : vector<72x128xf32>
    %32 = tpu.matmul %29, %31, %cst_13 {dimension_numbers = #tpu.dot_dimension_numbers<[1], [0], [0], [1], [0, 0, 1, 1], [], []>} : vector<72x256xbf16>, vector<256x128xbf16>, vector<72x128xf32> -> vector<72x128xf32>
    %33 = arith.addf %28, %32 : vector<72x128xf32>
    %34 = vector.extract_strided_slice %22 {offsets = [9, 0], sizes = [72, 256], strides = [1, 1]} : vector<90x256xbf16> to vector<72x256xbf16>
    %c2 = arith.constant 2 : index
    %c0_14 = arith.constant 0 : index
    %c0_15 = arith.constant 0 : index
    %35 = vector.load %arg2[%c2, %c0_14, %c0_15] : memref<4x256x128xbf16, #tpu.memory_space<vmem>>, vector<1x256x128xbf16>
    %36 = vector.shape_cast %35 : vector<1x256x128xbf16> to vector<256x128xbf16>
    %cst_16 = arith.constant dense<0.000000e+00> : vector<72x128xf32>
    %37 = tpu.matmul %34, %36, %cst_16 {dimension_numbers = #tpu.dot_dimension_numbers<[1], [0], [0], [1], [0, 0, 1, 1], [], []>} : vector<72x256xbf16>, vector<256x128xbf16>, vector<72x128xf32> -> vector<72x128xf32>
    %38 = arith.addf %33, %37 : vector<72x128xf32>
    %39 = vector.extract_strided_slice %22 {offsets = [10, 0], sizes = [72, 256], strides = [1, 1]} : vector<90x256xbf16> to vector<72x256xbf16>
    %c3 = arith.constant 3 : index
    %c0_17 = arith.constant 0 : index
    %c0_18 = arith.constant 0 : index
    %40 = vector.load %arg2[%c3, %c0_17, %c0_18] : memref<4x256x128xbf16, #tpu.memory_space<vmem>>, vector<1x256x128xbf16>
    %41 = vector.shape_cast %40 : vector<1x256x128xbf16> to vector<256x128xbf16>
    %cst_19 = arith.constant dense<0.000000e+00> : vector<72x128xf32>
    %42 = tpu.matmul %39, %41, %cst_19 {dimension_numbers = #tpu.dot_dimension_numbers<[1], [0], [0], [1], [0, 0, 1, 1], [], []>} : vector<72x256xbf16>, vector<256x128xbf16>, vector<72x128xf32> -> vector<72x128xf32>
    %43 = arith.addf %38, %42 : vector<72x128xf32>
    %c0_20 = arith.constant 0 : index
    %c0_21 = arith.constant 0 : index
    %44 = vector.load %arg3[%c0_20, %c0_21] : memref<1x128xf32, #tpu.memory_space<vmem>>, vector<1x128xf32>
    %45 = vector.broadcast %44 : vector<1x128xf32> to vector<72x128xf32>
    %46 = arith.addf %43, %45 : vector<72x128xf32>
    %c0_22 = arith.constant 0 : index
    %c0_23 = arith.constant 0 : index
    %c0_24 = arith.constant 0 : index
    %47 = vector.load %arg4[%c0_22, %c0_23, %c0_24] : memref<2x72x128xf32, #tpu.memory_space<vmem>>, vector<1x72x128xf32>
    %48 = vector.shape_cast %47 : vector<1x72x128xf32> to vector<72x128xf32>
    %49 = vector.shape_cast %46 : vector<72x128xf32> to vector<1x72x128xf32>
    tpu.vector_store %arg4[%c0_22, %c0_23, %c0_24], %49 {strides = array<i32>} : memref<2x72x128xf32, #tpu.memory_space<vmem>>, vector<1x72x128xf32>,
    %cst_25 = arith.constant 0.000000e+00 : f32
    %50 = vector.shape_cast %18 : vector<72x1xi1> to vector<72x1xi1>
    %51 = vector.broadcast %50 : vector<72x1xi1> to vector<72x128xi1>
    %52 = vector.broadcast %cst_25 : f32 to vector<72x128xf32>
    %53 = arith.select %51, %46, %52 : vector<72x128xi1>, vector<72x128xf32>
    %cst_26 = arith.constant dense<0.000000e+00> : vector<128xf32>
    %54 = vector.multi_reduction <add>, %53, %cst_26 [0] : vector<72x128xf32> to vector<128xf32>
    %55 = vector.shape_cast %54 : vector<128xf32> to vector<1x128xf32>
    %56 = arith.addf %19, %55 : vector<1x128xf32>
    %57 = arith.mulf %53, %53 : vector<72x128xf32>
    %cst_27 = arith.constant dense<0.000000e+00> : vector<128xf32>
    %58 = vector.multi_reduction <add>, %57, %cst_27 [0] : vector<72x128xf32> to vector<128xf32>
    %59 = vector.shape_cast %58 : vector<128xf32> to vector<1x128xf32>
    %60 = arith.addf %20, %59 : vector<1x128xf32>
    %c1_28 = arith.constant 1 : index
    %c0_29 = arith.constant 0 : index
    %c0_30 = arith.constant 0 : index
    %61 = vector.load %arg1[%c1_28, %c0_29, %c0_30] : memref<2x90x256xbf16, #tpu.memory_space<vmem>>, vector<1x90x256xbf16>
    %62 = vector.shape_cast %61 : vector<1x90x256xbf16> to vector<90x256xbf16>
    %cst_31 = arith.constant 0.000000e+00 : f32
    %63 = vector.broadcast %cst_31 : f32 to vector<72x128xf32>
    %64 = vector.extract_strided_slice %62 {offsets = [0, 0], sizes = [72, 256], strides = [1, 1]} : vector<90x256xbf16> to vector<72x256xbf16>
    %c0_32 = arith.constant 0 : index
    %c0_33 = arith.constant 0 : index
    %c0_34 = arith.constant 0 : index
    %65 = vector.load %arg2[%c0_32, %c0_33, %c0_34] : memref<4x256x128xbf16, #tpu.memory_space<vmem>>, vector<1x256x128xbf16>
    %66 = vector.shape_cast %65 : vector<1x256x128xbf16> to vector<256x128xbf16>
    %cst_35 = arith.constant dense<0.000000e+00> : vector<72x128xf32>
    %67 = tpu.matmul %64, %66, %cst_35 {dimension_numbers = #tpu.dot_dimension_numbers<[1], [0], [0], [1], [0, 0, 1, 1], [], []>} : vector<72x256xbf16>, vector<256x128xbf16>, vector<72x128xf32> -> vector<72x128xf32>
    %68 = arith.addf %63, %67 : vector<72x128xf32>
    %69 = vector.extract_strided_slice %62 {offsets = [1, 0], sizes = [72, 256], strides = [1, 1]} : vector<90x256xbf16> to vector<72x256xbf16>
    %c1_36 = arith.constant 1 : index
    %c0_37 = arith.constant 0 : index
    %c0_38 = arith.constant 0 : index
    %70 = vector.load %arg2[%c1_36, %c0_37, %c0_38] : memref<4x256x128xbf16, #tpu.memory_space<vmem>>, vector<1x256x128xbf16>
    %71 = vector.shape_cast %70 : vector<1x256x128xbf16> to vector<256x128xbf16>
    %cst_39 = arith.constant dense<0.000000e+00> : vector<72x128xf32>
    %72 = tpu.matmul %69, %71, %cst_39 {dimension_numbers = #tpu.dot_dimension_numbers<[1], [0], [0], [1], [0, 0, 1, 1], [], []>} : vector<72x256xbf16>, vector<256x128xbf16>, vector<72x128xf32> -> vector<72x128xf32>
    %73 = arith.addf %68, %72 : vector<72x128xf32>
    %74 = vector.extract_strided_slice %62 {offsets = [9, 0], sizes = [72, 256], strides = [1, 1]} : vector<90x256xbf16> to vector<72x256xbf16>
    %c2_40 = arith.constant 2 : index
    %c0_41 = arith.constant 0 : index
    %c0_42 = arith.constant 0 : index
    %75 = vector.load %arg2[%c2_40, %c0_41, %c0_42] : memref<4x256x128xbf16, #tpu.memory_space<vmem>>, vector<1x256x128xbf16>
    %76 = vector.shape_cast %75 : vector<1x256x128xbf16> to vector<256x128xbf16>
    %cst_43 = arith.constant dense<0.000000e+00> : vector<72x128xf32>
    %77 = tpu.matmul %74, %76, %cst_43 {dimension_numbers = #tpu.dot_dimension_numbers<[1], [0], [0], [1], [0, 0, 1, 1], [], []>} : vector<72x256xbf16>, vector<256x128xbf16>, vector<72x128xf32> -> vector<72x128xf32>
    %78 = arith.addf %73, %77 : vector<72x128xf32>
    %79 = vector.extract_strided_slice %62 {offsets = [10, 0], sizes = [72, 256], strides = [1, 1]} : vector<90x256xbf16> to vector<72x256xbf16>
    %c3_44 = arith.constant 3 : index
    %c0_45 = arith.constant 0 : index
    %c0_46 = arith.constant 0 : index
    %80 = vector.load %arg2[%c3_44, %c0_45, %c0_46] : memref<4x256x128xbf16, #tpu.memory_space<vmem>>, vector<1x256x128xbf16>
    %81 = vector.shape_cast %80 : vector<1x256x128xbf16> to vector<256x128xbf16>
    %cst_47 = arith.constant dense<0.000000e+00> : vector<72x128xf32>
    %82 = tpu.matmul %79, %81, %cst_47 {dimension_numbers = #tpu.dot_dimension_numbers<[1], [0], [0], [1], [0, 0, 1, 1], [], []>} : vector<72x256xbf16>, vector<256x128xbf16>, vector<72x128xf32> -> vector<72x128xf32>
    %83 = arith.addf %78, %82 : vector<72x128xf32>
    %c0_48 = arith.constant 0 : index
    %c0_49 = arith.constant 0 : index
    %84 = vector.load %arg3[%c0_48, %c0_49] : memref<1x128xf32, #tpu.memory_space<vmem>>, vector<1x128xf32>
    %85 = vector.broadcast %84 : vector<1x128xf32> to vector<72x128xf32>
    %86 = arith.addf %83, %85 : vector<72x128xf32>
    %c1_50 = arith.constant 1 : index
    %c0_51 = arith.constant 0 : index
    %c0_52 = arith.constant 0 : index
    %87 = vector.load %arg4[%c1_50, %c0_51, %c0_52] : memref<2x72x128xf32, #tpu.memory_space<vmem>>, vector<1x72x128xf32>
    %88 = vector.shape_cast %87 : vector<1x72x128xf32> to vector<72x128xf32>
    %89 = vector.shape_cast %86 : vector<72x128xf32> to vector<1x72x128xf32>
    tpu.vector_store %arg4[%c1_50, %c0_51, %c0_52], %89 {strides = array<i32>} : memref<2x72x128xf32, #tpu.memory_space<vmem>>, vector<1x72x128xf32>,
    %cst_53 = arith.constant 0.000000e+00 : f32
    %90 = vector.shape_cast %18 : vector<72x1xi1> to vector<72x1xi1>
    %91 = vector.broadcast %90 : vector<72x1xi1> to vector<72x128xi1>
    %92 = vector.broadcast %cst_53 : f32 to vector<72x128xf32>
    %93 = arith.select %91, %86, %92 : vector<72x128xi1>, vector<72x128xf32>
    %cst_54 = arith.constant dense<0.000000e+00> : vector<128xf32>
    %94 = vector.multi_reduction <add>, %93, %cst_54 [0] : vector<72x128xf32> to vector<128xf32>
    %95 = vector.shape_cast %94 : vector<128xf32> to vector<1x128xf32>
    %96 = arith.addf %56, %95 : vector<1x128xf32>
    %97 = arith.mulf %93, %93 : vector<72x128xf32>
    %cst_55 = arith.constant dense<0.000000e+00> : vector<128xf32>
    %98 = vector.multi_reduction <add>, %97, %cst_55 [0] : vector<72x128xf32> to vector<128xf32>
    %99 = vector.shape_cast %98 : vector<128xf32> to vector<1x128xf32>
    %100 = arith.addf %60, %99 : vector<1x128xf32>
    %c0_56 = arith.constant 0 : index
    %c0_57 = arith.constant 0 : index
    %c0_58 = arith.constant 0 : index
    %101 = vector.load %arg5[%c0_56, %c0_57, %c0_58] : memref<1x1x128xf32, #tpu.memory_space<vmem>>, vector<1x1x128xf32>
    %102 = vector.shape_cast %101 : vector<1x1x128xf32> to vector<1x128xf32>
    %103 = vector.shape_cast %96 : vector<1x128xf32> to vector<1x1x128xf32>
    tpu.vector_store %arg5[%c0_56, %c0_57, %c0_58], %103 {strides = array<i32>} : memref<1x1x128xf32, #tpu.memory_space<vmem>>, vector<1x1x128xf32>,
    %c0_59 = arith.constant 0 : index
    %c0_60 = arith.constant 0 : index
    %c0_61 = arith.constant 0 : index
    %104 = vector.load %arg6[%c0_59, %c0_60, %c0_61] : memref<1x1x128xf32, #tpu.memory_space<vmem>>, vector<1x1x128xf32>
    %105 = vector.shape_cast %104 : vector<1x1x128xf32> to vector<1x128xf32>
    %106 = vector.shape_cast %100 : vector<1x128xf32> to vector<1x1x128xf32>
    tpu.vector_store %arg6[%c0_59, %c0_60, %c0_61], %106 {strides = array<i32>} : memref<1x1x128xf32, #tpu.memory_space<vmem>>, vector<1x1x128xf32>,
    return
  }
  func.func @transform_0(%arg0: i32) -> (i32, i32, i32) {
    %c0_i32 = arith.constant 0 : i32
    %c0_i32_0 = arith.constant 0 : i32
    %c0_i32_1 = arith.constant 0 : i32
    return %arg0, %c0_i32, %c0_i32_0 : i32, i32, i32
  }
  func.func @transform_1(%arg0: i32) -> (i32, i32, i32) {
    %c0_i32 = arith.constant 0 : i32
    %c0_i32_0 = arith.constant 0 : i32
    %c0_i32_1 = arith.constant 0 : i32
    %c0_i32_2 = arith.constant 0 : i32
    return %c0_i32, %c0_i32_0, %c0_i32_1 : i32, i32, i32
  }
  func.func @transform_2(%arg0: i32) -> (i32, i32) {
    %c0_i32 = arith.constant 0 : i32
    %c0_i32_0 = arith.constant 0 : i32
    %c0_i32_1 = arith.constant 0 : i32
    return %c0_i32, %c0_i32_0 : i32, i32
  }
  func.func @transform_3(%arg0: i32) -> (i32, i32, i32) {
    %c0_i32 = arith.constant 0 : i32
    %c0_i32_0 = arith.constant 0 : i32
    %c0_i32_1 = arith.constant 0 : i32
    return %arg0, %c0_i32, %c0_i32_0 : i32, i32, i32
  }
  func.func @transform_4(%arg0: i32) -> (i32, i32, i32) {
    %c0_i32 = arith.constant 0 : i32
    %c0_i32_0 = arith.constant 0 : i32
    %c0_i32_1 = arith.constant 0 : i32
    return %arg0, %c0_i32, %c0_i32_0 : i32, i32, i32
  }
  func.func @transform_5(%arg0: i32) -> (i32, i32, i32) {
    %c0_i32 = arith.constant 0 : i32
    %c0_i32_0 = arith.constant 0 : i32
    %c0_i32_1 = arith.constant 0 : i32
    return %arg0, %c0_i32, %c0_i32_0 : i32, i32, i32
  }
}

module attributes {stable_mosaic.version = 11 : i64} {
  func.func @_conv_tap_kernel(%arg0: i32, %arg1: memref<2x30x512xbf16, #tpu.memory_space<vmem>>, %arg2: memref<4x512x256xbf16, #tpu.memory_space<vmem>>, %arg3: memref<1x256xf32, #tpu.memory_space<vmem>>, %arg4: memref<2x20x256xf32, #tpu.memory_space<vmem>>, %arg5: memref<1x1x256xf32, #tpu.memory_space<vmem>>, %arg6: memref<1x1x256xf32, #tpu.memory_space<vmem>>) attributes {dimension_semantics = [#tpu.dimension_semantics<parallel>], iteration_bounds = array<i64: 2>, scalar_prefetch = 0 : i64, scratch_operands = 0 : i64, tpu.core_type = #tpu.core_type<tc>, window_params = [{transform_indices = @transform_0, window_bounds = array<i64: 2, 30, 512>}, {pipeline_mode = #tpu.pipeline_mode<synchronous>, transform_indices = @transform_1, window_bounds = array<i64: 4, 512, 256>}, {pipeline_mode = #tpu.pipeline_mode<synchronous>, transform_indices = @transform_2, window_bounds = array<i64: 1, 256>}, {transform_indices = @transform_3, window_bounds = array<i64: 2, 20, 256>}, {transform_indices = @transform_4, window_bounds = array<i64: 1, 1, 256>}, {transform_indices = @transform_5, window_bounds = array<i64: 1, 1, 256>}]} {
    %0 = tpu.iota {dimensions = array<i32: 0>} : vector<20x1xi32>
    %c5_i32 = arith.constant 5 : i32
    %c0_i32 = arith.constant 0 : i32
    %1 = arith.cmpi eq, %c5_i32, %c0_i32 : i32
    %c1_i32 = arith.constant 1 : i32
    %2 = arith.select %1, %c1_i32, %c5_i32 : i32
    %3 = vector.broadcast %2 : i32 to vector<20x1xi32>
    %4 = arith.remsi %0, %3 : vector<20x1xi32>
    %c0_i32_0 = arith.constant 0 : i32
    %5 = vector.broadcast %c0_i32_0 : i32 to vector<20x1xi32>
    %6 = arith.cmpi ne, %4, %5 : vector<20x1xi32>
    %c0_i32_1 = arith.constant 0 : i32
    %7 = vector.broadcast %c0_i32_1 : i32 to vector<20x1xi32>
    %8 = arith.cmpi slt, %4, %7 : vector<20x1xi32>
    %c0_i32_2 = arith.constant 0 : i32
    %9 = arith.cmpi slt, %2, %c0_i32_2 : i32
    %10 = vector.broadcast %9 : i1 to vector<20x1xi1>
    %11 = vector.broadcast %10 : vector<20x1xi1> to vector<20x1xi1>
    %12 = arith.xori %8, %11 : vector<20x1xi1>
    %13 = arith.andi %12, %6 : vector<20x1xi1>
    %14 = vector.broadcast %2 : i32 to vector<20x1xi32>
    %15 = arith.addi %4, %14 : vector<20x1xi32>
    %16 = arith.select %13, %15, %4 : vector<20x1xi1>, vector<20x1xi32>
    %c4_i32 = arith.constant 4 : i32
    %17 = vector.broadcast %c4_i32 : i32 to vector<20x1xi32>
    %18 = arith.cmpi ne, %16, %17 : vector<20x1xi32>
    %cst = arith.constant 0.000000e+00 : f32
    %19 = vector.broadcast %cst : f32 to vector<1x256xf32>
    %cst_3 = arith.constant 0.000000e+00 : f32
    %20 = vector.broadcast %cst_3 : f32 to vector<1x256xf32>
    %c0 = arith.constant 0 : index
    %c0_4 = arith.constant 0 : index
    %c0_5 = arith.constant 0 : index
    %21 = vector.load %arg1[%c0, %c0_4, %c0_5] : memref<2x30x512xbf16, #tpu.memory_space<vmem>>, vector<1x30x512xbf16>
    %22 = vector.shape_cast %21 : vector<1x30x512xbf16> to vector<30x512xbf16>
    %cst_6 = arith.constant 0.000000e+00 : f32
    %23 = vector.broadcast %cst_6 : f32 to vector<20x256xf32>
    %24 = vector.extract_strided_slice %22 {offsets = [0, 0], sizes = [20, 512], strides = [1, 1]} : vector<30x512xbf16> to vector<20x512xbf16>
    %c0_7 = arith.constant 0 : index
    %c0_8 = arith.constant 0 : index
    %c0_9 = arith.constant 0 : index
    %25 = vector.load %arg2[%c0_7, %c0_8, %c0_9] : memref<4x512x256xbf16, #tpu.memory_space<vmem>>, vector<1x512x256xbf16>
    %26 = vector.shape_cast %25 : vector<1x512x256xbf16> to vector<512x256xbf16>
    %cst_10 = arith.constant dense<0.000000e+00> : vector<20x256xf32>
    %27 = tpu.matmul %24, %26, %cst_10 {dimension_numbers = #tpu.dot_dimension_numbers<[1], [0], [0], [1], [0, 0, 1, 1], [], []>} : vector<20x512xbf16>, vector<512x256xbf16>, vector<20x256xf32> -> vector<20x256xf32>
    %28 = arith.addf %23, %27 : vector<20x256xf32>
    %29 = vector.extract_strided_slice %22 {offsets = [1, 0], sizes = [20, 512], strides = [1, 1]} : vector<30x512xbf16> to vector<20x512xbf16>
    %c1 = arith.constant 1 : index
    %c0_11 = arith.constant 0 : index
    %c0_12 = arith.constant 0 : index
    %30 = vector.load %arg2[%c1, %c0_11, %c0_12] : memref<4x512x256xbf16, #tpu.memory_space<vmem>>, vector<1x512x256xbf16>
    %31 = vector.shape_cast %30 : vector<1x512x256xbf16> to vector<512x256xbf16>
    %cst_13 = arith.constant dense<0.000000e+00> : vector<20x256xf32>
    %32 = tpu.matmul %29, %31, %cst_13 {dimension_numbers = #tpu.dot_dimension_numbers<[1], [0], [0], [1], [0, 0, 1, 1], [], []>} : vector<20x512xbf16>, vector<512x256xbf16>, vector<20x256xf32> -> vector<20x256xf32>
    %33 = arith.addf %28, %32 : vector<20x256xf32>
    %34 = vector.extract_strided_slice %22 {offsets = [5, 0], sizes = [20, 512], strides = [1, 1]} : vector<30x512xbf16> to vector<20x512xbf16>
    %c2 = arith.constant 2 : index
    %c0_14 = arith.constant 0 : index
    %c0_15 = arith.constant 0 : index
    %35 = vector.load %arg2[%c2, %c0_14, %c0_15] : memref<4x512x256xbf16, #tpu.memory_space<vmem>>, vector<1x512x256xbf16>
    %36 = vector.shape_cast %35 : vector<1x512x256xbf16> to vector<512x256xbf16>
    %cst_16 = arith.constant dense<0.000000e+00> : vector<20x256xf32>
    %37 = tpu.matmul %34, %36, %cst_16 {dimension_numbers = #tpu.dot_dimension_numbers<[1], [0], [0], [1], [0, 0, 1, 1], [], []>} : vector<20x512xbf16>, vector<512x256xbf16>, vector<20x256xf32> -> vector<20x256xf32>
    %38 = arith.addf %33, %37 : vector<20x256xf32>
    %39 = vector.extract_strided_slice %22 {offsets = [6, 0], sizes = [20, 512], strides = [1, 1]} : vector<30x512xbf16> to vector<20x512xbf16>
    %c3 = arith.constant 3 : index
    %c0_17 = arith.constant 0 : index
    %c0_18 = arith.constant 0 : index
    %40 = vector.load %arg2[%c3, %c0_17, %c0_18] : memref<4x512x256xbf16, #tpu.memory_space<vmem>>, vector<1x512x256xbf16>
    %41 = vector.shape_cast %40 : vector<1x512x256xbf16> to vector<512x256xbf16>
    %cst_19 = arith.constant dense<0.000000e+00> : vector<20x256xf32>
    %42 = tpu.matmul %39, %41, %cst_19 {dimension_numbers = #tpu.dot_dimension_numbers<[1], [0], [0], [1], [0, 0, 1, 1], [], []>} : vector<20x512xbf16>, vector<512x256xbf16>, vector<20x256xf32> -> vector<20x256xf32>
    %43 = arith.addf %38, %42 : vector<20x256xf32>
    %c0_20 = arith.constant 0 : index
    %c0_21 = arith.constant 0 : index
    %44 = vector.load %arg3[%c0_20, %c0_21] : memref<1x256xf32, #tpu.memory_space<vmem>>, vector<1x256xf32>
    %45 = vector.broadcast %44 : vector<1x256xf32> to vector<20x256xf32>
    %46 = arith.addf %43, %45 : vector<20x256xf32>
    %c0_22 = arith.constant 0 : index
    %c0_23 = arith.constant 0 : index
    %c0_24 = arith.constant 0 : index
    %47 = vector.load %arg4[%c0_22, %c0_23, %c0_24] : memref<2x20x256xf32, #tpu.memory_space<vmem>>, vector<1x20x256xf32>
    %48 = vector.shape_cast %47 : vector<1x20x256xf32> to vector<20x256xf32>
    %49 = vector.shape_cast %46 : vector<20x256xf32> to vector<1x20x256xf32>
    tpu.vector_store %arg4[%c0_22, %c0_23, %c0_24], %49 {strides = array<i32>} : memref<2x20x256xf32, #tpu.memory_space<vmem>>, vector<1x20x256xf32>,
    %cst_25 = arith.constant 0.000000e+00 : f32
    %50 = vector.shape_cast %18 : vector<20x1xi1> to vector<20x1xi1>
    %51 = vector.broadcast %50 : vector<20x1xi1> to vector<20x256xi1>
    %52 = vector.broadcast %cst_25 : f32 to vector<20x256xf32>
    %53 = arith.select %51, %46, %52 : vector<20x256xi1>, vector<20x256xf32>
    %cst_26 = arith.constant dense<0.000000e+00> : vector<256xf32>
    %54 = vector.multi_reduction <add>, %53, %cst_26 [0] : vector<20x256xf32> to vector<256xf32>
    %55 = vector.shape_cast %54 : vector<256xf32> to vector<1x256xf32>
    %56 = arith.addf %19, %55 : vector<1x256xf32>
    %57 = arith.mulf %53, %53 : vector<20x256xf32>
    %cst_27 = arith.constant dense<0.000000e+00> : vector<256xf32>
    %58 = vector.multi_reduction <add>, %57, %cst_27 [0] : vector<20x256xf32> to vector<256xf32>
    %59 = vector.shape_cast %58 : vector<256xf32> to vector<1x256xf32>
    %60 = arith.addf %20, %59 : vector<1x256xf32>
    %c1_28 = arith.constant 1 : index
    %c0_29 = arith.constant 0 : index
    %c0_30 = arith.constant 0 : index
    %61 = vector.load %arg1[%c1_28, %c0_29, %c0_30] : memref<2x30x512xbf16, #tpu.memory_space<vmem>>, vector<1x30x512xbf16>
    %62 = vector.shape_cast %61 : vector<1x30x512xbf16> to vector<30x512xbf16>
    %cst_31 = arith.constant 0.000000e+00 : f32
    %63 = vector.broadcast %cst_31 : f32 to vector<20x256xf32>
    %64 = vector.extract_strided_slice %62 {offsets = [0, 0], sizes = [20, 512], strides = [1, 1]} : vector<30x512xbf16> to vector<20x512xbf16>
    %c0_32 = arith.constant 0 : index
    %c0_33 = arith.constant 0 : index
    %c0_34 = arith.constant 0 : index
    %65 = vector.load %arg2[%c0_32, %c0_33, %c0_34] : memref<4x512x256xbf16, #tpu.memory_space<vmem>>, vector<1x512x256xbf16>
    %66 = vector.shape_cast %65 : vector<1x512x256xbf16> to vector<512x256xbf16>
    %cst_35 = arith.constant dense<0.000000e+00> : vector<20x256xf32>
    %67 = tpu.matmul %64, %66, %cst_35 {dimension_numbers = #tpu.dot_dimension_numbers<[1], [0], [0], [1], [0, 0, 1, 1], [], []>} : vector<20x512xbf16>, vector<512x256xbf16>, vector<20x256xf32> -> vector<20x256xf32>
    %68 = arith.addf %63, %67 : vector<20x256xf32>
    %69 = vector.extract_strided_slice %62 {offsets = [1, 0], sizes = [20, 512], strides = [1, 1]} : vector<30x512xbf16> to vector<20x512xbf16>
    %c1_36 = arith.constant 1 : index
    %c0_37 = arith.constant 0 : index
    %c0_38 = arith.constant 0 : index
    %70 = vector.load %arg2[%c1_36, %c0_37, %c0_38] : memref<4x512x256xbf16, #tpu.memory_space<vmem>>, vector<1x512x256xbf16>
    %71 = vector.shape_cast %70 : vector<1x512x256xbf16> to vector<512x256xbf16>
    %cst_39 = arith.constant dense<0.000000e+00> : vector<20x256xf32>
    %72 = tpu.matmul %69, %71, %cst_39 {dimension_numbers = #tpu.dot_dimension_numbers<[1], [0], [0], [1], [0, 0, 1, 1], [], []>} : vector<20x512xbf16>, vector<512x256xbf16>, vector<20x256xf32> -> vector<20x256xf32>
    %73 = arith.addf %68, %72 : vector<20x256xf32>
    %74 = vector.extract_strided_slice %62 {offsets = [5, 0], sizes = [20, 512], strides = [1, 1]} : vector<30x512xbf16> to vector<20x512xbf16>
    %c2_40 = arith.constant 2 : index
    %c0_41 = arith.constant 0 : index
    %c0_42 = arith.constant 0 : index
    %75 = vector.load %arg2[%c2_40, %c0_41, %c0_42] : memref<4x512x256xbf16, #tpu.memory_space<vmem>>, vector<1x512x256xbf16>
    %76 = vector.shape_cast %75 : vector<1x512x256xbf16> to vector<512x256xbf16>
    %cst_43 = arith.constant dense<0.000000e+00> : vector<20x256xf32>
    %77 = tpu.matmul %74, %76, %cst_43 {dimension_numbers = #tpu.dot_dimension_numbers<[1], [0], [0], [1], [0, 0, 1, 1], [], []>} : vector<20x512xbf16>, vector<512x256xbf16>, vector<20x256xf32> -> vector<20x256xf32>
    %78 = arith.addf %73, %77 : vector<20x256xf32>
    %79 = vector.extract_strided_slice %62 {offsets = [6, 0], sizes = [20, 512], strides = [1, 1]} : vector<30x512xbf16> to vector<20x512xbf16>
    %c3_44 = arith.constant 3 : index
    %c0_45 = arith.constant 0 : index
    %c0_46 = arith.constant 0 : index
    %80 = vector.load %arg2[%c3_44, %c0_45, %c0_46] : memref<4x512x256xbf16, #tpu.memory_space<vmem>>, vector<1x512x256xbf16>
    %81 = vector.shape_cast %80 : vector<1x512x256xbf16> to vector<512x256xbf16>
    %cst_47 = arith.constant dense<0.000000e+00> : vector<20x256xf32>
    %82 = tpu.matmul %79, %81, %cst_47 {dimension_numbers = #tpu.dot_dimension_numbers<[1], [0], [0], [1], [0, 0, 1, 1], [], []>} : vector<20x512xbf16>, vector<512x256xbf16>, vector<20x256xf32> -> vector<20x256xf32>
    %83 = arith.addf %78, %82 : vector<20x256xf32>
    %c0_48 = arith.constant 0 : index
    %c0_49 = arith.constant 0 : index
    %84 = vector.load %arg3[%c0_48, %c0_49] : memref<1x256xf32, #tpu.memory_space<vmem>>, vector<1x256xf32>
    %85 = vector.broadcast %84 : vector<1x256xf32> to vector<20x256xf32>
    %86 = arith.addf %83, %85 : vector<20x256xf32>
    %c1_50 = arith.constant 1 : index
    %c0_51 = arith.constant 0 : index
    %c0_52 = arith.constant 0 : index
    %87 = vector.load %arg4[%c1_50, %c0_51, %c0_52] : memref<2x20x256xf32, #tpu.memory_space<vmem>>, vector<1x20x256xf32>
    %88 = vector.shape_cast %87 : vector<1x20x256xf32> to vector<20x256xf32>
    %89 = vector.shape_cast %86 : vector<20x256xf32> to vector<1x20x256xf32>
    tpu.vector_store %arg4[%c1_50, %c0_51, %c0_52], %89 {strides = array<i32>} : memref<2x20x256xf32, #tpu.memory_space<vmem>>, vector<1x20x256xf32>,
    %cst_53 = arith.constant 0.000000e+00 : f32
    %90 = vector.shape_cast %18 : vector<20x1xi1> to vector<20x1xi1>
    %91 = vector.broadcast %90 : vector<20x1xi1> to vector<20x256xi1>
    %92 = vector.broadcast %cst_53 : f32 to vector<20x256xf32>
    %93 = arith.select %91, %86, %92 : vector<20x256xi1>, vector<20x256xf32>
    %cst_54 = arith.constant dense<0.000000e+00> : vector<256xf32>
    %94 = vector.multi_reduction <add>, %93, %cst_54 [0] : vector<20x256xf32> to vector<256xf32>
    %95 = vector.shape_cast %94 : vector<256xf32> to vector<1x256xf32>
    %96 = arith.addf %56, %95 : vector<1x256xf32>
    %97 = arith.mulf %93, %93 : vector<20x256xf32>
    %cst_55 = arith.constant dense<0.000000e+00> : vector<256xf32>
    %98 = vector.multi_reduction <add>, %97, %cst_55 [0] : vector<20x256xf32> to vector<256xf32>
    %99 = vector.shape_cast %98 : vector<256xf32> to vector<1x256xf32>
    %100 = arith.addf %60, %99 : vector<1x256xf32>
    %c0_56 = arith.constant 0 : index
    %c0_57 = arith.constant 0 : index
    %c0_58 = arith.constant 0 : index
    %101 = vector.load %arg5[%c0_56, %c0_57, %c0_58] : memref<1x1x256xf32, #tpu.memory_space<vmem>>, vector<1x1x256xf32>
    %102 = vector.shape_cast %101 : vector<1x1x256xf32> to vector<1x256xf32>
    %103 = vector.shape_cast %96 : vector<1x256xf32> to vector<1x1x256xf32>
    tpu.vector_store %arg5[%c0_56, %c0_57, %c0_58], %103 {strides = array<i32>} : memref<1x1x256xf32, #tpu.memory_space<vmem>>, vector<1x1x256xf32>,
    %c0_59 = arith.constant 0 : index
    %c0_60 = arith.constant 0 : index
    %c0_61 = arith.constant 0 : index
    %104 = vector.load %arg6[%c0_59, %c0_60, %c0_61] : memref<1x1x256xf32, #tpu.memory_space<vmem>>, vector<1x1x256xf32>
    %105 = vector.shape_cast %104 : vector<1x1x256xf32> to vector<1x256xf32>
    %106 = vector.shape_cast %100 : vector<1x256xf32> to vector<1x1x256xf32>
    tpu.vector_store %arg6[%c0_59, %c0_60, %c0_61], %106 {strides = array<i32>} : memref<1x1x256xf32, #tpu.memory_space<vmem>>, vector<1x1x256xf32>,
    return
  }
  func.func @transform_0(%arg0: i32) -> (i32, i32, i32) {
    %c0_i32 = arith.constant 0 : i32
    %c0_i32_0 = arith.constant 0 : i32
    %c0_i32_1 = arith.constant 0 : i32
    return %arg0, %c0_i32, %c0_i32_0 : i32, i32, i32
  }
  func.func @transform_1(%arg0: i32) -> (i32, i32, i32) {
    %c0_i32 = arith.constant 0 : i32
    %c0_i32_0 = arith.constant 0 : i32
    %c0_i32_1 = arith.constant 0 : i32
    %c0_i32_2 = arith.constant 0 : i32
    return %c0_i32, %c0_i32_0, %c0_i32_1 : i32, i32, i32
  }
  func.func @transform_2(%arg0: i32) -> (i32, i32) {
    %c0_i32 = arith.constant 0 : i32
    %c0_i32_0 = arith.constant 0 : i32
    %c0_i32_1 = arith.constant 0 : i32
    return %c0_i32, %c0_i32_0 : i32, i32
  }
  func.func @transform_3(%arg0: i32) -> (i32, i32, i32) {
    %c0_i32 = arith.constant 0 : i32
    %c0_i32_0 = arith.constant 0 : i32
    %c0_i32_1 = arith.constant 0 : i32
    return %arg0, %c0_i32, %c0_i32_0 : i32, i32, i32
  }
  func.func @transform_4(%arg0: i32) -> (i32, i32, i32) {
    %c0_i32 = arith.constant 0 : i32
    %c0_i32_0 = arith.constant 0 : i32
    %c0_i32_1 = arith.constant 0 : i32
    return %arg0, %c0_i32, %c0_i32_0 : i32, i32, i32
  }
  func.func @transform_5(%arg0: i32) -> (i32, i32, i32) {
    %c0_i32 = arith.constant 0 : i32
    %c0_i32_0 = arith.constant 0 : i32
    %c0_i32_1 = arith.constant 0 : i32
    return %arg0, %c0_i32, %c0_i32_0 : i32, i32, i32
  }
}

</mosaic_0001>

<llo_original>
// kernel: discriminator_forward.3
$region0: #{discriminator_forward.3}
  #allocation0 [shape = 'u32[]', space=smem, size = 0x4, offset = 0x4, fixed_abs, tag = 'smem constant byte address 0x4 - core index']
  #allocation1 [shape = 'u32[144,128]{1,0:T(1,128)}', space=vmem, size = 0x12000, scoped, tag = 'internal scratch']
  %s0 = inlined_call_operand.vmem [shape: bf16[4,306,12], index: 0, kind: input, shape index: {}]
  %s1 = inlined_call_operand.vmem [shape: bf16[4,12,128], index: 1, kind: input, shape index: {}]
  %s2 = inlined_call_operand.vmem [shape: f32[1,128], index: 2, kind: input, shape index: {}]
  %s3 = inlined_call_operand.vmem [shape: bf16[4,272,128], index: 3, kind: output, shape index: {}]
  %s4 = sld [smem:[#allocation0]]
  $region45: #{discriminator_forward.3} parent=0
    _
  %s6 = ssub.s32 1, %s4
  %s7 = scalar_select 0, %s6, %s4
  loop: start=0, step=1, limit=4
  $region2: #{discriminator_forward.3} parent=0 // loop_pre_header
    _
  $region3: #{discriminator_forward.3} parent=0 // loop_header
    %s9 = sphi 0, %s13
    %p10 = scmp.ge.s32.totalorder %s9, 4
    %s19 = sphi 0, %s21
    %s22 = sphi 0, %s19
    %s23 = sphi 0, %s22
    %s39 = sphi 0, %s23
    %s43 = sphi 0, %s43
    %s45 = sphi 0, %s43
    %s46 = sphi 0, %s45
    %s60 = sphi 0, %s46
    %s64 = sphi 0, %s64
    %s66 = sphi 0, %s64
    %s67 = sphi 0, %s66
    %s81 = sphi 0, %s67
    %s87 = sphi 0, %s89
    %s90 = sphi 0, %s87
    %s91 = sphi 0, %s90
    %s107 = sphi 0, %s91
  $region4: #{discriminator_forward.3} parent=0 // loop_header_branch
    %12 = sbr.rel (%p10) target = $region8
  $region5: #{discriminator_forward.3} parent=0 // loop_body
    %s14 = ssub.s32 %s9, 1
    %s15 = ssub.s32 %s9, 2
    %s16 = sadd.s32 %s9, 1
    %s17 = ssub.s32 %s9, %s16
    %p18 = scmp.eq.s32.totalorder %s17, 0
    %s20 = sadd.s32 %s19, 1
    %s21 = scalar_select %p18, %s19, %s20
    %p24 = pneg %p18
    %p25 = scmp.eq.s32.totalorder %s9, 1
    %p26 = por %p24, %p25
    %p27 = scmp.ne.s32.totalorder %s19, %s22
    %p28 = scmp.eq.s32.totalorder %s9, 0
    %p29 = por %p27, %p28
    %p30 = scmp.ne.s32.totalorder %s19, %s22
    %p31 = scmp.eq.s32.totalorder %s14, 1
    %p32 = por %p30, %p31
    %p33 = scmp.ne.s32.totalorder %s22, %s23
    %p34 = scmp.eq.s32.totalorder %s14, 0
    %p35 = por %p33, %p34
    %p36 = scmp.ne.s32.totalorder %s22, %s23
    %p37 = scmp.eq.s32.totalorder %s15, 1
    %p38 = por %p36, %p37
    %p40 = scmp.ne.s32.totalorder %s23, %s39
    %p41 = scmp.eq.s32.totalorder %s15, 0
    %p42 = por %p40, %p41
    %s44 = sadd.s32 %s43, 1
    %p47 = scmp.eq.s32.totalorder %s9, 1
    %p48 = scmp.ne.s32.totalorder %s43, %s45
    %p49 = scmp.eq.s32.totalorder %s9, 0
    %p50 = por %p48, %p49
    %p51 = scmp.ne.s32.totalorder %s43, %s45
    %p52 = scmp.eq.s32.totalorder %s14, 1
    %p53 = por %p51, %p52
    %p54 = scmp.ne.s32.totalorder %s45, %s46
    %p55 = scmp.eq.s32.totalorder %s14, 0
    %p56 = por %p54, %p55
    %p57 = scmp.ne.s32.totalorder %s45, %s46
    %p58 = scmp.eq.s32.totalorder %s15, 1
    %p59 = por %p57, %p58
    %p61 = scmp.ne.s32.totalorder %s46, %s60
    %p62 = scmp.eq.s32.totalorder %s15, 0
    %p63 = por %p61, %p62
    %s65 = sadd.s32 %s64, 1
    %p68 = scmp.eq.s32.totalorder %s9, 1
    %p69 = scmp.ne.s32.totalorder %s64, %s66
    %p70 = scmp.eq.s32.totalorder %s9, 0
    %p71 = por %p69, %p70
    %p72 = scmp.ne.s32.totalorder %s64, %s66
    %p73 = scmp.eq.s32.totalorder %s14, 1
    %p74 = por %p72, %p73
    %p75 = scmp.ne.s32.totalorder %s66, %s67
    %p76 = scmp.eq.s32.totalorder %s14, 0
    %p77 = por %p75, %p76
    %p78 = scmp.ne.s32.totalorder %s66, %s67
    %p79 = scmp.eq.s32.totalorder %s15, 1
    %p80 = por %p78, %p79
    %p82 = scmp.ne.s32.totalorder %s67, %s81
    %p83 = scmp.eq.s32.totalorder %s15, 0
    %p84 = por %p82, %p83
    %s85 = ssub.s32 %s9, %s16
    %p86 = scmp.eq.s32.totalorder %s85, 0
    %s88 = sadd.s32 %s87, 1
    %s89 = scalar_select %p86, %s87, %s88
    %p92 = pneg %p86
    %p93 = scmp.eq.s32.totalorder %s9, 1
    %p94 = por %p92, %p93
    %p95 = scmp.ne.s32.totalorder %s87, %s90
    %p96 = scmp.eq.s32.totalorder %s9, 0
    %p97 = por %p95, %p96
    %p98 = scmp.ne.s32.totalorder %s87, %s90
    %p99 = scmp.eq.s32.totalorder %s14, 1
    %p100 = por %p98, %p99
    %p101 = scmp.ne.s32.totalorder %s90, %s91
    %p102 = scmp.eq.s32.totalorder %s14, 0
    %p103 = por %p101, %p102
    %p104 = scmp.ne.s32.totalorder %s90, %s91
    %p105 = scmp.eq.s32.totalorder %s15, 1
    %p106 = por %p104, %p105
    %p108 = scmp.ne.s32.totalorder %s91, %s107
    %p109 = scmp.eq.s32.totalorder %s15, 0
    %p110 = por %p108, %p109
    %p111 = scmp.le.s32.totalorder 1, %s9
    %p112 = scmp.lt.s32.totalorder %s9, 3
    %p113 = pnand %p111, %p112
    %p114 = pneg %p113
    // Predicated region
    $region9: #{discriminator_forward.3} parent=5 // pred_check
      _
    $region10: #{discriminator_forward.3} parent=5 // pred_check_branch
      %116 = sbr.rel (%p113) target = $region12
    $region11: #{discriminator_forward.3} parent=5 // pred_region
      %s117 = ssub.s32 %s9, 1
      // Predicated region
      $region13: #{discriminator_forward.3} parent=11 // pred_check
        %p118 = pneg %p56
      $region14: #{discriminator_forward.3} parent=11 // pred_check_branch
        %120 = sbr.rel (%p118) target = $region16
      $region15: #{discriminator_forward.3} parent=11 // pred_region
        _
      $region16: #{discriminator_forward.3} parent=11 // pred_fallthru
        _
      // Predicated region
      $region17: #{discriminator_forward.3} parent=11 // pred_check
        %p121 = pneg %p77
      $region18: #{discriminator_forward.3} parent=11 // pred_check_branch
        %123 = sbr.rel (%p121) target = $region20
      $region19: #{discriminator_forward.3} parent=11 // pred_region
        _
      $region20: #{discriminator_forward.3} parent=11 // pred_fallthru
        _
    $region12: #{discriminator_forward.3} parent=5 // pred_fallthru
      _
    %p124 = scmp.lt.s32.totalorder %s9, 2
    // Predicated region
    $region21: #{discriminator_forward.3} parent=5 // pred_check
      %p125 = pneg %p124
    $region22: #{discriminator_forward.3} parent=5 // pred_check_branch
      %127 = sbr.rel (%p125) target = $region24
    $region23: #{discriminator_forward.3} parent=5 // pred_region
      // Predicated region
      $region25: #{discriminator_forward.3} parent=23 // pred_check
        %p128 = pneg %p29
      $region26: #{discriminator_forward.3} parent=23 // pred_check_branch
        %130 = sbr.rel (%p128) target = $region28
      $region27: #{discriminator_forward.3} parent=23 // pred_region
        %s131 = smul.u32 2, %s9
        %p132 = scmp.lt.s32.totalorder %s131, 3
        %s133 = scalar_select %p132, %s131, 3
        %s134 = smul.addr %s133, 39
        %s135 = smul.addr %s134, 4
        %s136 = scalar_lea.vmem %s0, %s135
        %s137 = smul.u32 2, %s9
      $region28: #{discriminator_forward.3} parent=23 // pred_fallthru
        _
    $region24: #{discriminator_forward.3} parent=5 // pred_fallthru
      _
    %p138 = scmp.le.s32.totalorder 1, %s9
    %p139 = scmp.lt.s32.totalorder %s9, 3
    %p140 = pnand %p138, %p139
    %p141 = pneg %p140
    // Predicated region
    $region29: #{discriminator_forward.3} parent=5 // pred_check
      _
    $region30: #{discriminator_forward.3} parent=5 // pred_check_branch
      %143 = sbr.rel (%p140) target = $region32
    $region31: #{discriminator_forward.3} parent=5 // pred_region
      %s144 = ssub.s32 %s9, 1
      %s145 = smul.u32 2, %s14
      %p146 = scmp.lt.s32.totalorder %s145, 3
      %s147 = scalar_select %p146, %s145, 3
      %s148 = smul.addr %s147, 39
      %s149 = smul.addr %s148, 4
      %s150 = scalar_lea.vmem %s0, %s149
      %p151 = pneg %p35
      %p152 = pneg %p32
      %p153 = pneg %p56
      %p154 = pneg %p53
      %p155 = pneg %p77
      %p156 = pneg %p74
      %p157 = pneg %p103
      %p158 = pneg %p100
      %s159 = smul.u32 2, %s14
      %p160 = scmp.lt.s32.totalorder %s159, 3
      %s161 = scalar_select %p160, %s159, 3
      %s162 = smul.addr %s161, 34
      %s163 = smul.addr %s162, 4
      %s164 = scalar_lea.vmem %s3, %s163
      %s165 = smul.u32 2, %s14
      %p166 = scmp.lt.s32.totalorder %s165, 3
      %s167 = scalar_select %p166, %s165, 3
      %s168 = smul.addr %s167, 39
      %s169 = smul.addr %s168, 4
      %s170 = scalar_lea.vmem %s0, %s169
      %s171 = smul.u32 2, %s14
      %s172 = smul.u32 2, %s14
      %p173 = scmp.lt.s32.totalorder %s172, 3
      %s174 = scalar_select %p173, %s172, 3
      %s175 = smul.addr %s174, 34
      %s176 = smul.addr %s175, 4
      %s177 = scalar_lea.vmem %s3, %s176
      %s178 = smul.u32 2, %s14
      %v180 = vld [vmem:[%s170] sm:$0xf]
      %v181 = vld [vmem:[%s170 + $0x4] sm:$0xf]
      %v182 = vld [vmem:[%s170 + $0x8] sm:$0xf]
      %v183 = vld [vmem:[%s170 + $0xc] sm:$0xf]
      %v184 = vld [vmem:[%s170 + $0x10] sm:$0xf]
      %v185 = vld [vmem:[%s170 + $0x14] sm:$0xf]
      %v186 = vld [vmem:[%s170 + $0x18] sm:$0xf]
      %v187 = vld [vmem:[%s170 + $0x1c] sm:$0xf]
      %v188 = vld [vmem:[%s170 + $0x20] sm:$0xf]
      %v189 = vld [vmem:[%s170 + $0x24] sm:$0xf]
      %v190 = vld [vmem:[%s170 + $0x28] sm:$0xf]
      %v191 = vld [vmem:[%s170 + $0x2c] sm:$0xf]
      %v192 = vld [vmem:[%s170 + $0x30] sm:$0xf]
      %v193 = vld [vmem:[%s170 + $0x34] sm:$0xf]
      %v194 = vld [vmem:[%s170 + $0x38] sm:$0xf]
      %v195 = vld [vmem:[%s170 + $0x3c] sm:$0xf]
      %v196 = vld [vmem:[%s170 + $0x40] sm:$0xf]
      %v197 = vld [vmem:[%s170 + $0x44] sm:$0xf]
      %v198 = vld [vmem:[%s170 + $0x48] sm:$0xf]
      %v199 = vld [vmem:[%s170 + $0x4c] sm:$0xf]
      %v200 = vld [vmem:[%s170 + $0x50] sm:$0xf]
      %v201 = vld [vmem:[%s170 + $0x54] sm:$0xf]
      %v202 = vld [vmem:[%s170 + $0x58] sm:$0xf]
      %v203 = vld [vmem:[%s170 + $0x5c] sm:$0xf]
      %v204 = vld [vmem:[%s170 + $0x60] sm:$0xf]
      %v205 = vld [vmem:[%s170 + $0x64] sm:$0xf]
      %v206 = vld [vmem:[%s170 + $0x68] sm:$0xf]
      %v207 = vld [vmem:[%s170 + $0x6c] sm:$0xf]
      %v208 = vld [vmem:[%s170 + $0x70] sm:$0xf]
      %v209 = vld [vmem:[%s170 + $0x74] sm:$0xf]
      %v210 = vld [vmem:[%s170 + $0x78] sm:$0xf]
      %v211 = vld [vmem:[%s170 + $0x7c] sm:$0xf]
      %v212 = vld [vmem:[%s170 + $0x80] sm:$0xf]
      %v213 = vld [vmem:[%s170 + $0x84] sm:$0xf]
      %v214 = vld [vmem:[%s170 + $0x88] sm:$0xf]
      %v215 = vld [vmem:[%s170 + $0x8c] sm:$0xf]
      %v216 = vld [vmem:[%s170 + $0x90] sm:$0xf]
      %v217 = vld [vmem:[%s1] sm:$0xf]
      %v218 = vld [vmem:[%s1 + $0x4] sm:$0x3]
      %s219 = scalar_lea.vmem %s1, 8
      %v220 = vld [vmem:[%s219] sm:$0xf]
      %v221 = vld [vmem:[%s219 + $0x4] sm:$0x3]
      %v257 = vunpack.c.l.b16 %v180
      %v258 = vunpack.c.l.b16 %v181
      %v259 = vunpack.c.l.b16 %v182
      %v260 = vunpack.c.l.b16 %v183
      %v261 = vunpack.c.l.b16 %v184
      %v262 = vunpack.c.l.b16 %v185
      %v263 = vunpack.c.l.b16 %v186
      %v264 = vunpack.c.l.b16 %v187
      %v265 = vunpack.c.l.b16 %v188
      %v266 = vunpack.c.l.b16 %v189
      %v267 = vunpack.c.l.b16 %v190
      %v268 = vunpack.c.l.b16 %v191
      %v269 = vunpack.c.l.b16 %v192
      %v270 = vunpack.c.l.b16 %v193
      %v271 = vunpack.c.l.b16 %v194
      %v272 = vunpack.c.l.b16 %v195
      %v273 = vunpack.c.l.b16 %v196
      %v274 = vunpack.c.l.b16 %v197
      %v275 = vunpack.c.l.b16 %v198
      %v276 = vunpack.c.l.b16 %v199
      %v277 = vunpack.c.l.b16 %v200
      %v278 = vunpack.c.l.b16 %v201
      %v279 = vunpack.c.l.b16 %v202
      %v280 = vunpack.c.l.b16 %v203
      %v281 = vunpack.c.l.b16 %v204
      %v282 = vunpack.c.l.b16 %v205
      %v283 = vunpack.c.l.b16 %v206
      %v284 = vunpack.c.l.b16 %v207
      %v285 = vunpack.c.l.b16 %v208
      %v286 = vunpack.c.l.b16 %v209
      %v287 = vunpack.c.l.b16 %v210
      %v288 = vunpack.c.l.b16 %v211
      %v289 = vunpack.c.l.b16 %v212
      %v290 = vunpack.c.l.b16 %v213
      %v291 = vunpack.c.l.b16 %v214
      %v292 = vpack.c.b16 %v258, %v257
      %v293 = vpack.c.b16 %v260, %v259
      %v294 = vpack.c.b16 %v262, %v261
      %v295 = vpack.c.b16 %v264, %v263
      %v296 = vpack.c.b16 %v266, %v265
      %v297 = vpack.c.b16 %v268, %v267
      %v298 = vpack.c.b16 %v270, %v269
      %v299 = vpack.c.b16 %v272, %v271
      %v300 = vpack.c.b16 %v274, %v273
      %v301 = vpack.c.b16 %v276, %v275
      %v302 = vpack.c.b16 %v278, %v277
      %v303 = vpack.c.b16 %v280, %v279
      %v304 = vpack.c.b16 %v282, %v281
      %v305 = vpack.c.b16 %v284, %v283
      %v306 = vpack.c.b16 %v286, %v285
      %v307 = vpack.c.b16 %v288, %v287
      %v308 = vpack.c.b16 %v290, %v289
      %v309 = vpack.c.b16 %v291, %v291
      %vm310 = vsmask.f32 7424
      %v312 = vshrl.u32 %v292, 16
      %v314 = vshll.u32 %v292, 16
      %v316 = vrot.slane %v314, 1
      %v317 = vor.u32 %v312, %v316
      %v319 = vshll.u32 %v293, 16
      %v321 = vrot.slane %v319, 1
      %v322 = vsel %vm310, %v317, %v321
      %v323 = vshrl.u32 %v293, 16
      %v325 = vor.u32 %v323, %v321
      %v327 = vshll.u32 %v294, 16
      %v329 = vrot.slane %v327, 1
      %v330 = vsel %vm310, %v325, %v329
      %v331 = vshrl.u32 %v294, 16
      %v333 = vor.u32 %v331, %v329
      %v335 = vshll.u32 %v295, 16
      %v337 = vrot.slane %v335, 1
      %v338 = vsel %vm310, %v333, %v337
      %v339 = vshrl.u32 %v295, 16
      %v341 = vor.u32 %v339, %v337
      %v343 = vshll.u32 %v296, 16
      %v345 = vrot.slane %v343, 1
      %v346 = vsel %vm310, %v341, %v345
      %v347 = vshrl.u32 %v296, 16
      %v349 = vor.u32 %v347, %v345
      %v351 = vshll.u32 %v297, 16
      %v353 = vrot.slane %v351, 1
      %v354 = vsel %vm310, %v349, %v353
      %v355 = vshrl.u32 %v297, 16
      %v357 = vor.u32 %v355, %v353
      %v359 = vshll.u32 %v298, 16
      %v361 = vrot.slane %v359, 1
      %v362 = vsel %vm310, %v357, %v361
      %v363 = vshrl.u32 %v298, 16
      %v365 = vor.u32 %v363, %v361
      %v367 = vshll.u32 %v299, 16
      %v369 = vrot.slane %v367, 1
      %v370 = vsel %vm310, %v365, %v369
      %v371 = vshrl.u32 %v299, 16
      %v373 = vor.u32 %v371, %v369
      %v375 = vshll.u32 %v300, 16
      %v377 = vrot.slane %v375, 1
      %v378 = vsel %vm310, %v373, %v377
      %v379 = vshrl.u32 %v300, 16
      %v381 = vor.u32 %v379, %v377
      %v383 = vshll.u32 %v301, 16
      %v385 = vrot.slane %v383, 1
      %v386 = vsel %vm310, %v381, %v385
      %v387 = vshrl.u32 %v301, 16
      %v389 = vor.u32 %v387, %v385
      %v391 = vshll.u32 %v302, 16
      %v393 = vrot.slane %v391, 1
      %v394 = vsel %vm310, %v389, %v393
      %v395 = vshrl.u32 %v302, 16
      %v397 = vor.u32 %v395, %v393
      %v399 = vshll.u32 %v303, 16
      %v401 = vrot.slane %v399, 1
      %v402 = vsel %vm310, %v397, %v401
      %v403 = vshrl.u32 %v303, 16
      %v405 = vor.u32 %v403, %v401
      %v407 = vshll.u32 %v304, 16
      %v409 = vrot.slane %v407, 1
      %v410 = vsel %vm310, %v405, %v409
      %v411 = vshrl.u32 %v304, 16
      %v413 = vor.u32 %v411, %v409
      %v415 = vshll.u32 %v305, 16
      %v417 = vrot.slane %v415, 1
      %v418 = vsel %vm310, %v413, %v417
      %v419 = vshrl.u32 %v305, 16
      %v421 = vor.u32 %v419, %v417
      %v423 = vshll.u32 %v306, 16
      %v425 = vrot.slane %v423, 1
      %v426 = vsel %vm310, %v421, %v425
      %v427 = vshrl.u32 %v306, 16
      %v429 = vor.u32 %v427, %v425
      %v431 = vshll.u32 %v307, 16
      %v433 = vrot.slane %v431, 1
      %v434 = vsel %vm310, %v429, %v433
      %v435 = vshrl.u32 %v307, 16
      %v437 = vor.u32 %v435, %v433
      %v439 = vshll.u32 %v308, 16
      %v441 = vrot.slane %v439, 1
      %v442 = vsel %vm310, %v437, %v441
      %v443 = vshrl.u32 %v308, 16
      %v445 = vor.u32 %v443, %v441
      %v447 = vshll.u32 %v309, 16
      %v449 = vrot.slane %v447, 1
      %v450 = vsel %vm310, %v445, %v449
      %v453 = vunpack.c.l.b16 %v220
      %v454 = vunpack.c.l.b16 %v221
      %v455 = vpack.c.b16 %v454, %v453
      %vm456 = vcmask 97280
      %v458 = vsel %vm456, %v322, 0
      %v461 = vsel %vm456, %v330, 0
      %v464 = vsel %vm456, %v338, 0
      %v467 = vsel %vm456, %v346, 0
      %v470 = vsel %vm456, %v354, 0
      %v473 = vsel %vm456, %v362, 0
      %v476 = vsel %vm456, %v370, 0
      %v479 = vsel %vm456, %v378, 0
      %v482 = vsel %vm456, %v386, 0
      %v485 = vsel %vm456, %v394, 0
      %v488 = vsel %vm456, %v402, 0
      %v491 = vsel %vm456, %v410, 0
      %v494 = vsel %vm456, %v418, 0
      %v497 = vsel %vm456, %v426, 0
      %v500 = vsel %vm456, %v434, 0
      %v503 = vsel %vm456, %v442, 0
      %v506 = vsel %vm456, %v450, 0
      %vm508 = vcmask 1045504
      %v510 = vsel %vm508, %v455, 0
      %512 = vmatprep.subr.bf16.mxu0 0
      %513 = vmatpush1.bf16.msra.mxu0 %v510
      %514 = vmatprep.subr.bf16.mxu0 0
      %515 = vmatpush1.bf16.msra.mxu0 0
      %516 = vmatprep.subr.bf16.mxu0 0
      %517 = vmatpush1.bf16.msra.mxu0 0
      %518 = vmatprep.subr.bf16.mxu0 0
      %519 = vmatpush1.bf16.msra.mxu0 0
      %520 = vmatprep.subr.bf16.mxu0 0
      %521 = vmatpush1.bf16.msra.mxu0 0
      %522 = vmatprep.subr.bf16.mxu0 0
      %523 = vmatpush1.bf16.msra.mxu0 0
      %524 = vmatprep.subr.bf16.mxu0 0
      %525 = vmatpush1.bf16.msra.mxu0 0
      %526 = vmatprep.subr.bf16.mxu0 0
      %527 = vmatpush1.bf16.msra.mxu0 0
      %528 = vmatprep.subr.bf16.mxu0 0
      %529 = vmatpush1.bf16.msra.mxu0 0
      %530 = vmatprep.subr.bf16.mxu0 0
      %531 = vmatpush1.bf16.msra.mxu0 0
      %532 = vmatprep.subr.bf16.mxu0 0
      %533 = vmatpush1.bf16.msra.mxu0 0
      %534 = vmatprep.subr.bf16.mxu0 0
      %535 = vmatpush1.bf16.msra.mxu0 0
      %536 = vmatprep.subr.bf16.mxu0 0
      %537 = vmatpush1.bf16.msra.mxu0 0
      %538 = vmatprep.subr.bf16.mxu0 0
      %539 = vmatpush1.bf16.msra.mxu0 0
      %540 = vmatprep.subr.bf16.mxu0 0
      %541 = vmatpush1.bf16.msra.mxu0 0
      %542 = vmatprep.subr.bf16.mxu0 0
      %543 = vmatpush1.bf16.msra.mxu0 0
      %544 = vmatprep.mubr.bf16.mxu0 0
      %545 = vmatmul.mubr.bf16.gmra.mrb[0].mxu0 %v458
      %v546 = vpop.f32.mrb[0].mxu0
      %v547 = vadd.f32 0.0, %v546
      %v548 = vpop.f32.mrb[0].mxu0
      %v549 = vpop.f32.mrb[0].mxu0
      %v550 = vadd.f32 0.0, %v549
      %v551 = vpop.f32.mrb[0].mxu0
      %552 = vmatprep.mubr.bf16.mxu0 0
      %553 = vmatmul.mubr.bf16.gmra.mrb[0].mxu0 %v461
      %v554 = vpop.f32.mrb[0].mxu0
      %v555 = vadd.f32 0.0, %v554
      %v556 = vpop.f32.mrb[0].mxu0
      %v557 = vpop.f32.mrb[0].mxu0
      %v558 = vadd.f32 0.0, %v557
      %v559 = vpop.f32.mrb[0].mxu0
      %560 = vmatprep.mubr.bf16.mxu0 0
      %561 = vmatmul.mubr.bf16.gmra.mrb[0].mxu0 %v464
      %v562 = vpop.f32.mrb[0].mxu0
      %v563 = vadd.f32 0.0, %v562
      %v564 = vpop.f32.mrb[0].mxu0
      %v565 = vpop.f32.mrb[0].mxu0
      %v566 = vadd.f32 0.0, %v565
      %v567 = vpop.f32.mrb[0].mxu0
      %568 = vmatprep.mubr.bf16.mxu0 0
      %569 = vmatmul.mubr.bf16.gmra.mrb[0].mxu0 %v467
      %v570 = vpop.f32.mrb[0].mxu0
      %v571 = vadd.f32 0.0, %v570
      %v572 = vpop.f32.mrb[0].mxu0
      %v573 = vpop.f32.mrb[0].mxu0
      %v574 = vadd.f32 0.0, %v573
      %v575 = vpop.f32.mrb[0].mxu0
      %576 = vmatprep.mubr.bf16.mxu0 0
      %577 = vmatmul.mubr.bf16.gmra.mrb[0].mxu0 %v470
      %v578 = vpop.f32.mrb[0].mxu0
      %v579 = vadd.f32 0.0, %v578
      %v580 = vpop.f32.mrb[0].mxu0
      %v581 = vpop.f32.mrb[0].mxu0
      %v582 = vadd.f32 0.0, %v581
      %v583 = vpop.f32.mrb[0].mxu0
      %584 = vmatprep.mubr.bf16.mxu0 0
      %585 = vmatmul.mubr.bf16.gmra.mrb[0].mxu0 %v473
      %v586 = vpop.f32.mrb[0].mxu0
      %v587 = vadd.f32 0.0, %v586
      %v588 = vpop.f32.mrb[0].mxu0
      %v589 = vpop.f32.mrb[0].mxu0
      %v590 = vadd.f32 0.0, %v589
      %v591 = vpop.f32.mrb[0].mxu0
      %592 = vmatprep.mubr.bf16.mxu0 0
      %593 = vmatmul.mubr.bf16.gmra.mrb[0].mxu0 %v476
      %v594 = vpop.f32.mrb[0].mxu0
      %v595 = vadd.f32 0.0, %v594
      %v596 = vpop.f32.mrb[0].mxu0
      %v597 = vpop.f32.mrb[0].mxu0
      %v598 = vadd.f32 0.0, %v597
      %v599 = vpop.f32.mrb[0].mxu0
      %600 = vmatprep.mubr.bf16.mxu0 0
      %601 = vmatmul.mubr.bf16.gmra.mrb[0].mxu0 %v479
      %v602 = vpop.f32.mrb[0].mxu0
      %v603 = vadd.f32 0.0, %v602
      %v604 = vpop.f32.mrb[0].mxu0
      %v605 = vpop.f32.mrb[0].mxu0
      %v606 = vadd.f32 0.0, %v605
      %v607 = vpop.f32.mrb[0].mxu0
      %608 = vmatprep.mubr.bf16.mxu0 0
      %609 = vmatmul.mubr.bf16.gmra.mrb[0].mxu0 %v482
      %v610 = vpop.f32.mrb[0].mxu0
      %v611 = vadd.f32 0.0, %v610
      %v612 = vpop.f32.mrb[0].mxu0
      %v613 = vpop.f32.mrb[0].mxu0
      %v614 = vadd.f32 0.0, %v613
      %v615 = vpop.f32.mrb[0].mxu0
      %616 = vmatprep.mubr.bf16.mxu0 0
      %617 = vmatmul.mubr.bf16.gmra.mrb[0].mxu0 %v485
      %v618 = vpop.f32.mrb[0].mxu0
      %v619 = vadd.f32 0.0, %v618
      %v620 = vpop.f32.mrb[0].mxu0
      %v621 = vpop.f32.mrb[0].mxu0
      %v622 = vadd.f32 0.0, %v621
      %v623 = vpop.f32.mrb[0].mxu0
      %624 = vmatprep.mubr.bf16.mxu0 0
      %625 = vmatmul.mubr.bf16.gmra.mrb[0].mxu0 %v488
      %v626 = vpop.f32.mrb[0].mxu0
      %v627 = vadd.f32 0.0, %v626
      %v628 = vpop.f32.mrb[0].mxu0
      %v629 = vpop.f32.mrb[0].mxu0
      %v630 = vadd.f32 0.0, %v629
      %v631 = vpop.f32.mrb[0].mxu0
      %632 = vmatprep.mubr.bf16.mxu0 0
      %633 = vmatmul.mubr.bf16.gmra.mrb[0].mxu0 %v491
      %v634 = vpop.f32.mrb[0].mxu0
      %v635 = vadd.f32 0.0, %v634
      %v636 = vpop.f32.mrb[0].mxu0
      %v637 = vpop.f32.mrb[0].mxu0
      %v638 = vadd.f32 0.0, %v637
      %v639 = vpop.f32.mrb[0].mxu0
      %640 = vmatprep.mubr.bf16.mxu0 0
      %641 = vmatmul.mubr.bf16.gmra.mrb[0].mxu0 %v494
      %v642 = vpop.f32.mrb[0].mxu0
      %v643 = vadd.f32 0.0, %v642
      %v644 = vpop.f32.mrb[0].mxu0
      %v645 = vpop.f32.mrb[0].mxu0
      %v646 = vadd.f32 0.0, %v645
      %v647 = vpop.f32.mrb[0].mxu0
      %648 = vmatprep.mubr.bf16.mxu0 0
      %649 = vmatmul.mubr.bf16.gmra.mrb[0].mxu0 %v497
      %v650 = vpop.f32.mrb[0].mxu0
      %v651 = vadd.f32 0.0, %v650
      %v652 = vpop.f32.mrb[0].mxu0
      %v653 = vpop.f32.mrb[0].mxu0
      %v654 = vadd.f32 0.0, %v653
      %v655 = vpop.f32.mrb[0].mxu0
      %656 = vmatprep.mubr.bf16.mxu0 0
      %657 = vmatmul.mubr.bf16.gmra.mrb[0].mxu0 %v500
      %v658 = vpop.f32.mrb[0].mxu0
      %v659 = vadd.f32 0.0, %v658
      %v660 = vpop.f32.mrb[0].mxu0
      %v661 = vpop.f32.mrb[0].mxu0
      %v662 = vadd.f32 0.0, %v661
      %v663 = vpop.f32.mrb[0].mxu0
      %664 = vmatprep.mubr.bf16.mxu0 0
      %665 = vmatmul.mubr.bf16.gmra.mrb[0].mxu0 %v503
      %v666 = vpop.f32.mrb[0].mxu0
      %v667 = vadd.f32 0.0, %v666
      %v668 = vpop.f32.mrb[0].mxu0
      %v669 = vpop.f32.mrb[0].mxu0
      %v670 = vadd.f32 0.0, %v669
      %v671 = vpop.f32.mrb[0].mxu0
      %672 = vmatprep.mubr.bf16.mxu0 0
      %673 = vmatmul.mubr.bf16.gmra.mrb[0].mxu0 %v506
      %v674 = vpop.f32.mrb[0].mxu0
      %v675 = vadd.f32 0.0, %v674
      %v676 = vpop.f32.mrb[0].mxu0
      %v677 = vpop.f32.mrb[0].mxu0
      %v678 = vadd.f32 0.0, %v677
      %v679 = vpop.f32.mrb[0].mxu0
      %680 = vdwg.mxu0
      %v683 = vunpack.c.l.b16 %v217
      %v684 = vunpack.c.l.b16 %v218
      %v685 = vpack.c.b16 %v684, %v683
      %v686 = vsel %vm456, %v292, 0
      %v688 = vsel %vm456, %v293, 0
      %v690 = vsel %vm456, %v294, 0
      %v692 = vsel %vm456, %v295, 0
      %v694 = vsel %vm456, %v296, 0
      %v696 = vsel %vm456, %v297, 0
      %v698 = vsel %vm456, %v298, 0
      %v700 = vsel %vm456, %v299, 0
      %v702 = vsel %vm456, %v300, 0
      %v704 = vsel %vm456, %v301, 0
      %v706 = vsel %vm456, %v302, 0
      %v708 = vsel %vm456, %v303, 0
      %v710 = vsel %vm456, %v304, 0
      %v712 = vsel %vm456, %v305, 0
      %v714 = vsel %vm456, %v306, 0
      %v716 = vsel %vm456, %v307, 0
      %v718 = vsel %vm456, %v308, 0
      %v721 = vsel %vm508, %v685, 0
      %723 = vmatprep.subr.bf16.mxu0 0
      %724 = vmatpush1.bf16.msra.mxu0 %v721
      %725 = vmatprep.subr.bf16.mxu0 0
      %726 = vmatpush1.bf16.msra.mxu0 0
      %727 = vmatprep.subr.bf16.mxu0 0
      %728 = vmatpush1.bf16.msra.mxu0 0
      %729 = vmatprep.subr.bf16.mxu0 0
      %730 = vmatpush1.bf16.msra.mxu0 0
      %731 = vmatprep.subr.bf16.mxu0 0
      %732 = vmatpush1.bf16.msra.mxu0 0
      %733 = vmatprep.subr.bf16.mxu0 0
      %734 = vmatpush1.bf16.msra.mxu0 0
      %735 = vmatprep.subr.bf16.mxu0 0
      %736 = vmatpush1.bf16.msra.mxu0 0
      %737 = vmatprep.subr.bf16.mxu0 0
      %738 = vmatpush1.bf16.msra.mxu0 0
      %739 = vmatprep.subr.bf16.mxu0 0
      %740 = vmatpush1.bf16.msra.mxu0 0
      %741 = vmatprep.subr.bf16.mxu0 0
      %742 = vmatpush1.bf16.msra.mxu0 0
      %743 = vmatprep.subr.bf16.mxu0 0
      %744 = vmatpush1.bf16.msra.mxu0 0
      %745 = vmatprep.subr.bf16.mxu0 0
      %746 = vmatpush1.bf16.msra.mxu0 0
      %747 = vmatprep.subr.bf16.mxu0 0
      %748 = vmatpush1.bf16.msra.mxu0 0
      %749 = vmatprep.subr.bf16.mxu0 0
      %750 = vmatpush1.bf16.msra.mxu0 0
      %751 = vmatprep.subr.bf16.mxu0 0
      %752 = vmatpush1.bf16.msra.mxu0 0
      %753 = vmatprep.subr.bf16.mxu0 0
      %754 = vmatpush1.bf16.msra.mxu0 0
      %755 = vmatprep.mubr.bf16.mxu0 0
      %756 = vmatmul.mubr.bf16.gmra.mrb[0].mxu0 %v686
      %v757 = vpop.f32.mrb[0].mxu0
      %v758 = vadd.f32 %v547, %v757
      %v759 = vpop.f32.mrb[0].mxu0
      %v760 = vpop.f32.mrb[0].mxu0
      %v761 = vadd.f32 %v550, %v760
      %v762 = vpop.f32.mrb[0].mxu0
      %763 = vmatprep.mubr.bf16.mxu0 0
      %764 = vmatmul.mubr.bf16.gmra.mrb[0].mxu0 %v688
      %v765 = vpop.f32.mrb[0].mxu0
      %v766 = vadd.f32 %v555, %v765
      %v767 = vpop.f32.mrb[0].mxu0
      %v768 = vpop.f32.mrb[0].mxu0
      %v769 = vadd.f32 %v558, %v768
      %v770 = vpop.f32.mrb[0].mxu0
      %771 = vmatprep.mubr.bf16.mxu0 0
      %772 = vmatmul.mubr.bf16.gmra.mrb[0].mxu0 %v690
      %v773 = vpop.f32.mrb[0].mxu0
      %v774 = vadd.f32 %v563, %v773
      %v775 = vpop.f32.mrb[0].mxu0
      %v776 = vpop.f32.mrb[0].mxu0
      %v777 = vadd.f32 %v566, %v776
      %v778 = vpop.f32.mrb[0].mxu0
      %779 = vmatprep.mubr.bf16.mxu0 0
      %780 = vmatmul.mubr.bf16.gmra.mrb[0].mxu0 %v692
      %v781 = vpop.f32.mrb[0].mxu0
      %v782 = vadd.f32 %v571, %v781
      %v783 = vpop.f32.mrb[0].mxu0
      %v784 = vpop.f32.mrb[0].mxu0
      %v785 = vadd.f32 %v574, %v784
      %v786 = vpop.f32.mrb[0].mxu0
      %787 = vmatprep.mubr.bf16.mxu0 0
      %788 = vmatmul.mubr.bf16.gmra.mrb[0].mxu0 %v694
      %v789 = vpop.f32.mrb[0].mxu0
      %v790 = vadd.f32 %v579, %v789
      %v791 = vpop.f32.mrb[0].mxu0
      %v792 = vpop.f32.mrb[0].mxu0
      %v793 = vadd.f32 %v582, %v792
      %v794 = vpop.f32.mrb[0].mxu0
      %795 = vmatprep.mubr.bf16.mxu0 0
      %796 = vmatmul.mubr.bf16.gmra.mrb[0].mxu0 %v696
      %v797 = vpop.f32.mrb[0].mxu0
      %v798 = vadd.f32 %v587, %v797
      %v799 = vpop.f32.mrb[0].mxu0
      %v800 = vpop.f32.mrb[0].mxu0
      %v801 = vadd.f32 %v590, %v800
      %v802 = vpop.f32.mrb[0].mxu0
      %803 = vmatprep.mubr.bf16.mxu0 0
      %804 = vmatmul.mubr.bf16.gmra.mrb[0].mxu0 %v698
      %v805 = vpop.f32.mrb[0].mxu0
      %v806 = vadd.f32 %v595, %v805
      %v807 = vpop.f32.mrb[0].mxu0
      %v808 = vpop.f32.mrb[0].mxu0
      %v809 = vadd.f32 %v598, %v808
      %v810 = vpop.f32.mrb[0].mxu0
      %811 = vmatprep.mubr.bf16.mxu0 0
      %812 = vmatmul.mubr.bf16.gmra.mrb[0].mxu0 %v700
      %v813 = vpop.f32.mrb[0].mxu0
      %v814 = vadd.f32 %v603, %v813
      %v815 = vpop.f32.mrb[0].mxu0
      %v816 = vpop.f32.mrb[0].mxu0
      %v817 = vadd.f32 %v606, %v816
      %v818 = vpop.f32.mrb[0].mxu0
      %819 = vmatprep.mubr.bf16.mxu0 0
      %820 = vmatmul.mubr.bf16.gmra.mrb[0].mxu0 %v702
      %v821 = vpop.f32.mrb[0].mxu0
      %v822 = vadd.f32 %v611, %v821
      %v823 = vpop.f32.mrb[0].mxu0
      %v824 = vpop.f32.mrb[0].mxu0
      %v825 = vadd.f32 %v614, %v824
      %v826 = vpop.f32.mrb[0].mxu0
      %827 = vmatprep.mubr.bf16.mxu0 0
      %828 = vmatmul.mubr.bf16.gmra.mrb[0].mxu0 %v704
      %v829 = vpop.f32.mrb[0].mxu0
      %v830 = vadd.f32 %v619, %v829
      %v831 = vpop.f32.mrb[0].mxu0
      %v832 = vpop.f32.mrb[0].mxu0
      %v833 = vadd.f32 %v622, %v832
      %v834 = vpop.f32.mrb[0].mxu0
      %835 = vmatprep.mubr.bf16.mxu0 0
      %836 = vmatmul.mubr.bf16.gmra.mrb[0].mxu0 %v706
      %v837 = vpop.f32.mrb[0].mxu0
      %v838 = vadd.f32 %v627, %v837
      %v839 = vpop.f32.mrb[0].mxu0
      %v840 = vpop.f32.mrb[0].mxu0
      %v841 = vadd.f32 %v630, %v840
      %v842 = vpop.f32.mrb[0].mxu0
      %843 = vmatprep.mubr.bf16.mxu0 0
      %844 = vmatmul.mubr.bf16.gmra.mrb[0].mxu0 %v708
      %v845 = vpop.f32.mrb[0].mxu0
      %v846 = vadd.f32 %v635, %v845
      %v847 = vpop.f32.mrb[0].mxu0
      %v848 = vpop.f32.mrb[0].mxu0
      %v849 = vadd.f32 %v638, %v848
      %v850 = vpop.f32.mrb[0].mxu0
      %851 = vmatprep.mubr.bf16.mxu0 0
      %852 = vmatmul.mubr.bf16.gmra.mrb[0].mxu0 %v710
      %v853 = vpop.f32.mrb[0].mxu0
      %v854 = vadd.f32 %v643, %v853
      %v855 = vpop.f32.mrb[0].mxu0
      %v856 = vpop.f32.mrb[0].mxu0
      %v857 = vadd.f32 %v646, %v856
      %v858 = vpop.f32.mrb[0].mxu0
      %859 = vmatprep.mubr.bf16.mxu0 0
      %860 = vmatmul.mubr.bf16.gmra.mrb[0].mxu0 %v712
      %v861 = vpop.f32.mrb[0].mxu0
      %v862 = vadd.f32 %v651, %v861
      %v863 = vpop.f32.mrb[0].mxu0
      %v864 = vpop.f32.mrb[0].mxu0
      %v865 = vadd.f32 %v654, %v864
      %v866 = vpop.f32.mrb[0].mxu0
      %867 = vmatprep.mubr.bf16.mxu0 0
      %868 = vmatmul.mubr.bf16.gmra.mrb[0].mxu0 %v714
      %v869 = vpop.f32.mrb[0].mxu0
      %v870 = vadd.f32 %v659, %v869
      %v871 = vpop.f32.mrb[0].mxu0
      %v872 = vpop.f32.mrb[0].mxu0
      %v873 = vadd.f32 %v662, %v872
      %v874 = vpop.f32.mrb[0].mxu0
      %875 = vmatprep.mubr.bf16.mxu0 0
      %876 = vmatmul.mubr.bf16.gmra.mrb[0].mxu0 %v716
      %v877 = vpop.f32.mrb[0].mxu0
      %v878 = vadd.f32 %v667, %v877
      %v879 = vpop.f32.mrb[0].mxu0
      %v880 = vpop.f32.mrb[0].mxu0
      %v881 = vadd.f32 %v670, %v880
      %v882 = vpop.f32.mrb[0].mxu0
      %883 = vmatprep.mubr.bf16.mxu0 0
      %884 = vmatmul.mubr.bf16.gmra.mrb[0].mxu0 %v718
      %v885 = vpop.f32.mrb[0].mxu0
      %v886 = vadd.f32 %v675, %v885
      %v887 = vpop.f32.mrb[0].mxu0
      %v888 = vpop.f32.mrb[0].mxu0
      %v889 = vadd.f32 %v678, %v888
      %v890 = vpop.f32.mrb[0].mxu0
      %891 = vdwg.mxu0
      %s892 = scalar_lea.vmem %s1, 16
      %v893 = vld [vmem:[%s892] sm:$0xf]
      %v894 = vld [vmem:[%s892 + $0x4] sm:$0x3]
      %v897 = vunpack.c.l.b16 %v215
      %v898 = vunpack.c.l.b16 %v216
      %v899 = vpack.c.b16 %v897, %v291
      %v900 = vpack.c.b16 %v898, %v898
      %v902 = vshll.u32 %v899, 16
      %v904 = vrot.slane %v902, 1
      %v905 = vsel %vm310, %v445, %v904
      %v906 = vshrl.u32 %v899, 16
      %v908 = vor.u32 %v906, %v904
      %v910 = vshll.u32 %v900, 16
      %v912 = vrot.slane %v910, 1
      %v913 = vsel %vm310, %v908, %v912
      %v916 = vunpack.c.l.b16 %v893
      %v917 = vunpack.c.l.b16 %v894
      %v918 = vpack.c.b16 %v917, %v916
      %v920 = vsel %vm456, %v905, 0
      %v923 = vsel %vm456, %v913, 0
      %v926 = vsel %vm508, %v918, 0
      %928 = vmatprep.subr.bf16.mxu0 0
      %929 = vmatpush1.bf16.msra.mxu0 %v926
      %930 = vmatprep.subr.bf16.mxu0 0
      %931 = vmatpush1.bf16.msra.mxu0 0
      %932 = vmatprep.subr.bf16.mxu0 0
      %933 = vmatpush1.bf16.msra.mxu0 0
      %934 = vmatprep.subr.bf16.mxu0 0
      %935 = vmatpush1.bf16.msra.mxu0 0
      %936 = vmatprep.subr.bf16.mxu0 0
      %937 = vmatpush1.bf16.msra.mxu0 0
      %938 = vmatprep.subr.bf16.mxu0 0
      %939 = vmatpush1.bf16.msra.mxu0 0
      %940 = vmatprep.subr.bf16.mxu0 0
      %941 = vmatpush1.bf16.msra.mxu0 0
      %942 = vmatprep.subr.bf16.mxu0 0
      %943 = vmatpush1.bf16.msra.mxu0 0
      %944 = vmatprep.subr.bf16.mxu0 0
      %945 = vmatpush1.bf16.msra.mxu0 0
      %946 = vmatprep.subr.bf16.mxu0 0
      %947 = vmatpush1.bf16.msra.mxu0 0
      %948 = vmatprep.subr.bf16.mxu0 0
      %949 = vmatpush1.bf16.msra.mxu0 0
      %950 = vmatprep.subr.bf16.mxu0 0
      %951 = vmatpush1.bf16.msra.mxu0 0
      %952 = vmatprep.subr.bf16.mxu0 0
      %953 = vmatpush1.bf16.msra.mxu0 0
      %954 = vmatprep.subr.bf16.mxu0 0
      %955 = vmatpush1.bf16.msra.mxu0 0
      %956 = vmatprep.subr.bf16.mxu0 0
      %957 = vmatpush1.bf16.msra.mxu0 0
      %958 = vmatprep.subr.bf16.mxu0 0
      %959 = vmatpush1.bf16.msra.mxu0 0
      %960 = vmatprep.mubr.bf16.mxu0 0
      %961 = vmatmul.mubr.bf16.gmra.mrb[0].mxu0 %v461
      %v962 = vpop.f32.mrb[0].mxu0
      %v963 = vadd.f32 0.0, %v962
      %v964 = vpop.f32.mrb[0].mxu0
      %v965 = vpop.f32.mrb[0].mxu0
      %v966 = vadd.f32 0.0, %v965
      %v967 = vpop.f32.mrb[0].mxu0
      %968 = vmatprep.mubr.bf16.mxu0 0
      %969 = vmatmul.mubr.bf16.gmra.mrb[0].mxu0 %v464
      %v970 = vpop.f32.mrb[0].mxu0
      %v971 = vadd.f32 0.0, %v970
      %v972 = vpop.f32.mrb[0].mxu0
      %v973 = vpop.f32.mrb[0].mxu0
      %v974 = vadd.f32 0.0, %v973
      %v975 = vpop.f32.mrb[0].mxu0
      %976 = vmatprep.mubr.bf16.mxu0 0
      %977 = vmatmul.mubr.bf16.gmra.mrb[0].mxu0 %v467
      %v978 = vpop.f32.mrb[0].mxu0
      %v979 = vadd.f32 0.0, %v978
      %v980 = vpop.f32.mrb[0].mxu0
      %v981 = vpop.f32.mrb[0].mxu0
      %v982 = vadd.f32 0.0, %v981
      %v983 = vpop.f32.mrb[0].mxu0
      %984 = vmatprep.mubr.bf16.mxu0 0
      %985 = vmatmul.mubr.bf16.gmra.mrb[0].mxu0 %v470
      %v986 = vpop.f32.mrb[0].mxu0
      %v987 = vadd.f32 0.0, %v986
      %v988 = vpop.f32.mrb[0].mxu0
      %v989 = vpop.f32.mrb[0].mxu0
      %v990 = vadd.f32 0.0, %v989
      %v991 = vpop.f32.mrb[0].mxu0
      %992 = vmatprep.mubr.bf16.mxu0 0
      %993 = vmatmul.mubr.bf16.gmra.mrb[0].mxu0 %v473
      %v994 = vpop.f32.mrb[0].mxu0
      %v995 = vadd.f32 0.0, %v994
      %v996 = vpop.f32.mrb[0].mxu0
      %v997 = vpop.f32.mrb[0].mxu0
      %v998 = vadd.f32 0.0, %v997
      %v999 = vpop.f32.mrb[0].mxu0
      %1000 = vmatprep.mubr.bf16.mxu0 0
      %1001 = vmatmul.mubr.bf16.gmra.mrb[0].mxu0 %v476
      %v1002 = vpop.f32.mrb[0].mxu0
      %v1003 = vadd.f32 0.0, %v1002
      %v1004 = vpop.f32.mrb[0].mxu0
      %v1005 = vpop.f32.mrb[0].mxu0
      %v1006 = vadd.f32 0.0, %v1005
      %v1007 = vpop.f32.mrb[0].mxu0
      %1008 = vmatprep.mubr.bf16.mxu0 0
      %1009 = vmatmul.mubr.bf16.gmra.mrb[0].mxu0 %v479
      %v1010 = vpop.f32.mrb[0].mxu0
      %v1011 = vadd.f32 0.0, %v1010
      %v1012 = vpop.f32.mrb[0].mxu0
      %v1013 = vpop.f32.mrb[0].mxu0
      %v1014 = vadd.f32 0.0, %v1013
      %v1015 = vpop.f32.mrb[0].mxu0
      %1016 = vmatprep.mubr.bf16.mxu0 0
      %1017 = vmatmul.mubr.bf16.gmra.mrb[0].mxu0 %v482
      %v1018 = vpop.f32.mrb[0].mxu0
      %v1019 = vadd.f32 0.0, %v1018
      %v1020 = vpop.f32.mrb[0].mxu0
      %v1021 = vpop.f32.mrb[0].mxu0
      %v1022 = vadd.f32 0.0, %v1021
      %v1023 = vpop.f32.mrb[0].mxu0
      %1024 = vmatprep.mubr.bf16.mxu0 0
      %1025 = vmatmul.mubr.bf16.gmra.mrb[0].mxu0 %v485
      %v1026 = vpop.f32.mrb[0].mxu0
      %v1027 = vadd.f32 0.0, %v1026
      %v1028 = vpop.f32.mrb[0].mxu0
      %v1029 = vpop.f32.mrb[0].mxu0
      %v1030 = vadd.f32 0.0, %v1029
      %v1031 = vpop.f32.mrb[0].mxu0
      %1032 = vmatprep.mubr.bf16.mxu0 0
      %1033 = vmatmul.mubr.bf16.gmra.mrb[0].mxu0 %v488
      %v1034 = vpop.f32.mrb[0].mxu0
      %v1035 = vadd.f32 0.0, %v1034
      %v1036 = vpop.f32.mrb[0].mxu0
      %v1037 = vpop.f32.mrb[0].mxu0
      %v1038 = vadd.f32 0.0, %v1037
      %v1039 = vpop.f32.mrb[0].mxu0
      %1040 = vmatprep.mubr.bf16.mxu0 0
      %1041 = vmatmul.mubr.bf16.gmra.mrb[0].mxu0 %v491
      %v1042 = vpop.f32.mrb[0].mxu0
      %v1043 = vadd.f32 0.0, %v1042
      %v1044 = vpop.f32.mrb[0].mxu0
      %v1045 = vpop.f32.mrb[0].mxu0
      %v1046 = vadd.f32 0.0, %v1045
      %v1047 = vpop.f32.mrb[0].mxu0
      %1048 = vmatprep.mubr.bf16.mxu0 0
      %1049 = vmatmul.mubr.bf16.gmra.mrb[0].mxu0 %v494
      %v1050 = vpop.f32.mrb[0].mxu0
      %v1051 = vadd.f32 0.0, %v1050
      %v1052 = vpop.f32.mrb[0].mxu0
      %v1053 = vpop.f32.mrb[0].mxu0
      %v1054 = vadd.f32 0.0, %v1053
      %v1055 = vpop.f32.mrb[0].mxu0
      %1056 = vmatprep.mubr.bf16.mxu0 0
      %1057 = vmatmul.mubr.bf16.gmra.mrb[0].mxu0 %v497
      %v1058 = vpop.f32.mrb[0].mxu0
      %v1059 = vadd.f32 0.0, %v1058
      %v1060 = vpop.f32.mrb[0].mxu0
      %v1061 = vpop.f32.mrb[0].mxu0
      %v1062 = vadd.f32 0.0, %v1061
      %v1063 = vpop.f32.mrb[0].mxu0
      %1064 = vmatprep.mubr.bf16.mxu0 0
      %1065 = vmatmul.mubr.bf16.gmra.mrb[0].mxu0 %v500
      %v1066 = vpop.f32.mrb[0].mxu0
      %v1067 = vadd.f32 0.0, %v1066
      %v1068 = vpop.f32.mrb[0].mxu0
      %v1069 = vpop.f32.mrb[0].mxu0
      %v1070 = vadd.f32 0.0, %v1069
      %v1071 = vpop.f32.mrb[0].mxu0
      %1072 = vmatprep.mubr.bf16.mxu0 0
      %1073 = vmatmul.mubr.bf16.gmra.mrb[0].mxu0 %v503
      %v1074 = vpop.f32.mrb[0].mxu0
      %v1075 = vadd.f32 0.0, %v1074
      %v1076 = vpop.f32.mrb[0].mxu0
      %v1077 = vpop.f32.mrb[0].mxu0
      %v1078 = vadd.f32 0.0, %v1077
      %v1079 = vpop.f32.mrb[0].mxu0
      %1080 = vmatprep.mubr.bf16.mxu0 0
      %1081 = vmatmul.mubr.bf16.gmra.mrb[0].mxu0 %v920
      %v1082 = vpop.f32.mrb[0].mxu0
      %v1083 = vadd.f32 0.0, %v1082
      %v1084 = vpop.f32.mrb[0].mxu0
      %v1085 = vpop.f32.mrb[0].mxu0
      %v1086 = vadd.f32 0.0, %v1085
      %v1087 = vpop.f32.mrb[0].mxu0
      %1088 = vmatprep.mubr.bf16.mxu0 0
      %1089 = vmatmul.mubr.bf16.gmra.mrb[0].mxu0 %v923
      %v1090 = vpop.f32.mrb[0].mxu0
      %v1091 = vadd.f32 0.0, %v1090
      %v1092 = vpop.f32.mrb[0].mxu0
      %v1093 = vpop.f32.mrb[0].mxu0
      %v1094 = vadd.f32 0.0, %v1093
      %v1095 = vpop.f32.mrb[0].mxu0
      %1096 = vdwg.mxu0
      %v1097 = vadd.f32 %v758, %v963
      %v1098 = vadd.f32 %v761, %v966
      %v1099 = vadd.f32 %v766, %v971
      %v1100 = vadd.f32 %v769, %v974
      %v1101 = vadd.f32 %v774, %v979
      %v1102 = vadd.f32 %v777, %v982
      %v1103 = vadd.f32 %v782, %v987
      %v1104 = vadd.f32 %v785, %v990
      %v1105 = vadd.f32 %v790, %v995
      %v1106 = vadd.f32 %v793, %v998
      %v1107 = vadd.f32 %v798, %v1003
      %v1108 = vadd.f32 %v801, %v1006
      %v1109 = vadd.f32 %v806, %v1011
      %v1110 = vadd.f32 %v809, %v1014
      %v1111 = vadd.f32 %v814, %v1019
      %v1112 = vadd.f32 %v817, %v1022
      %v1113 = vadd.f32 %v822, %v1027
      %v1114 = vadd.f32 %v825, %v1030
      %v1115 = vadd.f32 %v830, %v1035
      %v1116 = vadd.f32 %v833, %v1038
      %v1117 = vadd.f32 %v838, %v1043
      %v1118 = vadd.f32 %v841, %v1046
      %v1119 = vadd.f32 %v846, %v1051
      %v1120 = vadd.f32 %v849, %v1054
      %v1121 = vadd.f32 %v854, %v1059
      %v1122 = vadd.f32 %v857, %v1062
      %v1123 = vadd.f32 %v862, %v1067
      %v1124 = vadd.f32 %v865, %v1070
      %v1125 = vadd.f32 %v870, %v1075
      %v1126 = vadd.f32 %v873, %v1078
      %v1127 = vadd.f32 %v878, %v1083
      %v1128 = vadd.f32 %v881, %v1086
      %v1129 = vadd.f32 %v886, %v1091
      %v1130 = vadd.f32 %v889, %v1094
      %s1131 = scalar_lea.vmem %s1, 24
      %v1132 = vld [vmem:[%s1131] sm:$0xf]
      %v1133 = vld [vmem:[%s1131 + $0x4] sm:$0x3]
      %vm1134 = vcmask 1046528
      %v1135 = vrot.slane %v293, 1
      %v1136 = vrot.slane %v294, 1
      %v1137 = vsel %vm1134, %v1135, %v1136
      %v1138 = vrot.slane %v295, 1
      %v1139 = vsel %vm1134, %v1136, %v1138
      %v1140 = vrot.slane %v296, 1
      %v1141 = vsel %vm1134, %v1138, %v1140
      %v1142 = vrot.slane %v297, 1
      %v1143 = vsel %vm1134, %v1140, %v1142
      %v1144 = vrot.slane %v298, 1
      %v1145 = vsel %vm1134, %v1142, %v1144
      %v1146 = vrot.slane %v299, 1
      %v1147 = vsel %vm1134, %v1144, %v1146
      %v1148 = vrot.slane %v300, 1
      %v1149 = vsel %vm1134, %v1146, %v1148
      %v1150 = vrot.slane %v301, 1
      %v1151 = vsel %vm1134, %v1148, %v1150
      %v1152 = vrot.slane %v302, 1
      %v1153 = vsel %vm1134, %v1150, %v1152
      %v1154 = vrot.slane %v303, 1
      %v1155 = vsel %vm1134, %v1152, %v1154
      %v1156 = vrot.slane %v304, 1
      %v1157 = vsel %vm1134, %v1154, %v1156
      %v1158 = vrot.slane %v305, 1
      %v1159 = vsel %vm1134, %v1156, %v1158
      %v1160 = vrot.slane %v306, 1
      %v1161 = vsel %vm1134, %v1158, %v1160
      %v1162 = vrot.slane %v307, 1
      %v1163 = vsel %vm1134, %v1160, %v1162
      %v1164 = vrot.slane %v308, 1
      %v1165 = vsel %vm1134, %v1162, %v1164
      %v1166 = vrot.slane %v899, 1
      %v1167 = vsel %vm1134, %v1164, %v1166
      %v1168 = vrot.slane %v900, 1
      %v1169 = vsel %vm1134, %v1166, %v1168
      %v1172 = vunpack.c.l.b16 %v1132
      %v1173 = vunpack.c.l.b16 %v1133
      %v1174 = vpack.c.b16 %v1173, %v1172
      %v1176 = vsel %vm456, %v1137, 0
      %v1179 = vsel %vm456, %v1139, 0
      %v1182 = vsel %vm456, %v1141, 0
      %v1185 = vsel %vm456, %v1143, 0
      %v1188 = vsel %vm456, %v1145, 0
      %v1191 = vsel %vm456, %v1147, 0
      %v1194 = vsel %vm456, %v1149, 0
      %v1197 = vsel %vm456, %v1151, 0
      %v1200 = vsel %vm456, %v1153, 0
      %v1203 = vsel %vm456, %v1155, 0
      %v1206 = vsel %vm456, %v1157, 0
      %v1209 = vsel %vm456, %v1159, 0
      %v1212 = vsel %vm456, %v1161, 0
      %v1215 = vsel %vm456, %v1163, 0
      %v1218 = vsel %vm456, %v1165, 0
      %v1221 = vsel %vm456, %v1167, 0
      %v1224 = vsel %vm456, %v1169, 0
      %v1227 = vsel %vm508, %v1174, 0
      %1229 = vmatprep.subr.bf16.mxu0 0
      %1230 = vmatpush1.bf16.msra.mxu0 %v1227
      %1231 = vmatprep.subr.bf16.mxu0 0
      %1232 = vmatpush1.bf16.msra.mxu0 0
      %1233 = vmatprep.subr.bf16.mxu0 0
      %1234 = vmatpush1.bf16.msra.mxu0 0
      %1235 = vmatprep.subr.bf16.mxu0 0
      %1236 = vmatpush1.bf16.msra.mxu0 0
      %1237 = vmatprep.subr.bf16.mxu0 0
      %1238 = vmatpush1.bf16.msra.mxu0 0
      %1239 = vmatprep.subr.bf16.mxu0 0
      %1240 = vmatpush1.bf16.msra.mxu0 0
      %1241 = vmatprep.subr.bf16.mxu0 0
      %1242 = vmatpush1.bf16.msra.mxu0 0
      %1243 = vmatprep.subr.bf16.mxu0 0
      %1244 = vmatpush1.bf16.msra.mxu0 0
      %1245 = vmatprep.subr.bf16.mxu0 0
      %1246 = vmatpush1.bf16.msra.mxu0 0
      %1247 = vmatprep.subr.bf16.mxu0 0
      %1248 = vmatpush1.bf16.msra.mxu0 0
      %1249 = vmatprep.subr.bf16.mxu0 0
      %1250 = vmatpush1.bf16.msra.mxu0 0
      %1251 = vmatprep.subr.bf16.mxu0 0
      %1252 = vmatpush1.bf16.msra.mxu0 0
      %1253 = vmatprep.subr.bf16.mxu0 0
      %1254 = vmatpush1.bf16.msra.mxu0 0
      %1255 = vmatprep.subr.bf16.mxu0 0
      %1256 = vmatpush1.bf16.msra.mxu0 0
      %1257 = vmatprep.subr.bf16.mxu0 0
      %1258 = vmatpush1.bf16.msra.mxu0 0
      %1259 = vmatprep.subr.bf16.mxu0 0
      %1260 = vmatpush1.bf16.msra.mxu0 0
      %1261 = vmatprep.mubr.bf16.mxu0 0
      %1262 = vmatmul.mubr.bf16.gmra.mrb[0].mxu0 %v1176
      %v1263 = vpop.f32.mrb[0].mxu0
      %v1264 = vadd.f32 0.0, %v1263
      %v1265 = vpop.f32.mrb[0].mxu0
      %v1266 = vpop.f32.mrb[0].mxu0
      %v1267 = vadd.f32 0.0, %v1266
      %v1268 = vpop.f32.mrb[0].mxu0
      %1269 = vmatprep.mubr.bf16.mxu0 0
      %1270 = vmatmul.mubr.bf16.gmra.mrb[0].mxu0 %v1179
      %v1271 = vpop.f32.mrb[0].mxu0
      %v1272 = vadd.f32 0.0, %v1271
      %v1273 = vpop.f32.mrb[0].mxu0
      %v1274 = vpop.f32.mrb[0].mxu0
      %v1275 = vadd.f32 0.0, %v1274
      %v1276 = vpop.f32.mrb[0].mxu0
      %1277 = vmatprep.mubr.bf16.mxu0 0
      %1278 = vmatmul.mubr.bf16.gmra.mrb[0].mxu0 %v1182
      %v1279 = vpop.f32.mrb[0].mxu0
      %v1280 = vadd.f32 0.0, %v1279
      %v1281 = vpop.f32.mrb[0].mxu0
      %v1282 = vpop.f32.mrb[0].mxu0
      %v1283 = vadd.f32 0.0, %v1282
      %v1284 = vpop.f32.mrb[0].mxu0
      %1285 = vmatprep.mubr.bf16.mxu0 0
      %1286 = vmatmul.mubr.bf16.gmra.mrb[0].mxu0 %v1185
      %v1287 = vpop.f32.mrb[0].mxu0
      %v1288 = vadd.f32 0.0, %v1287
      %v1289 = vpop.f32.mrb[0].mxu0
      %v1290 = vpop.f32.mrb[0].mxu0
      %v1291 = vadd.f32 0.0, %v1290
      %v1292 = vpop.f32.mrb[0].mxu0
      %1293 = vmatprep.mubr.bf16.mxu0 0
      %1294 = vmatmul.mubr.bf16.gmra.mrb[0].mxu0 %v1188
      %v1295 = vpop.f32.mrb[0].mxu0
      %v1296 = vadd.f32 0.0, %v1295
      %v1297 = vpop.f32.mrb[0].mxu0
      %v1298 = vpop.f32.mrb[0].mxu0
      %v1299 = vadd.f32 0.0, %v1298
      %v1300 = vpop.f32.mrb[0].mxu0
      %1301 = vmatprep.mubr.bf16.mxu0 0
      %1302 = vmatmul.mubr.bf16.gmra.mrb[0].mxu0 %v1191
      %v1303 = vpop.f32.mrb[0].mxu0
      %v1304 = vadd.f32 0.0, %v1303
      %v1305 = vpop.f32.mrb[0].mxu0
      %v1306 = vpop.f32.mrb[0].mxu0
      %v1307 = vadd.f32 0.0, %v1306
      %v1308 = vpop.f32.mrb[0].mxu0
      %1309 = vmatprep.mubr.bf16.mxu0 0
      %1310 = vmatmul.mubr.bf16.gmra.mrb[0].mxu0 %v1194
      %v1311 = vpop.f32.mrb[0].mxu0
      %v1312 = vadd.f32 0.0, %v1311
      %v1313 = vpop.f32.mrb[0].mxu0
      %v1314 = vpop.f32.mrb[0].mxu0
      %v1315 = vadd.f32 0.0, %v1314
      %v1316 = vpop.f32.mrb[0].mxu0
      %1317 = vmatprep.mubr.bf16.mxu0 0
      %1318 = vmatmul.mubr.bf16.gmra.mrb[0].mxu0 %v1197
      %v1319 = vpop.f32.mrb[0].mxu0
      %v1320 = vadd.f32 0.0, %v1319
      %v1321 = vpop.f32.mrb[0].mxu0
      %v1322 = vpop.f32.mrb[0].mxu0
      %v1323 = vadd.f32 0.0, %v1322
      %v1324 = vpop.f32.mrb[0].mxu0
      %1325 = vmatprep.mubr.bf16.mxu0 0
      %1326 = vmatmul.mubr.bf16.gmra.mrb[0].mxu0 %v1200
      %v1327 = vpop.f32.mrb[0].mxu0
      %v1328 = vadd.f32 0.0, %v1327
      %v1329 = vpop.f32.mrb[0].mxu0
      %v1330 = vpop.f32.mrb[0].mxu0
      %v1331 = vadd.f32 0.0, %v1330
      %v1332 = vpop.f32.mrb[0].mxu0
      %1333 = vmatprep.mubr.bf16.mxu0 0
      %1334 = vmatmul.mubr.bf16.gmra.mrb[0].mxu0 %v1203
      %v1335 = vpop.f32.mrb[0].mxu0
      %v1336 = vadd.f32 0.0, %v1335
      %v1337 = vpop.f32.mrb[0].mxu0
      %v1338 = vpop.f32.mrb[0].mxu0
      %v1339 = vadd.f32 0.0, %v1338
      %v1340 = vpop.f32.mrb[0].mxu0
      %1341 = vmatprep.mubr.bf16.mxu0 0
      %1342 = vmatmul.mubr.bf16.gmra.mrb[0].mxu0 %v1206
      %v1343 = vpop.f32.mrb[0].mxu0
      %v1344 = vadd.f32 0.0, %v1343
      %v1345 = vpop.f32.mrb[0].mxu0
      %v1346 = vpop.f32.mrb[0].mxu0
      %v1347 = vadd.f32 0.0, %v1346
      %v1348 = vpop.f32.mrb[0].mxu0
      %1349 = vmatprep.mubr.bf16.mxu0 0
      %1350 = vmatmul.mubr.bf16.gmra.mrb[0].mxu0 %v1209
      %v1351 = vpop.f32.mrb[0].mxu0
      %v1352 = vadd.f32 0.0, %v1351
      %v1353 = vpop.f32.mrb[0].mxu0
      %v1354 = vpop.f32.mrb[0].mxu0
      %v1355 = vadd.f32 0.0, %v1354
      %v1356 = vpop.f32.mrb[0].mxu0
      %1357 = vmatprep.mubr.bf16.mxu0 0
      %1358 = vmatmul.mubr.bf16.gmra.mrb[0].mxu0 %v1212
      %v1359 = vpop.f32.mrb[0].mxu0
      %v1360 = vadd.f32 0.0, %v1359
      %v1361 = vpop.f32.mrb[0].mxu0
      %v1362 = vpop.f32.mrb[0].mxu0
      %v1363 = vadd.f32 0.0, %v1362
      %v1364 = vpop.f32.mrb[0].mxu0
      %1365 = vmatprep.mubr.bf16.mxu0 0
      %1366 = vmatmul.mubr.bf16.gmra.mrb[0].mxu0 %v1215
      %v1367 = vpop.f32.mrb[0].mxu0
      %v1368 = vadd.f32 0.0, %v1367
      %v1369 = vpop.f32.mrb[0].mxu0
      %v1370 = vpop.f32.mrb[0].mxu0
      %v1371 = vadd.f32 0.0, %v1370
      %v1372 = vpop.f32.mrb[0].mxu0
      %1373 = vmatprep.mubr.bf16.mxu0 0
      %1374 = vmatmul.mubr.bf16.gmra.mrb[0].mxu0 %v1218
      %v1375 = vpop.f32.mrb[0].mxu0
      %v1376 = vadd.f32 0.0, %v1375
      %v1377 = vpop.f32.mrb[0].mxu0
      %v1378 = vpop.f32.mrb[0].mxu0
      %v1379 = vadd.f32 0.0, %v1378
      %v1380 = vpop.f32.mrb[0].mxu0
      %1381 = vmatprep.mubr.bf16.mxu0 0
      %1382 = vmatmul.mubr.bf16.gmra.mrb[0].mxu0 %v1221
      %v1383 = vpop.f32.mrb[0].mxu0
      %v1384 = vadd.f32 0.0, %v1383
      %v1385 = vpop.f32.mrb[0].mxu0
      %v1386 = vpop.f32.mrb[0].mxu0
      %v1387 = vadd.f32 0.0, %v1386
      %v1388 = vpop.f32.mrb[0].mxu0
      %1389 = vmatprep.mubr.bf16.mxu0 0
      %1390 = vmatmul.mubr.bf16.gmra.mrb[0].mxu0 %v1224
      %v1391 = vpop.f32.mrb[0].mxu0
      %v1392 = vadd.f32 0.0, %v1391
      %v1393 = vpop.f32.mrb[0].mxu0
      %v1394 = vpop.f32.mrb[0].mxu0
      %v1395 = vadd.f32 0.0, %v1394
      %v1396 = vpop.f32.mrb[0].mxu0
      %1397 = vdwg.mxu0
      %v1398 = vadd.f32 %v1097, %v1264
      %v1399 = vadd.f32 %v1098, %v1267
      %v1400 = vadd.f32 %v1099, %v1272
      %v1401 = vadd.f32 %v1100, %v1275
      %v1402 = vadd.f32 %v1101, %v1280
      %v1403 = vadd.f32 %v1102, %v1283
      %v1404 = vadd.f32 %v1103, %v1288
      %v1405 = vadd.f32 %v1104, %v1291
      %v1406 = vadd.f32 %v1105, %v1296
      %v1407 = vadd.f32 %v1106, %v1299
      %v1408 = vadd.f32 %v1107, %v1304
      %v1409 = vadd.f32 %v1108, %v1307
      %v1410 = vadd.f32 %v1109, %v1312
      %v1411 = vadd.f32 %v1110, %v1315
      %v1412 = vadd.f32 %v1111, %v1320
      %v1413 = vadd.f32 %v1112, %v1323
      %v1414 = vadd.f32 %v1113, %v1328
      %v1415 = vadd.f32 %v1114, %v1331
      %v1416 = vadd.f32 %v1115, %v1336
      %v1417 = vadd.f32 %v1116, %v1339
      %v1418 = vadd.f32 %v1117, %v1344
      %v1419 = vadd.f32 %v1118, %v1347
      %v1420 = vadd.f32 %v1119, %v1352
      %v1421 = vadd.f32 %v1120, %v1355
      %v1422 = vadd.f32 %v1121, %v1360
      %v1423 = vadd.f32 %v1122, %v1363
      %v1424 = vadd.f32 %v1123, %v1368
      %v1425 = vadd.f32 %v1124, %v1371
      %v1426 = vadd.f32 %v1125, %v1376
      %v1427 = vadd.f32 %v1126, %v1379
      %v1428 = vadd.f32 %v1127, %v1384
      %v1429 = vadd.f32 %v1128, %v1387
      %v1430 = vadd.f32 %v1129, %v1392
      %v1431 = vadd.f32 %v1130, %v1395
      %v1432 = vld [vmem:[%s2] sm:$0x1]
      %v1434 = vlaneseq
      %v1435 = vshrl.u32 %v1434, 7
      %v1436 = vsub.s32 0, %v1435
      %v1437 = vrot.slane %v1432, %v1436
      %v1439 = vadd.f32 %v1398, %v1437
      %v1440 = vadd.f32 %v1399, %v1437
      %v1441 = vadd.f32 %v1400, %v1437
      %v1442 = vadd.f32 %v1401, %v1437
      %v1443 = vadd.f32 %v1402, %v1437
      %v1444 = vadd.f32 %v1403, %v1437
      %v1445 = vadd.f32 %v1404, %v1437
      %v1446 = vadd.f32 %v1405, %v1437
      %v1447 = vadd.f32 %v1406, %v1437
      %v1448 = vadd.f32 %v1407, %v1437
      %v1449 = vadd.f32 %v1408, %v1437
      %v1450 = vadd.f32 %v1409, %v1437
      %v1451 = vadd.f32 %v1410, %v1437
      %v1452 = vadd.f32 %v1411, %v1437
      %v1453 = vadd.f32 %v1412, %v1437
      %v1454 = vadd.f32 %v1413, %v1437
      %v1455 = vadd.f32 %v1414, %v1437
      %v1456 = vadd.f32 %v1415, %v1437
      %v1457 = vadd.f32 %v1416, %v1437
      %v1458 = vadd.f32 %v1417, %v1437
      %v1459 = vadd.f32 %v1418, %v1437
      %v1460 = vadd.f32 %v1419, %v1437
      %v1461 = vadd.f32 %v1420, %v1437
      %v1462 = vadd.f32 %v1421, %v1437
      %v1463 = vadd.f32 %v1422, %v1437
      %v1464 = vadd.f32 %v1423, %v1437
      %v1465 = vadd.f32 %v1424, %v1437
      %v1466 = vadd.f32 %v1425, %v1437
      %v1467 = vadd.f32 %v1426, %v1437
      %v1468 = vadd.f32 %v1427, %v1437
      %v1469 = vadd.f32 %v1428, %v1437
      %v1470 = vadd.f32 %v1429, %v1437
      %v1471 = vadd.f32 %v1430, %v1437
      %v1472 = vadd.f32 %v1431, %v1437
      %vm1473 = vcmp.ge.f32.partialorder %v1439, 0.0
      %vm1474 = vcmp.ge.f32.partialorder %v1440, 0.0
      %vm1475 = vcmp.ge.f32.partialorder %v1441, 0.0
      %vm1476 = vcmp.ge.f32.partialorder %v1442, 0.0
      %vm1477 = vcmp.ge.f32.partialorder %v1443, 0.0
      %vm1478 = vcmp.ge.f32.partialorder %v1444, 0.0
      %vm1479 = vcmp.ge.f32.partialorder %v1445, 0.0
      %vm1480 = vcmp.ge.f32.partialorder %v1446, 0.0
      %vm1481 = vcmp.ge.f32.partialorder %v1447, 0.0
      %vm1482 = vcmp.ge.f32.partialorder %v1448, 0.0
      %vm1483 = vcmp.ge.f32.partialorder %v1449, 0.0
      %vm1484 = vcmp.ge.f32.partialorder %v1450, 0.0
      %vm1485 = vcmp.ge.f32.partialorder %v1451, 0.0
      %vm1486 = vcmp.ge.f32.partialorder %v1452, 0.0
      %vm1487 = vcmp.ge.f32.partialorder %v1453, 0.0
      %vm1488 = vcmp.ge.f32.partialorder %v1454, 0.0
      %vm1489 = vcmp.ge.f32.partialorder %v1455, 0.0
      %vm1490 = vcmp.ge.f32.partialorder %v1456, 0.0
      %vm1491 = vcmp.ge.f32.partialorder %v1457, 0.0
      %vm1492 = vcmp.ge.f32.partialorder %v1458, 0.0
      %vm1493 = vcmp.ge.f32.partialorder %v1459, 0.0
      %vm1494 = vcmp.ge.f32.partialorder %v1460, 0.0
      %vm1495 = vcmp.ge.f32.partialorder %v1461, 0.0
      %vm1496 = vcmp.ge.f32.partialorder %v1462, 0.0
      %vm1497 = vcmp.ge.f32.partialorder %v1463, 0.0
      %vm1498 = vcmp.ge.f32.partialorder %v1464, 0.0
      %vm1499 = vcmp.ge.f32.partialorder %v1465, 0.0
      %vm1500 = vcmp.ge.f32.partialorder %v1466, 0.0
      %vm1501 = vcmp.ge.f32.partialorder %v1467, 0.0
      %vm1502 = vcmp.ge.f32.partialorder %v1468, 0.0
      %vm1503 = vcmp.ge.f32.partialorder %v1469, 0.0
      %vm1504 = vcmp.ge.f32.partialorder %v1470, 0.0
      %vm1505 = vcmp.ge.f32.partialorder %v1471, 0.0
      %vm1506 = vcmp.ge.f32.partialorder %v1472, 0.0
      %v1507 = vmul.f32 %v1439, 0.2
      %v1508 = vmul.f32 %v1440, 0.2
      %v1509 = vmul.f32 %v1441, 0.2
      %v1510 = vmul.f32 %v1442, 0.2
      %v1511 = vmul.f32 %v1443, 0.2
      %v1512 = vmul.f32 %v1444, 0.2
      %v1513 = vmul.f32 %v1445, 0.2
      %v1514 = vmul.f32 %v1446, 0.2
      %v1515 = vmul.f32 %v1447, 0.2
      %v1516 = vmul.f32 %v1448, 0.2
      %v1517 = vmul.f32 %v1449, 0.2
      %v1518 = vmul.f32 %v1450, 0.2
      %v1519 = vmul.f32 %v1451, 0.2
      %v1520 = vmul.f32 %v1452, 0.2
      %v1521 = vmul.f32 %v1453, 0.2
      %v1522 = vmul.f32 %v1454, 0.2
      %v1523 = vmul.f32 %v1455, 0.2
      %v1524 = vmul.f32 %v1456, 0.2
      %v1525 = vmul.f32 %v1457, 0.2
      %v1526 = vmul.f32 %v1458, 0.2
      %v1527 = vmul.f32 %v1459, 0.2
      %v1528 = vmul.f32 %v1460, 0.2
      %v1529 = vmul.f32 %v1461, 0.2
      %v1530 = vmul.f32 %v1462, 0.2
      %v1531 = vmul.f32 %v1463, 0.2
      %v1532 = vmul.f32 %v1464, 0.2
      %v1533 = vmul.f32 %v1465, 0.2
      %v1534 = vmul.f32 %v1466, 0.2
      %v1535 = vmul.f32 %v1467, 0.2
      %v1536 = vmul.f32 %v1468, 0.2
      %v1537 = vmul.f32 %v1469, 0.2
      %v1538 = vmul.f32 %v1470, 0.2
      %v1539 = vmul.f32 %v1471, 0.2
      %v1540 = vmul.f32 %v1472, 0.2
      %v1541 = vsel %vm1473, %v1439, %v1507
      %v1542 = vsel %vm1474, %v1440, %v1508
      %v1543 = vsel %vm1475, %v1441, %v1509
      %v1544 = vsel %vm1476, %v1442, %v1510
      %v1545 = vsel %vm1477, %v1443, %v1511
      %v1546 = vsel %vm1478, %v1444, %v1512
      %v1547 = vsel %vm1479, %v1445, %v1513
      %v1548 = vsel %vm1480, %v1446, %v1514
      %v1549 = vsel %vm1481, %v1447, %v1515
      %v1550 = vsel %vm1482, %v1448, %v1516
      %v1551 = vsel %vm1483, %v1449, %v1517
      %v1552 = vsel %vm1484, %v1450, %v1518
      %v1553 = vsel %vm1485, %v1451, %v1519
      %v1554 = vsel %vm1486, %v1452, %v1520
      %v1555 = vsel %vm1487, %v1453, %v1521
      %v1556 = vsel %vm1488, %v1454, %v1522
      %v1557 = vsel %vm1489, %v1455, %v1523
      %v1558 = vsel %vm1490, %v1456, %v1524
      %v1559 = vsel %vm1491, %v1457, %v1525
      %v1560 = vsel %vm1492, %v1458, %v1526
      %v1561 = vsel %vm1493, %v1459, %v1527
      %v1562 = vsel %vm1494, %v1460, %v1528
      %v1563 = vsel %vm1495, %v1461, %v1529
      %v1564 = vsel %vm1496, %v1462, %v1530
      %v1565 = vsel %vm1497, %v1463, %v1531
      %v1566 = vsel %vm1498, %v1464, %v1532
      %v1567 = vsel %vm1499, %v1465, %v1533
      %v1568 = vsel %vm1500, %v1466, %v1534
      %v1569 = vsel %vm1501, %v1467, %v1535
      %v1570 = vsel %vm1502, %v1468, %v1536
      %v1571 = vsel %vm1503, %v1469, %v1537
      %v1572 = vsel %vm1504, %v1470, %v1538
      %v1573 = vsel %vm1505, %v1471, %v1539
      %v1574 = vsel %vm1506, %v1472, %v1540
      %v1575 = vpack.c.bf16 %v1542, %v1541
      %v1576 = vpack.c.bf16 %v1544, %v1543
      %v1577 = vpack.c.bf16 %v1546, %v1545
      %v1578 = vpack.c.bf16 %v1548, %v1547
      %v1579 = vpack.c.bf16 %v1550, %v1549
      %v1580 = vpack.c.bf16 %v1552, %v1551
      %v1581 = vpack.c.bf16 %v1554, %v1553
      %v1582 = vpack.c.bf16 %v1556, %v1555
      %v1583 = vpack.c.bf16 %v1558, %v1557
      %v1584 = vpack.c.bf16 %v1560, %v1559
      %v1585 = vpack.c.bf16 %v1562, %v1561
      %v1586 = vpack.c.bf16 %v1564, %v1563
      %v1587 = vpack.c.bf16 %v1566, %v1565
      %v1588 = vpack.c.bf16 %v1568, %v1567
      %v1589 = vpack.c.bf16 %v1570, %v1569
      %v1590 = vpack.c.bf16 %v1572, %v1571
      %v1591 = vpack.c.bf16 %v1574, %v1573
      %v1609 = vunpack.c.l.b16 %v1575
      %v1610 = vunpack.c.h.b16 %v1575
      %v1611 = vunpack.c.l.b16 %v1576
      %v1612 = vunpack.c.h.b16 %v1576
      %v1613 = vunpack.c.l.b16 %v1577
      %v1614 = vunpack.c.h.b16 %v1577
      %v1615 = vunpack.c.l.b16 %v1578
      %v1616 = vunpack.c.h.b16 %v1578
      %v1617 = vunpack.c.l.b16 %v1579
      %v1618 = vunpack.c.h.b16 %v1579
      %v1619 = vunpack.c.l.b16 %v1580
      %v1620 = vunpack.c.h.b16 %v1580
      %v1621 = vunpack.c.l.b16 %v1581
      %v1622 = vunpack.c.h.b16 %v1581
      %v1623 = vunpack.c.l.b16 %v1582
      %v1624 = vunpack.c.h.b16 %v1582
      %v1625 = vunpack.c.l.b16 %v1583
      %v1626 = vunpack.c.h.b16 %v1583
      %v1627 = vunpack.c.l.b16 %v1584
      %v1628 = vunpack.c.h.b16 %v1584
      %v1629 = vunpack.c.l.b16 %v1585
      %v1630 = vunpack.c.h.b16 %v1585
      %v1631 = vunpack.c.l.b16 %v1586
      %v1632 = vunpack.c.h.b16 %v1586
      %v1633 = vunpack.c.l.b16 %v1587
      %v1634 = vunpack.c.h.b16 %v1587
      %v1635 = vunpack.c.l.b16 %v1588
      %v1636 = vunpack.c.h.b16 %v1588
      %v1637 = vunpack.c.l.b16 %v1589
      %v1638 = vunpack.c.h.b16 %v1589
      %v1639 = vunpack.c.l.b16 %v1590
      %v1640 = vunpack.c.h.b16 %v1590
      %v1641 = vunpack.c.l.b16 %v1591
      %v1642 = vunpack.c.h.b16 %v1591
      %v1643 = vpack.c.b16 %v1609, %v1609
      %v1644 = vpack.c.b16 %v1610, %v1610
      %v1645 = vpack.c.b16 %v1611, %v1611
      %v1646 = vpack.c.b16 %v1612, %v1612
      %v1647 = vpack.c.b16 %v1613, %v1613
      %v1648 = vpack.c.b16 %v1614, %v1614
      %v1649 = vpack.c.b16 %v1615, %v1615
      %v1650 = vpack.c.b16 %v1616, %v1616
      %v1651 = vpack.c.b16 %v1617, %v1617
      %v1652 = vpack.c.b16 %v1618, %v1618
      %v1653 = vpack.c.b16 %v1619, %v1619
      %v1654 = vpack.c.b16 %v1620, %v1620
      %v1655 = vpack.c.b16 %v1621, %v1621
      %v1656 = vpack.c.b16 %v1622, %v1622
      %v1657 = vpack.c.b16 %v1623, %v1623
      %v1658 = vpack.c.b16 %v1624, %v1624
      %v1659 = vpack.c.b16 %v1625, %v1625
      %v1660 = vpack.c.b16 %v1626, %v1626
      %v1661 = vpack.c.b16 %v1627, %v1627
      %v1662 = vpack.c.b16 %v1628, %v1628
      %v1663 = vpack.c.b16 %v1629, %v1629
      %v1664 = vpack.c.b16 %v1630, %v1630
      %v1665 = vpack.c.b16 %v1631, %v1631
      %v1666 = vpack.c.b16 %v1632, %v1632
      %v1667 = vpack.c.b16 %v1633, %v1633
      %v1668 = vpack.c.b16 %v1634, %v1634
      %v1669 = vpack.c.b16 %v1635, %v1635
      %v1670 = vpack.c.b16 %v1636, %v1636
      %v1671 = vpack.c.b16 %v1637, %v1637
      %v1672 = vpack.c.b16 %v1638, %v1638
      %v1673 = vpack.c.b16 %v1639, %v1639
      %v1674 = vpack.c.b16 %v1640, %v1640
      %v1675 = vpack.c.b16 %v1641, %v1641
      %v1676 = vpack.c.b16 %v1642, %v1642
      %1711 = vst [vmem:[%s177] sm:$0xf] %v1643
      %1712 = vst [vmem:[%s177 + $0x4] sm:$0xf] %v1644
      %1713 = vst [vmem:[%s177 + $0x8] sm:$0xf] %v1645
      %1714 = vst [vmem:[%s177 + $0xc] sm:$0xf] %v1646
      %1715 = vst [vmem:[%s177 + $0x10] sm:$0xf] %v1647
      %1716 = vst [vmem:[%s177 + $0x14] sm:$0xf] %v1648
      %1717 = vst [vmem:[%s177 + $0x18] sm:$0xf] %v1649
      %1718 = vst [vmem:[%s177 + $0x1c] sm:$0xf] %v1650
      %1719 = vst [vmem:[%s177 + $0x20] sm:$0xf] %v1651
      %1720 = vst [vmem:[%s177 + $0x24] sm:$0xf] %v1652
      %1721 = vst [vmem:[%s177 + $0x28] sm:$0xf] %v1653
      %1722 = vst [vmem:[%s177 + $0x2c] sm:$0xf] %v1654
      %1723 = vst [vmem:[%s177 + $0x30] sm:$0xf] %v1655
      %1724 = vst [vmem:[%s177 + $0x34] sm:$0xf] %v1656
      %1725 = vst [vmem:[%s177 + $0x38] sm:$0xf] %v1657
      %1726 = vst [vmem:[%s177 + $0x3c] sm:$0xf] %v1658
      %1727 = vst [vmem:[%s177 + $0x40] sm:$0xf] %v1659
      %1728 = vst [vmem:[%s177 + $0x44] sm:$0xf] %v1660
      %1729 = vst [vmem:[%s177 + $0x48] sm:$0xf] %v1661
      %1730 = vst [vmem:[%s177 + $0x4c] sm:$0xf] %v1662
      %1731 = vst [vmem:[%s177 + $0x50] sm:$0xf] %v1663
      %1732 = vst [vmem:[%s177 + $0x54] sm:$0xf] %v1664
      %1733 = vst [vmem:[%s177 + $0x58] sm:$0xf] %v1665
      %1734 = vst [vmem:[%s177 + $0x5c] sm:$0xf] %v1666
      %1735 = vst [vmem:[%s177 + $0x60] sm:$0xf] %v1667
      %1736 = vst [vmem:[%s177 + $0x64] sm:$0xf] %v1668
      %1737 = vst [vmem:[%s177 + $0x68] sm:$0xf] %v1669
      %1738 = vst [vmem:[%s177 + $0x6c] sm:$0xf] %v1670
      %1739 = vst [vmem:[%s177 + $0x70] sm:$0xf] %v1671
      %1740 = vst [vmem:[%s177 + $0x74] sm:$0xf] %v1672
      %1741 = vst [vmem:[%s177 + $0x78] sm:$0xf] %v1673
      %1742 = vst [vmem:[%s177 + $0x7c] sm:$0xf] %v1674
      %1743 = vst [vmem:[%s177 + $0x80] sm:$0xf] %v1675
      %1744 = vst [vmem:[%s177 + $0x84] sm:$0xf] %v1676
      %s1745 = scalar_lea.vmem %s170, 156
      %v1746 = vld [vmem:[%s1745] sm:$0xf]
      %v1747 = vld [vmem:[%s1745 + $0x4] sm:$0xf]
      %v1748 = vld [vmem:[%s1745 + $0x8] sm:$0xf]
      %v1749 = vld [vmem:[%s1745 + $0xc] sm:$0xf]
      %v1750 = vld [vmem:[%s1745 + $0x10] sm:$0xf]
      %v1751 = vld [vmem:[%s1745 + $0x14] sm:$0xf]
      %v1752 = vld [vmem:[%s1745 + $0x18] sm:$0xf]
      %v1753 = vld [vmem:[%s1745 + $0x1c] sm:$0xf]
      %v1754 = vld [vmem:[%s1745 + $0x20] sm:$0xf]
      %v1755 = vld [vmem:[%s1745 + $0x24] sm:$0xf]
      %v1756 = vld [vmem:[%s1745 + $0x28] sm:$0xf]
      %v1757 = vld [vmem:[%s1745 + $0x2c] sm:$0xf]
      %v1758 = vld [vmem:[%s1745 + $0x30] sm:$0xf]
      %v1759 = vld [vmem:[%s1745 + $0x34] sm:$0xf]
      %v1760 = vld [vmem:[%s1745 + $0x38] sm:$0xf]
      %v1761 = vld [vmem:[%s1745 + $0x3c] sm:$0xf]
      %v1762 = vld [vmem:[%s1745 + $0x40] sm:$0xf]
      %v1763 = vld [vmem:[%s1745 + $0x44] sm:$0xf]
      %v1764 = vld [vmem:[%s1745 + $0x48] sm:$0xf]
      %v1765 = vld [vmem:[%s1745 + $0x4c] sm:$0xf]
      %v1766 = vld [vmem:[%s1745 + $0x50] sm:$0xf]
      %v1767 = vld [vmem:[%s1745 + $0x54] sm:$0xf]
      %v1768 = vld [vmem:[%s1745 + $0x58] sm:$0xf]
      %v1769 = vld [vmem:[%s1745 + $0x5c] sm:$0xf]
      %v1770 = vld [vmem:[%s1745 + $0x60] sm:$0xf]
      %v1771 = vld [vmem:[%s1745 + $0x64] sm:$0xf]
      %v1772 = vld [vmem:[%s1745 + $0x68] sm:$0xf]
      %v1773 = vld [vmem:[%s1745 + $0x6c] sm:$0xf]
      %v1774 = vld [vmem:[%s1745 + $0x70] sm:$0xf]
      %v1775 = vld [vmem:[%s1745 + $0x74] sm:$0xf]
      %v1776 = vld [vmem:[%s1745 + $0x78] sm:$0xf]
      %v1777 = vld [vmem:[%s1745 + $0x7c] sm:$0xf]
      %v1778 = vld [vmem:[%s1745 + $0x80] sm:$0xf]
      %v1779 = vld [vmem:[%s1745 + $0x84] sm:$0xf]
      %v1780 = vld [vmem:[%s1745 + $0x88] sm:$0xf]
      %v1781 = vld [vmem:[%s1745 + $0x8c] sm:$0xf]
      %v1782 = vld [vmem:[%s1745 + $0x90] sm:$0xf]
      %v1783 = vld [vmem:[%s1] sm:$0xf]
      %v1784 = vld [vmem:[%s1 + $0x4] sm:$0x3]
      %v1785 = vld [vmem:[%s219] sm:$0xf]
      %v1786 = vld [vmem:[%s219 + $0x4] sm:$0x3]
      %v1822 = vunpack.c.l.b16 %v1746
      %v1823 = vunpack.c.l.b16 %v1747
      %v1824 = vunpack.c.l.b16 %v1748
      %v1825 = vunpack.c.l.b16 %v1749
      %v1826 = vunpack.c.l.b16 %v1750
      %v1827 = vunpack.c.l.b16 %v1751
      %v1828 = vunpack.c.l.b16 %v1752
      %v1829 = vunpack.c.l.b16 %v1753
      %v1830 = vunpack.c.l.b16 %v1754
      %v1831 = vunpack.c.l.b16 %v1755
      %v1832 = vunpack.c.l.b16 %v1756
      %v1833 = vunpack.c.l.b16 %v1757
      %v1834 = vunpack.c.l.b16 %v1758
      %v1835 = vunpack.c.l.b16 %v1759
      %v1836 = vunpack.c.l.b16 %v1760
      %v1837 = vunpack.c.l.b16 %v1761
      %v1838 = vunpack.c.l.b16 %v1762
      %v1839 = vunpack.c.l.b16 %v1763
      %v1840 = vunpack.c.l.b16 %v1764
      %v1841 = vunpack.c.l.b16 %v1765
      %v1842 = vunpack.c.l.b16 %v1766
      %v1843 = vunpack.c.l.b16 %v1767
      %v1844 = vunpack.c.l.b16 %v1768
      %v1845 = vunpack.c.l.b16 %v1769
      %v1846 = vunpack.c.l.b16 %v1770
      %v1847 = vunpack.c.l.b16 %v1771
      %v1848 = vunpack.c.l.b16 %v1772
      %v1849 = vunpack.c.l.b16 %v1773
      %v1850 = vunpack.c.l.b16 %v1774
      %v1851 = vunpack.c.l.b16 %v1775
      %v1852 = vunpack.c.l.b16 %v1776
      %v1853 = vunpack.c.l.b16 %v1777
      %v1854 = vunpack.c.l.b16 %v1778
      %v1855 = vunpack.c.l.b16 %v1779
      %v1856 = vunpack.c.l.b16 %v1780
      %v1857 = vpack.c.b16 %v1823, %v1822
      %v1858 = vpack.c.b16 %v1825, %v1824
      %v1859 = vpack.c.b16 %v1827, %v1826
      %v1860 = vpack.c.b16 %v1829, %v1828
      %v1861 = vpack.c.b16 %v1831, %v1830
      %v1862 = vpack.c.b16 %v1833, %v1832
      %v1863 = vpack.c.b16 %v1835, %v1834
      %v1864 = vpack.c.b16 %v1837, %v1836
      %v1865 = vpack.c.b16 %v1839, %v1838
      %v1866 = vpack.c.b16 %v1841, %v1840
      %v1867 = vpack.c.b16 %v1843, %v1842
      %v1868 = vpack.c.b16 %v1845, %v1844
      %v1869 = vpack.c.b16 %v1847, %v1846
      %v1870 = vpack.c.b16 %v1849, %v1848
      %v1871 = vpack.c.b16 %v1851, %v1850
      %v1872 = vpack.c.b16 %v1853, %v1852
      %v1873 = vpack.c.b16 %v1855, %v1854
      %v1874 = vpack.c.b16 %v1856, %v1856
      %v1876 = vshrl.u32 %v1857, 16
      %v1878 = vshll.u32 %v1857, 16
      %v1880 = vrot.slane %v1878, 1
      %v1881 = vor.u32 %v1876, %v1880
      %v1883 = vshll.u32 %v1858, 16
      %v1885 = vrot.slane %v1883, 1
      %v1886 = vsel %vm310, %v1881, %v1885
      %v1887 = vshrl.u32 %v1858, 16
      %v1889 = vor.u32 %v1887, %v1885
      %v1891 = vshll.u32 %v1859, 16
      %v1893 = vrot.slane %v1891, 1
      %v1894 = vsel %vm310, %v1889, %v1893
      %v1895 = vshrl.u32 %v1859, 16
      %v1897 = vor.u32 %v1895, %v1893
      %v1899 = vshll.u32 %v1860, 16
      %v1901 = vrot.slane %v1899, 1
      %v1902 = vsel %vm310, %v1897, %v1901
      %v1903 = vshrl.u32 %v1860, 16
      %v1905 = vor.u32 %v1903, %v1901
      %v1907 = vshll.u32 %v1861, 16
      %v1909 = vrot.slane %v1907, 1
      %v1910 = vsel %vm310, %v1905, %v1909
      %v1911 = vshrl.u32 %v1861, 16
      %v1913 = vor.u32 %v1911, %v1909
      %v1915 = vshll.u32 %v1862, 16
      %v1917 = vrot.slane %v1915, 1
      %v1918 = vsel %vm310, %v1913, %v1917
      %v1919 = vshrl.u32 %v1862, 16
      %v1921 = vor.u32 %v1919, %v1917
      %v1923 = vshll.u32 %v1863, 16
      %v1925 = vrot.slane %v1923, 1
      %v1926 = vsel %vm310, %v1921, %v1925
      %v1927 = vshrl.u32 %v1863, 16
      %v1929 = vor.u32 %v1927, %v1925
      %v1931 = vshll.u32 %v1864, 16
      %v1933 = vrot.slane %v1931, 1
      %v1934 = vsel %vm310, %v1929, %v1933
      %v1935 = vshrl.u32 %v1864, 16
      %v1937 = vor.u32 %v1935, %v1933
      %v1939 = vshll.u32 %v1865, 16
      %v1941 = vrot.slane %v1939, 1
      %v1942 = vsel %vm310, %v1937, %v1941
      %v1943 = vshrl.u32 %v1865, 16
      %v1945 = vor.u32 %v1943, %v1941
      %v1947 = vshll.u32 %v1866, 16
      %v1949 = vrot.slane %v1947, 1
      %v1950 = vsel %vm310, %v1945, %v1949
      %v1951 = vshrl.u32 %v1866, 16
      %v1953 = vor.u32 %v1951, %v1949
      %v1955 = vshll.u32 %v1867, 16
      %v1957 = vrot.slane %v1955, 1
      %v1958 = vsel %vm310, %v1953, %v1957
      %v1959 = vshrl.u32 %v1867, 16
      %v1961 = vor.u32 %v1959, %v1957
      %v1963 = vshll.u32 %v1868, 16
      %v1965 = vrot.slane %v1963, 1
      %v1966 = vsel %vm310, %v1961, %v1965
      %v1967 = vshrl.u32 %v1868, 16
      %v1969 = vor.u32 %v1967, %v1965
      %v1971 = vshll.u32 %v1869, 16
      %v1973 = vrot.slane %v1971, 1
      %v1974 = vsel %vm310, %v1969, %v1973
      %v1975 = vshrl.u32 %v1869, 16
      %v1977 = vor.u32 %v1975, %v1973
      %v1979 = vshll.u32 %v1870, 16
      %v1981 = vrot.slane %v1979, 1
      %v1982 = vsel %vm310, %v1977, %v1981
      %v1983 = vshrl.u32 %v1870, 16
      %v1985 = vor.u32 %v1983, %v1981
      %v1987 = vshll.u32 %v1871, 16
      %v1989 = vrot.slane %v1987, 1
      %v1990 = vsel %vm310, %v1985, %v1989
      %v1991 = vshrl.u32 %v1871, 16
      %v1993 = vor.u32 %v1991, %v1989
      %v1995 = vshll.u32 %v1872, 16
      %v1997 = vrot.slane %v1995, 1
      %v1998 = vsel %vm310, %v1993, %v1997
      %v1999 = vshrl.u32 %v1872, 16
      %v2001 = vor.u32 %v1999, %v1997
      %v2003 = vshll.u32 %v1873, 16
      %v2005 = vrot.slane %v2003, 1
      %v2006 = vsel %vm310, %v2001, %v2005
      %v2007 = vshrl.u32 %v1873, 16
      %v2009 = vor.u32 %v2007, %v2005
      %v2011 = vshll.u32 %v1874, 16
      %v2013 = vrot.slane %v2011, 1
      %v2014 = vsel %vm310, %v2009, %v2013
      %v2017 = vunpack.c.l.b16 %v1785
      %v2018 = vunpack.c.l.b16 %v1786
      %v2019 = vpack.c.b16 %v2018, %v2017
      %v2021 = vsel %vm456, %v1886, 0
      %v2024 = vsel %vm456, %v1894, 0
      %v2027 = vsel %vm456, %v1902, 0
      %v2030 = vsel %vm456, %v1910, 0
      %v2033 = vsel %vm456, %v1918, 0
      %v2036 = vsel %vm456, %v1926, 0
      %v2039 = vsel %vm456, %v1934, 0
      %v2042 = vsel %vm456, %v1942, 0
      %v2045 = vsel %vm456, %v1950, 0
      %v2048 = vsel %vm456, %v1958, 0
      %v2051 = vsel %vm456, %v1966, 0
      %v2054 = vsel %vm456, %v1974, 0
      %v2057 = vsel %vm456, %v1982, 0
      %v2060 = vsel %vm456, %v1990, 0
      %v2063 = vsel %vm456, %v1998, 0
      %v2066 = vsel %vm456, %v2006, 0
      %v2069 = vsel %vm456, %v2014, 0
      %v2072 = vsel %vm508, %v2019, 0
      %2074 = vmatprep.subr.bf16.mxu0 0
      %2075 = vmatpush1.bf16.msra.mxu0 %v2072
      %2076 = vmatprep.subr.bf16.mxu0 0
      %2077 = vmatpush1.bf16.msra.mxu0 0
      %2078 = vmatprep.subr.bf16.mxu0 0
      %2079 = vmatpush1.bf16.msra.mxu0 0
      %2080 = vmatprep.subr.bf16.mxu0 0
      %2081 = vmatpush1.bf16.msra.mxu0 0
      %2082 = vmatprep.subr.bf16.mxu0 0
      %2083 = vmatpush1.bf16.msra.mxu0 0
      %2084 = vmatprep.subr.bf16.mxu0 0
      %2085 = vmatpush1.bf16.msra.mxu0 0
      %2086 = vmatprep.subr.bf16.mxu0 0
      %2087 = vmatpush1.bf16.msra.mxu0 0
      %2088 = vmatprep.subr.bf16.mxu0 0
      %2089 = vmatpush1.bf16.msra.mxu0 0
      %2090 = vmatprep.subr.bf16.mxu0 0
      %2091 = vmatpush1.bf16.msra.mxu0 0
      %2092 = vmatprep.subr.bf16.mxu0 0
      %2093 = vmatpush1.bf16.msra.mxu0 0
      %2094 = vmatprep.subr.bf16.mxu0 0
      %2095 = vmatpush1.bf16.msra.mxu0 0
      %2096 = vmatprep.subr.bf16.mxu0 0
      %2097 = vmatpush1.bf16.msra.mxu0 0
      %2098 = vmatprep.subr.bf16.mxu0 0
      %2099 = vmatpush1.bf16.msra.mxu0 0
      %2100 = vmatprep.subr.bf16.mxu0 0
      %2101 = vmatpush1.bf16.msra.mxu0 0
      %2102 = vmatprep.subr.bf16.mxu0 0
      %2103 = vmatpush1.bf16.msra.mxu0 0
      %2104 = vmatprep.subr.bf16.mxu0 0
      %2105 = vmatpush1.bf16.msra.mxu0 0
      %2106 = vmatprep.mubr.bf16.mxu0 0
      %2107 = vmatmul.mubr.bf16.gmra.mrb[0].mxu0 %v2021
      %v2108 = vpop.f32.mrb[0].mxu0
      %v2109 = vadd.f32 0.0, %v2108
      %v2110 = vpop.f32.mrb[0].mxu0
      %v2111 = vpop.f32.mrb[0].mxu0
      %v2112 = vadd.f32 0.0, %v2111
      %v2113 = vpop.f32.mrb[0].mxu0
      %2114 = vmatprep.mubr.bf16.mxu0 0
      %2115 = vmatmul.mubr.bf16.gmra.mrb[0].mxu0 %v2024
      %v2116 = vpop.f32.mrb[0].mxu0
      %v2117 = vadd.f32 0.0, %v2116
      %v2118 = vpop.f32.mrb[0].mxu0
      %v2119 = vpop.f32.mrb[0].mxu0
      %v2120 = vadd.f32 0.0, %v2119
      %v2121 = vpop.f32.mrb[0].mxu0
      %2122 = vmatprep.mubr.bf16.mxu0 0
      %2123 = vmatmul.mubr.bf16.gmra.mrb[0].mxu0 %v2027
      %v2124 = vpop.f32.mrb[0].mxu0
      %v2125 = vadd.f32 0.0, %v2124
      %v2126 = vpop.f32.mrb[0].mxu0
      %v2127 = vpop.f32.mrb[0].mxu0
      %v2128 = vadd.f32 0.0, %v2127
      %v2129 = vpop.f32.mrb[0].mxu0
      %2130 = vmatprep.mubr.bf16.mxu0 0
      %2131 = vmatmul.mubr.bf16.gmra.mrb[0].mxu0 %v2030
      %v2132 = vpop.f32.mrb[0].mxu0
      %v2133 = vadd.f32 0.0, %v2132
      %v2134 = vpop.f32.mrb[0].mxu0
      %v2135 = vpop.f32.mrb[0].mxu0
      %v2136 = vadd.f32 0.0, %v2135
      %v2137 = vpop.f32.mrb[0].mxu0
      %2138 = vmatprep.mubr.bf16.mxu0 0
      %2139 = vmatmul.mubr.bf16.gmra.mrb[0].mxu0 %v2033
      %v2140 = vpop.f32.mrb[0].mxu0
      %v2141 = vadd.f32 0.0, %v2140
      %v2142 = vpop.f32.mrb[0].mxu0
      %v2143 = vpop.f32.mrb[0].mxu0
      %v2144 = vadd.f32 0.0, %v2143
      %v2145 = vpop.f32.mrb[0].mxu0
      %2146 = vmatprep.mubr.bf16.mxu0 0
      %2147 = vmatmul.mubr.bf16.gmra.mrb[0].mxu0 %v2036
      %v2148 = vpop.f32.mrb[0].mxu0
      %v2149 = vadd.f32 0.0, %v2148
      %v2150 = vpop.f32.mrb[0].mxu0
      %v2151 = vpop.f32.mrb[0].mxu0
      %v2152 = vadd.f32 0.0, %v2151
      %v2153 = vpop.f32.mrb[0].mxu0
      %2154 = vmatprep.mubr.bf16.mxu0 0
      %2155 = vmatmul.mubr.bf16.gmra.mrb[0].mxu0 %v2039
      %v2156 = vpop.f32.mrb[0].mxu0
      %v2157 = vadd.f32 0.0, %v2156
      %v2158 = vpop.f32.mrb[0].mxu0
      %v2159 = vpop.f32.mrb[0].mxu0
      %v2160 = vadd.f32 0.0, %v2159
      %v2161 = vpop.f32.mrb[0].mxu0
      %2162 = vmatprep.mubr.bf16.mxu0 0
      %2163 = vmatmul.mubr.bf16.gmra.mrb[0].mxu0 %v2042
      %v2164 = vpop.f32.mrb[0].mxu0
      %v2165 = vadd.f32 0.0, %v2164
      %v2166 = vpop.f32.mrb[0].mxu0
      %v2167 = vpop.f32.mrb[0].mxu0
      %v2168 = vadd.f32 0.0, %v2167
      %v2169 = vpop.f32.mrb[0].mxu0
      %2170 = vmatprep.mubr.bf16.mxu0 0
      %2171 = vmatmul.mubr.bf16.gmra.mrb[0].mxu0 %v2045
      %v2172 = vpop.f32.mrb[0].mxu0
      %v2173 = vadd.f32 0.0, %v2172
      %v2174 = vpop.f32.mrb[0].mxu0
      %v2175 = vpop.f32.mrb[0].mxu0
      %v2176 = vadd.f32 0.0, %v2175
      %v2177 = vpop.f32.mrb[0].mxu0
      %2178 = vmatprep.mubr.bf16.mxu0 0
      %2179 = vmatmul.mubr.bf16.gmra.mrb[0].mxu0 %v2048
      %v2180 = vpop.f32.mrb[0].mxu0
      %v2181 = vadd.f32 0.0, %v2180
      %v2182 = vpop.f32.mrb[0].mxu0
      %v2183 = vpop.f32.mrb[0].mxu0
      %v2184 = vadd.f32 0.0, %v2183
      %v2185 = vpop.f32.mrb[0].mxu0
      %2186 = vmatprep.mubr.bf16.mxu0 0
      %2187 = vmatmul.mubr.bf16.gmra.mrb[0].mxu0 %v2051
      %v2188 = vpop.f32.mrb[0].mxu0
      %v2189 = vadd.f32 0.0, %v2188
      %v2190 = vpop.f32.mrb[0].mxu0
      %v2191 = vpop.f32.mrb[0].mxu0
      %v2192 = vadd.f32 0.0, %v2191
      %v2193 = vpop.f32.mrb[0].mxu0
      %2194 = vmatprep.mubr.bf16.mxu0 0
      %2195 = vmatmul.mubr.bf16.gmra.mrb[0].mxu0 %v2054
      %v2196 = vpop.f32.mrb[0].mxu0
      %v2197 = vadd.f32 0.0, %v2196
      %v2198 = vpop.f32.mrb[0].mxu0
      %v2199 = vpop.f32.mrb[0].mxu0
      %v2200 = vadd.f32 0.0, %v2199
      %v2201 = vpop.f32.mrb[0].mxu0
      %2202 = vmatprep.mubr.bf16.mxu0 0
      %2203 = vmatmul.mubr.bf16.gmra.mrb[0].mxu0 %v2057
      %v2204 = vpop.f32.mrb[0].mxu0
      %v2205 = vadd.f32 0.0, %v2204
      %v2206 = vpop.f32.mrb[0].mxu0
      %v2207 = vpop.f32.mrb[0].mxu0
      %v2208 = vadd.f32 0.0, %v2207
      %v2209 = vpop.f32.mrb[0].mxu0
      %2210 = vmatprep.mubr.bf16.mxu0 0
      %2211 = vmatmul.mubr.bf16.gmra.mrb[0].mxu0 %v2060
      %v2212 = vpop.f32.mrb[0].mxu0
      %v2213 = vadd.f32 0.0, %v2212
      %v2214 = vpop.f32.mrb[0].mxu0
      %v2215 = vpop.f32.mrb[0].mxu0
      %v2216 = vadd.f32 0.0, %v2215
      %v2217 = vpop.f32.mrb[0].mxu0
      %2218 = vmatprep.mubr.bf16.mxu0 0
      %2219 = vmatmul.mubr.bf16.gmra.mrb[0].mxu0 %v2063
      %v2220 = vpop.f32.mrb[0].mxu0
      %v2221 = vadd.f32 0.0, %v2220
      %v2222 = vpop.f32.mrb[0].mxu0
      %v2223 = vpop.f32.mrb[0].mxu0
      %v2224 = vadd.f32 0.0, %v2223
      %v2225 = vpop.f32.mrb[0].mxu0
      %2226 = vmatprep.mubr.bf16.mxu0 0
      %2227 = vmatmul.mubr.bf16.gmra.mrb[0].mxu0 %v2066
      %v2228 = vpop.f32.mrb[0].mxu0
      %v2229 = vadd.f32 0.0, %v2228
      %v2230 = vpop.f32.mrb[0].mxu0
      %v2231 = vpop.f32.mrb[0].mxu0
      %v2232 = vadd.f32 0.0, %v2231
      %v2233 = vpop.f32.mrb[0].mxu0
      %2234 = vmatprep.mubr.bf16.mxu0 0
      %2235 = vmatmul.mubr.bf16.gmra.mrb[0].mxu0 %v2069
      %v2236 = vpop.f32.mrb[0].mxu0
      %v2237 = vadd.f32 0.0, %v2236
      %v2238 = vpop.f32.mrb[0].mxu0
      %v2239 = vpop.f32.mrb[0].mxu0
      %v2240 = vadd.f32 0.0, %v2239
      %v2241 = vpop.f32.mrb[0].mxu0
      %2242 = vdwg.mxu0
      %v2245 = vunpack.c.l.b16 %v1783
      %v2246 = vunpack.c.l.b16 %v1784
      %v2247 = vpack.c.b16 %v2246, %v2245
      %v2248 = vsel %vm456, %v1857, 0
      %v2250 = vsel %vm456, %v1858, 0
      %v2252 = vsel %vm456, %v1859, 0
      %v2254 = vsel %vm456, %v1860, 0
      %v2256 = vsel %vm456, %v1861, 0
      %v2258 = vsel %vm456, %v1862, 0
      %v2260 = vsel %vm456, %v1863, 0
      %v2262 = vsel %vm456, %v1864, 0
      %v2264 = vsel %vm456, %v1865, 0
      %v2266 = vsel %vm456, %v1866, 0
      %v2268 = vsel %vm456, %v1867, 0
      %v2270 = vsel %vm456, %v1868, 0
      %v2272 = vsel %vm456, %v1869, 0
      %v2274 = vsel %vm456, %v1870, 0
      %v2276 = vsel %vm456, %v1871, 0
      %v2278 = vsel %vm456, %v1872, 0
      %v2280 = vsel %vm456, %v1873, 0
      %v2283 = vsel %vm508, %v2247, 0
      %2285 = vmatprep.subr.bf16.mxu0 0
      %2286 = vmatpush1.bf16.msra.mxu0 %v2283
      %2287 = vmatprep.subr.bf16.mxu0 0
      %2288 = vmatpush1.bf16.msra.mxu0 0
      %2289 = vmatprep.subr.bf16.mxu0 0
      %2290 = vmatpush1.bf16.msra.mxu0 0
      %2291 = vmatprep.subr.bf16.mxu0 0
      %2292 = vmatpush1.bf16.msra.mxu0 0
      %2293 = vmatprep.subr.bf16.mxu0 0
      %2294 = vmatpush1.bf16.msra.mxu0 0
      %2295 = vmatprep.subr.bf16.mxu0 0
      %2296 = vmatpush1.bf16.msra.mxu0 0
      %2297 = vmatprep.subr.bf16.mxu0 0
      %2298 = vmatpush1.bf16.msra.mxu0 0
      %2299 = vmatprep.subr.bf16.mxu0 0
      %2300 = vmatpush1.bf16.msra.mxu0 0
      %2301 = vmatprep.subr.bf16.mxu0 0
      %2302 = vmatpush1.bf16.msra.mxu0 0
      %2303 = vmatprep.subr.bf16.mxu0 0
      %2304 = vmatpush1.bf16.msra.mxu0 0
      %2305 = vmatprep.subr.bf16.mxu0 0
      %2306 = vmatpush1.bf16.msra.mxu0 0
      %2307 = vmatprep.subr.bf16.mxu0 0
      %2308 = vmatpush1.bf16.msra.mxu0 0
      %2309 = vmatprep.subr.bf16.mxu0 0
      %2310 = vmatpush1.bf16.msra.mxu0 0
      %2311 = vmatprep.subr.bf16.mxu0 0
      %2312 = vmatpush1.bf16.msra.mxu0 0
      %2313 = vmatprep.subr.bf16.mxu0 0
      %2314 = vmatpush1.bf16.msra.mxu0 0
      %2315 = vmatprep.subr.bf16.mxu0 0
      %2316 = vmatpush1.bf16.msra.mxu0 0
      %2317 = vmatprep.mubr.bf16.mxu0 0
      %2318 = vmatmul.mubr.bf16.gmra.mrb[0].mxu0 %v2248
      %v2319 = vpop.f32.mrb[0].mxu0
      %v2320 = vadd.f32 %v2109, %v2319
      %v2321 = vpop.f32.mrb[0].mxu0
      %v2322 = vpop.f32.mrb[0].mxu0
      %v2323 = vadd.f32 %v2112, %v2322
      %v2324 = vpop.f32.mrb[0].mxu0
      %2325 = vmatprep.mubr.bf16.mxu0 0
      %2326 = vmatmul.mubr.bf16.gmra.mrb[0].mxu0 %v2250
      %v2327 = vpop.f32.mrb[0].mxu0
      %v2328 = vadd.f32 %v2117, %v2327
      %v2329 = vpop.f32.mrb[0].mxu0
      %v2330 = vpop.f32.mrb[0].mxu0
      %v2331 = vadd.f32 %v2120, %v2330
      %v2332 = vpop.f32.mrb[0].mxu0
      %2333 = vmatprep.mubr.bf16.mxu0 0
      %2334 = vmatmul.mubr.bf16.gmra.mrb[0].mxu0 %v2252
      %v2335 = vpop.f32.mrb[0].mxu0
      %v2336 = vadd.f32 %v2125, %v2335
      %v2337 = vpop.f32.mrb[0].mxu0
      %v2338 = vpop.f32.mrb[0].mxu0
      %v2339 = vadd.f32 %v2128, %v2338
      %v2340 = vpop.f32.mrb[0].mxu0
      %2341 = vmatprep.mubr.bf16.mxu0 0
      %2342 = vmatmul.mubr.bf16.gmra.mrb[0].mxu0 %v2254
      %v2343 = vpop.f32.mrb[0].mxu0
      %v2344 = vadd.f32 %v2133, %v2343
      %v2345 = vpop.f32.mrb[0].mxu0
      %v2346 = vpop.f32.mrb[0].mxu0
      %v2347 = vadd.f32 %v2136, %v2346
      %v2348 = vpop.f32.mrb[0].mxu0
      %2349 = vmatprep.mubr.bf16.mxu0 0
      %2350 = vmatmul.mubr.bf16.gmra.mrb[0].mxu0 %v2256
      %v2351 = vpop.f32.mrb[0].mxu0
      %v2352 = vadd.f32 %v2141, %v2351
      %v2353 = vpop.f32.mrb[0].mxu0
      %v2354 = vpop.f32.mrb[0].mxu0
      %v2355 = vadd.f32 %v2144, %v2354
      %v2356 = vpop.f32.mrb[0].mxu0
      %2357 = vmatprep.mubr.bf16.mxu0 0
      %2358 = vmatmul.mubr.bf16.gmra.mrb[0].mxu0 %v2258
      %v2359 = vpop.f32.mrb[0].mxu0
      %v2360 = vadd.f32 %v2149, %v2359
      %v2361 = vpop.f32.mrb[0].mxu0
      %v2362 = vpop.f32.mrb[0].mxu0
      %v2363 = vadd.f32 %v2152, %v2362
      %v2364 = vpop.f32.mrb[0].mxu0
      %2365 = vmatprep.mubr.bf16.mxu0 0
      %2366 = vmatmul.mubr.bf16.gmra.mrb[0].mxu0 %v2260
      %v2367 = vpop.f32.mrb[0].mxu0
      %v2368 = vadd.f32 %v2157, %v2367
      %v2369 = vpop.f32.mrb[0].mxu0
      %v2370 = vpop.f32.mrb[0].mxu0
      %v2371 = vadd.f32 %v2160, %v2370
      %v2372 = vpop.f32.mrb[0].mxu0
      %2373 = vmatprep.mubr.bf16.mxu0 0
      %2374 = vmatmul.mubr.bf16.gmra.mrb[0].mxu0 %v2262
      %v2375 = vpop.f32.mrb[0].mxu0
      %v2376 = vadd.f32 %v2165, %v2375
      %v2377 = vpop.f32.mrb[0].mxu0
      %v2378 = vpop.f32.mrb[0].mxu0
      %v2379 = vadd.f32 %v2168, %v2378
      %v2380 = vpop.f32.mrb[0].mxu0
      %2381 = vmatprep.mubr.bf16.mxu0 0
      %2382 = vmatmul.mubr.bf16.gmra.mrb[0].mxu0 %v2264
      %v2383 = vpop.f32.mrb[0].mxu0
      %v2384 = vadd.f32 %v2173, %v2383
      %v2385 = vpop.f32.mrb[0].mxu0
      %v2386 = vpop.f32.mrb[0].mxu0
      %v2387 = vadd.f32 %v2176, %v2386
      %v2388 = vpop.f32.mrb[0].mxu0
      %2389 = vmatprep.mubr.bf16.mxu0 0
      %2390 = vmatmul.mubr.bf16.gmra.mrb[0].mxu0 %v2266
      %v2391 = vpop.f32.mrb[0].mxu0
      %v2392 = vadd.f32 %v2181, %v2391
      %v2393 = vpop.f32.mrb[0].mxu0
      %v2394 = vpop.f32.mrb[0].mxu0
      %v2395 = vadd.f32 %v2184, %v2394
      %v2396 = vpop.f32.mrb[0].mxu0
      %2397 = vmatprep.mubr.bf16.mxu0 0
      %2398 = vmatmul.mubr.bf16.gmra.mrb[0].mxu0 %v2268
      %v2399 = vpop.f32.mrb[0].mxu0
      %v2400 = vadd.f32 %v2189, %v2399
      %v2401 = vpop.f32.mrb[0].mxu0
      %v2402 = vpop.f32.mrb[0].mxu0
      %v2403 = vadd.f32 %v2192, %v2402
      %v2404 = vpop.f32.mrb[0].mxu0
      %2405 = vmatprep.mubr.bf16.mxu0 0
      %2406 = vmatmul.mubr.bf16.gmra.mrb[0].mxu0 %v2270
      %v2407 = vpop.f32.mrb[0].mxu0
      %v2408 = vadd.f32 %v2197, %v2407
      %v2409 = vpop.f32.mrb[0].mxu0
      %v2410 = vpop.f32.mrb[0].mxu0
      %v2411 = vadd.f32 %v2200, %v2410
      %v2412 = vpop.f32.mrb[0].mxu0
      %2413 = vmatprep.mubr.bf16.mxu0 0
      %2414 = vmatmul.mubr.bf16.gmra.mrb[0].mxu0 %v2272
      %v2415 = vpop.f32.mrb[0].mxu0
      %v2416 = vadd.f32 %v2205, %v2415
      %v2417 = vpop.f32.mrb[0].mxu0
      %v2418 = vpop.f32.mrb[0].mxu0
      %v2419 = vadd.f32 %v2208, %v2418
      %v2420 = vpop.f32.mrb[0].mxu0
      %2421 = vmatprep.mubr.bf16.mxu0 0
      %2422 = vmatmul.mubr.bf16.gmra.mrb[0].mxu0 %v2274
      %v2423 = vpop.f32.mrb[0].mxu0
      %v2424 = vadd.f32 %v2213, %v2423
      %v2425 = vpop.f32.mrb[0].mxu0
      %v2426 = vpop.f32.mrb[0].mxu0
      %v2427 = vadd.f32 %v2216, %v2426
      %v2428 = vpop.f32.mrb[0].mxu0
      %2429 = vmatprep.mubr.bf16.mxu0 0
      %2430 = vmatmul.mubr.bf16.gmra.mrb[0].mxu0 %v2276
      %v2431 = vpop.f32.mrb[0].mxu0
      %v2432 = vadd.f32 %v2221, %v2431
      %v2433 = vpop.f32.mrb[0].mxu0
      %v2434 = vpop.f32.mrb[0].mxu0
      %v2435 = vadd.f32 %v2224, %v2434
      %v2436 = vpop.f32.mrb[0].mxu0
      %2437 = vmatprep.mubr.bf16.mxu0 0
      %2438 = vmatmul.mubr.bf16.gmra.mrb[0].mxu0 %v2278
      %v2439 = vpop.f32.mrb[0].mxu0
      %v2440 = vadd.f32 %v2229, %v2439
      %v2441 = vpop.f32.mrb[0].mxu0
      %v2442 = vpop.f32.mrb[0].mxu0
      %v2443 = vadd.f32 %v2232, %v2442
      %v2444 = vpop.f32.mrb[0].mxu0
      %2445 = vmatprep.mubr.bf16.mxu0 0
      %2446 = vmatmul.mubr.bf16.gmra.mrb[0].mxu0 %v2280
      %v2447 = vpop.f32.mrb[0].mxu0
      %v2448 = vadd.f32 %v2237, %v2447
      %v2449 = vpop.f32.mrb[0].mxu0
      %v2450 = vpop.f32.mrb[0].mxu0
      %v2451 = vadd.f32 %v2240, %v2450
      %v2452 = vpop.f32.mrb[0].mxu0
      %2453 = vdwg.mxu0
      %v2454 = vld [vmem:[%s892] sm:$0xf]
      %v2455 = vld [vmem:[%s892 + $0x4] sm:$0x3]
      %v2458 = vunpack.c.l.b16 %v1781
      %v2459 = vunpack.c.l.b16 %v1782
      %v2460 = vpack.c.b16 %v2458, %v1856
      %v2461 = vpack.c.b16 %v2459, %v2459
      %v2463 = vshll.u32 %v2460, 16
      %v2465 = vrot.slane %v2463, 1
      %v2466 = vsel %vm310, %v2009, %v2465
      %v2467 = vshrl.u32 %v2460, 16
      %v2469 = vor.u32 %v2467, %v2465
      %v2471 = vshll.u32 %v2461, 16
      %v2473 = vrot.slane %v2471, 1
      %v2474 = vsel %vm310, %v2469, %v2473
      %v2477 = vunpack.c.l.b16 %v2454
      %v2478 = vunpack.c.l.b16 %v2455
      %v2479 = vpack.c.b16 %v2478, %v2477
      %v2481 = vsel %vm456, %v2466, 0
      %v2484 = vsel %vm456, %v2474, 0
      %v2487 = vsel %vm508, %v2479, 0
      %2489 = vmatprep.subr.bf16.mxu0 0
      %2490 = vmatpush1.bf16.msra.mxu0 %v2487
      %2491 = vmatprep.subr.bf16.mxu0 0
      %2492 = vmatpush1.bf16.msra.mxu0 0
      %2493 = vmatprep.subr.bf16.mxu0 0
      %2494 = vmatpush1.bf16.msra.mxu0 0
      %2495 = vmatprep.subr.bf16.mxu0 0
      %2496 = vmatpush1.bf16.msra.mxu0 0
      %2497 = vmatprep.subr.bf16.mxu0 0
      %2498 = vmatpush1.bf16.msra.mxu0 0
      %2499 = vmatprep.subr.bf16.mxu0 0
      %2500 = vmatpush1.bf16.msra.mxu0 0
      %2501 = vmatprep.subr.bf16.mxu0 0
      %2502 = vmatpush1.bf16.msra.mxu0 0
      %2503 = vmatprep.subr.bf16.mxu0 0
      %2504 = vmatpush1.bf16.msra.mxu0 0
      %2505 = vmatprep.subr.bf16.mxu0 0
      %2506 = vmatpush1.bf16.msra.mxu0 0
      %2507 = vmatprep.subr.bf16.mxu0 0
      %2508 = vmatpush1.bf16.msra.mxu0 0
      %2509 = vmatprep.subr.bf16.mxu0 0
      %2510 = vmatpush1.bf16.msra.mxu0 0
      %2511 = vmatprep.subr.bf16.mxu0 0
      %2512 = vmatpush1.bf16.msra.mxu0 0
      %2513 = vmatprep.subr.bf16.mxu0 0
      %2514 = vmatpush1.bf16.msra.mxu0 0
      %2515 = vmatprep.subr.bf16.mxu0 0
      %2516 = vmatpush1.bf16.msra.mxu0 0
      %2517 = vmatprep.subr.bf16.mxu0 0
      %2518 = vmatpush1.bf16.msra.mxu0 0
      %2519 = vmatprep.subr.bf16.mxu0 0
      %2520 = vmatpush1.bf16.msra.mxu0 0
      %2521 = vmatprep.mubr.bf16.mxu0 0
      %2522 = vmatmul.mubr.bf16.gmra.mrb[0].mxu0 %v2024
      %v2523 = vpop.f32.mrb[0].mxu0
      %v2524 = vadd.f32 0.0, %v2523
      %v2525 = vpop.f32.mrb[0].mxu0
      %v2526 = vpop.f32.mrb[0].mxu0
      %v2527 = vadd.f32 0.0, %v2526
      %v2528 = vpop.f32.mrb[0].mxu0
      %2529 = vmatprep.mubr.bf16.mxu0 0
      %2530 = vmatmul.mubr.bf16.gmra.mrb[0].mxu0 %v2027
      %v2531 = vpop.f32.mrb[0].mxu0
      %v2532 = vadd.f32 0.0, %v2531
      %v2533 = vpop.f32.mrb[0].mxu0
      %v2534 = vpop.f32.mrb[0].mxu0
      %v2535 = vadd.f32 0.0, %v2534
      %v2536 = vpop.f32.mrb[0].mxu0
      %2537 = vmatprep.mubr.bf16.mxu0 0
      %2538 = vmatmul.mubr.bf16.gmra.mrb[0].mxu0 %v2030
      %v2539 = vpop.f32.mrb[0].mxu0
      %v2540 = vadd.f32 0.0, %v2539
      %v2541 = vpop.f32.mrb[0].mxu0
      %v2542 = vpop.f32.mrb[0].mxu0
      %v2543 = vadd.f32 0.0, %v2542
      %v2544 = vpop.f32.mrb[0].mxu0
      %2545 = vmatprep.mubr.bf16.mxu0 0
      %2546 = vmatmul.mubr.bf16.gmra.mrb[0].mxu0 %v2033
      %v2547 = vpop.f32.mrb[0].mxu0
      %v2548 = vadd.f32 0.0, %v2547
      %v2549 = vpop.f32.mrb[0].mxu0
      %v2550 = vpop.f32.mrb[0].mxu0
      %v2551 = vadd.f32 0.0, %v2550
      %v2552 = vpop.f32.mrb[0].mxu0
      %2553 = vmatprep.mubr.bf16.mxu0 0
      %2554 = vmatmul.mubr.bf16.gmra.mrb[0].mxu0 %v2036
      %v2555 = vpop.f32.mrb[0].mxu0
      %v2556 = vadd.f32 0.0, %v2555
      %v2557 = vpop.f32.mrb[0].mxu0
      %v2558 = vpop.f32.mrb[0].mxu0
      %v2559 = vadd.f32 0.0, %v2558
      %v2560 = vpop.f32.mrb[0].mxu0
      %2561 = vmatprep.mubr.bf16.mxu0 0
      %2562 = vmatmul.mubr.bf16.gmra.mrb[0].mxu0 %v2039
      %v2563 = vpop.f32.mrb[0].mxu0
      %v2564 = vadd.f32 0.0, %v2563
      %v2565 = vpop.f32.mrb[0].mxu0
      %v2566 = vpop.f32.mrb[0].mxu0
      %v2567 = vadd.f32 0.0, %v2566
      %v2568 = vpop.f32.mrb[0].mxu0
      %2569 = vmatprep.mubr.bf16.mxu0 0
      %2570 = vmatmul.mubr.bf16.gmra.mrb[0].mxu0 %v2042
      %v2571 = vpop.f32.mrb[0].mxu0
      %v2572 = vadd.f32 0.0, %v2571
      %v2573 = vpop.f32.mrb[0].mxu0
      %v2574 = vpop.f32.mrb[0].mxu0
      %v2575 = vadd.f32 0.0, %v2574
      %v2576 = vpop.f32.mrb[0].mxu0
      %2577 = vmatprep.mubr.bf16.mxu0 0
      %2578 = vmatmul.mubr.bf16.gmra.mrb[0].mxu0 %v2045
      %v2579 = vpop.f32.mrb[0].mxu0
      %v2580 = vadd.f32 0.0, %v2579
      %v2581 = vpop.f32.mrb[0].mxu0
      %v2582 = vpop.f32.mrb[0].mxu0
      %v2583 = vadd.f32 0.0, %v2582
      %v2584 = vpop.f32.mrb[0].mxu0
      %2585 = vmatprep.mubr.bf16.mxu0 0
      %2586 = vmatmul.mubr.bf16.gmra.mrb[0].mxu0 %v2048
      %v2587 = vpop.f32.mrb[0].mxu0
      %v2588 = vadd.f32 0.0, %v2587
      %v2589 = vpop.f32.mrb[0].mxu0
      %v2590 = vpop.f32.mrb[0].mxu0
      %v2591 = vadd.f32 0.0, %v2590
      %v2592 = vpop.f32.mrb[0].mxu0
      %2593 = vmatprep.mubr.bf16.mxu0 0
      %2594 = vmatmul.mubr.bf16.gmra.mrb[0].mxu0 %v2051
      %v2595 = vpop.f32.mrb[0].mxu0
      %v2596 = vadd.f32 0.0, %v2595
      %v2597 = vpop.f32.mrb[0].mxu0
      %v2598 = vpop.f32.mrb[0].mxu0
      %v2599 = vadd.f32 0.0, %v2598
      %v2600 = vpop.f32.mrb[0].mxu0
      %2601 = vmatprep.mubr.bf16.mxu0 0
      %2602 = vmatmul.mubr.bf16.gmra.mrb[0].mxu0 %v2054
      %v2603 = vpop.f32.mrb[0].mxu0
      %v2604 = vadd.f32 0.0, %v2603
      %v2605 = vpop.f32.mrb[0].mxu0
      %v2606 = vpop.f32.mrb[0].mxu0
      %v2607 = vadd.f32 0.0, %v2606
      %v2608 = vpop.f32.mrb[0].mxu0
      %2609 = vmatprep.mubr.bf16.mxu0 0
      %2610 = vmatmul.mubr.bf16.gmra.mrb[0].mxu0 %v2057
      %v2611 = vpop.f32.mrb[0].mxu0
      %v2612 = vadd.f32 0.0, %v2611
      %v2613 = vpop.f32.mrb[0].mxu0
      %v2614 = vpop.f32.mrb[0].mxu0
      %v2615 = vadd.f32 0.0, %v2614
      %v2616 = vpop.f32.mrb[0].mxu0
      %2617 = vmatprep.mubr.bf16.mxu0 0
      %2618 = vmatmul.mubr.bf16.gmra.mrb[0].mxu0 %v2060
      %v2619 = vpop.f32.mrb[0].mxu0
      %v2620 = vadd.f32 0.0, %v2619
      %v2621 = vpop.f32.mrb[0].mxu0
      %v2622 = vpop.f32.mrb[0].mxu0
      %v2623 = vadd.f32 0.0, %v2622
      %v2624 = vpop.f32.mrb[0].mxu0
      %2625 = vmatprep.mubr.bf16.mxu0 0
      %2626 = vmatmul.mubr.bf16.gmra.mrb[0].mxu0 %v2063
      %v2627 = vpop.f32.mrb[0].mxu0
      %v2628 = vadd.f32 0.0, %v2627
      %v2629 = vpop.f32.mrb[0].mxu0
      %v2630 = vpop.f32.mrb[0].mxu0
      %v2631 = vadd.f32 0.0, %v2630
      %v2632 = vpop.f32.mrb[0].mxu0
      %2633 = vmatprep.mubr.bf16.mxu0 0
      %2634 = vmatmul.mubr.bf16.gmra.mrb[0].mxu0 %v2066
      %v2635 = vpop.f32.mrb[0].mxu0
      %v2636 = vadd.f32 0.0, %v2635
      %v2637 = vpop.f32.mrb[0].mxu0
      %v2638 = vpop.f32.mrb[0].mxu0
      %v2639 = vadd.f32 0.0, %v2638
      %v2640 = vpop.f32.mrb[0].mxu0
      %2641 = vmatprep.mubr.bf16.mxu0 0
      %2642 = vmatmul.mubr.bf16.gmra.mrb[0].mxu0 %v2481
      %v2643 = vpop.f32.mrb[0].mxu0
      %v2644 = vadd.f32 0.0, %v2643
      %v2645 = vpop.f32.mrb[0].mxu0
      %v2646 = vpop.f32.mrb[0].mxu0
      %v2647 = vadd.f32 0.0, %v2646
      %v2648 = vpop.f32.mrb[0].mxu0
      %2649 = vmatprep.mubr.bf16.mxu0 0
      %2650 = vmatmul.mubr.bf16.gmra.mrb[0].mxu0 %v2484
      %v2651 = vpop.f32.mrb[0].mxu0
      %v2652 = vadd.f32 0.0, %v2651
      %v2653 = vpop.f32.mrb[0].mxu0
      %v2654 = vpop.f32.mrb[0].mxu0
      %v2655 = vadd.f32 0.0, %v2654
      %v2656 = vpop.f32.mrb[0].mxu0
      %2657 = vdwg.mxu0
      %v2658 = vadd.f32 %v2320, %v2524
      %v2659 = vadd.f32 %v2323, %v2527
      %v2660 = vadd.f32 %v2328, %v2532
      %v2661 = vadd.f32 %v2331, %v2535
      %v2662 = vadd.f32 %v2336, %v2540
      %v2663 = vadd.f32 %v2339, %v2543
      %v2664 = vadd.f32 %v2344, %v2548
      %v2665 = vadd.f32 %v2347, %v2551
      %v2666 = vadd.f32 %v2352, %v2556
      %v2667 = vadd.f32 %v2355, %v2559
      %v2668 = vadd.f32 %v2360, %v2564
      %v2669 = vadd.f32 %v2363, %v2567
      %v2670 = vadd.f32 %v2368, %v2572
      %v2671 = vadd.f32 %v2371, %v2575
      %v2672 = vadd.f32 %v2376, %v2580
      %v2673 = vadd.f32 %v2379, %v2583
      %v2674 = vadd.f32 %v2384, %v2588
      %v2675 = vadd.f32 %v2387, %v2591
      %v2676 = vadd.f32 %v2392, %v2596
      %v2677 = vadd.f32 %v2395, %v2599
      %v2678 = vadd.f32 %v2400, %v2604
      %v2679 = vadd.f32 %v2403, %v2607
      %v2680 = vadd.f32 %v2408, %v2612
      %v2681 = vadd.f32 %v2411, %v2615
      %v2682 = vadd.f32 %v2416, %v2620
      %v2683 = vadd.f32 %v2419, %v2623
      %v2684 = vadd.f32 %v2424, %v2628
      %v2685 = vadd.f32 %v2427, %v2631
      %v2686 = vadd.f32 %v2432, %v2636
      %v2687 = vadd.f32 %v2435, %v2639
      %v2688 = vadd.f32 %v2440, %v2644
      %v2689 = vadd.f32 %v2443, %v2647
      %v2690 = vadd.f32 %v2448, %v2652
      %v2691 = vadd.f32 %v2451, %v2655
      %v2692 = vld [vmem:[%s1131] sm:$0xf]
      %v2693 = vld [vmem:[%s1131 + $0x4] sm:$0x3]
      %v2694 = vrot.slane %v1858, 1
      %v2695 = vrot.slane %v1859, 1
      %v2696 = vsel %vm1134, %v2694, %v2695
      %v2697 = vrot.slane %v1860, 1
      %v2698 = vsel %vm1134, %v2695, %v2697
      %v2699 = vrot.slane %v1861, 1
      %v2700 = vsel %vm1134, %v2697, %v2699
      %v2701 = vrot.slane %v1862, 1
      %v2702 = vsel %vm1134, %v2699, %v2701
      %v2703 = vrot.slane %v1863, 1
      %v2704 = vsel %vm1134, %v2701, %v2703
      %v2705 = vrot.slane %v1864, 1
      %v2706 = vsel %vm1134, %v2703, %v2705
      %v2707 = vrot.slane %v1865, 1
      %v2708 = vsel %vm1134, %v2705, %v2707
      %v2709 = vrot.slane %v1866, 1
      %v2710 = vsel %vm1134, %v2707, %v2709
      %v2711 = vrot.slane %v1867, 1
      %v2712 = vsel %vm1134, %v2709, %v2711
      %v2713 = vrot.slane %v1868, 1
      %v2714 = vsel %vm1134, %v2711, %v2713
      %v2715 = vrot.slane %v1869, 1
      %v2716 = vsel %vm1134, %v2713, %v2715
      %v2717 = vrot.slane %v1870, 1
      %v2718 = vsel %vm1134, %v2715, %v2717
      %v2719 = vrot.slane %v1871, 1
      %v2720 = vsel %vm1134, %v2717, %v2719
      %v2721 = vrot.slane %v1872, 1
      %v2722 = vsel %vm1134, %v2719, %v2721
      %v2723 = vrot.slane %v1873, 1
      %v2724 = vsel %vm1134, %v2721, %v2723
      %v2725 = vrot.slane %v2460, 1
      %v2726 = vsel %vm1134, %v2723, %v2725
      %v2727 = vrot.slane %v2461, 1
      %v2728 = vsel %vm1134, %v2725, %v2727
      %v2731 = vunpack.c.l.b16 %v2692
      %v2732 = vunpack.c.l.b16 %v2693
      %v2733 = vpack.c.b16 %v2732, %v2731
      %v2735 = vsel %vm456, %v2696, 0
      %v2738 = vsel %vm456, %v2698, 0
      %v2741 = vsel %vm456, %v2700, 0
      %v2744 = vsel %vm456, %v2702, 0
      %v2747 = vsel %vm456, %v2704, 0
      %v2750 = vsel %vm456, %v2706, 0
      %v2753 = vsel %vm456, %v2708, 0
      %v2756 = vsel %vm456, %v2710, 0
      %v2759 = vsel %vm456, %v2712, 0
      %v2762 = vsel %vm456, %v2714, 0
      %v2765 = vsel %vm456, %v2716, 0
      %v2768 = vsel %vm456, %v2718, 0
      %v2771 = vsel %vm456, %v2720, 0
      %v2774 = vsel %vm456, %v2722, 0
      %v2777 = vsel %vm456, %v2724, 0
      %v2780 = vsel %vm456, %v2726, 0
      %v2783 = vsel %vm456, %v2728, 0
      %v2786 = vsel %vm508, %v2733, 0
      %2788 = vmatprep.subr.bf16.mxu0 0
      %2789 = vmatpush1.bf16.msra.mxu0 %v2786
      %2790 = vmatprep.subr.bf16.mxu0 0
      %2791 = vmatpush1.bf16.msra.mxu0 0
      %2792 = vmatprep.subr.bf16.mxu0 0
      %2793 = vmatpush1.bf16.msra.mxu0 0
      %2794 = vmatprep.subr.bf16.mxu0 0
      %2795 = vmatpush1.bf16.msra.mxu0 0
      %2796 = vmatprep.subr.bf16.mxu0 0
      %2797 = vmatpush1.bf16.msra.mxu0 0
      %2798 = vmatprep.subr.bf16.mxu0 0
      %2799 = vmatpush1.bf16.msra.mxu0 0
      %2800 = vmatprep.subr.bf16.mxu0 0
      %2801 = vmatpush1.bf16.msra.mxu0 0
      %2802 = vmatprep.subr.bf16.mxu0 0
      %2803 = vmatpush1.bf16.msra.mxu0 0
      %2804 = vmatprep.subr.bf16.mxu0 0
      %2805 = vmatpush1.bf16.msra.mxu0 0
      %2806 = vmatprep.subr.bf16.mxu0 0
      %2807 = vmatpush1.bf16.msra.mxu0 0
      %2808 = vmatprep.subr.bf16.mxu0 0
      %2809 = vmatpush1.bf16.msra.mxu0 0
      %2810 = vmatprep.subr.bf16.mxu0 0
      %2811 = vmatpush1.bf16.msra.mxu0 0
      %2812 = vmatprep.subr.bf16.mxu0 0
      %2813 = vmatpush1.bf16.msra.mxu0 0
      %2814 = vmatprep.subr.bf16.mxu0 0
      %2815 = vmatpush1.bf16.msra.mxu0 0
      %2816 = vmatprep.subr.bf16.mxu0 0
      %2817 = vmatpush1.bf16.msra.mxu0 0
      %2818 = vmatprep.subr.bf16.mxu0 0
      %2819 = vmatpush1.bf16.msra.mxu0 0
      %2820 = vmatprep.mubr.bf16.mxu0 0
      %2821 = vmatmul.mubr.bf16.gmra.mrb[0].mxu0 %v2735
      %v2822 = vpop.f32.mrb[0].mxu0
      %v2823 = vadd.f32 0.0, %v2822
      %v2824 = vpop.f32.mrb[0].mxu0
      %v2825 = vpop.f32.mrb[0].mxu0
      %v2826 = vadd.f32 0.0, %v2825
      %v2827 = vpop.f32.mrb[0].mxu0
      %2828 = vmatprep.mubr.bf16.mxu0 0
      %2829 = vmatmul.mubr.bf16.gmra.mrb[0].mxu0 %v2738
      %v2830 = vpop.f32.mrb[0].mxu0
      %v2831 = vadd.f32 0.0, %v2830
      %v2832 = vpop.f32.mrb[0].mxu0
      %v2833 = vpop.f32.mrb[0].mxu0
      %v2834 = vadd.f32 0.0, %v2833
      %v2835 = vpop.f32.mrb[0].mxu0
      %2836 = vmatprep.mubr.bf16.mxu0 0
      %2837 = vmatmul.mubr.bf16.gmra.mrb[0].mxu0 %v2741
      %v2838 = vpop.f32.mrb[0].mxu0
      %v2839 = vadd.f32 0.0, %v2838
      %v2840 = vpop.f32.mrb[0].mxu0
      %v2841 = vpop.f32.mrb[0].mxu0
      %v2842 = vadd.f32 0.0, %v2841
      %v2843 = vpop.f32.mrb[0].mxu0
      %2844 = vmatprep.mubr.bf16.mxu0 0
      %2845 = vmatmul.mubr.bf16.gmra.mrb[0].mxu0 %v2744
      %v2846 = vpop.f32.mrb[0].mxu0
      %v2847 = vadd.f32 0.0, %v2846
      %v2848 = vpop.f32.mrb[0].mxu0
      %v2849 = vpop.f32.mrb[0].mxu0
      %v2850 = vadd.f32 0.0, %v2849
      %v2851 = vpop.f32.mrb[0].mxu0
      %2852 = vmatprep.mubr.bf16.mxu0 0
      %2853 = vmatmul.mubr.bf16.gmra.mrb[0].mxu0 %v2747
      %v2854 = vpop.f32.mrb[0].mxu0
      %v2855 = vadd.f32 0.0, %v2854
      %v2856 = vpop.f32.mrb[0].mxu0
      %v2857 = vpop.f32.mrb[0].mxu0
      %v2858 = vadd.f32 0.0, %v2857
      %v2859 = vpop.f32.mrb[0].mxu0
      %2860 = vmatprep.mubr.bf16.mxu0 0
      %2861 = vmatmul.mubr.bf16.gmra.mrb[0].mxu0 %v2750
      %v2862 = vpop.f32.mrb[0].mxu0
      %v2863 = vadd.f32 0.0, %v2862
      %v2864 = vpop.f32.mrb[0].mxu0
      %v2865 = vpop.f32.mrb[0].mxu0
      %v2866 = vadd.f32 0.0, %v2865
      %v2867 = vpop.f32.mrb[0].mxu0
      %2868 = vmatprep.mubr.bf16.mxu0 0
      %2869 = vmatmul.mubr.bf16.gmra.mrb[0].mxu0 %v2753
      %v2870 = vpop.f32.mrb[0].mxu0
      %v2871 = vadd.f32 0.0, %v2870
      %v2872 = vpop.f32.mrb[0].mxu0
      %v2873 = vpop.f32.mrb[0].mxu0
      %v2874 = vadd.f32 0.0, %v2873
      %v2875 = vpop.f32.mrb[0].mxu0
      %2876 = vmatprep.mubr.bf16.mxu0 0
      %2877 = vmatmul.mubr.bf16.gmra.mrb[0].mxu0 %v2756
      %v2878 = vpop.f32.mrb[0].mxu0
      %v2879 = vadd.f32 0.0, %v2878
      %v2880 = vpop.f32.mrb[0].mxu0
      %v2881 = vpop.f32.mrb[0].mxu0
      %v2882 = vadd.f32 0.0, %v2881
      %v2883 = vpop.f32.mrb[0].mxu0
      %2884 = vmatprep.mubr.bf16.mxu0 0
      %2885 = vmatmul.mubr.bf16.gmra.mrb[0].mxu0 %v2759
      %v2886 = vpop.f32.mrb[0].mxu0
      %v2887 = vadd.f32 0.0, %v2886
      %v2888 = vpop.f32.mrb[0].mxu0
      %v2889 = vpop.f32.mrb[0].mxu0
      %v2890 = vadd.f32 0.0, %v2889
      %v2891 = vpop.f32.mrb[0].mxu0
      %2892 = vmatprep.mubr.bf16.mxu0 0
      %2893 = vmatmul.mubr.bf16.gmra.mrb[0].mxu0 %v2762
      %v2894 = vpop.f32.mrb[0].mxu0
      %v2895 = vadd.f32 0.0, %v2894
      %v2896 = vpop.f32.mrb[0].mxu0
      %v2897 = vpop.f32.mrb[0].mxu0
      %v2898 = vadd.f32 0.0, %v2897
      %v2899 = vpop.f32.mrb[0].mxu0
      %2900 = vmatprep.mubr.bf16.mxu0 0
      %2901 = vmatmul.mubr.bf16.gmra.mrb[0].mxu0 %v2765
      %v2902 = vpop.f32.mrb[0].mxu0
      %v2903 = vadd.f32 0.0, %v2902
      %v2904 = vpop.f32.mrb[0].mxu0
      %v2905 = vpop.f32.mrb[0].mxu0
      %v2906 = vadd.f32 0.0, %v2905
      %v2907 = vpop.f32.mrb[0].mxu0
      %2908 = vmatprep.mubr.bf16.mxu0 0
      %2909 = vmatmul.mubr.bf16.gmra.mrb[0].mxu0 %v2768
      %v2910 = vpop.f32.mrb[0].mxu0
      %v2911 = vadd.f32 0.0, %v2910
      %v2912 = vpop.f32.mrb[0].mxu0
      %v2913 = vpop.f32.mrb[0].mxu0
      %v2914 = vadd.f32 0.0, %v2913
      %v2915 = vpop.f32.mrb[0].mxu0
      %2916 = vmatprep.mubr.bf16.mxu0 0
      %2917 = vmatmul.mubr.bf16.gmra.mrb[0].mxu0 %v2771
      %v2918 = vpop.f32.mrb[0].mxu0
      %v2919 = vadd.f32 0.0, %v2918
      %v2920 = vpop.f32.mrb[0].mxu0
      %v2921 = vpop.f32.mrb[0].mxu0
      %v2922 = vadd.f32 0.0, %v2921
      %v2923 = vpop.f32.mrb[0].mxu0
      %2924 = vmatprep.mubr.bf16.mxu0 0
      %2925 = vmatmul.mubr.bf16.gmra.mrb[0].mxu0 %v2774
      %v2926 = vpop.f32.mrb[0].mxu0
      %v2927 = vadd.f32 0.0, %v2926
      %v2928 = vpop.f32.mrb[0].mxu0
      %v2929 = vpop.f32.mrb[0].mxu0
      %v2930 = vadd.f32 0.0, %v2929
      %v2931 = vpop.f32.mrb[0].mxu0
      %2932 = vmatprep.mubr.bf16.mxu0 0
      %2933 = vmatmul.mubr.bf16.gmra.mrb[0].mxu0 %v2777
      %v2934 = vpop.f32.mrb[0].mxu0
      %v2935 = vadd.f32 0.0, %v2934
      %v2936 = vpop.f32.mrb[0].mxu0
      %v2937 = vpop.f32.mrb[0].mxu0
      %v2938 = vadd.f32 0.0, %v2937
      %v2939 = vpop.f32.mrb[0].mxu0
      %2940 = vmatprep.mubr.bf16.mxu0 0
      %2941 = vmatmul.mubr.bf16.gmra.mrb[0].mxu0 %v2780
      %v2942 = vpop.f32.mrb[0].mxu0
      %v2943 = vadd.f32 0.0, %v2942
      %v2944 = vpop.f32.mrb[0].mxu0
      %v2945 = vpop.f32.mrb[0].mxu0
      %v2946 = vadd.f32 0.0, %v2945
      %v2947 = vpop.f32.mrb[0].mxu0
      %2948 = vmatprep.mubr.bf16.mxu0 0
      %2949 = vmatmul.mubr.bf16.gmra.mrb[0].mxu0 %v2783
      %v2950 = vpop.f32.mrb[0].mxu0
      %v2951 = vadd.f32 0.0, %v2950
      %v2952 = vpop.f32.mrb[0].mxu0
      %v2953 = vpop.f32.mrb[0].mxu0
      %v2954 = vadd.f32 0.0, %v2953
      %v2955 = vpop.f32.mrb[0].mxu0
      %2956 = vdwg.mxu0
      %v2957 = vadd.f32 %v2658, %v2823
      %v2958 = vadd.f32 %v2659, %v2826
      %v2959 = vadd.f32 %v2660, %v2831
      %v2960 = vadd.f32 %v2661, %v2834
      %v2961 = vadd.f32 %v2662, %v2839
      %v2962 = vadd.f32 %v2663, %v2842
      %v2963 = vadd.f32 %v2664, %v2847
      %v2964 = vadd.f32 %v2665, %v2850
      %v2965 = vadd.f32 %v2666, %v2855
      %v2966 = vadd.f32 %v2667, %v2858
      %v2967 = vadd.f32 %v2668, %v2863
      %v2968 = vadd.f32 %v2669, %v2866
      %v2969 = vadd.f32 %v2670, %v2871
      %v2970 = vadd.f32 %v2671, %v2874
      %v2971 = vadd.f32 %v2672, %v2879
      %v2972 = vadd.f32 %v2673, %v2882
      %v2973 = vadd.f32 %v2674, %v2887
      %v2974 = vadd.f32 %v2675, %v2890
      %v2975 = vadd.f32 %v2676, %v2895
      %v2976 = vadd.f32 %v2677, %v2898
      %v2977 = vadd.f32 %v2678, %v2903
      %v2978 = vadd.f32 %v2679, %v2906
      %v2979 = vadd.f32 %v2680, %v2911
      %v2980 = vadd.f32 %v2681, %v2914
      %v2981 = vadd.f32 %v2682, %v2919
      %v2982 = vadd.f32 %v2683, %v2922
      %v2983 = vadd.f32 %v2684, %v2927
      %v2984 = vadd.f32 %v2685, %v2930
      %v2985 = vadd.f32 %v2686, %v2935
      %v2986 = vadd.f32 %v2687, %v2938
      %v2987 = vadd.f32 %v2688, %v2943
      %v2988 = vadd.f32 %v2689, %v2946
      %v2989 = vadd.f32 %v2690, %v2951
      %v2990 = vadd.f32 %v2691, %v2954
      %v2991 = vld [vmem:[%s2] sm:$0x1]
      %v2993 = vlaneseq
      %v2994 = vshrl.u32 %v2993, 7
      %v2995 = vsub.s32 0, %v2994
      %v2996 = vrot.slane %v2991, %v2995
      %v2998 = vadd.f32 %v2957, %v2996
      %v2999 = vadd.f32 %v2958, %v2996
      %v3000 = vadd.f32 %v2959, %v2996
      %v3001 = vadd.f32 %v2960, %v2996
      %v3002 = vadd.f32 %v2961, %v2996
      %v3003 = vadd.f32 %v2962, %v2996
      %v3004 = vadd.f32 %v2963, %v2996
      %v3005 = vadd.f32 %v2964, %v2996
      %v3006 = vadd.f32 %v2965, %v2996
      %v3007 = vadd.f32 %v2966, %v2996
      %v3008 = vadd.f32 %v2967, %v2996
      %v3009 = vadd.f32 %v2968, %v2996
      %v3010 = vadd.f32 %v2969, %v2996
      %v3011 = vadd.f32 %v2970, %v2996
      %v3012 = vadd.f32 %v2971, %v2996
      %v3013 = vadd.f32 %v2972, %v2996
      %v3014 = vadd.f32 %v2973, %v2996
      %v3015 = vadd.f32 %v2974, %v2996
      %v3016 = vadd.f32 %v2975, %v2996
      %v3017 = vadd.f32 %v2976, %v2996
      %v3018 = vadd.f32 %v2977, %v2996
      %v3019 = vadd.f32 %v2978, %v2996
      %v3020 = vadd.f32 %v2979, %v2996
      %v3021 = vadd.f32 %v2980, %v2996
      %v3022 = vadd.f32 %v2981, %v2996
      %v3023 = vadd.f32 %v2982, %v2996
      %v3024 = vadd.f32 %v2983, %v2996
      %v3025 = vadd.f32 %v2984, %v2996
      %v3026 = vadd.f32 %v2985, %v2996
      %v3027 = vadd.f32 %v2986, %v2996
      %v3028 = vadd.f32 %v2987, %v2996
      %v3029 = vadd.f32 %v2988, %v2996
      %v3030 = vadd.f32 %v2989, %v2996
      %v3031 = vadd.f32 %v2990, %v2996
      %vm3032 = vcmp.ge.f32.partialorder %v2998, 0.0
      %vm3033 = vcmp.ge.f32.partialorder %v2999, 0.0
      %vm3034 = vcmp.ge.f32.partialorder %v3000, 0.0
      %vm3035 = vcmp.ge.f32.partialorder %v3001, 0.0
      %vm3036 = vcmp.ge.f32.partialorder %v3002, 0.0
      %vm3037 = vcmp.ge.f32.partialorder %v3003, 0.0
      %vm3038 = vcmp.ge.f32.partialorder %v3004, 0.0
      %vm3039 = vcmp.ge.f32.partialorder %v3005, 0.0
      %vm3040 = vcmp.ge.f32.partialorder %v3006, 0.0
      %vm3041 = vcmp.ge.f32.partialorder %v3007, 0.0
      %vm3042 = vcmp.ge.f32.partialorder %v3008, 0.0
      %vm3043 = vcmp.ge.f32.partialorder %v3009, 0.0
      %vm3044 = vcmp.ge.f32.partialorder %v3010, 0.0
      %vm3045 = vcmp.ge.f32.partialorder %v3011, 0.0
      %vm3046 = vcmp.ge.f32.partialorder %v3012, 0.0
      %vm3047 = vcmp.ge.f32.partialorder %v3013, 0.0
      %vm3048 = vcmp.ge.f32.partialorder %v3014, 0.0
      %vm3049 = vcmp.ge.f32.partialorder %v3015, 0.0
      %vm3050 = vcmp.ge.f32.partialorder %v3016, 0.0
      %vm3051 = vcmp.ge.f32.partialorder %v3017, 0.0
      %vm3052 = vcmp.ge.f32.partialorder %v3018, 0.0
      %vm3053 = vcmp.ge.f32.partialorder %v3019, 0.0
      %vm3054 = vcmp.ge.f32.partialorder %v3020, 0.0
      %vm3055 = vcmp.ge.f32.partialorder %v3021, 0.0
      %vm3056 = vcmp.ge.f32.partialorder %v3022, 0.0
      %vm3057 = vcmp.ge.f32.partialorder %v3023, 0.0
      %vm3058 = vcmp.ge.f32.partialorder %v3024, 0.0
      %vm3059 = vcmp.ge.f32.partialorder %v3025, 0.0
      %vm3060 = vcmp.ge.f32.partialorder %v3026, 0.0
      %vm3061 = vcmp.ge.f32.partialorder %v3027, 0.0
      %vm3062 = vcmp.ge.f32.partialorder %v3028, 0.0
      %vm3063 = vcmp.ge.f32.partialorder %v3029, 0.0
      %vm3064 = vcmp.ge.f32.partialorder %v3030, 0.0
      %vm3065 = vcmp.ge.f32.partialorder %v3031, 0.0
      %v3066 = vmul.f32 %v2998, 0.2
      %v3067 = vmul.f32 %v2999, 0.2
      %v3068 = vmul.f32 %v3000, 0.2
      %v3069 = vmul.f32 %v3001, 0.2
      %v3070 = vmul.f32 %v3002, 0.2
      %v3071 = vmul.f32 %v3003, 0.2
      %v3072 = vmul.f32 %v3004, 0.2
      %v3073 = vmul.f32 %v3005, 0.2
      %v3074 = vmul.f32 %v3006, 0.2
      %v3075 = vmul.f32 %v3007, 0.2
      %v3076 = vmul.f32 %v3008, 0.2
      %v3077 = vmul.f32 %v3009, 0.2
      %v3078 = vmul.f32 %v3010, 0.2
      %v3079 = vmul.f32 %v3011, 0.2
      %v3080 = vmul.f32 %v3012, 0.2
      %v3081 = vmul.f32 %v3013, 0.2
      %v3082 = vmul.f32 %v3014, 0.2
      %v3083 = vmul.f32 %v3015, 0.2
      %v3084 = vmul.f32 %v3016, 0.2
      %v3085 = vmul.f32 %v3017, 0.2
      %v3086 = vmul.f32 %v3018, 0.2
      %v3087 = vmul.f32 %v3019, 0.2
      %v3088 = vmul.f32 %v3020, 0.2
      %v3089 = vmul.f32 %v3021, 0.2
      %v3090 = vmul.f32 %v3022, 0.2
      %v3091 = vmul.f32 %v3023, 0.2
      %v3092 = vmul.f32 %v3024, 0.2
      %v3093 = vmul.f32 %v3025, 0.2
      %v3094 = vmul.f32 %v3026, 0.2
      %v3095 = vmul.f32 %v3027, 0.2
      %v3096 = vmul.f32 %v3028, 0.2
      %v3097 = vmul.f32 %v3029, 0.2
      %v3098 = vmul.f32 %v3030, 0.2
      %v3099 = vmul.f32 %v3031, 0.2
      %v3100 = vsel %vm3032, %v2998, %v3066
      %v3101 = vsel %vm3033, %v2999, %v3067
      %v3102 = vsel %vm3034, %v3000, %v3068
      %v3103 = vsel %vm3035, %v3001, %v3069
      %v3104 = vsel %vm3036, %v3002, %v3070
      %v3105 = vsel %vm3037, %v3003, %v3071
      %v3106 = vsel %vm3038, %v3004, %v3072
      %v3107 = vsel %vm3039, %v3005, %v3073
      %v3108 = vsel %vm3040, %v3006, %v3074
      %v3109 = vsel %vm3041, %v3007, %v3075
      %v3110 = vsel %vm3042, %v3008, %v3076
      %v3111 = vsel %vm3043, %v3009, %v3077
      %v3112 = vsel %vm3044, %v3010, %v3078
      %v3113 = vsel %vm3045, %v3011, %v3079
      %v3114 = vsel %vm3046, %v3012, %v3080
      %v3115 = vsel %vm3047, %v3013, %v3081
      %v3116 = vsel %vm3048, %v3014, %v3082
      %v3117 = vsel %vm3049, %v3015, %v3083
      %v3118 = vsel %vm3050, %v3016, %v3084
      %v3119 = vsel %vm3051, %v3017, %v3085
      %v3120 = vsel %vm3052, %v3018, %v3086
      %v3121 = vsel %vm3053, %v3019, %v3087
      %v3122 = vsel %vm3054, %v3020, %v3088
      %v3123 = vsel %vm3055, %v3021, %v3089
      %v3124 = vsel %vm3056, %v3022, %v3090
      %v3125 = vsel %vm3057, %v3023, %v3091
      %v3126 = vsel %vm3058, %v3024, %v3092
      %v3127 = vsel %vm3059, %v3025, %v3093
      %v3128 = vsel %vm3060, %v3026, %v3094
      %v3129 = vsel %vm3061, %v3027, %v3095
      %v3130 = vsel %vm3062, %v3028, %v3096
      %v3131 = vsel %vm3063, %v3029, %v3097
      %v3132 = vsel %vm3064, %v3030, %v3098
      %v3133 = vsel %vm3065, %v3031, %v3099
      %v3134 = vpack.c.bf16 %v3101, %v3100
      %v3135 = vpack.c.bf16 %v3103, %v3102
      %v3136 = vpack.c.bf16 %v3105, %v3104
      %v3137 = vpack.c.bf16 %v3107, %v3106
      %v3138 = vpack.c.bf16 %v3109, %v3108
      %v3139 = vpack.c.bf16 %v3111, %v3110
      %v3140 = vpack.c.bf16 %v3113, %v3112
      %v3141 = vpack.c.bf16 %v3115, %v3114
      %v3142 = vpack.c.bf16 %v3117, %v3116
      %v3143 = vpack.c.bf16 %v3119, %v3118
      %v3144 = vpack.c.bf16 %v3121, %v3120
      %v3145 = vpack.c.bf16 %v3123, %v3122
      %v3146 = vpack.c.bf16 %v3125, %v3124
      %v3147 = vpack.c.bf16 %v3127, %v3126
      %v3148 = vpack.c.bf16 %v3129, %v3128
      %v3149 = vpack.c.bf16 %v3131, %v3130
      %v3150 = vpack.c.bf16 %v3133, %v3132
      %v3168 = vunpack.c.l.b16 %v3134
      %v3169 = vunpack.c.h.b16 %v3134
      %v3170 = vunpack.c.l.b16 %v3135
      %v3171 = vunpack.c.h.b16 %v3135
      %v3172 = vunpack.c.l.b16 %v3136
      %v3173 = vunpack.c.h.b16 %v3136
      %v3174 = vunpack.c.l.b16 %v3137
      %v3175 = vunpack.c.h.b16 %v3137
      %v3176 = vunpack.c.l.b16 %v3138
      %v3177 = vunpack.c.h.b16 %v3138
      %v3178 = vunpack.c.l.b16 %v3139
      %v3179 = vunpack.c.h.b16 %v3139
      %v3180 = vunpack.c.l.b16 %v3140
      %v3181 = vunpack.c.h.b16 %v3140
      %v3182 = vunpack.c.l.b16 %v3141
      %v3183 = vunpack.c.h.b16 %v3141
      %v3184 = vunpack.c.l.b16 %v3142
      %v3185 = vunpack.c.h.b16 %v3142
      %v3186 = vunpack.c.l.b16 %v3143
      %v3187 = vunpack.c.h.b16 %v3143
      %v3188 = vunpack.c.l.b16 %v3144
      %v3189 = vunpack.c.h.b16 %v3144
      %v3190 = vunpack.c.l.b16 %v3145
      %v3191 = vunpack.c.h.b16 %v3145
      %v3192 = vunpack.c.l.b16 %v3146
      %v3193 = vunpack.c.h.b16 %v3146
      %v3194 = vunpack.c.l.b16 %v3147
      %v3195 = vunpack.c.h.b16 %v3147
      %v3196 = vunpack.c.l.b16 %v3148
      %v3197 = vunpack.c.h.b16 %v3148
      %v3198 = vunpack.c.l.b16 %v3149
      %v3199 = vunpack.c.h.b16 %v3149
      %v3200 = vunpack.c.l.b16 %v3150
      %v3201 = vunpack.c.h.b16 %v3150
      %v3202 = vpack.c.b16 %v3168, %v3168
      %v3203 = vpack.c.b16 %v3169, %v3169
      %v3204 = vpack.c.b16 %v3170, %v3170
      %v3205 = vpack.c.b16 %v3171, %v3171
      %v3206 = vpack.c.b16 %v3172, %v3172
      %v3207 = vpack.c.b16 %v3173, %v3173
      %v3208 = vpack.c.b16 %v3174, %v3174
      %v3209 = vpack.c.b16 %v3175, %v3175
      %v3210 = vpack.c.b16 %v3176, %v3176
      %v3211 = vpack.c.b16 %v3177, %v3177
      %v3212 = vpack.c.b16 %v3178, %v3178
      %v3213 = vpack.c.b16 %v3179, %v3179
      %v3214 = vpack.c.b16 %v3180, %v3180
      %v3215 = vpack.c.b16 %v3181, %v3181
      %v3216 = vpack.c.b16 %v3182, %v3182
      %v3217 = vpack.c.b16 %v3183, %v3183
      %v3218 = vpack.c.b16 %v3184, %v3184
      %v3219 = vpack.c.b16 %v3185, %v3185
      %v3220 = vpack.c.b16 %v3186, %v3186
      %v3221 = vpack.c.b16 %v3187, %v3187
      %v3222 = vpack.c.b16 %v3188, %v3188
      %v3223 = vpack.c.b16 %v3189, %v3189
      %v3224 = vpack.c.b16 %v3190, %v3190
      %v3225 = vpack.c.b16 %v3191, %v3191
      %v3226 = vpack.c.b16 %v3192, %v3192
      %v3227 = vpack.c.b16 %v3193, %v3193
      %v3228 = vpack.c.b16 %v3194, %v3194
      %v3229 = vpack.c.b16 %v3195, %v3195
      %v3230 = vpack.c.b16 %v3196, %v3196
      %v3231 = vpack.c.b16 %v3197, %v3197
      %v3232 = vpack.c.b16 %v3198, %v3198
      %v3233 = vpack.c.b16 %v3199, %v3199
      %v3234 = vpack.c.b16 %v3200, %v3200
      %v3235 = vpack.c.b16 %v3201, %v3201
      %s3270 = scalar_lea.vmem %s177, 136
      %3271 = vst [vmem:[%s3270] sm:$0xf] %v3202
      %3272 = vst [vmem:[%s3270 + $0x4] sm:$0xf] %v3203
      %3273 = vst [vmem:[%s3270 + $0x8] sm:$0xf] %v3204
      %3274 = vst [vmem:[%s3270 + $0xc] sm:$0xf] %v3205
      %3275 = vst [vmem:[%s3270 + $0x10] sm:$0xf] %v3206
      %3276 = vst [vmem:[%s3270 + $0x14] sm:$0xf] %v3207
      %3277 = vst [vmem:[%s3270 + $0x18] sm:$0xf] %v3208
      %3278 = vst [vmem:[%s3270 + $0x1c] sm:$0xf] %v3209
      %3279 = vst [vmem:[%s3270 + $0x20] sm:$0xf] %v3210
      %3280 = vst [vmem:[%s3270 + $0x24] sm:$0xf] %v3211
      %3281 = vst [vmem:[%s3270 + $0x28] sm:$0xf] %v3212
      %3282 = vst [vmem:[%s3270 + $0x2c] sm:$0xf] %v3213
      %3283 = vst [vmem:[%s3270 + $0x30] sm:$0xf] %v3214
      %3284 = vst [vmem:[%s3270 + $0x34] sm:$0xf] %v3215
      %3285 = vst [vmem:[%s3270 + $0x38] sm:$0xf] %v3216
      %3286 = vst [vmem:[%s3270 + $0x3c] sm:$0xf] %v3217
      %3287 = vst [vmem:[%s3270 + $0x40] sm:$0xf] %v3218
      %3288 = vst [vmem:[%s3270 + $0x44] sm:$0xf] %v3219
      %3289 = vst [vmem:[%s3270 + $0x48] sm:$0xf] %v3220
      %3290 = vst [vmem:[%s3270 + $0x4c] sm:$0xf] %v3221
      %3291 = vst [vmem:[%s3270 + $0x50] sm:$0xf] %v3222
      %3292 = vst [vmem:[%s3270 + $0x54] sm:$0xf] %v3223
      %3293 = vst [vmem:[%s3270 + $0x58] sm:$0xf] %v3224
      %3294 = vst [vmem:[%s3270 + $0x5c] sm:$0xf] %v3225
      %3295 = vst [vmem:[%s3270 + $0x60] sm:$0xf] %v3226
      %3296 = vst [vmem:[%s3270 + $0x64] sm:$0xf] %v3227
      %3297 = vst [vmem:[%s3270 + $0x68] sm:$0xf] %v3228
      %3298 = vst [vmem:[%s3270 + $0x6c] sm:$0xf] %v3229
      %3299 = vst [vmem:[%s3270 + $0x70] sm:$0xf] %v3230
      %3300 = vst [vmem:[%s3270 + $0x74] sm:$0xf] %v3231
      %3301 = vst [vmem:[%s3270 + $0x78] sm:$0xf] %v3232
      %3302 = vst [vmem:[%s3270 + $0x7c] sm:$0xf] %v3233
      %3303 = vst [vmem:[%s3270 + $0x80] sm:$0xf] %v3234
      %3304 = vst [vmem:[%s3270 + $0x84] sm:$0xf] %v3235
      %s3305 = smul.u32 2, %s14
      %p3306 = scmp.lt.s32.totalorder %s3305, 3
      %s3307 = scalar_select %p3306, %s3305, 3
      %s3308 = smul.addr %s3307, 34
      %s3309 = smul.addr %s3308, 4
      %s3310 = scalar_lea.vmem %s3, %s3309
      // Predicated region
      $region33: #{discriminator_forward.3} parent=31 // pred_check
        %p3311 = pneg %p100
      $region34: #{discriminator_forward.3} parent=31 // pred_check_branch
        %3313 = sbr.rel (%p3311) target = $region36
      $region35: #{discriminator_forward.3} parent=31 // pred_region
        %s3314 = smul.u32 2, %s14
      $region36: #{discriminator_forward.3} parent=31 // pred_fallthru
        _
    $region32: #{discriminator_forward.3} parent=5 // pred_fallthru
      _
    %p3315 = scmp.le.s32.totalorder 2, %s9
    // Predicated region
    $region37: #{discriminator_forward.3} parent=5 // pred_check
      %p3316 = pneg %p3315
    $region38: #{discriminator_forward.3} parent=5 // pred_check_branch
      %3318 = sbr.rel (%p3316) target = $region40
    $region39: #{discriminator_forward.3} parent=5 // pred_region
      %s3319 = ssub.s32 %s9, 2
      // Predicated region
      $region41: #{discriminator_forward.3} parent=39 // pred_check
        %p3320 = pneg %p106
      $region42: #{discriminator_forward.3} parent=39 // pred_check_branch
        %3322 = sbr.rel (%p3320) target = $region44
      $region43: #{discriminator_forward.3} parent=39 // pred_region
        %s3323 = smul.u32 2, %s15
        %p3324 = scmp.lt.s32.totalorder %s3323, 3
        %s3325 = scalar_select %p3324, %s3323, 3
        %s3326 = smul.addr %s3325, 34
        %s3327 = smul.addr %s3326, 4
        %s3328 = scalar_lea.vmem %s3, %s3327
      $region44: #{discriminator_forward.3} parent=39 // pred_fallthru
        _
    $region40: #{discriminator_forward.3} parent=5 // pred_fallthru
      _
  $region6: #{discriminator_forward.3} parent=0 // loop_footer
    %s13 = sadd.s32 1, %s9
  $region7: #{discriminator_forward.3} parent=0 // loop_footer_branch
    %8 = sbr.rel target = $region3
  $region8: #{discriminator_forward.3} parent=0 // loop_exit
    _

// kernel: discriminator_forward.4
$region0: #{discriminator_forward.4}
  #allocation0 [shape = 'u32[]', space=smem, size = 0x4, offset = 0x4, fixed_abs, tag = 'smem constant byte address 0x4 - core index']
  #allocation1 [shape = 'u32[144,128]{1,0:T(1,128)}', space=vmem, size = 0x12000, scoped, tag = 'internal scratch']
  %s0 = inlined_call_operand.vmem [shape: bf16[4,90,256], index: 0, kind: input, shape index: {}]
  %s1 = inlined_call_operand.vmem [shape: bf16[4,256,128], index: 1, kind: input, shape index: {}]
  %s2 = inlined_call_operand.vmem [shape: f32[1,128], index: 2, kind: input, shape index: {}]
  %s3 = inlined_call_operand.vmem [shape: f32[4,72,128], index: 3, kind: output, shape index: {0}]
  %s4 = inlined_call_operand.vmem [shape: f32[2,1,128], index: 4, kind: output, shape index: {1}]
  %s5 = inlined_call_operand.vmem [shape: f32[2,1,128], index: 5, kind: output, shape index: {2}]
  %6 = xla_tuple %s3, %s4, %s5
  %s7 = sld [smem:[#allocation0]]
  $region61: #{discriminator_forward.4} parent=0
    _
  %s9 = ssub.s32 1, %s7
  %s10 = scalar_select 0, %s9, %s7
  loop: start=0, step=1, limit=4
  $region2: #{discriminator_forward.4} parent=0 // loop_pre_header
    _
  $region3: #{discriminator_forward.4} parent=0 // loop_header
    %s12 = sphi 0, %s16
    %p13 = scmp.ge.s32.totalorder %s12, 4
    %s22 = sphi 0, %s24
    %s25 = sphi 0, %s22
    %s26 = sphi 0, %s25
    %s42 = sphi 0, %s26
    %s46 = sphi 0, %s46
    %s48 = sphi 0, %s46
    %s49 = sphi 0, %s48
    %s63 = sphi 0, %s49
    %s67 = sphi 0, %s67
    %s69 = sphi 0, %s67
    %s70 = sphi 0, %s69
    %s84 = sphi 0, %s70
    %s90 = sphi 0, %s92
    %s93 = sphi 0, %s90
    %s94 = sphi 0, %s93
    %s110 = sphi 0, %s94
    %s116 = sphi 0, %s118
    %s119 = sphi 0, %s116
    %s120 = sphi 0, %s119
    %s136 = sphi 0, %s120
    %s142 = sphi 0, %s144
    %s145 = sphi 0, %s142
    %s146 = sphi 0, %s145
    %s162 = sphi 0, %s146
  $region4: #{discriminator_forward.4} parent=0 // loop_header_branch
    %15 = sbr.rel (%p13) target = $region8
  $region5: #{discriminator_forward.4} parent=0 // loop_body
    %s17 = ssub.s32 %s12, 1
    %s18 = ssub.s32 %s12, 2
    %s19 = sadd.s32 %s12, 1
    %s20 = ssub.s32 %s12, %s19
    %p21 = scmp.eq.s32.totalorder %s20, 0
    %s23 = sadd.s32 %s22, 1
    %s24 = scalar_select %p21, %s22, %s23
    %p27 = pneg %p21
    %p28 = scmp.eq.s32.totalorder %s12, 1
    %p29 = por %p27, %p28
    %p30 = scmp.ne.s32.totalorder %s22, %s25
    %p31 = scmp.eq.s32.totalorder %s12, 0
    %p32 = por %p30, %p31
    %p33 = scmp.ne.s32.totalorder %s22, %s25
    %p34 = scmp.eq.s32.totalorder %s17, 1
    %p35 = por %p33, %p34
    %p36 = scmp.ne.s32.totalorder %s25, %s26
    %p37 = scmp.eq.s32.totalorder %s17, 0
    %p38 = por %p36, %p37
    %p39 = scmp.ne.s32.totalorder %s25, %s26
    %p40 = scmp.eq.s32.totalorder %s18, 1
    %p41 = por %p39, %p40
    %p43 = scmp.ne.s32.totalorder %s26, %s42
    %p44 = scmp.eq.s32.totalorder %s18, 0
    %p45 = por %p43, %p44
    %s47 = sadd.s32 %s46, 1
    %p50 = scmp.eq.s32.totalorder %s12, 1
    %p51 = scmp.ne.s32.totalorder %s46, %s48
    %p52 = scmp.eq.s32.totalorder %s12, 0
    %p53 = por %p51, %p52
    %p54 = scmp.ne.s32.totalorder %s46, %s48
    %p55 = scmp.eq.s32.totalorder %s17, 1
    %p56 = por %p54, %p55
    %p57 = scmp.ne.s32.totalorder %s48, %s49
    %p58 = scmp.eq.s32.totalorder %s17, 0
    %p59 = por %p57, %p58
    %p60 = scmp.ne.s32.totalorder %s48, %s49
    %p61 = scmp.eq.s32.totalorder %s18, 1
    %p62 = por %p60, %p61
    %p64 = scmp.ne.s32.totalorder %s49, %s63
    %p65 = scmp.eq.s32.totalorder %s18, 0
    %p66 = por %p64, %p65
    %s68 = sadd.s32 %s67, 1
    %p71 = scmp.eq.s32.totalorder %s12, 1
    %p72 = scmp.ne.s32.totalorder %s67, %s69
    %p73 = scmp.eq.s32.totalorder %s12, 0
    %p74 = por %p72, %p73
    %p75 = scmp.ne.s32.totalorder %s67, %s69
    %p76 = scmp.eq.s32.totalorder %s17, 1
    %p77 = por %p75, %p76
    %p78 = scmp.ne.s32.totalorder %s69, %s70
    %p79 = scmp.eq.s32.totalorder %s17, 0
    %p80 = por %p78, %p79
    %p81 = scmp.ne.s32.totalorder %s69, %s70
    %p82 = scmp.eq.s32.totalorder %s18, 1
    %p83 = por %p81, %p82
    %p85 = scmp.ne.s32.totalorder %s70, %s84
    %p86 = scmp.eq.s32.totalorder %s18, 0
    %p87 = por %p85, %p86
    %s88 = ssub.s32 %s12, %s19
    %p89 = scmp.eq.s32.totalorder %s88, 0
    %s91 = sadd.s32 %s90, 1
    %s92 = scalar_select %p89, %s90, %s91
    %p95 = pneg %p89
    %p96 = scmp.eq.s32.totalorder %s12, 1
    %p97 = por %p95, %p96
    %p98 = scmp.ne.s32.totalorder %s90, %s93
    %p99 = scmp.eq.s32.totalorder %s12, 0
    %p100 = por %p98, %p99
    %p101 = scmp.ne.s32.totalorder %s90, %s93
    %p102 = scmp.eq.s32.totalorder %s17, 1
    %p103 = por %p101, %p102
    %p104 = scmp.ne.s32.totalorder %s93, %s94
    %p105 = scmp.eq.s32.totalorder %s17, 0
    %p106 = por %p104, %p105
    %p107 = scmp.ne.s32.totalorder %s93, %s94
    %p108 = scmp.eq.s32.totalorder %s18, 1
    %p109 = por %p107, %p108
    %p111 = scmp.ne.s32.totalorder %s94, %s110
    %p112 = scmp.eq.s32.totalorder %s18, 0
    %p113 = por %p111, %p112
    %s114 = ssub.s32 %s12, %s19
    %p115 = scmp.eq.s32.totalorder %s114, 0
    %s117 = sadd.s32 %s116, 1
    %s118 = scalar_select %p115, %s116, %s117
    %p121 = pneg %p115
    %p122 = scmp.eq.s32.totalorder %s12, 1
    %p123 = por %p121, %p122
    %p124 = scmp.ne.s32.totalorder %s116, %s119
    %p125 = scmp.eq.s32.totalorder %s12, 0
    %p126 = por %p124, %p125
    %p127 = scmp.ne.s32.totalorder %s116, %s119
    %p128 = scmp.eq.s32.totalorder %s17, 1
    %p129 = por %p127, %p128
    %p130 = scmp.ne.s32.totalorder %s119, %s120
    %p131 = scmp.eq.s32.totalorder %s17, 0
    %p132 = por %p130, %p131
    %p133 = scmp.ne.s32.totalorder %s119, %s120
    %p134 = scmp.eq.s32.totalorder %s18, 1
    %p135 = por %p133, %p134
    %p137 = scmp.ne.s32.totalorder %s120, %s136
    %p138 = scmp.eq.s32.totalorder %s18, 0
    %p139 = por %p137, %p138
    %s140 = ssub.s32 %s12, %s19
    %p141 = scmp.eq.s32.totalorder %s140, 0
    %s143 = sadd.s32 %s142, 1
    %s144 = scalar_select %p141, %s142, %s143
    %p147 = pneg %p141
    %p148 = scmp.eq.s32.totalorder %s12, 1
    %p149 = por %p147, %p148
    %p150 = scmp.ne.s32.totalorder %s142, %s145
    %p151 = scmp.eq.s32.totalorder %s12, 0
    %p152 = por %p150, %p151
    %p153 = scmp.ne.s32.totalorder %s142, %s145
    %p154 = scmp.eq.s32.totalorder %s17, 1
    %p155 = por %p153, %p154
    %p156 = scmp.ne.s32.totalorder %s145, %s146
    %p157 = scmp.eq.s32.totalorder %s17, 0
    %p158 = por %p156, %p157
    %p159 = scmp.ne.s32.totalorder %s145, %s146
    %p160 = scmp.eq.s32.totalorder %s18, 1
    %p161 = por %p159, %p160
    %p163 = scmp.ne.s32.totalorder %s146, %s162
    %p164 = scmp.eq.s32.totalorder %s18, 0
    %p165 = por %p163, %p164
    %p166 = scmp.le.s32.totalorder 1, %s12
    %p167 = scmp.lt.s32.totalorder %s12, 3
    %p168 = pnand %p166, %p167
    %p169 = pneg %p168
    // Predicated region
    $region9: #{discriminator_forward.4} parent=5 // pred_check
      _
    $region10: #{discriminator_forward.4} parent=5 // pred_check_branch
      %171 = sbr.rel (%p168) target = $region12
    $region11: #{discriminator_forward.4} parent=5 // pred_region
      %s172 = ssub.s32 %s12, 1
      // Predicated region
      $region13: #{discriminator_forward.4} parent=11 // pred_check
        %p173 = pneg %p59
      $region14: #{discriminator_forward.4} parent=11 // pred_check_branch
        %175 = sbr.rel (%p173) target = $region16
      $region15: #{discriminator_forward.4} parent=11 // pred_region
        _
      $region16: #{discriminator_forward.4} parent=11 // pred_fallthru
        _
      // Predicated region
      $region17: #{discriminator_forward.4} parent=11 // pred_check
        %p176 = pneg %p80
      $region18: #{discriminator_forward.4} parent=11 // pred_check_branch
        %178 = sbr.rel (%p176) target = $region20
      $region19: #{discriminator_forward.4} parent=11 // pred_region
        _
      $region20: #{discriminator_forward.4} parent=11 // pred_fallthru
        _
    $region12: #{discriminator_forward.4} parent=5 // pred_fallthru
      _
    %p179 = scmp.lt.s32.totalorder %s12, 2
    // Predicated region
    $region21: #{discriminator_forward.4} parent=5 // pred_check
      %p180 = pneg %p179
    $region22: #{discriminator_forward.4} parent=5 // pred_check_branch
      %182 = sbr.rel (%p180) target = $region24
    $region23: #{discriminator_forward.4} parent=5 // pred_region
      // Predicated region
      $region25: #{discriminator_forward.4} parent=23 // pred_check
        %p183 = pneg %p32
      $region26: #{discriminator_forward.4} parent=23 // pred_check_branch
        %185 = sbr.rel (%p183) target = $region28
      $region27: #{discriminator_forward.4} parent=23 // pred_region
        %s186 = smul.u32 2, %s12
        %p187 = scmp.lt.s32.totalorder %s186, 3
        %s188 = scalar_select %p187, %s186, 3
        %s189 = smul.addr %s188, 24
        %s190 = smul.addr %s189, 4
        %s191 = scalar_lea.vmem %s0, %s190
        %s192 = smul.u32 2, %s12
      $region28: #{discriminator_forward.4} parent=23 // pred_fallthru
        _
    $region24: #{discriminator_forward.4} parent=5 // pred_fallthru
      _
    %p193 = scmp.le.s32.totalorder 1, %s12
    %p194 = scmp.lt.s32.totalorder %s12, 3
    %p195 = pnand %p193, %p194
    %p196 = pneg %p195
    // Predicated region
    $region29: #{discriminator_forward.4} parent=5 // pred_check
      _
    $region30: #{discriminator_forward.4} parent=5 // pred_check_branch
      %198 = sbr.rel (%p195) target = $region32
    $region31: #{discriminator_forward.4} parent=5 // pred_region
      %s199 = ssub.s32 %s12, 1
      %s200 = smul.u32 2, %s17
      %p201 = scmp.lt.s32.totalorder %s200, 3
      %s202 = scalar_select %p201, %s200, 3
      %s203 = smul.addr %s202, 24
      %s204 = smul.addr %s203, 4
      %s205 = scalar_lea.vmem %s0, %s204
      %p206 = pneg %p38
      %p207 = pneg %p35
      %p208 = pneg %p59
      %p209 = pneg %p56
      %p210 = pneg %p80
      %p211 = pneg %p77
      %p212 = pneg %p106
      %p213 = pneg %p103
      %s214 = smul.u32 2, %s17
      %p215 = scmp.lt.s32.totalorder %s214, 3
      %s216 = scalar_select %p215, %s214, 3
      %s217 = smul.addr %s216, 9
      %s218 = smul.addr %s217, 8
      %s219 = scalar_lea.vmem %s3, %s218
      %p220 = pneg %p132
      %p221 = pneg %p129
      %p222 = scmp.lt.s32.totalorder %s17, 1
      %s223 = scalar_select %p222, %s17, 1
      %s224 = scalar_lea.vmem %s4, %s223
      %p225 = pneg %p158
      %p226 = pneg %p155
      %p227 = scmp.lt.s32.totalorder %s17, 1
      %s228 = scalar_select %p227, %s17, 1
      %s229 = scalar_lea.vmem %s5, %s228
      %s230 = smul.u32 2, %s17
      %p231 = scmp.lt.s32.totalorder %s230, 3
      %s232 = scalar_select %p231, %s230, 3
      %s233 = smul.addr %s232, 24
      %s234 = smul.addr %s233, 4
      %s235 = scalar_lea.vmem %s0, %s234
      %s236 = smul.u32 2, %s17
      %s237 = smul.u32 2, %s17
      %p238 = scmp.lt.s32.totalorder %s237, 3
      %s239 = scalar_select %p238, %s237, 3
      %s240 = smul.addr %s239, 9
      %s241 = smul.addr %s240, 8
      %s242 = scalar_lea.vmem %s3, %s241
      %s243 = smul.u32 2, %s17
      %p244 = scmp.lt.s32.totalorder %s17, 1
      %s245 = scalar_select %p244, %s17, 1
      %s246 = scalar_lea.vmem %s4, %s245
      %p247 = scmp.lt.s32.totalorder %s17, 1
      %s248 = scalar_select %p247, %s17, 1
      %s249 = scalar_lea.vmem %s5, %s248
      %v251 = vlaneseq
      %v252 = vshrl.u32 %v251, 7
      %v253 = vadd.s32 %v252, 8
      %v254 = vadd.s32 %v252, 16
      %v255 = vadd.s32 %v252, 24
      %v256 = vadd.s32 %v252, 32
      %v257 = vadd.s32 %v252, 40
      %v258 = vadd.s32 %v252, 48
      %v259 = vadd.s32 %v252, 56
      %v260 = vadd.s32 %v252, 64
      %vm261 = vcmp.lt.s32.totalorder %v252, 0
      %v262 = vsub.s32 0, %v252
      %v263 = vsel %vm261, %v262, %v252
      %v264 = vmul.u32.u64.compose %v263, 3817748708
      %v265 = vextract.low.u32 %v264
      %v266 = vextract.high.u32 %v264
      %v267 = vshrl.u32 %v266, 3
      %v268 = vmul.u32 %v267, 9
      %v269 = vsub.s32 %v263, %v268
      %v270 = vsub.s32 0, %v269
      %v271 = vsel %vm261, %v270, %v269
      %vm272 = vcmp.lt.s32.totalorder %v253, 0
      %v273 = vsub.s32 0, %v253
      %v274 = vsel %vm272, %v273, %v253
      %v275 = vmul.u32.u64.compose %v274, 3817748708
      %v276 = vextract.low.u32 %v275
      %v277 = vextract.high.u32 %v275
      %v278 = vshrl.u32 %v277, 3
      %v279 = vmul.u32 %v278, 9
      %v280 = vsub.s32 %v274, %v279
      %v281 = vsub.s32 0, %v280
      %v282 = vsel %vm272, %v281, %v280
      %vm283 = vcmp.lt.s32.totalorder %v254, 0
      %v284 = vsub.s32 0, %v254
      %v285 = vsel %vm283, %v284, %v254
      %v286 = vmul.u32.u64.compose %v285, 3817748708
      %v287 = vextract.low.u32 %v286
      %v288 = vextract.high.u32 %v286
      %v289 = vshrl.u32 %v288, 3
      %v290 = vmul.u32 %v289, 9
      %v291 = vsub.s32 %v285, %v290
      %v292 = vsub.s32 0, %v291
      %v293 = vsel %vm283, %v292, %v291
      %vm294 = vcmp.lt.s32.totalorder %v255, 0
      %v295 = vsub.s32 0, %v255
      %v296 = vsel %vm294, %v295, %v255
      %v297 = vmul.u32.u64.compose %v296, 3817748708
      %v298 = vextract.low.u32 %v297
      %v299 = vextract.high.u32 %v297
      %v300 = vshrl.u32 %v299, 3
      %v301 = vmul.u32 %v300, 9
      %v302 = vsub.s32 %v296, %v301
      %v303 = vsub.s32 0, %v302
      %v304 = vsel %vm294, %v303, %v302
      %vm305 = vcmp.lt.s32.totalorder %v256, 0
      %v306 = vsub.s32 0, %v256
      %v307 = vsel %vm305, %v306, %v256
      %v308 = vmul.u32.u64.compose %v307, 3817748708
      %v309 = vextract.low.u32 %v308
      %v310 = vextract.high.u32 %v308
      %v311 = vshrl.u32 %v310, 3
      %v312 = vmul.u32 %v311, 9
      %v313 = vsub.s32 %v307, %v312
      %v314 = vsub.s32 0, %v313
      %v315 = vsel %vm305, %v314, %v313
      %vm316 = vcmp.lt.s32.totalorder %v257, 0
      %v317 = vsub.s32 0, %v257
      %v318 = vsel %vm316, %v317, %v257
      %v319 = vmul.u32.u64.compose %v318, 3817748708
      %v320 = vextract.low.u32 %v319
      %v321 = vextract.high.u32 %v319
      %v322 = vshrl.u32 %v321, 3
      %v323 = vmul.u32 %v322, 9
      %v324 = vsub.s32 %v318, %v323
      %v325 = vsub.s32 0, %v324
      %v326 = vsel %vm316, %v325, %v324
      %vm327 = vcmp.lt.s32.totalorder %v258, 0
      %v328 = vsub.s32 0, %v258
      %v329 = vsel %vm327, %v328, %v258
      %v330 = vmul.u32.u64.compose %v329, 3817748708
      %v331 = vextract.low.u32 %v330
      %v332 = vextract.high.u32 %v330
      %v333 = vshrl.u32 %v332, 3
      %v334 = vmul.u32 %v333, 9
      %v335 = vsub.s32 %v329, %v334
      %v336 = vsub.s32 0, %v335
      %v337 = vsel %vm327, %v336, %v335
      %vm338 = vcmp.lt.s32.totalorder %v259, 0
      %v339 = vsub.s32 0, %v259
      %v340 = vsel %vm338, %v339, %v259
      %v341 = vmul.u32.u64.compose %v340, 3817748708
      %v342 = vextract.low.u32 %v341
      %v343 = vextract.high.u32 %v341
      %v344 = vshrl.u32 %v343, 3
      %v345 = vmul.u32 %v344, 9
      %v346 = vsub.s32 %v340, %v345
      %v347 = vsub.s32 0, %v346
      %v348 = vsel %vm338, %v347, %v346
      %vm349 = vcmp.lt.s32.totalorder %v260, 0
      %v350 = vsub.s32 0, %v260
      %v351 = vsel %vm349, %v350, %v260
      %v352 = vmul.u32.u64.compose %v351, 3817748708
      %v353 = vextract.low.u32 %v352
      %v354 = vextract.high.u32 %v352
      %v355 = vshrl.u32 %v354, 3
      %v356 = vmul.u32 %v355, 9
      %v357 = vsub.s32 %v351, %v356
      %v358 = vsub.s32 0, %v357
      %v359 = vsel %vm349, %v358, %v357
      %vm360 = vcmp.ne.s32.totalorder %v271, 0
      %vm361 = vcmp.ne.s32.totalorder %v282, 0
      %vm362 = vcmp.ne.s32.totalorder %v293, 0
      %vm363 = vcmp.ne.s32.totalorder %v304, 0
      %vm364 = vcmp.ne.s32.totalorder %v315, 0
      %vm365 = vcmp.ne.s32.totalorder %v326, 0
      %vm366 = vcmp.ne.s32.totalorder %v337, 0
      %vm367 = vcmp.ne.s32.totalorder %v348, 0
      %vm368 = vcmp.ne.s32.totalorder %v359, 0
      %vm369 = vcmp.lt.s32.totalorder %v271, 0
      %vm370 = vcmp.lt.s32.totalorder %v282, 0
      %vm371 = vcmp.lt.s32.totalorder %v293, 0
      %vm372 = vcmp.lt.s32.totalorder %v304, 0
      %vm373 = vcmp.lt.s32.totalorder %v315, 0
      %vm374 = vcmp.lt.s32.totalorder %v326, 0
      %vm375 = vcmp.lt.s32.totalorder %v337, 0
      %vm376 = vcmp.lt.s32.totalorder %v348, 0
      %vm377 = vcmp.lt.s32.totalorder %v359, 0
      %vm378 = vmand %vm369, %vm360
      %vm379 = vmand %vm370, %vm361
      %vm380 = vmand %vm371, %vm362
      %vm381 = vmand %vm372, %vm363
      %vm382 = vmand %vm373, %vm364
      %vm383 = vmand %vm374, %vm365
      %vm384 = vmand %vm375, %vm366
      %vm385 = vmand %vm376, %vm367
      %vm386 = vmand %vm377, %vm368
      %v387 = vadd.s32 %v271, 9
      %v388 = vadd.s32 %v282, 9
      %v389 = vadd.s32 %v293, 9
      %v390 = vadd.s32 %v304, 9
      %v391 = vadd.s32 %v315, 9
      %v392 = vadd.s32 %v326, 9
      %v393 = vadd.s32 %v337, 9
      %v394 = vadd.s32 %v348, 9
      %v395 = vadd.s32 %v359, 9
      %v396 = vsel %vm378, %v387, %v271
      %v397 = vsel %vm379, %v388, %v282
      %v398 = vsel %vm380, %v389, %v293
      %v399 = vsel %vm381, %v390, %v304
      %v400 = vsel %vm382, %v391, %v315
      %v401 = vsel %vm383, %v392, %v326
      %v402 = vsel %vm384, %v393, %v337
      %v403 = vsel %vm385, %v394, %v348
      %v404 = vsel %vm386, %v395, %v359
      %vm405 = vcmp.ne.s32.totalorder %v396, 8
      %vm406 = vcmp.ne.s32.totalorder %v397, 8
      %vm407 = vcmp.ne.s32.totalorder %v398, 8
      %vm408 = vcmp.ne.s32.totalorder %v399, 8
      %vm409 = vcmp.ne.s32.totalorder %v400, 8
      %vm410 = vcmp.ne.s32.totalorder %v401, 8
      %vm411 = vcmp.ne.s32.totalorder %v402, 8
      %vm412 = vcmp.ne.s32.totalorder %v403, 8
      %vm413 = vcmp.ne.s32.totalorder %v404, 8
      %v414 = vld [vmem:[%s235] sm:$0xff]
      %v415 = vld [vmem:[%s235 + $0x8] sm:$0xff]
      %v416 = vld [vmem:[%s235 + $0x10] sm:$0xff]
      %v417 = vld [vmem:[%s235 + $0x18] sm:$0xff]
      %v418 = vld [vmem:[%s235 + $0x20] sm:$0xff]
      %v419 = vld [vmem:[%s235 + $0x28] sm:$0xff]
      %v420 = vld [vmem:[%s235 + $0x30] sm:$0xff]
      %v421 = vld [vmem:[%s235 + $0x38] sm:$0xff]
      %v422 = vld [vmem:[%s235 + $0x40] sm:$0xff]
      %v423 = vld [vmem:[%s235 + $0x48] sm:$0xff]
      %v424 = vld [vmem:[%s235 + $0x50] sm:$0xff]
      %v425 = vld [vmem:[%s1] sm:$0xf]
      %v426 = vld [vmem:[%s1 + $0x4] sm:$0xf]
      %v427 = vld [vmem:[%s1 + $0x8] sm:$0xf]
      %v428 = vld [vmem:[%s1 + $0xc] sm:$0xf]
      %v429 = vld [vmem:[%s1 + $0x10] sm:$0xf]
      %v430 = vld [vmem:[%s1 + $0x14] sm:$0xf]
      %v431 = vld [vmem:[%s1 + $0x18] sm:$0xf]
      %v432 = vld [vmem:[%s1 + $0x1c] sm:$0xf]
      %v433 = vld [vmem:[%s1 + $0x20] sm:$0xf]
      %v434 = vld [vmem:[%s1 + $0x24] sm:$0xf]
      %v435 = vld [vmem:[%s1 + $0x28] sm:$0xf]
      %v436 = vld [vmem:[%s1 + $0x2c] sm:$0xf]
      %v437 = vld [vmem:[%s1 + $0x30] sm:$0xf]
      %v438 = vld [vmem:[%s1 + $0x34] sm:$0xf]
      %v439 = vld [vmem:[%s1 + $0x38] sm:$0xf]
      %v440 = vld [vmem:[%s1 + $0x3c] sm:$0xf]
      %v441 = vld [vmem:[%s1 + $0x40] sm:$0xf]
      %v442 = vld [vmem:[%s1 + $0x44] sm:$0xf]
      %v443 = vld [vmem:[%s1 + $0x48] sm:$0xf]
      %v444 = vld [vmem:[%s1 + $0x4c] sm:$0xf]
      %v445 = vld [vmem:[%s1 + $0x50] sm:$0xf]
      %v446 = vld [vmem:[%s1 + $0x54] sm:$0xf]
      %v447 = vld [vmem:[%s1 + $0x58] sm:$0xf]
      %v448 = vld [vmem:[%s1 + $0x5c] sm:$0xf]
      %v449 = vld [vmem:[%s1 + $0x60] sm:$0xf]
      %v450 = vld [vmem:[%s1 + $0x64] sm:$0xf]
      %v451 = vld [vmem:[%s1 + $0x68] sm:$0xf]
      %v452 = vld [vmem:[%s1 + $0x6c] sm:$0xf]
      %v453 = vld [vmem:[%s1 + $0x70] sm:$0xf]
      %v454 = vld [vmem:[%s1 + $0x74] sm:$0xf]
      %v455 = vld [vmem:[%s1 + $0x78] sm:$0xf]
      %v456 = vld [vmem:[%s1 + $0x7c] sm:$0xf]
      %s457 = scalar_lea.vmem %s1, 128
      %v458 = vld [vmem:[%s457] sm:$0xf]
      %v459 = vld [vmem:[%s457 + $0x4] sm:$0xf]
      %v460 = vld [vmem:[%s457 + $0x8] sm:$0xf]
      %v461 = vld [vmem:[%s457 + $0xc] sm:$0xf]
      %v462 = vld [vmem:[%s457 + $0x10] sm:$0xf]
      %v463 = vld [vmem:[%s457 + $0x14] sm:$0xf]
      %v464 = vld [vmem:[%s457 + $0x18] sm:$0xf]
      %v465 = vld [vmem:[%s457 + $0x1c] sm:$0xf]
      %v466 = vld [vmem:[%s457 + $0x20] sm:$0xf]
      %v467 = vld [vmem:[%s457 + $0x24] sm:$0xf]
      %v468 = vld [vmem:[%s457 + $0x28] sm:$0xf]
      %v469 = vld [vmem:[%s457 + $0x2c] sm:$0xf]
      %v470 = vld [vmem:[%s457 + $0x30] sm:$0xf]
      %v471 = vld [vmem:[%s457 + $0x34] sm:$0xf]
      %v472 = vld [vmem:[%s457 + $0x38] sm:$0xf]
      %v473 = vld [vmem:[%s457 + $0x3c] sm:$0xf]
      %v474 = vld [vmem:[%s457 + $0x40] sm:$0xf]
      %v475 = vld [vmem:[%s457 + $0x44] sm:$0xf]
      %v476 = vld [vmem:[%s457 + $0x48] sm:$0xf]
      %v477 = vld [vmem:[%s457 + $0x4c] sm:$0xf]
      %v478 = vld [vmem:[%s457 + $0x50] sm:$0xf]
      %v479 = vld [vmem:[%s457 + $0x54] sm:$0xf]
      %v480 = vld [vmem:[%s457 + $0x58] sm:$0xf]
      %v481 = vld [vmem:[%s457 + $0x5c] sm:$0xf]
      %v482 = vld [vmem:[%s457 + $0x60] sm:$0xf]
      %v483 = vld [vmem:[%s457 + $0x64] sm:$0xf]
      %v484 = vld [vmem:[%s457 + $0x68] sm:$0xf]
      %v485 = vld [vmem:[%s457 + $0x6c] sm:$0xf]
      %v486 = vld [vmem:[%s457 + $0x70] sm:$0xf]
      %v487 = vld [vmem:[%s457 + $0x74] sm:$0xf]
      %v488 = vld [vmem:[%s457 + $0x78] sm:$0xf]
      %v489 = vld [vmem:[%s457 + $0x7c] sm:$0xf]
      %v500 = vunpack.c.l.b16 %v414
      %v501 = vunpack.c.h.b16 %v414
      %v502 = vunpack.c.l.b16 %v415
      %v503 = vunpack.c.h.b16 %v415
      %v504 = vunpack.c.l.b16 %v416
      %v505 = vunpack.c.h.b16 %v416
      %v506 = vunpack.c.l.b16 %v417
      %v507 = vunpack.c.h.b16 %v417
      %v508 = vunpack.c.l.b16 %v418
      %v509 = vunpack.c.h.b16 %v418
      %v510 = vunpack.c.l.b16 %v419
      %v511 = vunpack.c.h.b16 %v419
      %v512 = vunpack.c.l.b16 %v420
      %v513 = vunpack.c.h.b16 %v420
      %v514 = vunpack.c.l.b16 %v421
      %v515 = vunpack.c.h.b16 %v421
      %v516 = vunpack.c.l.b16 %v422
      %v517 = vunpack.c.h.b16 %v422
      %v518 = vunpack.c.l.b16 %v423
      %v519 = vunpack.c.h.b16 %v423
      %v520 = vpack.c.b16 %v502, %v500
      %v521 = vpack.c.b16 %v503, %v501
      %v522 = vpack.c.b16 %v506, %v504
      %v523 = vpack.c.b16 %v507, %v505
      %v524 = vpack.c.b16 %v510, %v508
      %v525 = vpack.c.b16 %v511, %v509
      %v526 = vpack.c.b16 %v514, %v512
      %v527 = vpack.c.b16 %v515, %v513
      %v528 = vpack.c.b16 %v518, %v516
      %v529 = vpack.c.b16 %v519, %v517
      %vm530 = vsmask.f32 7424
      %v532 = vshrl.u32 %v520, 16
      %v534 = vshll.u32 %v520, 16
      %v536 = vrot.slane %v534, 1
      %v537 = vor.u32 %v532, %v536
      %v539 = vshll.u32 %v522, 16
      %v541 = vrot.slane %v539, 1
      %v542 = vsel %vm530, %v537, %v541
      %v544 = vshrl.u32 %v521, 16
      %v546 = vshll.u32 %v521, 16
      %v548 = vrot.slane %v546, 1
      %v549 = vor.u32 %v544, %v548
      %v551 = vshll.u32 %v523, 16
      %v553 = vrot.slane %v551, 1
      %v554 = vsel %vm530, %v549, %v553
      %v555 = vshrl.u32 %v522, 16
      %v557 = vor.u32 %v555, %v541
      %v559 = vshll.u32 %v524, 16
      %v561 = vrot.slane %v559, 1
      %v562 = vsel %vm530, %v557, %v561
      %v563 = vshrl.u32 %v523, 16
      %v565 = vor.u32 %v563, %v553
      %v567 = vshll.u32 %v525, 16
      %v569 = vrot.slane %v567, 1
      %v570 = vsel %vm530, %v565, %v569
      %v571 = vshrl.u32 %v524, 16
      %v573 = vor.u32 %v571, %v561
      %v575 = vshll.u32 %v526, 16
      %v577 = vrot.slane %v575, 1
      %v578 = vsel %vm530, %v573, %v577
      %v579 = vshrl.u32 %v525, 16
      %v581 = vor.u32 %v579, %v569
      %v583 = vshll.u32 %v527, 16
      %v585 = vrot.slane %v583, 1
      %v586 = vsel %vm530, %v581, %v585
      %v587 = vshrl.u32 %v526, 16
      %v589 = vor.u32 %v587, %v577
      %v591 = vshll.u32 %v528, 16
      %v593 = vrot.slane %v591, 1
      %v594 = vsel %vm530, %v589, %v593
      %v595 = vshrl.u32 %v527, 16
      %v597 = vor.u32 %v595, %v585
      %v599 = vshll.u32 %v529, 16
      %v601 = vrot.slane %v599, 1
      %v602 = vsel %vm530, %v597, %v601
      %v603 = vshrl.u32 %v528, 16
      %v605 = vor.u32 %v603, %v593
      %v606 = vshrl.u32 %v529, 16
      %v608 = vor.u32 %v606, %v601
      %v651 = vunpack.c.l.b16 %v458
      %v652 = vunpack.c.l.b16 %v459
      %v653 = vunpack.c.l.b16 %v460
      %v654 = vunpack.c.l.b16 %v461
      %v655 = vunpack.c.l.b16 %v462
      %v656 = vunpack.c.l.b16 %v463
      %v657 = vunpack.c.l.b16 %v464
      %v658 = vunpack.c.l.b16 %v465
      %v659 = vunpack.c.l.b16 %v466
      %v660 = vunpack.c.l.b16 %v467
      %v661 = vunpack.c.l.b16 %v468
      %v662 = vunpack.c.l.b16 %v469
      %v663 = vunpack.c.l.b16 %v470
      %v664 = vunpack.c.l.b16 %v471
      %v665 = vunpack.c.l.b16 %v472
      %v666 = vunpack.c.l.b16 %v473
      %v667 = vunpack.c.l.b16 %v474
      %v668 = vunpack.c.l.b16 %v475
      %v669 = vunpack.c.l.b16 %v476
      %v670 = vunpack.c.l.b16 %v477
      %v671 = vunpack.c.l.b16 %v478
      %v672 = vunpack.c.l.b16 %v479
      %v673 = vunpack.c.l.b16 %v480
      %v674 = vunpack.c.l.b16 %v481
      %v675 = vunpack.c.l.b16 %v482
      %v676 = vunpack.c.l.b16 %v483
      %v677 = vunpack.c.l.b16 %v484
      %v678 = vunpack.c.l.b16 %v485
      %v679 = vunpack.c.l.b16 %v486
      %v680 = vunpack.c.l.b16 %v487
      %v681 = vunpack.c.l.b16 %v488
      %v682 = vunpack.c.l.b16 %v489
      %v683 = vpack.c.b16 %v652, %v651
      %v684 = vpack.c.b16 %v654, %v653
      %v685 = vpack.c.b16 %v656, %v655
      %v686 = vpack.c.b16 %v658, %v657
      %v687 = vpack.c.b16 %v660, %v659
      %v688 = vpack.c.b16 %v662, %v661
      %v689 = vpack.c.b16 %v664, %v663
      %v690 = vpack.c.b16 %v666, %v665
      %v691 = vpack.c.b16 %v668, %v667
      %v692 = vpack.c.b16 %v670, %v669
      %v693 = vpack.c.b16 %v672, %v671
      %v694 = vpack.c.b16 %v674, %v673
      %v695 = vpack.c.b16 %v676, %v675
      %v696 = vpack.c.b16 %v678, %v677
      %v697 = vpack.c.b16 %v680, %v679
      %v698 = vpack.c.b16 %v682, %v681
      %715 = vmatprep.subr.bf16.mxu0 0
      %716 = vmatpush1.bf16.msra.mxu0 %v683
      %717 = vmatprep.subr.bf16.mxu0 0
      %718 = vmatpush1.bf16.msra.mxu0 %v684
      %719 = vmatprep.subr.bf16.mxu0 0
      %720 = vmatpush1.bf16.msra.mxu0 %v685
      %721 = vmatprep.subr.bf16.mxu0 0
      %722 = vmatpush1.bf16.msra.mxu0 %v686
      %723 = vmatprep.subr.bf16.mxu0 0
      %724 = vmatpush1.bf16.msra.mxu0 %v687
      %725 = vmatprep.subr.bf16.mxu0 0
      %726 = vmatpush1.bf16.msra.mxu0 %v688
      %727 = vmatprep.subr.bf16.mxu0 0
      %728 = vmatpush1.bf16.msra.mxu0 %v689
      %729 = vmatprep.subr.bf16.mxu0 0
      %730 = vmatpush1.bf16.msra.mxu0 %v690
      %731 = vmatprep.subr.bf16.mxu0 0
      %732 = vmatpush1.bf16.msra.mxu0 %v691
      %733 = vmatprep.subr.bf16.mxu0 0
      %734 = vmatpush1.bf16.msra.mxu0 %v692
      %735 = vmatprep.subr.bf16.mxu0 0
      %736 = vmatpush1.bf16.msra.mxu0 %v693
      %737 = vmatprep.subr.bf16.mxu0 0
      %738 = vmatpush1.bf16.msra.mxu0 %v694
      %739 = vmatprep.subr.bf16.mxu0 0
      %740 = vmatpush1.bf16.msra.mxu0 %v695
      %741 = vmatprep.subr.bf16.mxu0 0
      %742 = vmatpush1.bf16.msra.mxu0 %v696
      %743 = vmatprep.subr.bf16.mxu0 0
      %744 = vmatpush1.bf16.msra.mxu0 %v697
      %745 = vmatprep.subr.bf16.mxu0 0
      %746 = vmatpush1.bf16.msra.mxu0 %v698
      %747 = vmatprep.mubr.bf16.mxu0 %v554
      %748 = vmatmul.mubr.bf16.gmra.mrb[0].mxu0 %v542
      %v749 = vpop.f32.mrb[0].mxu0
      %v750 = vadd.f32 0.0, %v749
      %v751 = vpop.f32.mrb[0].mxu0
      %v752 = vpop.f32.mrb[0].mxu0
      %v753 = vadd.f32 0.0, %v752
      %v754 = vpop.f32.mrb[0].mxu0
      %755 = vmatprep.mubr.bf16.mxu0 %v570
      %756 = vmatmul.mubr.bf16.gmra.mrb[0].mxu0 %v562
      %v757 = vpop.f32.mrb[0].mxu0
      %v758 = vadd.f32 0.0, %v757
      %v759 = vpop.f32.mrb[0].mxu0
      %v760 = vpop.f32.mrb[0].mxu0
      %v761 = vadd.f32 0.0, %v760
      %v762 = vpop.f32.mrb[0].mxu0
      %763 = vmatprep.mubr.bf16.mxu0 %v586
      %764 = vmatmul.mubr.bf16.gmra.mrb[0].mxu0 %v578
      %v765 = vpop.f32.mrb[0].mxu0
      %v766 = vadd.f32 0.0, %v765
      %v767 = vpop.f32.mrb[0].mxu0
      %v768 = vpop.f32.mrb[0].mxu0
      %v769 = vadd.f32 0.0, %v768
      %v770 = vpop.f32.mrb[0].mxu0
      %771 = vmatprep.mubr.bf16.mxu0 %v602
      %772 = vmatmul.mubr.bf16.gmra.mrb[0].mxu0 %v594
      %v773 = vpop.f32.mrb[0].mxu0
      %v774 = vadd.f32 0.0, %v773
      %v775 = vpop.f32.mrb[0].mxu0
      %v776 = vpop.f32.mrb[0].mxu0
      %v777 = vadd.f32 0.0, %v776
      %v778 = vpop.f32.mrb[0].mxu0
      %779 = vmatprep.mubr.bf16.mxu0 %v608
      %780 = vmatmul.mubr.bf16.gmra.mrb[0].mxu0 %v605
      %v781 = vpop.f32.mrb[0].mxu0
      %v782 = vadd.f32 0.0, %v781
      %v783 = vpop.f32.mrb[0].mxu0
      %v784 = vpop.f32.mrb[0].mxu0
      %v785 = vpop.f32.mrb[0].mxu0
      %786 = vdwg.mxu0
      %v787 = vpack.c.b16 %v516, %v516
      %v788 = vpack.c.b16 %v517, %v517
      %v831 = vunpack.c.l.b16 %v425
      %v832 = vunpack.c.l.b16 %v426
      %v833 = vunpack.c.l.b16 %v427
      %v834 = vunpack.c.l.b16 %v428
      %v835 = vunpack.c.l.b16 %v429
      %v836 = vunpack.c.l.b16 %v430
      %v837 = vunpack.c.l.b16 %v431
      %v838 = vunpack.c.l.b16 %v432
      %v839 = vunpack.c.l.b16 %v433
      %v840 = vunpack.c.l.b16 %v434
      %v841 = vunpack.c.l.b16 %v435
      %v842 = vunpack.c.l.b16 %v436
      %v843 = vunpack.c.l.b16 %v437
      %v844 = vunpack.c.l.b16 %v438
      %v845 = vunpack.c.l.b16 %v439
      %v846 = vunpack.c.l.b16 %v440
      %v847 = vunpack.c.l.b16 %v441
      %v848 = vunpack.c.l.b16 %v442
      %v849 = vunpack.c.l.b16 %v443
      %v850 = vunpack.c.l.b16 %v444
      %v851 = vunpack.c.l.b16 %v445
      %v852 = vunpack.c.l.b16 %v446
      %v853 = vunpack.c.l.b16 %v447
      %v854 = vunpack.c.l.b16 %v448
      %v855 = vunpack.c.l.b16 %v449
      %v856 = vunpack.c.l.b16 %v450
      %v857 = vunpack.c.l.b16 %v451
      %v858 = vunpack.c.l.b16 %v452
      %v859 = vunpack.c.l.b16 %v453
      %v860 = vunpack.c.l.b16 %v454
      %v861 = vunpack.c.l.b16 %v455
      %v862 = vunpack.c.l.b16 %v456
      %v863 = vpack.c.b16 %v832, %v831
      %v864 = vpack.c.b16 %v834, %v833
      %v865 = vpack.c.b16 %v836, %v835
      %v866 = vpack.c.b16 %v838, %v837
      %v867 = vpack.c.b16 %v840, %v839
      %v868 = vpack.c.b16 %v842, %v841
      %v869 = vpack.c.b16 %v844, %v843
      %v870 = vpack.c.b16 %v846, %v845
      %v871 = vpack.c.b16 %v848, %v847
      %v872 = vpack.c.b16 %v850, %v849
      %v873 = vpack.c.b16 %v852, %v851
      %v874 = vpack.c.b16 %v854, %v853
      %v875 = vpack.c.b16 %v856, %v855
      %v876 = vpack.c.b16 %v858, %v857
      %v877 = vpack.c.b16 %v860, %v859
      %v878 = vpack.c.b16 %v862, %v861
      %895 = vmatprep.subr.bf16.mxu0 0
      %896 = vmatpush1.bf16.msra.mxu0 %v863
      %897 = vmatprep.subr.bf16.mxu0 0
      %898 = vmatpush1.bf16.msra.mxu0 %v864
      %899 = vmatprep.subr.bf16.mxu0 0
      %900 = vmatpush1.bf16.msra.mxu0 %v865
      %901 = vmatprep.subr.bf16.mxu0 0
      %902 = vmatpush1.bf16.msra.mxu0 %v866
      %903 = vmatprep.subr.bf16.mxu0 0
      %904 = vmatpush1.bf16.msra.mxu0 %v867
      %905 = vmatprep.subr.bf16.mxu0 0
      %906 = vmatpush1.bf16.msra.mxu0 %v868
      %907 = vmatprep.subr.bf16.mxu0 0
      %908 = vmatpush1.bf16.msra.mxu0 %v869
      %909 = vmatprep.subr.bf16.mxu0 0
      %910 = vmatpush1.bf16.msra.mxu0 %v870
      %911 = vmatprep.subr.bf16.mxu0 0
      %912 = vmatpush1.bf16.msra.mxu0 %v871
      %913 = vmatprep.subr.bf16.mxu0 0
      %914 = vmatpush1.bf16.msra.mxu0 %v872
      %915 = vmatprep.subr.bf16.mxu0 0
      %916 = vmatpush1.bf16.msra.mxu0 %v873
      %917 = vmatprep.subr.bf16.mxu0 0
      %918 = vmatpush1.bf16.msra.mxu0 %v874
      %919 = vmatprep.subr.bf16.mxu0 0
      %920 = vmatpush1.bf16.msra.mxu0 %v875
      %921 = vmatprep.subr.bf16.mxu0 0
      %922 = vmatpush1.bf16.msra.mxu0 %v876
      %923 = vmatprep.subr.bf16.mxu0 0
      %924 = vmatpush1.bf16.msra.mxu0 %v877
      %925 = vmatprep.subr.bf16.mxu0 0
      %926 = vmatpush1.bf16.msra.mxu0 %v878
      %927 = vmatprep.mubr.bf16.mxu0 %v521
      %928 = vmatmul.mubr.bf16.gmra.mrb[0].mxu0 %v520
      %v929 = vpop.f32.mrb[0].mxu0
      %v930 = vadd.f32 %v750, %v929
      %v931 = vpop.f32.mrb[0].mxu0
      %v932 = vpop.f32.mrb[0].mxu0
      %v933 = vadd.f32 %v753, %v932
      %v934 = vpop.f32.mrb[0].mxu0
      %935 = vmatprep.mubr.bf16.mxu0 %v523
      %936 = vmatmul.mubr.bf16.gmra.mrb[0].mxu0 %v522
      %v937 = vpop.f32.mrb[0].mxu0
      %v938 = vadd.f32 %v758, %v937
      %v939 = vpop.f32.mrb[0].mxu0
      %v940 = vpop.f32.mrb[0].mxu0
      %v941 = vadd.f32 %v761, %v940
      %v942 = vpop.f32.mrb[0].mxu0
      %943 = vmatprep.mubr.bf16.mxu0 %v525
      %944 = vmatmul.mubr.bf16.gmra.mrb[0].mxu0 %v524
      %v945 = vpop.f32.mrb[0].mxu0
      %v946 = vadd.f32 %v766, %v945
      %v947 = vpop.f32.mrb[0].mxu0
      %v948 = vpop.f32.mrb[0].mxu0
      %v949 = vadd.f32 %v769, %v948
      %v950 = vpop.f32.mrb[0].mxu0
      %951 = vmatprep.mubr.bf16.mxu0 %v527
      %952 = vmatmul.mubr.bf16.gmra.mrb[0].mxu0 %v526
      %v953 = vpop.f32.mrb[0].mxu0
      %v954 = vadd.f32 %v774, %v953
      %v955 = vpop.f32.mrb[0].mxu0
      %v956 = vpop.f32.mrb[0].mxu0
      %v957 = vadd.f32 %v777, %v956
      %v958 = vpop.f32.mrb[0].mxu0
      %959 = vmatprep.mubr.bf16.mxu0 %v788
      %960 = vmatmul.mubr.bf16.gmra.mrb[0].mxu0 %v787
      %v961 = vpop.f32.mrb[0].mxu0
      %v962 = vadd.f32 %v782, %v961
      %v963 = vpop.f32.mrb[0].mxu0
      %v964 = vpop.f32.mrb[0].mxu0
      %v965 = vpop.f32.mrb[0].mxu0
      %966 = vdwg.mxu0
      %s967 = scalar_lea.vmem %s1, 256
      %v968 = vld [vmem:[%s967] sm:$0xf]
      %v969 = vld [vmem:[%s967 + $0x4] sm:$0xf]
      %v970 = vld [vmem:[%s967 + $0x8] sm:$0xf]
      %v971 = vld [vmem:[%s967 + $0xc] sm:$0xf]
      %v972 = vld [vmem:[%s967 + $0x10] sm:$0xf]
      %v973 = vld [vmem:[%s967 + $0x14] sm:$0xf]
      %v974 = vld [vmem:[%s967 + $0x18] sm:$0xf]
      %v975 = vld [vmem:[%s967 + $0x1c] sm:$0xf]
      %v976 = vld [vmem:[%s967 + $0x20] sm:$0xf]
      %v977 = vld [vmem:[%s967 + $0x24] sm:$0xf]
      %v978 = vld [vmem:[%s967 + $0x28] sm:$0xf]
      %v979 = vld [vmem:[%s967 + $0x2c] sm:$0xf]
      %v980 = vld [vmem:[%s967 + $0x30] sm:$0xf]
      %v981 = vld [vmem:[%s967 + $0x34] sm:$0xf]
      %v982 = vld [vmem:[%s967 + $0x38] sm:$0xf]
      %v983 = vld [vmem:[%s967 + $0x3c] sm:$0xf]
      %v984 = vld [vmem:[%s967 + $0x40] sm:$0xf]
      %v985 = vld [vmem:[%s967 + $0x44] sm:$0xf]
      %v986 = vld [vmem:[%s967 + $0x48] sm:$0xf]
      %v987 = vld [vmem:[%s967 + $0x4c] sm:$0xf]
      %v988 = vld [vmem:[%s967 + $0x50] sm:$0xf]
      %v989 = vld [vmem:[%s967 + $0x54] sm:$0xf]
      %v990 = vld [vmem:[%s967 + $0x58] sm:$0xf]
      %v991 = vld [vmem:[%s967 + $0x5c] sm:$0xf]
      %v992 = vld [vmem:[%s967 + $0x60] sm:$0xf]
      %v993 = vld [vmem:[%s967 + $0x64] sm:$0xf]
      %v994 = vld [vmem:[%s967 + $0x68] sm:$0xf]
      %v995 = vld [vmem:[%s967 + $0x6c] sm:$0xf]
      %v996 = vld [vmem:[%s967 + $0x70] sm:$0xf]
      %v997 = vld [vmem:[%s967 + $0x74] sm:$0xf]
      %v998 = vld [vmem:[%s967 + $0x78] sm:$0xf]
      %v999 = vld [vmem:[%s967 + $0x7c] sm:$0xf]
      %v1001 = vunpack.c.l.b16 %v424
      %v1002 = vunpack.c.h.b16 %v424
      %v1003 = vpack.c.b16 %v504, %v502
      %v1004 = vpack.c.b16 %v505, %v503
      %v1005 = vpack.c.b16 %v508, %v506
      %v1006 = vpack.c.b16 %v509, %v507
      %v1007 = vpack.c.b16 %v512, %v510
      %v1008 = vpack.c.b16 %v513, %v511
      %v1009 = vpack.c.b16 %v516, %v514
      %v1010 = vpack.c.b16 %v517, %v515
      %v1011 = vpack.c.b16 %v1001, %v518
      %v1012 = vpack.c.b16 %v1002, %v519
      %v1014 = vshrl.u32 %v1003, 16
      %v1016 = vshll.u32 %v1003, 16
      %v1018 = vrot.slane %v1016, 1
      %v1019 = vor.u32 %v1014, %v1018
      %v1021 = vshll.u32 %v1005, 16
      %v1023 = vrot.slane %v1021, 1
      %v1024 = vsel %vm530, %v1019, %v1023
      %v1026 = vshrl.u32 %v1004, 16
      %v1028 = vshll.u32 %v1004, 16
      %v1030 = vrot.slane %v1028, 1
      %v1031 = vor.u32 %v1026, %v1030
      %v1033 = vshll.u32 %v1006, 16
      %v1035 = vrot.slane %v1033, 1
      %v1036 = vsel %vm530, %v1031, %v1035
      %v1037 = vshrl.u32 %v1005, 16
      %v1039 = vor.u32 %v1037, %v1023
      %v1041 = vshll.u32 %v1007, 16
      %v1043 = vrot.slane %v1041, 1
      %v1044 = vsel %vm530, %v1039, %v1043
      %v1045 = vshrl.u32 %v1006, 16
      %v1047 = vor.u32 %v1045, %v1035
      %v1049 = vshll.u32 %v1008, 16
      %v1051 = vrot.slane %v1049, 1
      %v1052 = vsel %vm530, %v1047, %v1051
      %v1053 = vshrl.u32 %v1007, 16
      %v1055 = vor.u32 %v1053, %v1043
      %v1057 = vshll.u32 %v1009, 16
      %v1059 = vrot.slane %v1057, 1
      %v1060 = vsel %vm530, %v1055, %v1059
      %v1061 = vshrl.u32 %v1008, 16
      %v1063 = vor.u32 %v1061, %v1051
      %v1065 = vshll.u32 %v1010, 16
      %v1067 = vrot.slane %v1065, 1
      %v1068 = vsel %vm530, %v1063, %v1067
      %v1069 = vshrl.u32 %v1009, 16
      %v1071 = vor.u32 %v1069, %v1059
      %v1073 = vshll.u32 %v1011, 16
      %v1075 = vrot.slane %v1073, 1
      %v1076 = vsel %vm530, %v1071, %v1075
      %v1077 = vshrl.u32 %v1010, 16
      %v1079 = vor.u32 %v1077, %v1067
      %v1081 = vshll.u32 %v1012, 16
      %v1083 = vrot.slane %v1081, 1
      %v1084 = vsel %vm530, %v1079, %v1083
      %v1085 = vshrl.u32 %v1011, 16
      %v1087 = vor.u32 %v1085, %v1075
      %v1088 = vshrl.u32 %v1012, 16
      %v1090 = vor.u32 %v1088, %v1083
      %v1133 = vunpack.c.l.b16 %v968
      %v1134 = vunpack.c.l.b16 %v969
      %v1135 = vunpack.c.l.b16 %v970
      %v1136 = vunpack.c.l.b16 %v971
      %v1137 = vunpack.c.l.b16 %v972
      %v1138 = vunpack.c.l.b16 %v973
      %v1139 = vunpack.c.l.b16 %v974
      %v1140 = vunpack.c.l.b16 %v975
      %v1141 = vunpack.c.l.b16 %v976
      %v1142 = vunpack.c.l.b16 %v977
      %v1143 = vunpack.c.l.b16 %v978
      %v1144 = vunpack.c.l.b16 %v979
      %v1145 = vunpack.c.l.b16 %v980
      %v1146 = vunpack.c.l.b16 %v981
      %v1147 = vunpack.c.l.b16 %v982
      %v1148 = vunpack.c.l.b16 %v983
      %v1149 = vunpack.c.l.b16 %v984
      %v1150 = vunpack.c.l.b16 %v985
      %v1151 = vunpack.c.l.b16 %v986
      %v1152 = vunpack.c.l.b16 %v987
      %v1153 = vunpack.c.l.b16 %v988
      %v1154 = vunpack.c.l.b16 %v989
      %v1155 = vunpack.c.l.b16 %v990
      %v1156 = vunpack.c.l.b16 %v991
      %v1157 = vunpack.c.l.b16 %v992
      %v1158 = vunpack.c.l.b16 %v993
      %v1159 = vunpack.c.l.b16 %v994
      %v1160 = vunpack.c.l.b16 %v995
      %v1161 = vunpack.c.l.b16 %v996
      %v1162 = vunpack.c.l.b16 %v997
      %v1163 = vunpack.c.l.b16 %v998
      %v1164 = vunpack.c.l.b16 %v999
      %v1165 = vpack.c.b16 %v1134, %v1133
      %v1166 = vpack.c.b16 %v1136, %v1135
      %v1167 = vpack.c.b16 %v1138, %v1137
      %v1168 = vpack.c.b16 %v1140, %v1139
      %v1169 = vpack.c.b16 %v1142, %v1141
      %v1170 = vpack.c.b16 %v1144, %v1143
      %v1171 = vpack.c.b16 %v1146, %v1145
      %v1172 = vpack.c.b16 %v1148, %v1147
      %v1173 = vpack.c.b16 %v1150, %v1149
      %v1174 = vpack.c.b16 %v1152, %v1151
      %v1175 = vpack.c.b16 %v1154, %v1153
      %v1176 = vpack.c.b16 %v1156, %v1155
      %v1177 = vpack.c.b16 %v1158, %v1157
      %v1178 = vpack.c.b16 %v1160, %v1159
      %v1179 = vpack.c.b16 %v1162, %v1161
      %v1180 = vpack.c.b16 %v1164, %v1163
      %1197 = vmatprep.subr.bf16.mxu0 0
      %1198 = vmatpush1.bf16.msra.mxu0 %v1165
      %1199 = vmatprep.subr.bf16.mxu0 0
      %1200 = vmatpush1.bf16.msra.mxu0 %v1166
      %1201 = vmatprep.subr.bf16.mxu0 0
      %1202 = vmatpush1.bf16.msra.mxu0 %v1167
      %1203 = vmatprep.subr.bf16.mxu0 0
      %1204 = vmatpush1.bf16.msra.mxu0 %v1168
      %1205 = vmatprep.subr.bf16.mxu0 0
      %1206 = vmatpush1.bf16.msra.mxu0 %v1169
      %1207 = vmatprep.subr.bf16.mxu0 0
      %1208 = vmatpush1.bf16.msra.mxu0 %v1170
      %1209 = vmatprep.subr.bf16.mxu0 0
      %1210 = vmatpush1.bf16.msra.mxu0 %v1171
      %1211 = vmatprep.subr.bf16.mxu0 0
      %1212 = vmatpush1.bf16.msra.mxu0 %v1172
      %1213 = vmatprep.subr.bf16.mxu0 0
      %1214 = vmatpush1.bf16.msra.mxu0 %v1173
      %1215 = vmatprep.subr.bf16.mxu0 0
      %1216 = vmatpush1.bf16.msra.mxu0 %v1174
      %1217 = vmatprep.subr.bf16.mxu0 0
      %1218 = vmatpush1.bf16.msra.mxu0 %v1175
      %1219 = vmatprep.subr.bf16.mxu0 0
      %1220 = vmatpush1.bf16.msra.mxu0 %v1176
      %1221 = vmatprep.subr.bf16.mxu0 0
      %1222 = vmatpush1.bf16.msra.mxu0 %v1177
      %1223 = vmatprep.subr.bf16.mxu0 0
      %1224 = vmatpush1.bf16.msra.mxu0 %v1178
      %1225 = vmatprep.subr.bf16.mxu0 0
      %1226 = vmatpush1.bf16.msra.mxu0 %v1179
      %1227 = vmatprep.subr.bf16.mxu0 0
      %1228 = vmatpush1.bf16.msra.mxu0 %v1180
      %1229 = vmatprep.mubr.bf16.mxu0 %v1036
      %1230 = vmatmul.mubr.bf16.gmra.mrb[0].mxu0 %v1024
      %v1231 = vpop.f32.mrb[0].mxu0
      %v1232 = vadd.f32 0.0, %v1231
      %v1233 = vpop.f32.mrb[0].mxu0
      %v1234 = vpop.f32.mrb[0].mxu0
      %v1235 = vadd.f32 0.0, %v1234
      %v1236 = vpop.f32.mrb[0].mxu0
      %1237 = vmatprep.mubr.bf16.mxu0 %v1052
      %1238 = vmatmul.mubr.bf16.gmra.mrb[0].mxu0 %v1044
      %v1239 = vpop.f32.mrb[0].mxu0
      %v1240 = vadd.f32 0.0, %v1239
      %v1241 = vpop.f32.mrb[0].mxu0
      %v1242 = vpop.f32.mrb[0].mxu0
      %v1243 = vadd.f32 0.0, %v1242
      %v1244 = vpop.f32.mrb[0].mxu0
      %1245 = vmatprep.mubr.bf16.mxu0 %v1068
      %1246 = vmatmul.mubr.bf16.gmra.mrb[0].mxu0 %v1060
      %v1247 = vpop.f32.mrb[0].mxu0
      %v1248 = vadd.f32 0.0, %v1247
      %v1249 = vpop.f32.mrb[0].mxu0
      %v1250 = vpop.f32.mrb[0].mxu0
      %v1251 = vadd.f32 0.0, %v1250
      %v1252 = vpop.f32.mrb[0].mxu0
      %1253 = vmatprep.mubr.bf16.mxu0 %v1084
      %1254 = vmatmul.mubr.bf16.gmra.mrb[0].mxu0 %v1076
      %v1255 = vpop.f32.mrb[0].mxu0
      %v1256 = vadd.f32 0.0, %v1255
      %v1257 = vpop.f32.mrb[0].mxu0
      %v1258 = vpop.f32.mrb[0].mxu0
      %v1259 = vadd.f32 0.0, %v1258
      %v1260 = vpop.f32.mrb[0].mxu0
      %1261 = vmatprep.mubr.bf16.mxu0 %v1090
      %1262 = vmatmul.mubr.bf16.gmra.mrb[0].mxu0 %v1087
      %v1263 = vpop.f32.mrb[0].mxu0
      %v1264 = vadd.f32 0.0, %v1263
      %v1265 = vpop.f32.mrb[0].mxu0
      %v1266 = vpop.f32.mrb[0].mxu0
      %v1267 = vpop.f32.mrb[0].mxu0
      %1268 = vdwg.mxu0
      %v1269 = vadd.f32 %v930, %v1232
      %v1270 = vadd.f32 %v933, %v1235
      %v1271 = vadd.f32 %v938, %v1240
      %v1272 = vadd.f32 %v941, %v1243
      %v1273 = vadd.f32 %v946, %v1248
      %v1274 = vadd.f32 %v949, %v1251
      %v1275 = vadd.f32 %v954, %v1256
      %v1276 = vadd.f32 %v957, %v1259
      %v1277 = vadd.f32 %v962, %v1264
      %s1278 = scalar_lea.vmem %s1, 384
      %v1279 = vld [vmem:[%s1278] sm:$0xf]
      %v1280 = vld [vmem:[%s1278 + $0x4] sm:$0xf]
      %v1281 = vld [vmem:[%s1278 + $0x8] sm:$0xf]
      %v1282 = vld [vmem:[%s1278 + $0xc] sm:$0xf]
      %v1283 = vld [vmem:[%s1278 + $0x10] sm:$0xf]
      %v1284 = vld [vmem:[%s1278 + $0x14] sm:$0xf]
      %v1285 = vld [vmem:[%s1278 + $0x18] sm:$0xf]
      %v1286 = vld [vmem:[%s1278 + $0x1c] sm:$0xf]
      %v1287 = vld [vmem:[%s1278 + $0x20] sm:$0xf]
      %v1288 = vld [vmem:[%s1278 + $0x24] sm:$0xf]
      %v1289 = vld [vmem:[%s1278 + $0x28] sm:$0xf]
      %v1290 = vld [vmem:[%s1278 + $0x2c] sm:$0xf]
      %v1291 = vld [vmem:[%s1278 + $0x30] sm:$0xf]
      %v1292 = vld [vmem:[%s1278 + $0x34] sm:$0xf]
      %v1293 = vld [vmem:[%s1278 + $0x38] sm:$0xf]
      %v1294 = vld [vmem:[%s1278 + $0x3c] sm:$0xf]
      %v1295 = vld [vmem:[%s1278 + $0x40] sm:$0xf]
      %v1296 = vld [vmem:[%s1278 + $0x44] sm:$0xf]
      %v1297 = vld [vmem:[%s1278 + $0x48] sm:$0xf]
      %v1298 = vld [vmem:[%s1278 + $0x4c] sm:$0xf]
      %v1299 = vld [vmem:[%s1278 + $0x50] sm:$0xf]
      %v1300 = vld [vmem:[%s1278 + $0x54] sm:$0xf]
      %v1301 = vld [vmem:[%s1278 + $0x58] sm:$0xf]
      %v1302 = vld [vmem:[%s1278 + $0x5c] sm:$0xf]
      %v1303 = vld [vmem:[%s1278 + $0x60] sm:$0xf]
      %v1304 = vld [vmem:[%s1278 + $0x64] sm:$0xf]
      %v1305 = vld [vmem:[%s1278 + $0x68] sm:$0xf]
      %v1306 = vld [vmem:[%s1278 + $0x6c] sm:$0xf]
      %v1307 = vld [vmem:[%s1278 + $0x70] sm:$0xf]
      %v1308 = vld [vmem:[%s1278 + $0x74] sm:$0xf]
      %v1309 = vld [vmem:[%s1278 + $0x78] sm:$0xf]
      %v1310 = vld [vmem:[%s1278 + $0x7c] sm:$0xf]
      %vm1311 = vcmask 1046528
      %v1312 = vrot.slane %v1003, 1
      %v1313 = vrot.slane %v1005, 1
      %v1314 = vsel %vm1311, %v1312, %v1313
      %v1315 = vrot.slane %v1004, 1
      %v1316 = vrot.slane %v1006, 1
      %v1317 = vsel %vm1311, %v1315, %v1316
      %v1318 = vrot.slane %v1007, 1
      %v1319 = vsel %vm1311, %v1313, %v1318
      %v1320 = vrot.slane %v1008, 1
      %v1321 = vsel %vm1311, %v1316, %v1320
      %v1322 = vrot.slane %v1009, 1
      %v1323 = vsel %vm1311, %v1318, %v1322
      %v1324 = vrot.slane %v1010, 1
      %v1325 = vsel %vm1311, %v1320, %v1324
      %v1326 = vrot.slane %v1011, 1
      %v1327 = vsel %vm1311, %v1322, %v1326
      %v1328 = vrot.slane %v1012, 1
      %v1329 = vsel %vm1311, %v1324, %v1328
      %v1372 = vunpack.c.l.b16 %v1279
      %v1373 = vunpack.c.l.b16 %v1280
      %v1374 = vunpack.c.l.b16 %v1281
      %v1375 = vunpack.c.l.b16 %v1282
      %v1376 = vunpack.c.l.b16 %v1283
      %v1377 = vunpack.c.l.b16 %v1284
      %v1378 = vunpack.c.l.b16 %v1285
      %v1379 = vunpack.c.l.b16 %v1286
      %v1380 = vunpack.c.l.b16 %v1287
      %v1381 = vunpack.c.l.b16 %v1288
      %v1382 = vunpack.c.l.b16 %v1289
      %v1383 = vunpack.c.l.b16 %v1290
      %v1384 = vunpack.c.l.b16 %v1291
      %v1385 = vunpack.c.l.b16 %v1292
      %v1386 = vunpack.c.l.b16 %v1293
      %v1387 = vunpack.c.l.b16 %v1294
      %v1388 = vunpack.c.l.b16 %v1295
      %v1389 = vunpack.c.l.b16 %v1296
      %v1390 = vunpack.c.l.b16 %v1297
      %v1391 = vunpack.c.l.b16 %v1298
      %v1392 = vunpack.c.l.b16 %v1299
      %v1393 = vunpack.c.l.b16 %v1300
      %v1394 = vunpack.c.l.b16 %v1301
      %v1395 = vunpack.c.l.b16 %v1302
      %v1396 = vunpack.c.l.b16 %v1303
      %v1397 = vunpack.c.l.b16 %v1304
      %v1398 = vunpack.c.l.b16 %v1305
      %v1399 = vunpack.c.l.b16 %v1306
      %v1400 = vunpack.c.l.b16 %v1307
      %v1401 = vunpack.c.l.b16 %v1308
      %v1402 = vunpack.c.l.b16 %v1309
      %v1403 = vunpack.c.l.b16 %v1310
      %v1404 = vpack.c.b16 %v1373, %v1372
      %v1405 = vpack.c.b16 %v1375, %v1374
      %v1406 = vpack.c.b16 %v1377, %v1376
      %v1407 = vpack.c.b16 %v1379, %v1378
      %v1408 = vpack.c.b16 %v1381, %v1380
      %v1409 = vpack.c.b16 %v1383, %v1382
      %v1410 = vpack.c.b16 %v1385, %v1384
      %v1411 = vpack.c.b16 %v1387, %v1386
      %v1412 = vpack.c.b16 %v1389, %v1388
      %v1413 = vpack.c.b16 %v1391, %v1390
      %v1414 = vpack.c.b16 %v1393, %v1392
      %v1415 = vpack.c.b16 %v1395, %v1394
      %v1416 = vpack.c.b16 %v1397, %v1396
      %v1417 = vpack.c.b16 %v1399, %v1398
      %v1418 = vpack.c.b16 %v1401, %v1400
      %v1419 = vpack.c.b16 %v1403, %v1402
      %1436 = vmatprep.subr.bf16.mxu0 0
      %1437 = vmatpush1.bf16.msra.mxu0 %v1404
      %1438 = vmatprep.subr.bf16.mxu0 0
      %1439 = vmatpush1.bf16.msra.mxu0 %v1405
      %1440 = vmatprep.subr.bf16.mxu0 0
      %1441 = vmatpush1.bf16.msra.mxu0 %v1406
      %1442 = vmatprep.subr.bf16.mxu0 0
      %1443 = vmatpush1.bf16.msra.mxu0 %v1407
      %1444 = vmatprep.subr.bf16.mxu0 0
      %1445 = vmatpush1.bf16.msra.mxu0 %v1408
      %1446 = vmatprep.subr.bf16.mxu0 0
      %1447 = vmatpush1.bf16.msra.mxu0 %v1409
      %1448 = vmatprep.subr.bf16.mxu0 0
      %1449 = vmatpush1.bf16.msra.mxu0 %v1410
      %1450 = vmatprep.subr.bf16.mxu0 0
      %1451 = vmatpush1.bf16.msra.mxu0 %v1411
      %1452 = vmatprep.subr.bf16.mxu0 0
      %1453 = vmatpush1.bf16.msra.mxu0 %v1412
      %1454 = vmatprep.subr.bf16.mxu0 0
      %1455 = vmatpush1.bf16.msra.mxu0 %v1413
      %1456 = vmatprep.subr.bf16.mxu0 0
      %1457 = vmatpush1.bf16.msra.mxu0 %v1414
      %1458 = vmatprep.subr.bf16.mxu0 0
      %1459 = vmatpush1.bf16.msra.mxu0 %v1415
      %1460 = vmatprep.subr.bf16.mxu0 0
      %1461 = vmatpush1.bf16.msra.mxu0 %v1416
      %1462 = vmatprep.subr.bf16.mxu0 0
      %1463 = vmatpush1.bf16.msra.mxu0 %v1417
      %1464 = vmatprep.subr.bf16.mxu0 0
      %1465 = vmatpush1.bf16.msra.mxu0 %v1418
      %1466 = vmatprep.subr.bf16.mxu0 0
      %1467 = vmatpush1.bf16.msra.mxu0 %v1419
      %1468 = vmatprep.mubr.bf16.mxu0 %v1317
      %1469 = vmatmul.mubr.bf16.gmra.mrb[0].mxu0 %v1314
      %v1470 = vpop.f32.mrb[0].mxu0
      %v1471 = vadd.f32 0.0, %v1470
      %v1472 = vpop.f32.mrb[0].mxu0
      %v1473 = vpop.f32.mrb[0].mxu0
      %v1474 = vadd.f32 0.0, %v1473
      %v1475 = vpop.f32.mrb[0].mxu0
      %1476 = vmatprep.mubr.bf16.mxu0 %v1321
      %1477 = vmatmul.mubr.bf16.gmra.mrb[0].mxu0 %v1319
      %v1478 = vpop.f32.mrb[0].mxu0
      %v1479 = vadd.f32 0.0, %v1478
      %v1480 = vpop.f32.mrb[0].mxu0
      %v1481 = vpop.f32.mrb[0].mxu0
      %v1482 = vadd.f32 0.0, %v1481
      %v1483 = vpop.f32.mrb[0].mxu0
      %1484 = vmatprep.mubr.bf16.mxu0 %v1325
      %1485 = vmatmul.mubr.bf16.gmra.mrb[0].mxu0 %v1323
      %v1486 = vpop.f32.mrb[0].mxu0
      %v1487 = vadd.f32 0.0, %v1486
      %v1488 = vpop.f32.mrb[0].mxu0
      %v1489 = vpop.f32.mrb[0].mxu0
      %v1490 = vadd.f32 0.0, %v1489
      %v1491 = vpop.f32.mrb[0].mxu0
      %1492 = vmatprep.mubr.bf16.mxu0 %v1329
      %1493 = vmatmul.mubr.bf16.gmra.mrb[0].mxu0 %v1327
      %v1494 = vpop.f32.mrb[0].mxu0
      %v1495 = vadd.f32 0.0, %v1494
      %v1496 = vpop.f32.mrb[0].mxu0
      %v1497 = vpop.f32.mrb[0].mxu0
      %v1498 = vadd.f32 0.0, %v1497
      %v1499 = vpop.f32.mrb[0].mxu0
      %1500 = vmatprep.mubr.bf16.mxu0 %v1328
      %1501 = vmatmul.mubr.bf16.gmra.mrb[0].mxu0 %v1326
      %v1502 = vpop.f32.mrb[0].mxu0
      %v1503 = vadd.f32 0.0, %v1502
      %v1504 = vpop.f32.mrb[0].mxu0
      %v1505 = vpop.f32.mrb[0].mxu0
      %v1506 = vpop.f32.mrb[0].mxu0
      %1507 = vdwg.mxu0
      %v1508 = vadd.f32 %v1269, %v1471
      %v1509 = vadd.f32 %v1270, %v1474
      %v1510 = vadd.f32 %v1271, %v1479
      %v1511 = vadd.f32 %v1272, %v1482
      %v1512 = vadd.f32 %v1273, %v1487
      %v1513 = vadd.f32 %v1274, %v1490
      %v1514 = vadd.f32 %v1275, %v1495
      %v1515 = vadd.f32 %v1276, %v1498
      %v1516 = vadd.f32 %v1277, %v1503
      %v1517 = vld [vmem:[%s2] sm:$0x1]
      %v1519 = vlaneseq
      %v1520 = vshrl.u32 %v1519, 7
      %v1521 = vsub.s32 0, %v1520
      %v1522 = vrot.slane %v1517, %v1521
      %v1524 = vadd.f32 %v1508, %v1522
      %v1525 = vadd.f32 %v1509, %v1522
      %v1526 = vadd.f32 %v1510, %v1522
      %v1527 = vadd.f32 %v1511, %v1522
      %v1528 = vadd.f32 %v1512, %v1522
      %v1529 = vadd.f32 %v1513, %v1522
      %v1530 = vadd.f32 %v1514, %v1522
      %v1531 = vadd.f32 %v1515, %v1522
      %v1532 = vadd.f32 %v1516, %v1522
      %1533 = vst [vmem:[%s242] sm:$0xff] %v1524
      %1534 = vst [vmem:[%s242 + $0x8] sm:$0xff] %v1525
      %1535 = vst [vmem:[%s242 + $0x10] sm:$0xff] %v1526
      %1536 = vst [vmem:[%s242 + $0x18] sm:$0xff] %v1527
      %1537 = vst [vmem:[%s242 + $0x20] sm:$0xff] %v1528
      %1538 = vst [vmem:[%s242 + $0x28] sm:$0xff] %v1529
      %1539 = vst [vmem:[%s242 + $0x30] sm:$0xff] %v1530
      %1540 = vst [vmem:[%s242 + $0x38] sm:$0xff] %v1531
      %1541 = vst [vmem:[%s242 + $0x40] sm:$0xff] %v1532
      %v1542 = vsel %vm405, 1, 0
      %v1543 = vsel %vm406, 1, 0
      %v1544 = vsel %vm407, 1, 0
      %v1545 = vsel %vm408, 1, 0
      %v1546 = vsel %vm409, 1, 0
      %v1547 = vsel %vm410, 1, 0
      %v1548 = vsel %vm411, 1, 0
      %v1549 = vsel %vm412, 1, 0
      %v1550 = vsel %vm413, 1, 0
      %vm1551 = vcmp.eq.s32.totalorder %v1542, 1
      %vm1552 = vcmp.eq.s32.totalorder %v1543, 1
      %vm1553 = vcmp.eq.s32.totalorder %v1544, 1
      %vm1554 = vcmp.eq.s32.totalorder %v1545, 1
      %vm1555 = vcmp.eq.s32.totalorder %v1546, 1
      %vm1556 = vcmp.eq.s32.totalorder %v1547, 1
      %vm1557 = vcmp.eq.s32.totalorder %v1548, 1
      %vm1558 = vcmp.eq.s32.totalorder %v1549, 1
      %vm1559 = vcmp.eq.s32.totalorder %v1550, 1
      %v1560 = vsel %vm1551, %v1524, 0.0
      %v1561 = vsel %vm1552, %v1525, 0.0
      %v1562 = vsel %vm1553, %v1526, 0.0
      %v1563 = vsel %vm1554, %v1527, 0.0
      %v1564 = vsel %vm1555, %v1528, 0.0
      %v1565 = vsel %vm1556, %v1529, 0.0
      %v1566 = vsel %vm1557, %v1530, 0.0
      %v1567 = vsel %vm1558, %v1531, 0.0
      %v1568 = vsel %vm1559, %v1532, 0.0
      %v1569 = vadd.f32 %v1560, %v1561
      %v1570 = vadd.f32 %v1569, %v1562
      %v1571 = vadd.f32 %v1570, %v1563
      %v1572 = vadd.f32 %v1571, %v1564
      %v1573 = vadd.f32 %v1572, %v1565
      %v1574 = vadd.f32 %v1573, %v1566
      %v1575 = vadd.f32 %v1574, %v1567
      %v1576 = vadd.f32 %v1575, %v1568
      %v1577 = vrot.slane %v1576, 4
      %v1578 = vadd.f32 %v1576, %v1577
      %v1579 = vrot.slane %v1578, 2
      %v1580 = vadd.f32 %v1578, %v1579
      %v1581 = vrot.slane %v1580, 1
      %v1582 = vadd.f32 %v1580, %v1581
      %v1583 = vadd.f32 %v1582, 0.0
      %v1584 = vmul.f32 %v1560, %v1560
      %v1585 = vmul.f32 %v1561, %v1561
      %v1586 = vmul.f32 %v1562, %v1562
      %v1587 = vmul.f32 %v1563, %v1563
      %v1588 = vmul.f32 %v1564, %v1564
      %v1589 = vmul.f32 %v1565, %v1565
      %v1590 = vmul.f32 %v1566, %v1566
      %v1591 = vmul.f32 %v1567, %v1567
      %v1592 = vmul.f32 %v1568, %v1568
      %v1593 = vadd.f32 %v1584, %v1585
      %v1594 = vadd.f32 %v1593, %v1586
      %v1595 = vadd.f32 %v1594, %v1587
      %v1596 = vadd.f32 %v1595, %v1588
      %v1597 = vadd.f32 %v1596, %v1589
      %v1598 = vadd.f32 %v1597, %v1590
      %v1599 = vadd.f32 %v1598, %v1591
      %v1600 = vadd.f32 %v1599, %v1592
      %v1601 = vrot.slane %v1600, 4
      %v1602 = vadd.f32 %v1600, %v1601
      %v1603 = vrot.slane %v1602, 2
      %v1604 = vadd.f32 %v1602, %v1603
      %v1605 = vrot.slane %v1604, 1
      %v1606 = vadd.f32 %v1604, %v1605
      %v1607 = vadd.f32 %v1606, 0.0
      %s1608 = scalar_lea.vmem %s235, 96
      %v1609 = vld [vmem:[%s1608] sm:$0xff]
      %v1610 = vld [vmem:[%s1608 + $0x8] sm:$0xff]
      %v1611 = vld [vmem:[%s1608 + $0x10] sm:$0xff]
      %v1612 = vld [vmem:[%s1608 + $0x18] sm:$0xff]
      %v1613 = vld [vmem:[%s1608 + $0x20] sm:$0xff]
      %v1614 = vld [vmem:[%s1608 + $0x28] sm:$0xff]
      %v1615 = vld [vmem:[%s1608 + $0x30] sm:$0xff]
      %v1616 = vld [vmem:[%s1608 + $0x38] sm:$0xff]
      %v1617 = vld [vmem:[%s1608 + $0x40] sm:$0xff]
      %v1618 = vld [vmem:[%s1608 + $0x48] sm:$0xff]
      %v1619 = vld [vmem:[%s1608 + $0x50] sm:$0xff]
      %v1620 = vld [vmem:[%s1] sm:$0xf]
      %v1621 = vld [vmem:[%s1 + $0x4] sm:$0xf]
      %v1622 = vld [vmem:[%s1 + $0x8] sm:$0xf]
      %v1623 = vld [vmem:[%s1 + $0xc] sm:$0xf]
      %v1624 = vld [vmem:[%s1 + $0x10] sm:$0xf]
      %v1625 = vld [vmem:[%s1 + $0x14] sm:$0xf]
      %v1626 = vld [vmem:[%s1 + $0x18] sm:$0xf]
      %v1627 = vld [vmem:[%s1 + $0x1c] sm:$0xf]
      %v1628 = vld [vmem:[%s1 + $0x20] sm:$0xf]
      %v1629 = vld [vmem:[%s1 + $0x24] sm:$0xf]
      %v1630 = vld [vmem:[%s1 + $0x28] sm:$0xf]
      %v1631 = vld [vmem:[%s1 + $0x2c] sm:$0xf]
      %v1632 = vld [vmem:[%s1 + $0x30] sm:$0xf]
      %v1633 = vld [vmem:[%s1 + $0x34] sm:$0xf]
      %v1634 = vld [vmem:[%s1 + $0x38] sm:$0xf]
      %v1635 = vld [vmem:[%s1 + $0x3c] sm:$0xf]
      %v1636 = vld [vmem:[%s1 + $0x40] sm:$0xf]
      %v1637 = vld [vmem:[%s1 + $0x44] sm:$0xf]
      %v1638 = vld [vmem:[%s1 + $0x48] sm:$0xf]
      %v1639 = vld [vmem:[%s1 + $0x4c] sm:$0xf]
      %v1640 = vld [vmem:[%s1 + $0x50] sm:$0xf]
      %v1641 = vld [vmem:[%s1 + $0x54] sm:$0xf]
      %v1642 = vld [vmem:[%s1 + $0x58] sm:$0xf]
      %v1643 = vld [vmem:[%s1 + $0x5c] sm:$0xf]
      %v1644 = vld [vmem:[%s1 + $0x60] sm:$0xf]
      %v1645 = vld [vmem:[%s1 + $0x64] sm:$0xf]
      %v1646 = vld [vmem:[%s1 + $0x68] sm:$0xf]
      %v1647 = vld [vmem:[%s1 + $0x6c] sm:$0xf]
      %v1648 = vld [vmem:[%s1 + $0x70] sm:$0xf]
      %v1649 = vld [vmem:[%s1 + $0x74] sm:$0xf]
      %v1650 = vld [vmem:[%s1 + $0x78] sm:$0xf]
      %v1651 = vld [vmem:[%s1 + $0x7c] sm:$0xf]
      %v1652 = vld [vmem:[%s457] sm:$0xf]
      %v1653 = vld [vmem:[%s457 + $0x4] sm:$0xf]
      %v1654 = vld [vmem:[%s457 + $0x8] sm:$0xf]
      %v1655 = vld [vmem:[%s457 + $0xc] sm:$0xf]
      %v1656 = vld [vmem:[%s457 + $0x10] sm:$0xf]
      %v1657 = vld [vmem:[%s457 + $0x14] sm:$0xf]
      %v1658 = vld [vmem:[%s457 + $0x18] sm:$0xf]
      %v1659 = vld [vmem:[%s457 + $0x1c] sm:$0xf]
      %v1660 = vld [vmem:[%s457 + $0x20] sm:$0xf]
      %v1661 = vld [vmem:[%s457 + $0x24] sm:$0xf]
      %v1662 = vld [vmem:[%s457 + $0x28] sm:$0xf]
      %v1663 = vld [vmem:[%s457 + $0x2c] sm:$0xf]
      %v1664 = vld [vmem:[%s457 + $0x30] sm:$0xf]
      %v1665 = vld [vmem:[%s457 + $0x34] sm:$0xf]
      %v1666 = vld [vmem:[%s457 + $0x38] sm:$0xf]
      %v1667 = vld [vmem:[%s457 + $0x3c] sm:$0xf]
      %v1668 = vld [vmem:[%s457 + $0x40] sm:$0xf]
      %v1669 = vld [vmem:[%s457 + $0x44] sm:$0xf]
      %v1670 = vld [vmem:[%s457 + $0x48] sm:$0xf]
      %v1671 = vld [vmem:[%s457 + $0x4c] sm:$0xf]
      %v1672 = vld [vmem:[%s457 + $0x50] sm:$0xf]
      %v1673 = vld [vmem:[%s457 + $0x54] sm:$0xf]
      %v1674 = vld [vmem:[%s457 + $0x58] sm:$0xf]
      %v1675 = vld [vmem:[%s457 + $0x5c] sm:$0xf]
      %v1676 = vld [vmem:[%s457 + $0x60] sm:$0xf]
      %v1677 = vld [vmem:[%s457 + $0x64] sm:$0xf]
      %v1678 = vld [vmem:[%s457 + $0x68] sm:$0xf]
      %v1679 = vld [vmem:[%s457 + $0x6c] sm:$0xf]
      %v1680 = vld [vmem:[%s457 + $0x70] sm:$0xf]
      %v1681 = vld [vmem:[%s457 + $0x74] sm:$0xf]
      %v1682 = vld [vmem:[%s457 + $0x78] sm:$0xf]
      %v1683 = vld [vmem:[%s457 + $0x7c] sm:$0xf]
      %v1694 = vunpack.c.l.b16 %v1609
      %v1695 = vunpack.c.h.b16 %v1609
      %v1696 = vunpack.c.l.b16 %v1610
      %v1697 = vunpack.c.h.b16 %v1610
      %v1698 = vunpack.c.l.b16 %v1611
      %v1699 = vunpack.c.h.b16 %v1611
      %v1700 = vunpack.c.l.b16 %v1612
      %v1701 = vunpack.c.h.b16 %v1612
      %v1702 = vunpack.c.l.b16 %v1613
      %v1703 = vunpack.c.h.b16 %v1613
      %v1704 = vunpack.c.l.b16 %v1614
      %v1705 = vunpack.c.h.b16 %v1614
      %v1706 = vunpack.c.l.b16 %v1615
      %v1707 = vunpack.c.h.b16 %v1615
      %v1708 = vunpack.c.l.b16 %v1616
      %v1709 = vunpack.c.h.b16 %v1616
      %v1710 = vunpack.c.l.b16 %v1617
      %v1711 = vunpack.c.h.b16 %v1617
      %v1712 = vunpack.c.l.b16 %v1618
      %v1713 = vunpack.c.h.b16 %v1618
      %v1714 = vpack.c.b16 %v1696, %v1694
      %v1715 = vpack.c.b16 %v1697, %v1695
      %v1716 = vpack.c.b16 %v1700, %v1698
      %v1717 = vpack.c.b16 %v1701, %v1699
      %v1718 = vpack.c.b16 %v1704, %v1702
      %v1719 = vpack.c.b16 %v1705, %v1703
      %v1720 = vpack.c.b16 %v1708, %v1706
      %v1721 = vpack.c.b16 %v1709, %v1707
      %v1722 = vpack.c.b16 %v1712, %v1710
      %v1723 = vpack.c.b16 %v1713, %v1711
      %v1725 = vshrl.u32 %v1714, 16
      %v1727 = vshll.u32 %v1714, 16
      %v1729 = vrot.slane %v1727, 1
      %v1730 = vor.u32 %v1725, %v1729
      %v1732 = vshll.u32 %v1716, 16
      %v1734 = vrot.slane %v1732, 1
      %v1735 = vsel %vm530, %v1730, %v1734
      %v1737 = vshrl.u32 %v1715, 16
      %v1739 = vshll.u32 %v1715, 16
      %v1741 = vrot.slane %v1739, 1
      %v1742 = vor.u32 %v1737, %v1741
      %v1744 = vshll.u32 %v1717, 16
      %v1746 = vrot.slane %v1744, 1
      %v1747 = vsel %vm530, %v1742, %v1746
      %v1748 = vshrl.u32 %v1716, 16
      %v1750 = vor.u32 %v1748, %v1734
      %v1752 = vshll.u32 %v1718, 16
      %v1754 = vrot.slane %v1752, 1
      %v1755 = vsel %vm530, %v1750, %v1754
      %v1756 = vshrl.u32 %v1717, 16
      %v1758 = vor.u32 %v1756, %v1746
      %v1760 = vshll.u32 %v1719, 16
      %v1762 = vrot.slane %v1760, 1
      %v1763 = vsel %vm530, %v1758, %v1762
      %v1764 = vshrl.u32 %v1718, 16
      %v1766 = vor.u32 %v1764, %v1754
      %v1768 = vshll.u32 %v1720, 16
      %v1770 = vrot.slane %v1768, 1
      %v1771 = vsel %vm530, %v1766, %v1770
      %v1772 = vshrl.u32 %v1719, 16
      %v1774 = vor.u32 %v1772, %v1762
      %v1776 = vshll.u32 %v1721, 16
      %v1778 = vrot.slane %v1776, 1
      %v1779 = vsel %vm530, %v1774, %v1778
      %v1780 = vshrl.u32 %v1720, 16
      %v1782 = vor.u32 %v1780, %v1770
      %v1784 = vshll.u32 %v1722, 16
      %v1786 = vrot.slane %v1784, 1
      %v1787 = vsel %vm530, %v1782, %v1786
      %v1788 = vshrl.u32 %v1721, 16
      %v1790 = vor.u32 %v1788, %v1778
      %v1792 = vshll.u32 %v1723, 16
      %v1794 = vrot.slane %v1792, 1
      %v1795 = vsel %vm530, %v1790, %v1794
      %v1796 = vshrl.u32 %v1722, 16
      %v1798 = vor.u32 %v1796, %v1786
      %v1799 = vshrl.u32 %v1723, 16
      %v1801 = vor.u32 %v1799, %v1794
      %v1844 = vunpack.c.l.b16 %v1652
      %v1845 = vunpack.c.l.b16 %v1653
      %v1846 = vunpack.c.l.b16 %v1654
      %v1847 = vunpack.c.l.b16 %v1655
      %v1848 = vunpack.c.l.b16 %v1656
      %v1849 = vunpack.c.l.b16 %v1657
      %v1850 = vunpack.c.l.b16 %v1658
      %v1851 = vunpack.c.l.b16 %v1659
      %v1852 = vunpack.c.l.b16 %v1660
      %v1853 = vunpack.c.l.b16 %v1661
      %v1854 = vunpack.c.l.b16 %v1662
      %v1855 = vunpack.c.l.b16 %v1663
      %v1856 = vunpack.c.l.b16 %v1664
      %v1857 = vunpack.c.l.b16 %v1665
      %v1858 = vunpack.c.l.b16 %v1666
      %v1859 = vunpack.c.l.b16 %v1667
      %v1860 = vunpack.c.l.b16 %v1668
      %v1861 = vunpack.c.l.b16 %v1669
      %v1862 = vunpack.c.l.b16 %v1670
      %v1863 = vunpack.c.l.b16 %v1671
      %v1864 = vunpack.c.l.b16 %v1672
      %v1865 = vunpack.c.l.b16 %v1673
      %v1866 = vunpack.c.l.b16 %v1674
      %v1867 = vunpack.c.l.b16 %v1675
      %v1868 = vunpack.c.l.b16 %v1676
      %v1869 = vunpack.c.l.b16 %v1677
      %v1870 = vunpack.c.l.b16 %v1678
      %v1871 = vunpack.c.l.b16 %v1679
      %v1872 = vunpack.c.l.b16 %v1680
      %v1873 = vunpack.c.l.b16 %v1681
      %v1874 = vunpack.c.l.b16 %v1682
      %v1875 = vunpack.c.l.b16 %v1683
      %v1876 = vpack.c.b16 %v1845, %v1844
      %v1877 = vpack.c.b16 %v1847, %v1846
      %v1878 = vpack.c.b16 %v1849, %v1848
      %v1879 = vpack.c.b16 %v1851, %v1850
      %v1880 = vpack.c.b16 %v1853, %v1852
      %v1881 = vpack.c.b16 %v1855, %v1854
      %v1882 = vpack.c.b16 %v1857, %v1856
      %v1883 = vpack.c.b16 %v1859, %v1858
      %v1884 = vpack.c.b16 %v1861, %v1860
      %v1885 = vpack.c.b16 %v1863, %v1862
      %v1886 = vpack.c.b16 %v1865, %v1864
      %v1887 = vpack.c.b16 %v1867, %v1866
      %v1888 = vpack.c.b16 %v1869, %v1868
      %v1889 = vpack.c.b16 %v1871, %v1870
      %v1890 = vpack.c.b16 %v1873, %v1872
      %v1891 = vpack.c.b16 %v1875, %v1874
      %1908 = vmatprep.subr.bf16.mxu0 0
      %1909 = vmatpush1.bf16.msra.mxu0 %v1876
      %1910 = vmatprep.subr.bf16.mxu0 0
      %1911 = vmatpush1.bf16.msra.mxu0 %v1877
      %1912 = vmatprep.subr.bf16.mxu0 0
      %1913 = vmatpush1.bf16.msra.mxu0 %v1878
      %1914 = vmatprep.subr.bf16.mxu0 0
      %1915 = vmatpush1.bf16.msra.mxu0 %v1879
      %1916 = vmatprep.subr.bf16.mxu0 0
      %1917 = vmatpush1.bf16.msra.mxu0 %v1880
      %1918 = vmatprep.subr.bf16.mxu0 0
      %1919 = vmatpush1.bf16.msra.mxu0 %v1881
      %1920 = vmatprep.subr.bf16.mxu0 0
      %1921 = vmatpush1.bf16.msra.mxu0 %v1882
      %1922 = vmatprep.subr.bf16.mxu0 0
      %1923 = vmatpush1.bf16.msra.mxu0 %v1883
      %1924 = vmatprep.subr.bf16.mxu0 0
      %1925 = vmatpush1.bf16.msra.mxu0 %v1884
      %1926 = vmatprep.subr.bf16.mxu0 0
      %1927 = vmatpush1.bf16.msra.mxu0 %v1885
      %1928 = vmatprep.subr.bf16.mxu0 0
      %1929 = vmatpush1.bf16.msra.mxu0 %v1886
      %1930 = vmatprep.subr.bf16.mxu0 0
      %1931 = vmatpush1.bf16.msra.mxu0 %v1887
      %1932 = vmatprep.subr.bf16.mxu0 0
      %1933 = vmatpush1.bf16.msra.mxu0 %v1888
      %1934 = vmatprep.subr.bf16.mxu0 0
      %1935 = vmatpush1.bf16.msra.mxu0 %v1889
      %1936 = vmatprep.subr.bf16.mxu0 0
      %1937 = vmatpush1.bf16.msra.mxu0 %v1890
      %1938 = vmatprep.subr.bf16.mxu0 0
      %1939 = vmatpush1.bf16.msra.mxu0 %v1891
      %1940 = vmatprep.mubr.bf16.mxu0 %v1747
      %1941 = vmatmul.mubr.bf16.gmra.mrb[0].mxu0 %v1735
      %v1942 = vpop.f32.mrb[0].mxu0
      %v1943 = vadd.f32 0.0, %v1942
      %v1944 = vpop.f32.mrb[0].mxu0
      %v1945 = vpop.f32.mrb[0].mxu0
      %v1946 = vadd.f32 0.0, %v1945
      %v1947 = vpop.f32.mrb[0].mxu0
      %1948 = vmatprep.mubr.bf16.mxu0 %v1763
      %1949 = vmatmul.mubr.bf16.gmra.mrb[0].mxu0 %v1755
      %v1950 = vpop.f32.mrb[0].mxu0
      %v1951 = vadd.f32 0.0, %v1950
      %v1952 = vpop.f32.mrb[0].mxu0
      %v1953 = vpop.f32.mrb[0].mxu0
      %v1954 = vadd.f32 0.0, %v1953
      %v1955 = vpop.f32.mrb[0].mxu0
      %1956 = vmatprep.mubr.bf16.mxu0 %v1779
      %1957 = vmatmul.mubr.bf16.gmra.mrb[0].mxu0 %v1771
      %v1958 = vpop.f32.mrb[0].mxu0
      %v1959 = vadd.f32 0.0, %v1958
      %v1960 = vpop.f32.mrb[0].mxu0
      %v1961 = vpop.f32.mrb[0].mxu0
      %v1962 = vadd.f32 0.0, %v1961
      %v1963 = vpop.f32.mrb[0].mxu0
      %1964 = vmatprep.mubr.bf16.mxu0 %v1795
      %1965 = vmatmul.mubr.bf16.gmra.mrb[0].mxu0 %v1787
      %v1966 = vpop.f32.mrb[0].mxu0
      %v1967 = vadd.f32 0.0, %v1966
      %v1968 = vpop.f32.mrb[0].mxu0
      %v1969 = vpop.f32.mrb[0].mxu0
      %v1970 = vadd.f32 0.0, %v1969
      %v1971 = vpop.f32.mrb[0].mxu0
      %1972 = vmatprep.mubr.bf16.mxu0 %v1801
      %1973 = vmatmul.mubr.bf16.gmra.mrb[0].mxu0 %v1798
      %v1974 = vpop.f32.mrb[0].mxu0
      %v1975 = vadd.f32 0.0, %v1974
      %v1976 = vpop.f32.mrb[0].mxu0
      %v1977 = vpop.f32.mrb[0].mxu0
      %v1978 = vpop.f32.mrb[0].mxu0
      %1979 = vdwg.mxu0
      %v1980 = vpack.c.b16 %v1710, %v1710
      %v1981 = vpack.c.b16 %v1711, %v1711
      %v2024 = vunpack.c.l.b16 %v1620
      %v2025 = vunpack.c.l.b16 %v1621
      %v2026 = vunpack.c.l.b16 %v1622
      %v2027 = vunpack.c.l.b16 %v1623
      %v2028 = vunpack.c.l.b16 %v1624
      %v2029 = vunpack.c.l.b16 %v1625
      %v2030 = vunpack.c.l.b16 %v1626
      %v2031 = vunpack.c.l.b16 %v1627
      %v2032 = vunpack.c.l.b16 %v1628
      %v2033 = vunpack.c.l.b16 %v1629
      %v2034 = vunpack.c.l.b16 %v1630
      %v2035 = vunpack.c.l.b16 %v1631
      %v2036 = vunpack.c.l.b16 %v1632
      %v2037 = vunpack.c.l.b16 %v1633
      %v2038 = vunpack.c.l.b16 %v1634
      %v2039 = vunpack.c.l.b16 %v1635
      %v2040 = vunpack.c.l.b16 %v1636
      %v2041 = vunpack.c.l.b16 %v1637
      %v2042 = vunpack.c.l.b16 %v1638
      %v2043 = vunpack.c.l.b16 %v1639
      %v2044 = vunpack.c.l.b16 %v1640
      %v2045 = vunpack.c.l.b16 %v1641
      %v2046 = vunpack.c.l.b16 %v1642
      %v2047 = vunpack.c.l.b16 %v1643
      %v2048 = vunpack.c.l.b16 %v1644
      %v2049 = vunpack.c.l.b16 %v1645
      %v2050 = vunpack.c.l.b16 %v1646
      %v2051 = vunpack.c.l.b16 %v1647
      %v2052 = vunpack.c.l.b16 %v1648
      %v2053 = vunpack.c.l.b16 %v1649
      %v2054 = vunpack.c.l.b16 %v1650
      %v2055 = vunpack.c.l.b16 %v1651
      %v2056 = vpack.c.b16 %v2025, %v2024
      %v2057 = vpack.c.b16 %v2027, %v2026
      %v2058 = vpack.c.b16 %v2029, %v2028
      %v2059 = vpack.c.b16 %v2031, %v2030
      %v2060 = vpack.c.b16 %v2033, %v2032
      %v2061 = vpack.c.b16 %v2035, %v2034
      %v2062 = vpack.c.b16 %v2037, %v2036
      %v2063 = vpack.c.b16 %v2039, %v2038
      %v2064 = vpack.c.b16 %v2041, %v2040
      %v2065 = vpack.c.b16 %v2043, %v2042
      %v2066 = vpack.c.b16 %v2045, %v2044
      %v2067 = vpack.c.b16 %v2047, %v2046
      %v2068 = vpack.c.b16 %v2049, %v2048
      %v2069 = vpack.c.b16 %v2051, %v2050
      %v2070 = vpack.c.b16 %v2053, %v2052
      %v2071 = vpack.c.b16 %v2055, %v2054
      %2088 = vmatprep.subr.bf16.mxu0 0
      %2089 = vmatpush1.bf16.msra.mxu0 %v2056
      %2090 = vmatprep.subr.bf16.mxu0 0
      %2091 = vmatpush1.bf16.msra.mxu0 %v2057
      %2092 = vmatprep.subr.bf16.mxu0 0
      %2093 = vmatpush1.bf16.msra.mxu0 %v2058
      %2094 = vmatprep.subr.bf16.mxu0 0
      %2095 = vmatpush1.bf16.msra.mxu0 %v2059
      %2096 = vmatprep.subr.bf16.mxu0 0
      %2097 = vmatpush1.bf16.msra.mxu0 %v2060
      %2098 = vmatprep.subr.bf16.mxu0 0
      %2099 = vmatpush1.bf16.msra.mxu0 %v2061
      %2100 = vmatprep.subr.bf16.mxu0 0
      %2101 = vmatpush1.bf16.msra.mxu0 %v2062
      %2102 = vmatprep.subr.bf16.mxu0 0
      %2103 = vmatpush1.bf16.msra.mxu0 %v2063
      %2104 = vmatprep.subr.bf16.mxu0 0
      %2105 = vmatpush1.bf16.msra.mxu0 %v2064
      %2106 = vmatprep.subr.bf16.mxu0 0
      %2107 = vmatpush1.bf16.msra.mxu0 %v2065
      %2108 = vmatprep.subr.bf16.mxu0 0
      %2109 = vmatpush1.bf16.msra.mxu0 %v2066
      %2110 = vmatprep.subr.bf16.mxu0 0
      %2111 = vmatpush1.bf16.msra.mxu0 %v2067
      %2112 = vmatprep.subr.bf16.mxu0 0
      %2113 = vmatpush1.bf16.msra.mxu0 %v2068
      %2114 = vmatprep.subr.bf16.mxu0 0
      %2115 = vmatpush1.bf16.msra.mxu0 %v2069
      %2116 = vmatprep.subr.bf16.mxu0 0
      %2117 = vmatpush1.bf16.msra.mxu0 %v2070
      %2118 = vmatprep.subr.bf16.mxu0 0
      %2119 = vmatpush1.bf16.msra.mxu0 %v2071
      %2120 = vmatprep.mubr.bf16.mxu0 %v1715
      %2121 = vmatmul.mubr.bf16.gmra.mrb[0].mxu0 %v1714
      %v2122 = vpop.f32.mrb[0].mxu0
      %v2123 = vadd.f32 %v1943, %v2122
      %v2124 = vpop.f32.mrb[0].mxu0
      %v2125 = vpop.f32.mrb[0].mxu0
      %v2126 = vadd.f32 %v1946, %v2125
      %v2127 = vpop.f32.mrb[0].mxu0
      %2128 = vmatprep.mubr.bf16.mxu0 %v1717
      %2129 = vmatmul.mubr.bf16.gmra.mrb[0].mxu0 %v1716
      %v2130 = vpop.f32.mrb[0].mxu0
      %v2131 = vadd.f32 %v1951, %v2130
      %v2132 = vpop.f32.mrb[0].mxu0
      %v2133 = vpop.f32.mrb[0].mxu0
      %v2134 = vadd.f32 %v1954, %v2133
      %v2135 = vpop.f32.mrb[0].mxu0
      %2136 = vmatprep.mubr.bf16.mxu0 %v1719
      %2137 = vmatmul.mubr.bf16.gmra.mrb[0].mxu0 %v1718
      %v2138 = vpop.f32.mrb[0].mxu0
      %v2139 = vadd.f32 %v1959, %v2138
      %v2140 = vpop.f32.mrb[0].mxu0
      %v2141 = vpop.f32.mrb[0].mxu0
      %v2142 = vadd.f32 %v1962, %v2141
      %v2143 = vpop.f32.mrb[0].mxu0
      %2144 = vmatprep.mubr.bf16.mxu0 %v1721
      %2145 = vmatmul.mubr.bf16.gmra.mrb[0].mxu0 %v1720
      %v2146 = vpop.f32.mrb[0].mxu0
      %v2147 = vadd.f32 %v1967, %v2146
      %v2148 = vpop.f32.mrb[0].mxu0
      %v2149 = vpop.f32.mrb[0].mxu0
      %v2150 = vadd.f32 %v1970, %v2149
      %v2151 = vpop.f32.mrb[0].mxu0
      %2152 = vmatprep.mubr.bf16.mxu0 %v1981
      %2153 = vmatmul.mubr.bf16.gmra.mrb[0].mxu0 %v1980
      %v2154 = vpop.f32.mrb[0].mxu0
      %v2155 = vadd.f32 %v1975, %v2154
      %v2156 = vpop.f32.mrb[0].mxu0
      %v2157 = vpop.f32.mrb[0].mxu0
      %v2158 = vpop.f32.mrb[0].mxu0
      %2159 = vdwg.mxu0
      %v2160 = vld [vmem:[%s967] sm:$0xf]
      %v2161 = vld [vmem:[%s967 + $0x4] sm:$0xf]
      %v2162 = vld [vmem:[%s967 + $0x8] sm:$0xf]
      %v2163 = vld [vmem:[%s967 + $0xc] sm:$0xf]
      %v2164 = vld [vmem:[%s967 + $0x10] sm:$0xf]
      %v2165 = vld [vmem:[%s967 + $0x14] sm:$0xf]
      %v2166 = vld [vmem:[%s967 + $0x18] sm:$0xf]
      %v2167 = vld [vmem:[%s967 + $0x1c] sm:$0xf]
      %v2168 = vld [vmem:[%s967 + $0x20] sm:$0xf]
      %v2169 = vld [vmem:[%s967 + $0x24] sm:$0xf]
      %v2170 = vld [vmem:[%s967 + $0x28] sm:$0xf]
      %v2171 = vld [vmem:[%s967 + $0x2c] sm:$0xf]
      %v2172 = vld [vmem:[%s967 + $0x30] sm:$0xf]
      %v2173 = vld [vmem:[%s967 + $0x34] sm:$0xf]
      %v2174 = vld [vmem:[%s967 + $0x38] sm:$0xf]
      %v2175 = vld [vmem:[%s967 + $0x3c] sm:$0xf]
      %v2176 = vld [vmem:[%s967 + $0x40] sm:$0xf]
      %v2177 = vld [vmem:[%s967 + $0x44] sm:$0xf]
      %v2178 = vld [vmem:[%s967 + $0x48] sm:$0xf]
      %v2179 = vld [vmem:[%s967 + $0x4c] sm:$0xf]
      %v2180 = vld [vmem:[%s967 + $0x50] sm:$0xf]
      %v2181 = vld [vmem:[%s967 + $0x54] sm:$0xf]
      %v2182 = vld [vmem:[%s967 + $0x58] sm:$0xf]
      %v2183 = vld [vmem:[%s967 + $0x5c] sm:$0xf]
      %v2184 = vld [vmem:[%s967 + $0x60] sm:$0xf]
      %v2185 = vld [vmem:[%s967 + $0x64] sm:$0xf]
      %v2186 = vld [vmem:[%s967 + $0x68] sm:$0xf]
      %v2187 = vld [vmem:[%s967 + $0x6c] sm:$0xf]
      %v2188 = vld [vmem:[%s967 + $0x70] sm:$0xf]
      %v2189 = vld [vmem:[%s967 + $0x74] sm:$0xf]
      %v2190 = vld [vmem:[%s967 + $0x78] sm:$0xf]
      %v2191 = vld [vmem:[%s967 + $0x7c] sm:$0xf]
      %v2193 = vunpack.c.l.b16 %v1619
      %v2194 = vunpack.c.h.b16 %v1619
      %v2195 = vpack.c.b16 %v1698, %v1696
      %v2196 = vpack.c.b16 %v1699, %v1697
      %v2197 = vpack.c.b16 %v1702, %v1700
      %v2198 = vpack.c.b16 %v1703, %v1701
      %v2199 = vpack.c.b16 %v1706, %v1704
      %v2200 = vpack.c.b16 %v1707, %v1705
      %v2201 = vpack.c.b16 %v1710, %v1708
      %v2202 = vpack.c.b16 %v1711, %v1709
      %v2203 = vpack.c.b16 %v2193, %v1712
      %v2204 = vpack.c.b16 %v2194, %v1713
      %v2206 = vshrl.u32 %v2195, 16
      %v2208 = vshll.u32 %v2195, 16
      %v2210 = vrot.slane %v2208, 1
      %v2211 = vor.u32 %v2206, %v2210
      %v2213 = vshll.u32 %v2197, 16
      %v2215 = vrot.slane %v2213, 1
      %v2216 = vsel %vm530, %v2211, %v2215
      %v2218 = vshrl.u32 %v2196, 16
      %v2220 = vshll.u32 %v2196, 16
      %v2222 = vrot.slane %v2220, 1
      %v2223 = vor.u32 %v2218, %v2222
      %v2225 = vshll.u32 %v2198, 16
      %v2227 = vrot.slane %v2225, 1
      %v2228 = vsel %vm530, %v2223, %v2227
      %v2229 = vshrl.u32 %v2197, 16
      %v2231 = vor.u32 %v2229, %v2215
      %v2233 = vshll.u32 %v2199, 16
      %v2235 = vrot.slane %v2233, 1
      %v2236 = vsel %vm530, %v2231, %v2235
      %v2237 = vshrl.u32 %v2198, 16
      %v2239 = vor.u32 %v2237, %v2227
      %v2241 = vshll.u32 %v2200, 16
      %v2243 = vrot.slane %v2241, 1
      %v2244 = vsel %vm530, %v2239, %v2243
      %v2245 = vshrl.u32 %v2199, 16
      %v2247 = vor.u32 %v2245, %v2235
      %v2249 = vshll.u32 %v2201, 16
      %v2251 = vrot.slane %v2249, 1
      %v2252 = vsel %vm530, %v2247, %v2251
      %v2253 = vshrl.u32 %v2200, 16
      %v2255 = vor.u32 %v2253, %v2243
      %v2257 = vshll.u32 %v2202, 16
      %v2259 = vrot.slane %v2257, 1
      %v2260 = vsel %vm530, %v2255, %v2259
      %v2261 = vshrl.u32 %v2201, 16
      %v2263 = vor.u32 %v2261, %v2251
      %v2265 = vshll.u32 %v2203, 16
      %v2267 = vrot.slane %v2265, 1
      %v2268 = vsel %vm530, %v2263, %v2267
      %v2269 = vshrl.u32 %v2202, 16
      %v2271 = vor.u32 %v2269, %v2259
      %v2273 = vshll.u32 %v2204, 16
      %v2275 = vrot.slane %v2273, 1
      %v2276 = vsel %vm530, %v2271, %v2275
      %v2277 = vshrl.u32 %v2203, 16
      %v2279 = vor.u32 %v2277, %v2267
      %v2280 = vshrl.u32 %v2204, 16
      %v2282 = vor.u32 %v2280, %v2275
      %v2325 = vunpack.c.l.b16 %v2160
      %v2326 = vunpack.c.l.b16 %v2161
      %v2327 = vunpack.c.l.b16 %v2162
      %v2328 = vunpack.c.l.b16 %v2163
      %v2329 = vunpack.c.l.b16 %v2164
      %v2330 = vunpack.c.l.b16 %v2165
      %v2331 = vunpack.c.l.b16 %v2166
      %v2332 = vunpack.c.l.b16 %v2167
      %v2333 = vunpack.c.l.b16 %v2168
      %v2334 = vunpack.c.l.b16 %v2169
      %v2335 = vunpack.c.l.b16 %v2170
      %v2336 = vunpack.c.l.b16 %v2171
      %v2337 = vunpack.c.l.b16 %v2172
      %v2338 = vunpack.c.l.b16 %v2173
      %v2339 = vunpack.c.l.b16 %v2174
      %v2340 = vunpack.c.l.b16 %v2175
      %v2341 = vunpack.c.l.b16 %v2176
      %v2342 = vunpack.c.l.b16 %v2177
      %v2343 = vunpack.c.l.b16 %v2178
      %v2344 = vunpack.c.l.b16 %v2179
      %v2345 = vunpack.c.l.b16 %v2180
      %v2346 = vunpack.c.l.b16 %v2181
      %v2347 = vunpack.c.l.b16 %v2182
      %v2348 = vunpack.c.l.b16 %v2183
      %v2349 = vunpack.c.l.b16 %v2184
      %v2350 = vunpack.c.l.b16 %v2185
      %v2351 = vunpack.c.l.b16 %v2186
      %v2352 = vunpack.c.l.b16 %v2187
      %v2353 = vunpack.c.l.b16 %v2188
      %v2354 = vunpack.c.l.b16 %v2189
      %v2355 = vunpack.c.l.b16 %v2190
      %v2356 = vunpack.c.l.b16 %v2191
      %v2357 = vpack.c.b16 %v2326, %v2325
      %v2358 = vpack.c.b16 %v2328, %v2327
      %v2359 = vpack.c.b16 %v2330, %v2329
      %v2360 = vpack.c.b16 %v2332, %v2331
      %v2361 = vpack.c.b16 %v2334, %v2333
      %v2362 = vpack.c.b16 %v2336, %v2335
      %v2363 = vpack.c.b16 %v2338, %v2337
      %v2364 = vpack.c.b16 %v2340, %v2339
      %v2365 = vpack.c.b16 %v2342, %v2341
      %v2366 = vpack.c.b16 %v2344, %v2343
      %v2367 = vpack.c.b16 %v2346, %v2345
      %v2368 = vpack.c.b16 %v2348, %v2347
      %v2369 = vpack.c.b16 %v2350, %v2349
      %v2370 = vpack.c.b16 %v2352, %v2351
      %v2371 = vpack.c.b16 %v2354, %v2353
      %v2372 = vpack.c.b16 %v2356, %v2355
      %2389 = vmatprep.subr.bf16.mxu0 0
      %2390 = vmatpush1.bf16.msra.mxu0 %v2357
      %2391 = vmatprep.subr.bf16.mxu0 0
      %2392 = vmatpush1.bf16.msra.mxu0 %v2358
      %2393 = vmatprep.subr.bf16.mxu0 0
      %2394 = vmatpush1.bf16.msra.mxu0 %v2359
      %2395 = vmatprep.subr.bf16.mxu0 0
      %2396 = vmatpush1.bf16.msra.mxu0 %v2360
      %2397 = vmatprep.subr.bf16.mxu0 0
      %2398 = vmatpush1.bf16.msra.mxu0 %v2361
      %2399 = vmatprep.subr.bf16.mxu0 0
      %2400 = vmatpush1.bf16.msra.mxu0 %v2362
      %2401 = vmatprep.subr.bf16.mxu0 0
      %2402 = vmatpush1.bf16.msra.mxu0 %v2363
      %2403 = vmatprep.subr.bf16.mxu0 0
      %2404 = vmatpush1.bf16.msra.mxu0 %v2364
      %2405 = vmatprep.subr.bf16.mxu0 0
      %2406 = vmatpush1.bf16.msra.mxu0 %v2365
      %2407 = vmatprep.subr.bf16.mxu0 0
      %2408 = vmatpush1.bf16.msra.mxu0 %v2366
      %2409 = vmatprep.subr.bf16.mxu0 0
      %2410 = vmatpush1.bf16.msra.mxu0 %v2367
      %2411 = vmatprep.subr.bf16.mxu0 0
      %2412 = vmatpush1.bf16.msra.mxu0 %v2368
      %2413 = vmatprep.subr.bf16.mxu0 0
      %2414 = vmatpush1.bf16.msra.mxu0 %v2369
      %2415 = vmatprep.subr.bf16.mxu0 0
      %2416 = vmatpush1.bf16.msra.mxu0 %v2370
      %2417 = vmatprep.subr.bf16.mxu0 0
      %2418 = vmatpush1.bf16.msra.mxu0 %v2371
      %2419 = vmatprep.subr.bf16.mxu0 0
      %2420 = vmatpush1.bf16.msra.mxu0 %v2372
      %2421 = vmatprep.mubr.bf16.mxu0 %v2228
      %2422 = vmatmul.mubr.bf16.gmra.mrb[0].mxu0 %v2216
      %v2423 = vpop.f32.mrb[0].mxu0
      %v2424 = vadd.f32 0.0, %v2423
      %v2425 = vpop.f32.mrb[0].mxu0
      %v2426 = vpop.f32.mrb[0].mxu0
      %v2427 = vadd.f32 0.0, %v2426
      %v2428 = vpop.f32.mrb[0].mxu0
      %2429 = vmatprep.mubr.bf16.mxu0 %v2244
      %2430 = vmatmul.mubr.bf16.gmra.mrb[0].mxu0 %v2236
      %v2431 = vpop.f32.mrb[0].mxu0
      %v2432 = vadd.f32 0.0, %v2431
      %v2433 = vpop.f32.mrb[0].mxu0
      %v2434 = vpop.f32.mrb[0].mxu0
      %v2435 = vadd.f32 0.0, %v2434
      %v2436 = vpop.f32.mrb[0].mxu0
      %2437 = vmatprep.mubr.bf16.mxu0 %v2260
      %2438 = vmatmul.mubr.bf16.gmra.mrb[0].mxu0 %v2252
      %v2439 = vpop.f32.mrb[0].mxu0
      %v2440 = vadd.f32 0.0, %v2439
      %v2441 = vpop.f32.mrb[0].mxu0
      %v2442 = vpop.f32.mrb[0].mxu0
      %v2443 = vadd.f32 0.0, %v2442
      %v2444 = vpop.f32.mrb[0].mxu0
      %2445 = vmatprep.mubr.bf16.mxu0 %v2276
      %2446 = vmatmul.mubr.bf16.gmra.mrb[0].mxu0 %v2268
      %v2447 = vpop.f32.mrb[0].mxu0
      %v2448 = vadd.f32 0.0, %v2447
      %v2449 = vpop.f32.mrb[0].mxu0
      %v2450 = vpop.f32.mrb[0].mxu0
      %v2451 = vadd.f32 0.0, %v2450
      %v2452 = vpop.f32.mrb[0].mxu0
      %2453 = vmatprep.mubr.bf16.mxu0 %v2282
      %2454 = vmatmul.mubr.bf16.gmra.mrb[0].mxu0 %v2279
      %v2455 = vpop.f32.mrb[0].mxu0
      %v2456 = vadd.f32 0.0, %v2455
      %v2457 = vpop.f32.mrb[0].mxu0
      %v2458 = vpop.f32.mrb[0].mxu0
      %v2459 = vpop.f32.mrb[0].mxu0
      %2460 = vdwg.mxu0
      %v2461 = vadd.f32 %v2123, %v2424
      %v2462 = vadd.f32 %v2126, %v2427
      %v2463 = vadd.f32 %v2131, %v2432
      %v2464 = vadd.f32 %v2134, %v2435
      %v2465 = vadd.f32 %v2139, %v2440
      %v2466 = vadd.f32 %v2142, %v2443
      %v2467 = vadd.f32 %v2147, %v2448
      %v2468 = vadd.f32 %v2150, %v2451
      %v2469 = vadd.f32 %v2155, %v2456
      %v2470 = vld [vmem:[%s1278] sm:$0xf]
      %v2471 = vld [vmem:[%s1278 + $0x4] sm:$0xf]
      %v2472 = vld [vmem:[%s1278 + $0x8] sm:$0xf]
      %v2473 = vld [vmem:[%s1278 + $0xc] sm:$0xf]
      %v2474 = vld [vmem:[%s1278 + $0x10] sm:$0xf]
      %v2475 = vld [vmem:[%s1278 + $0x14] sm:$0xf]
      %v2476 = vld [vmem:[%s1278 + $0x18] sm:$0xf]
      %v2477 = vld [vmem:[%s1278 + $0x1c] sm:$0xf]
      %v2478 = vld [vmem:[%s1278 + $0x20] sm:$0xf]
      %v2479 = vld [vmem:[%s1278 + $0x24] sm:$0xf]
      %v2480 = vld [vmem:[%s1278 + $0x28] sm:$0xf]
      %v2481 = vld [vmem:[%s1278 + $0x2c] sm:$0xf]
      %v2482 = vld [vmem:[%s1278 + $0x30] sm:$0xf]
      %v2483 = vld [vmem:[%s1278 + $0x34] sm:$0xf]
      %v2484 = vld [vmem:[%s1278 + $0x38] sm:$0xf]
      %v2485 = vld [vmem:[%s1278 + $0x3c] sm:$0xf]
      %v2486 = vld [vmem:[%s1278 + $0x40] sm:$0xf]
      %v2487 = vld [vmem:[%s1278 + $0x44] sm:$0xf]
      %v2488 = vld [vmem:[%s1278 + $0x48] sm:$0xf]
      %v2489 = vld [vmem:[%s1278 + $0x4c] sm:$0xf]
      %v2490 = vld [vmem:[%s1278 + $0x50] sm:$0xf]
      %v2491 = vld [vmem:[%s1278 + $0x54] sm:$0xf]
      %v2492 = vld [vmem:[%s1278 + $0x58] sm:$0xf]
      %v2493 = vld [vmem:[%s1278 + $0x5c] sm:$0xf]
      %v2494 = vld [vmem:[%s1278 + $0x60] sm:$0xf]
      %v2495 = vld [vmem:[%s1278 + $0x64] sm:$0xf]
      %v2496 = vld [vmem:[%s1278 + $0x68] sm:$0xf]
      %v2497 = vld [vmem:[%s1278 + $0x6c] sm:$0xf]
      %v2498 = vld [vmem:[%s1278 + $0x70] sm:$0xf]
      %v2499 = vld [vmem:[%s1278 + $0x74] sm:$0xf]
      %v2500 = vld [vmem:[%s1278 + $0x78] sm:$0xf]
      %v2501 = vld [vmem:[%s1278 + $0x7c] sm:$0xf]
      %v2502 = vrot.slane %v2195, 1
      %v2503 = vrot.slane %v2197, 1
      %v2504 = vsel %vm1311, %v2502, %v2503
      %v2505 = vrot.slane %v2196, 1
      %v2506 = vrot.slane %v2198, 1
      %v2507 = vsel %vm1311, %v2505, %v2506
      %v2508 = vrot.slane %v2199, 1
      %v2509 = vsel %vm1311, %v2503, %v2508
      %v2510 = vrot.slane %v2200, 1
      %v2511 = vsel %vm1311, %v2506, %v2510
      %v2512 = vrot.slane %v2201, 1
      %v2513 = vsel %vm1311, %v2508, %v2512
      %v2514 = vrot.slane %v2202, 1
      %v2515 = vsel %vm1311, %v2510, %v2514
      %v2516 = vrot.slane %v2203, 1
      %v2517 = vsel %vm1311, %v2512, %v2516
      %v2518 = vrot.slane %v2204, 1
      %v2519 = vsel %vm1311, %v2514, %v2518
      %v2562 = vunpack.c.l.b16 %v2470
      %v2563 = vunpack.c.l.b16 %v2471
      %v2564 = vunpack.c.l.b16 %v2472
      %v2565 = vunpack.c.l.b16 %v2473
      %v2566 = vunpack.c.l.b16 %v2474
      %v2567 = vunpack.c.l.b16 %v2475
      %v2568 = vunpack.c.l.b16 %v2476
      %v2569 = vunpack.c.l.b16 %v2477
      %v2570 = vunpack.c.l.b16 %v2478
      %v2571 = vunpack.c.l.b16 %v2479
      %v2572 = vunpack.c.l.b16 %v2480
      %v2573 = vunpack.c.l.b16 %v2481
      %v2574 = vunpack.c.l.b16 %v2482
      %v2575 = vunpack.c.l.b16 %v2483
      %v2576 = vunpack.c.l.b16 %v2484
      %v2577 = vunpack.c.l.b16 %v2485
      %v2578 = vunpack.c.l.b16 %v2486
      %v2579 = vunpack.c.l.b16 %v2487
      %v2580 = vunpack.c.l.b16 %v2488
      %v2581 = vunpack.c.l.b16 %v2489
      %v2582 = vunpack.c.l.b16 %v2490
      %v2583 = vunpack.c.l.b16 %v2491
      %v2584 = vunpack.c.l.b16 %v2492
      %v2585 = vunpack.c.l.b16 %v2493
      %v2586 = vunpack.c.l.b16 %v2494
      %v2587 = vunpack.c.l.b16 %v2495
      %v2588 = vunpack.c.l.b16 %v2496
      %v2589 = vunpack.c.l.b16 %v2497
      %v2590 = vunpack.c.l.b16 %v2498
      %v2591 = vunpack.c.l.b16 %v2499
      %v2592 = vunpack.c.l.b16 %v2500
      %v2593 = vunpack.c.l.b16 %v2501
      %v2594 = vpack.c.b16 %v2563, %v2562
      %v2595 = vpack.c.b16 %v2565, %v2564
      %v2596 = vpack.c.b16 %v2567, %v2566
      %v2597 = vpack.c.b16 %v2569, %v2568
      %v2598 = vpack.c.b16 %v2571, %v2570
      %v2599 = vpack.c.b16 %v2573, %v2572
      %v2600 = vpack.c.b16 %v2575, %v2574
      %v2601 = vpack.c.b16 %v2577, %v2576
      %v2602 = vpack.c.b16 %v2579, %v2578
      %v2603 = vpack.c.b16 %v2581, %v2580
      %v2604 = vpack.c.b16 %v2583, %v2582
      %v2605 = vpack.c.b16 %v2585, %v2584
      %v2606 = vpack.c.b16 %v2587, %v2586
      %v2607 = vpack.c.b16 %v2589, %v2588
      %v2608 = vpack.c.b16 %v2591, %v2590
      %v2609 = vpack.c.b16 %v2593, %v2592
      %2626 = vmatprep.subr.bf16.mxu0 0
      %2627 = vmatpush1.bf16.msra.mxu0 %v2594
      %2628 = vmatprep.subr.bf16.mxu0 0
      %2629 = vmatpush1.bf16.msra.mxu0 %v2595
      %2630 = vmatprep.subr.bf16.mxu0 0
      %2631 = vmatpush1.bf16.msra.mxu0 %v2596
      %2632 = vmatprep.subr.bf16.mxu0 0
      %2633 = vmatpush1.bf16.msra.mxu0 %v2597
      %2634 = vmatprep.subr.bf16.mxu0 0
      %2635 = vmatpush1.bf16.msra.mxu0 %v2598
      %2636 = vmatprep.subr.bf16.mxu0 0
      %2637 = vmatpush1.bf16.msra.mxu0 %v2599
      %2638 = vmatprep.subr.bf16.mxu0 0
      %2639 = vmatpush1.bf16.msra.mxu0 %v2600
      %2640 = vmatprep.subr.bf16.mxu0 0
      %2641 = vmatpush1.bf16.msra.mxu0 %v2601
      %2642 = vmatprep.subr.bf16.mxu0 0
      %2643 = vmatpush1.bf16.msra.mxu0 %v2602
      %2644 = vmatprep.subr.bf16.mxu0 0
      %2645 = vmatpush1.bf16.msra.mxu0 %v2603
      %2646 = vmatprep.subr.bf16.mxu0 0
      %2647 = vmatpush1.bf16.msra.mxu0 %v2604
      %2648 = vmatprep.subr.bf16.mxu0 0
      %2649 = vmatpush1.bf16.msra.mxu0 %v2605
      %2650 = vmatprep.subr.bf16.mxu0 0
      %2651 = vmatpush1.bf16.msra.mxu0 %v2606
      %2652 = vmatprep.subr.bf16.mxu0 0
      %2653 = vmatpush1.bf16.msra.mxu0 %v2607
      %2654 = vmatprep.subr.bf16.mxu0 0
      %2655 = vmatpush1.bf16.msra.mxu0 %v2608
      %2656 = vmatprep.subr.bf16.mxu0 0
      %2657 = vmatpush1.bf16.msra.mxu0 %v2609
      %2658 = vmatprep.mubr.bf16.mxu0 %v2507
      %2659 = vmatmul.mubr.bf16.gmra.mrb[0].mxu0 %v2504
      %v2660 = vpop.f32.mrb[0].mxu0
      %v2661 = vadd.f32 0.0, %v2660
      %v2662 = vpop.f32.mrb[0].mxu0
      %v2663 = vpop.f32.mrb[0].mxu0
      %v2664 = vadd.f32 0.0, %v2663
      %v2665 = vpop.f32.mrb[0].mxu0
      %2666 = vmatprep.mubr.bf16.mxu0 %v2511
      %2667 = vmatmul.mubr.bf16.gmra.mrb[0].mxu0 %v2509
      %v2668 = vpop.f32.mrb[0].mxu0
      %v2669 = vadd.f32 0.0, %v2668
      %v2670 = vpop.f32.mrb[0].mxu0
      %v2671 = vpop.f32.mrb[0].mxu0
      %v2672 = vadd.f32 0.0, %v2671
      %v2673 = vpop.f32.mrb[0].mxu0
      %2674 = vmatprep.mubr.bf16.mxu0 %v2515
      %2675 = vmatmul.mubr.bf16.gmra.mrb[0].mxu0 %v2513
      %v2676 = vpop.f32.mrb[0].mxu0
      %v2677 = vadd.f32 0.0, %v2676
      %v2678 = vpop.f32.mrb[0].mxu0
      %v2679 = vpop.f32.mrb[0].mxu0
      %v2680 = vadd.f32 0.0, %v2679
      %v2681 = vpop.f32.mrb[0].mxu0
      %2682 = vmatprep.mubr.bf16.mxu0 %v2519
      %2683 = vmatmul.mubr.bf16.gmra.mrb[0].mxu0 %v2517
      %v2684 = vpop.f32.mrb[0].mxu0
      %v2685 = vadd.f32 0.0, %v2684
      %v2686 = vpop.f32.mrb[0].mxu0
      %v2687 = vpop.f32.mrb[0].mxu0
      %v2688 = vadd.f32 0.0, %v2687
      %v2689 = vpop.f32.mrb[0].mxu0
      %2690 = vmatprep.mubr.bf16.mxu0 %v2518
      %2691 = vmatmul.mubr.bf16.gmra.mrb[0].mxu0 %v2516
      %v2692 = vpop.f32.mrb[0].mxu0
      %v2693 = vadd.f32 0.0, %v2692
      %v2694 = vpop.f32.mrb[0].mxu0
      %v2695 = vpop.f32.mrb[0].mxu0
      %v2696 = vpop.f32.mrb[0].mxu0
      %2697 = vdwg.mxu0
      %v2698 = vadd.f32 %v2461, %v2661
      %v2699 = vadd.f32 %v2462, %v2664
      %v2700 = vadd.f32 %v2463, %v2669
      %v2701 = vadd.f32 %v2464, %v2672
      %v2702 = vadd.f32 %v2465, %v2677
      %v2703 = vadd.f32 %v2466, %v2680
      %v2704 = vadd.f32 %v2467, %v2685
      %v2705 = vadd.f32 %v2468, %v2688
      %v2706 = vadd.f32 %v2469, %v2693
      %v2707 = vld [vmem:[%s2] sm:$0x1]
      %v2709 = vlaneseq
      %v2710 = vshrl.u32 %v2709, 7
      %v2711 = vsub.s32 0, %v2710
      %v2712 = vrot.slane %v2707, %v2711
      %v2714 = vadd.f32 %v2698, %v2712
      %v2715 = vadd.f32 %v2699, %v2712
      %v2716 = vadd.f32 %v2700, %v2712
      %v2717 = vadd.f32 %v2701, %v2712
      %v2718 = vadd.f32 %v2702, %v2712
      %v2719 = vadd.f32 %v2703, %v2712
      %v2720 = vadd.f32 %v2704, %v2712
      %v2721 = vadd.f32 %v2705, %v2712
      %v2722 = vadd.f32 %v2706, %v2712
      %s2723 = scalar_lea.vmem %s242, 72
      %2724 = vst [vmem:[%s2723] sm:$0xff] %v2714
      %2725 = vst [vmem:[%s2723 + $0x8] sm:$0xff] %v2715
      %2726 = vst [vmem:[%s2723 + $0x10] sm:$0xff] %v2716
      %2727 = vst [vmem:[%s2723 + $0x18] sm:$0xff] %v2717
      %2728 = vst [vmem:[%s2723 + $0x20] sm:$0xff] %v2718
      %2729 = vst [vmem:[%s2723 + $0x28] sm:$0xff] %v2719
      %2730 = vst [vmem:[%s2723 + $0x30] sm:$0xff] %v2720
      %2731 = vst [vmem:[%s2723 + $0x38] sm:$0xff] %v2721
      %2732 = vst [vmem:[%s2723 + $0x40] sm:$0xff] %v2722
      %v2733 = vsel %vm1551, %v2714, 0.0
      %v2734 = vsel %vm1552, %v2715, 0.0
      %v2735 = vsel %vm1553, %v2716, 0.0
      %v2736 = vsel %vm1554, %v2717, 0.0
      %v2737 = vsel %vm1555, %v2718, 0.0
      %v2738 = vsel %vm1556, %v2719, 0.0
      %v2739 = vsel %vm1557, %v2720, 0.0
      %v2740 = vsel %vm1558, %v2721, 0.0
      %v2741 = vsel %vm1559, %v2722, 0.0
      %v2742 = vadd.f32 %v2733, %v2734
      %v2743 = vadd.f32 %v2742, %v2735
      %v2744 = vadd.f32 %v2743, %v2736
      %v2745 = vadd.f32 %v2744, %v2737
      %v2746 = vadd.f32 %v2745, %v2738
      %v2747 = vadd.f32 %v2746, %v2739
      %v2748 = vadd.f32 %v2747, %v2740
      %v2749 = vadd.f32 %v2748, %v2741
      %v2750 = vrot.slane %v2749, 4
      %v2751 = vadd.f32 %v2749, %v2750
      %v2752 = vrot.slane %v2751, 2
      %v2753 = vadd.f32 %v2751, %v2752
      %v2754 = vrot.slane %v2753, 1
      %v2755 = vadd.f32 %v2753, %v2754
      %v2756 = vadd.f32 %v1583, %v2755
      %v2757 = vmul.f32 %v2733, %v2733
      %v2758 = vmul.f32 %v2734, %v2734
      %v2759 = vmul.f32 %v2735, %v2735
      %v2760 = vmul.f32 %v2736, %v2736
      %v2761 = vmul.f32 %v2737, %v2737
      %v2762 = vmul.f32 %v2738, %v2738
      %v2763 = vmul.f32 %v2739, %v2739
      %v2764 = vmul.f32 %v2740, %v2740
      %v2765 = vmul.f32 %v2741, %v2741
      %v2766 = vadd.f32 %v2757, %v2758
      %v2767 = vadd.f32 %v2766, %v2759
      %v2768 = vadd.f32 %v2767, %v2760
      %v2769 = vadd.f32 %v2768, %v2761
      %v2770 = vadd.f32 %v2769, %v2762
      %v2771 = vadd.f32 %v2770, %v2763
      %v2772 = vadd.f32 %v2771, %v2764
      %v2773 = vadd.f32 %v2772, %v2765
      %v2774 = vrot.slane %v2773, 4
      %v2775 = vadd.f32 %v2773, %v2774
      %v2776 = vrot.slane %v2775, 2
      %v2777 = vadd.f32 %v2775, %v2776
      %v2778 = vrot.slane %v2777, 1
      %v2779 = vadd.f32 %v2777, %v2778
      %v2780 = vadd.f32 %v1607, %v2779
      %2781 = vst [vmem:[%s246] sm:$0x1] %v2756
      %2782 = vst [vmem:[%s249] sm:$0x1] %v2780
      %s2783 = smul.u32 2, %s17
      %p2784 = scmp.lt.s32.totalorder %s2783, 3
      %s2785 = scalar_select %p2784, %s2783, 3
      %s2786 = smul.addr %s2785, 9
      %s2787 = smul.addr %s2786, 8
      %s2788 = scalar_lea.vmem %s3, %s2787
      %p2789 = scmp.lt.s32.totalorder %s17, 1
      %s2790 = scalar_select %p2789, %s17, 1
      %s2791 = scalar_lea.vmem %s4, %s2790
      %p2792 = scmp.lt.s32.totalorder %s17, 1
      %s2793 = scalar_select %p2792, %s17, 1
      %s2794 = scalar_lea.vmem %s5, %s2793
      // Predicated region
      $region33: #{discriminator_forward.4} parent=31 // pred_check
        %p2795 = pneg %p103
      $region34: #{discriminator_forward.4} parent=31 // pred_check_branch
        %2797 = sbr.rel (%p2795) target = $region36
      $region35: #{discriminator_forward.4} parent=31 // pred_region
        %s2798 = smul.u32 2, %s17
      $region36: #{discriminator_forward.4} parent=31 // pred_fallthru
        _
      // Predicated region
      $region37: #{discriminator_forward.4} parent=31 // pred_check
        %p2799 = pneg %p129
      $region38: #{discriminator_forward.4} parent=31 // pred_check_branch
        %2801 = sbr.rel (%p2799) target = $region40
      $region39: #{discriminator_forward.4} parent=31 // pred_region
        _
      $region40: #{discriminator_forward.4} parent=31 // pred_fallthru
        _
      // Predicated region
      $region41: #{discriminator_forward.4} parent=31 // pred_check
        %p2802 = pneg %p155
      $region42: #{discriminator_forward.4} parent=31 // pred_check_branch
        %2804 = sbr.rel (%p2802) target = $region44
      $region43: #{discriminator_forward.4} parent=31 // pred_region
        _
      $region44: #{discriminator_forward.4} parent=31 // pred_fallthru
        _
    $region32: #{discriminator_forward.4} parent=5 // pred_fallthru
      _
    %p2805 = scmp.le.s32.totalorder 2, %s12
    // Predicated region
    $region45: #{discriminator_forward.4} parent=5 // pred_check
      %p2806 = pneg %p2805
    $region46: #{discriminator_forward.4} parent=5 // pred_check_branch
      %2808 = sbr.rel (%p2806) target = $region48
    $region47: #{discriminator_forward.4} parent=5 // pred_region
      %s2809 = ssub.s32 %s12, 2
      // Predicated region
      $region49: #{discriminator_forward.4} parent=47 // pred_check
        %p2810 = pneg %p109
      $region50: #{discriminator_forward.4} parent=47 // pred_check_branch
        %2812 = sbr.rel (%p2810) target = $region52
      $region51: #{discriminator_forward.4} parent=47 // pred_region
        %s2813 = smul.u32 2, %s18
        %p2814 = scmp.lt.s32.totalorder %s2813, 3
        %s2815 = scalar_select %p2814, %s2813, 3
        %s2816 = smul.addr %s2815, 9
        %s2817 = smul.addr %s2816, 8
        %s2818 = scalar_lea.vmem %s3, %s2817
      $region52: #{discriminator_forward.4} parent=47 // pred_fallthru
        _
      // Predicated region
      $region53: #{discriminator_forward.4} parent=47 // pred_check
        %p2819 = pneg %p135
      $region54: #{discriminator_forward.4} parent=47 // pred_check_branch
        %2821 = sbr.rel (%p2819) target = $region56
      $region55: #{discriminator_forward.4} parent=47 // pred_region
        %p2822 = scmp.lt.s32.totalorder %s18, 1
        %s2823 = scalar_select %p2822, %s18, 1
        %s2824 = scalar_lea.vmem %s4, %s2823
      $region56: #{discriminator_forward.4} parent=47 // pred_fallthru
        _
      // Predicated region
      $region57: #{discriminator_forward.4} parent=47 // pred_check
        %p2825 = pneg %p161
      $region58: #{discriminator_forward.4} parent=47 // pred_check_branch
        %2827 = sbr.rel (%p2825) target = $region60
      $region59: #{discriminator_forward.4} parent=47 // pred_region
        %p2828 = scmp.lt.s32.totalorder %s18, 1
        %s2829 = scalar_select %p2828, %s18, 1
        %s2830 = scalar_lea.vmem %s5, %s2829
      $region60: #{discriminator_forward.4} parent=47 // pred_fallthru
        _
    $region48: #{discriminator_forward.4} parent=5 // pred_fallthru
      _
  $region6: #{discriminator_forward.4} parent=0 // loop_footer
    %s16 = sadd.s32 1, %s12
  $region7: #{discriminator_forward.4} parent=0 // loop_footer_branch
    %11 = sbr.rel target = $region3
  $region8: #{discriminator_forward.4} parent=0 // loop_exit
    _

// kernel: discriminator_forward.5
$region0: #{discriminator_forward.5}
  #allocation0 [shape = 'u32[]', space=smem, size = 0x4, offset = 0x4, fixed_abs, tag = 'smem constant byte address 0x4 - core index']
  #allocation1 [shape = 'u32[144,128]{1,0:T(1,128)}', space=vmem, size = 0x12000, scoped, tag = 'internal scratch']
  %s0 = inlined_call_operand.vmem [shape: bf16[4,30,512], index: 0, kind: input, shape index: {}]
  %s1 = inlined_call_operand.vmem [shape: bf16[4,512,256], index: 1, kind: input, shape index: {}]
  %s2 = inlined_call_operand.vmem [shape: f32[1,256], index: 2, kind: input, shape index: {}]
  %s3 = inlined_call_operand.vmem [shape: f32[4,20,256], index: 3, kind: output, shape index: {0}]
  %s4 = inlined_call_operand.vmem [shape: f32[2,1,256], index: 4, kind: output, shape index: {1}]
  %s5 = inlined_call_operand.vmem [shape: f32[2,1,256], index: 5, kind: output, shape index: {2}]
  %6 = xla_tuple %s3, %s4, %s5
  %s7 = sld [smem:[#allocation0]]
  $region61: #{discriminator_forward.5} parent=0
    _
  %s9 = ssub.s32 1, %s7
  %s10 = scalar_select 0, %s9, %s7
  loop: start=0, step=1, limit=4
  $region2: #{discriminator_forward.5} parent=0 // loop_pre_header
    _
  $region3: #{discriminator_forward.5} parent=0 // loop_header
    %s12 = sphi 0, %s16
    %p13 = scmp.ge.s32.totalorder %s12, 4
    %s22 = sphi 0, %s24
    %s25 = sphi 0, %s22
    %s26 = sphi 0, %s25
    %s42 = sphi 0, %s26
    %s46 = sphi 0, %s46
    %s48 = sphi 0, %s46
    %s49 = sphi 0, %s48
    %s63 = sphi 0, %s49
    %s67 = sphi 0, %s67
    %s69 = sphi 0, %s67
    %s70 = sphi 0, %s69
    %s84 = sphi 0, %s70
    %s90 = sphi 0, %s92
    %s93 = sphi 0, %s90
    %s94 = sphi 0, %s93
    %s110 = sphi 0, %s94
    %s116 = sphi 0, %s118
    %s119 = sphi 0, %s116
    %s120 = sphi 0, %s119
    %s136 = sphi 0, %s120
    %s142 = sphi 0, %s144
    %s145 = sphi 0, %s142
    %s146 = sphi 0, %s145
    %s162 = sphi 0, %s146
  $region4: #{discriminator_forward.5} parent=0 // loop_header_branch
    %15 = sbr.rel (%p13) target = $region8
  $region5: #{discriminator_forward.5} parent=0 // loop_body
    %s17 = ssub.s32 %s12, 1
    %s18 = ssub.s32 %s12, 2
    %s19 = sadd.s32 %s12, 1
    %s20 = ssub.s32 %s12, %s19
    %p21 = scmp.eq.s32.totalorder %s20, 0
    %s23 = sadd.s32 %s22, 1
    %s24 = scalar_select %p21, %s22, %s23
    %p27 = pneg %p21
    %p28 = scmp.eq.s32.totalorder %s12, 1
    %p29 = por %p27, %p28
    %p30 = scmp.ne.s32.totalorder %s22, %s25
    %p31 = scmp.eq.s32.totalorder %s12, 0
    %p32 = por %p30, %p31
    %p33 = scmp.ne.s32.totalorder %s22, %s25
    %p34 = scmp.eq.s32.totalorder %s17, 1
    %p35 = por %p33, %p34
    %p36 = scmp.ne.s32.totalorder %s25, %s26
    %p37 = scmp.eq.s32.totalorder %s17, 0
    %p38 = por %p36, %p37
    %p39 = scmp.ne.s32.totalorder %s25, %s26
    %p40 = scmp.eq.s32.totalorder %s18, 1
    %p41 = por %p39, %p40
    %p43 = scmp.ne.s32.totalorder %s26, %s42
    %p44 = scmp.eq.s32.totalorder %s18, 0
    %p45 = por %p43, %p44
    %s47 = sadd.s32 %s46, 1
    %p50 = scmp.eq.s32.totalorder %s12, 1
    %p51 = scmp.ne.s32.totalorder %s46, %s48
    %p52 = scmp.eq.s32.totalorder %s12, 0
    %p53 = por %p51, %p52
    %p54 = scmp.ne.s32.totalorder %s46, %s48
    %p55 = scmp.eq.s32.totalorder %s17, 1
    %p56 = por %p54, %p55
    %p57 = scmp.ne.s32.totalorder %s48, %s49
    %p58 = scmp.eq.s32.totalorder %s17, 0
    %p59 = por %p57, %p58
    %p60 = scmp.ne.s32.totalorder %s48, %s49
    %p61 = scmp.eq.s32.totalorder %s18, 1
    %p62 = por %p60, %p61
    %p64 = scmp.ne.s32.totalorder %s49, %s63
    %p65 = scmp.eq.s32.totalorder %s18, 0
    %p66 = por %p64, %p65
    %s68 = sadd.s32 %s67, 1
    %p71 = scmp.eq.s32.totalorder %s12, 1
    %p72 = scmp.ne.s32.totalorder %s67, %s69
    %p73 = scmp.eq.s32.totalorder %s12, 0
    %p74 = por %p72, %p73
    %p75 = scmp.ne.s32.totalorder %s67, %s69
    %p76 = scmp.eq.s32.totalorder %s17, 1
    %p77 = por %p75, %p76
    %p78 = scmp.ne.s32.totalorder %s69, %s70
    %p79 = scmp.eq.s32.totalorder %s17, 0
    %p80 = por %p78, %p79
    %p81 = scmp.ne.s32.totalorder %s69, %s70
    %p82 = scmp.eq.s32.totalorder %s18, 1
    %p83 = por %p81, %p82
    %p85 = scmp.ne.s32.totalorder %s70, %s84
    %p86 = scmp.eq.s32.totalorder %s18, 0
    %p87 = por %p85, %p86
    %s88 = ssub.s32 %s12, %s19
    %p89 = scmp.eq.s32.totalorder %s88, 0
    %s91 = sadd.s32 %s90, 1
    %s92 = scalar_select %p89, %s90, %s91
    %p95 = pneg %p89
    %p96 = scmp.eq.s32.totalorder %s12, 1
    %p97 = por %p95, %p96
    %p98 = scmp.ne.s32.totalorder %s90, %s93
    %p99 = scmp.eq.s32.totalorder %s12, 0
    %p100 = por %p98, %p99
    %p101 = scmp.ne.s32.totalorder %s90, %s93
    %p102 = scmp.eq.s32.totalorder %s17, 1
    %p103 = por %p101, %p102
    %p104 = scmp.ne.s32.totalorder %s93, %s94
    %p105 = scmp.eq.s32.totalorder %s17, 0
    %p106 = por %p104, %p105
    %p107 = scmp.ne.s32.totalorder %s93, %s94
    %p108 = scmp.eq.s32.totalorder %s18, 1
    %p109 = por %p107, %p108
    %p111 = scmp.ne.s32.totalorder %s94, %s110
    %p112 = scmp.eq.s32.totalorder %s18, 0
    %p113 = por %p111, %p112
    %s114 = ssub.s32 %s12, %s19
    %p115 = scmp.eq.s32.totalorder %s114, 0
    %s117 = sadd.s32 %s116, 1
    %s118 = scalar_select %p115, %s116, %s117
    %p121 = pneg %p115
    %p122 = scmp.eq.s32.totalorder %s12, 1
    %p123 = por %p121, %p122
    %p124 = scmp.ne.s32.totalorder %s116, %s119
    %p125 = scmp.eq.s32.totalorder %s12, 0
    %p126 = por %p124, %p125
    %p127 = scmp.ne.s32.totalorder %s116, %s119
    %p128 = scmp.eq.s32.totalorder %s17, 1
    %p129 = por %p127, %p128
    %p130 = scmp.ne.s32.totalorder %s119, %s120
    %p131 = scmp.eq.s32.totalorder %s17, 0
    %p132 = por %p130, %p131
    %p133 = scmp.ne.s32.totalorder %s119, %s120
    %p134 = scmp.eq.s32.totalorder %s18, 1
    %p135 = por %p133, %p134
    %p137 = scmp.ne.s32.totalorder %s120, %s136
    %p138 = scmp.eq.s32.totalorder %s18, 0
    %p139 = por %p137, %p138
    %s140 = ssub.s32 %s12, %s19
    %p141 = scmp.eq.s32.totalorder %s140, 0
    %s143 = sadd.s32 %s142, 1
    %s144 = scalar_select %p141, %s142, %s143
    %p147 = pneg %p141
    %p148 = scmp.eq.s32.totalorder %s12, 1
    %p149 = por %p147, %p148
    %p150 = scmp.ne.s32.totalorder %s142, %s145
    %p151 = scmp.eq.s32.totalorder %s12, 0
    %p152 = por %p150, %p151
    %p153 = scmp.ne.s32.totalorder %s142, %s145
    %p154 = scmp.eq.s32.totalorder %s17, 1
    %p155 = por %p153, %p154
    %p156 = scmp.ne.s32.totalorder %s145, %s146
    %p157 = scmp.eq.s32.totalorder %s17, 0
    %p158 = por %p156, %p157
    %p159 = scmp.ne.s32.totalorder %s145, %s146
    %p160 = scmp.eq.s32.totalorder %s18, 1
    %p161 = por %p159, %p160
    %p163 = scmp.ne.s32.totalorder %s146, %s162
    %p164 = scmp.eq.s32.totalorder %s18, 0
    %p165 = por %p163, %p164
    %p166 = scmp.le.s32.totalorder 1, %s12
    %p167 = scmp.lt.s32.totalorder %s12, 3
    %p168 = pnand %p166, %p167
    %p169 = pneg %p168
    // Predicated region
    $region9: #{discriminator_forward.5} parent=5 // pred_check
      _
    $region10: #{discriminator_forward.5} parent=5 // pred_check_branch
      %171 = sbr.rel (%p168) target = $region12
    $region11: #{discriminator_forward.5} parent=5 // pred_region
      %s172 = ssub.s32 %s12, 1
      // Predicated region
      $region13: #{discriminator_forward.5} parent=11 // pred_check
        %p173 = pneg %p59
      $region14: #{discriminator_forward.5} parent=11 // pred_check_branch
        %175 = sbr.rel (%p173) target = $region16
      $region15: #{discriminator_forward.5} parent=11 // pred_region
        _
      $region16: #{discriminator_forward.5} parent=11 // pred_fallthru
        _
      // Predicated region
      $region17: #{discriminator_forward.5} parent=11 // pred_check
        %p176 = pneg %p80
      $region18: #{discriminator_forward.5} parent=11 // pred_check_branch
        %178 = sbr.rel (%p176) target = $region20
      $region19: #{discriminator_forward.5} parent=11 // pred_region
        _
      $region20: #{discriminator_forward.5} parent=11 // pred_fallthru
        _
    $region12: #{discriminator_forward.5} parent=5 // pred_fallthru
      _
    %p179 = scmp.lt.s32.totalorder %s12, 2
    // Predicated region
    $region21: #{discriminator_forward.5} parent=5 // pred_check
      %p180 = pneg %p179
    $region22: #{discriminator_forward.5} parent=5 // pred_check_branch
      %182 = sbr.rel (%p180) target = $region24
    $region23: #{discriminator_forward.5} parent=5 // pred_region
      // Predicated region
      $region25: #{discriminator_forward.5} parent=23 // pred_check
        %p183 = pneg %p32
      $region26: #{discriminator_forward.5} parent=23 // pred_check_branch
        %185 = sbr.rel (%p183) target = $region28
      $region27: #{discriminator_forward.5} parent=23 // pred_region
        %s186 = smul.u32 2, %s12
        %p187 = scmp.lt.s32.totalorder %s186, 3
        %s188 = scalar_select %p187, %s186, 3
        %s189 = smul.addr %s188, 16
        %s190 = smul.addr %s189, 4
        %s191 = scalar_lea.vmem %s0, %s190
        %s192 = smul.u32 2, %s12
      $region28: #{discriminator_forward.5} parent=23 // pred_fallthru
        _
    $region24: #{discriminator_forward.5} parent=5 // pred_fallthru
      _
    %p193 = scmp.le.s32.totalorder 1, %s12
    %p194 = scmp.lt.s32.totalorder %s12, 3
    %p195 = pnand %p193, %p194
    %p196 = pneg %p195
    // Predicated region
    $region29: #{discriminator_forward.5} parent=5 // pred_check
      _
    $region30: #{discriminator_forward.5} parent=5 // pred_check_branch
      %198 = sbr.rel (%p195) target = $region32
    $region31: #{discriminator_forward.5} parent=5 // pred_region
      %s199 = ssub.s32 %s12, 1
      %s200 = smul.u32 2, %s17
      %p201 = scmp.lt.s32.totalorder %s200, 3
      %s202 = scalar_select %p201, %s200, 3
      %s203 = smul.addr %s202, 16
      %s204 = smul.addr %s203, 4
      %s205 = scalar_lea.vmem %s0, %s204
      %p206 = pneg %p38
      %p207 = pneg %p35
      %p208 = pneg %p59
      %p209 = pneg %p56
      %p210 = pneg %p80
      %p211 = pneg %p77
      %p212 = pneg %p106
      %p213 = pneg %p103
      %s214 = smul.u32 2, %s17
      %p215 = scmp.lt.s32.totalorder %s214, 3
      %s216 = scalar_select %p215, %s214, 3
      %s217 = smul.addr %s216, 6
      %s218 = smul.addr %s217, 8
      %s219 = scalar_lea.vmem %s3, %s218
      %p220 = pneg %p132
      %p221 = pneg %p129
      %p222 = scmp.lt.s32.totalorder %s17, 1
      %s223 = scalar_select %p222, %s17, 1
      %s224 = smul.addr %s223, 2
      %s225 = scalar_lea.vmem %s4, %s224
      %p226 = pneg %p158
      %p227 = pneg %p155
      %p228 = scmp.lt.s32.totalorder %s17, 1
      %s229 = scalar_select %p228, %s17, 1
      %s230 = smul.addr %s229, 2
      %s231 = scalar_lea.vmem %s5, %s230
      %s232 = smul.u32 2, %s17
      %p233 = scmp.lt.s32.totalorder %s232, 3
      %s234 = scalar_select %p233, %s232, 3
      %s235 = smul.addr %s234, 16
      %s236 = smul.addr %s235, 4
      %s237 = scalar_lea.vmem %s0, %s236
      %s238 = smul.u32 2, %s17
      %s239 = smul.u32 2, %s17
      %p240 = scmp.lt.s32.totalorder %s239, 3
      %s241 = scalar_select %p240, %s239, 3
      %s242 = smul.addr %s241, 6
      %s243 = smul.addr %s242, 8
      %s244 = scalar_lea.vmem %s3, %s243
      %s245 = smul.u32 2, %s17
      %p246 = scmp.lt.s32.totalorder %s17, 1
      %s247 = scalar_select %p246, %s17, 1
      %s248 = smul.addr %s247, 2
      %s249 = scalar_lea.vmem %s4, %s248
      %p250 = scmp.lt.s32.totalorder %s17, 1
      %s251 = scalar_select %p250, %s17, 1
      %s252 = smul.addr %s251, 2
      %s253 = scalar_lea.vmem %s5, %s252
      %v254 = vlaneseq
      %v255 = vshrl.u32 %v254, 7
      %v256 = vadd.s32 %v255, 8
      %v257 = vadd.s32 %v255, 16
      %vm258 = vcmp.lt.s32.totalorder %v255, 0
      %v259 = vsub.s32 0, %v255
      %v260 = vsel %vm258, %v259, %v255
      %v261 = vmul.u32.u64.compose %v260, 3435973837
      %v262 = vextract.low.u32 %v261
      %v263 = vextract.high.u32 %v261
      %v264 = vshrl.u32 %v263, 2
      %v265 = vmul.u32 %v264, 5
      %v266 = vsub.s32 %v260, %v265
      %v267 = vsub.s32 0, %v266
      %v268 = vsel %vm258, %v267, %v266
      %vm269 = vcmp.lt.s32.totalorder %v256, 0
      %v270 = vsub.s32 0, %v256
      %v271 = vsel %vm269, %v270, %v256
      %v272 = vmul.u32.u64.compose %v271, 3435973837
      %v273 = vextract.low.u32 %v272
      %v274 = vextract.high.u32 %v272
      %v275 = vshrl.u32 %v274, 2
      %v276 = vmul.u32 %v275, 5
      %v277 = vsub.s32 %v271, %v276
      %v278 = vsub.s32 0, %v277
      %v279 = vsel %vm269, %v278, %v277
      %vm280 = vcmp.lt.s32.totalorder %v257, 0
      %v281 = vsub.s32 0, %v257
      %v282 = vsel %vm280, %v281, %v257
      %v283 = vmul.u32.u64.compose %v282, 3435973837
      %v284 = vextract.low.u32 %v283
      %v285 = vextract.high.u32 %v283
      %v286 = vshrl.u32 %v285, 2
      %v287 = vmul.u32 %v286, 5
      %v288 = vsub.s32 %v282, %v287
      %v289 = vsub.s32 0, %v288
      %v290 = vsel %vm280, %v289, %v288
      %vm291 = vcmp.ne.s32.totalorder %v268, 0
      %vm292 = vcmp.ne.s32.totalorder %v279, 0
      %vm293 = vcmp.ne.s32.totalorder %v290, 0
      %vm294 = vcmp.lt.s32.totalorder %v268, 0
      %vm295 = vcmp.lt.s32.totalorder %v279, 0
      %vm296 = vcmp.lt.s32.totalorder %v290, 0
      %vm297 = vmand %vm294, %vm291
      %vm298 = vmand %vm295, %vm292
      %vm299 = vmand %vm296, %vm293
      %v300 = vadd.s32 %v268, 5
      %v301 = vadd.s32 %v279, 5
      %v302 = vadd.s32 %v290, 5
      %v303 = vsel %vm297, %v300, %v268
      %v304 = vsel %vm298, %v301, %v279
      %v305 = vsel %vm299, %v302, %v290
      %vm306 = vcmp.ne.s32.totalorder %v303, 4
      %vm307 = vcmp.ne.s32.totalorder %v304, 4
      %vm308 = vcmp.ne.s32.totalorder %v305, 4
      %v309 = vld [vmem:[%s237] sm:$0xff]
      %v310 = vld [vmem:[%s237 + $0x8] sm:$0xff]
      %v311 = vld [vmem:[%s237 + $0x10] sm:$0xff]
      %v312 = vld [vmem:[%s237 + $0x18] sm:$0xff]
      %v313 = vld [vmem:[%s237 + $0x20] sm:$0xff]
      %v314 = vld [vmem:[%s237 + $0x28] sm:$0xff]
      %v315 = vld [vmem:[%s237 + $0x30] sm:$0x77]
      %v316 = vld [vmem:[%s237 + $0x38] sm:$0x77]
      %v317 = vld [vmem:[%s1] sm:$0xff]
      %v318 = vld [vmem:[%s1 + $0x8] sm:$0xff]
      %v319 = vld [vmem:[%s1 + $0x10] sm:$0xff]
      %v320 = vld [vmem:[%s1 + $0x18] sm:$0xff]
      %v321 = vld [vmem:[%s1 + $0x20] sm:$0xff]
      %v322 = vld [vmem:[%s1 + $0x28] sm:$0xff]
      %v323 = vld [vmem:[%s1 + $0x30] sm:$0xff]
      %v324 = vld [vmem:[%s1 + $0x38] sm:$0xff]
      %v325 = vld [vmem:[%s1 + $0x40] sm:$0xff]
      %v326 = vld [vmem:[%s1 + $0x48] sm:$0xff]
      %v327 = vld [vmem:[%s1 + $0x50] sm:$0xff]
      %v328 = vld [vmem:[%s1 + $0x58] sm:$0xff]
      %v329 = vld [vmem:[%s1 + $0x60] sm:$0xff]
      %v330 = vld [vmem:[%s1 + $0x68] sm:$0xff]
      %v331 = vld [vmem:[%s1 + $0x70] sm:$0xff]
      %v332 = vld [vmem:[%s1 + $0x78] sm:$0xff]
      %v333 = vld [vmem:[%s1 + $0x80] sm:$0xff]
      %v334 = vld [vmem:[%s1 + $0x88] sm:$0xff]
      %v335 = vld [vmem:[%s1 + $0x90] sm:$0xff]
      %v336 = vld [vmem:[%s1 + $0x98] sm:$0xff]
      %v337 = vld [vmem:[%s1 + $0xa0] sm:$0xff]
      %v338 = vld [vmem:[%s1 + $0xa8] sm:$0xff]
      %v339 = vld [vmem:[%s1 + $0xb0] sm:$0xff]
      %v340 = vld [vmem:[%s1 + $0xb8] sm:$0xff]
      %v341 = vld [vmem:[%s1 + $0xc0] sm:$0xff]
      %v342 = vld [vmem:[%s1 + $0xc8] sm:$0xff]
      %v343 = vld [vmem:[%s1 + $0xd0] sm:$0xff]
      %v344 = vld [vmem:[%s1 + $0xd8] sm:$0xff]
      %v345 = vld [vmem:[%s1 + $0xe0] sm:$0xff]
      %v346 = vld [vmem:[%s1 + $0xe8] sm:$0xff]
      %v347 = vld [vmem:[%s1 + $0xf0] sm:$0xff]
      %v348 = vld [vmem:[%s1 + $0xf8] sm:$0xff]
      %v349 = vld [vmem:[%s1 + $0x100] sm:$0xff]
      %v350 = vld [vmem:[%s1 + $0x108] sm:$0xff]
      %v351 = vld [vmem:[%s1 + $0x110] sm:$0xff]
      %v352 = vld [vmem:[%s1 + $0x118] sm:$0xff]
      %v353 = vld [vmem:[%s1 + $0x120] sm:$0xff]
      %v354 = vld [vmem:[%s1 + $0x128] sm:$0xff]
      %v355 = vld [vmem:[%s1 + $0x130] sm:$0xff]
      %v356 = vld [vmem:[%s1 + $0x138] sm:$0xff]
      %v357 = vld [vmem:[%s1 + $0x140] sm:$0xff]
      %v358 = vld [vmem:[%s1 + $0x148] sm:$0xff]
      %v359 = vld [vmem:[%s1 + $0x150] sm:$0xff]
      %v360 = vld [vmem:[%s1 + $0x158] sm:$0xff]
      %v361 = vld [vmem:[%s1 + $0x160] sm:$0xff]
      %v362 = vld [vmem:[%s1 + $0x168] sm:$0xff]
      %v363 = vld [vmem:[%s1 + $0x170] sm:$0xff]
      %v364 = vld [vmem:[%s1 + $0x178] sm:$0xff]
      %v365 = vld [vmem:[%s1 + $0x180] sm:$0xff]
      %v366 = vld [vmem:[%s1 + $0x188] sm:$0xff]
      %v367 = vld [vmem:[%s1 + $0x190] sm:$0xff]
      %v368 = vld [vmem:[%s1 + $0x198] sm:$0xff]
      %v369 = vld [vmem:[%s1 + $0x1a0] sm:$0xff]
      %v370 = vld [vmem:[%s1 + $0x1a8] sm:$0xff]
      %v371 = vld [vmem:[%s1 + $0x1b0] sm:$0xff]
      %v372 = vld [vmem:[%s1 + $0x1b8] sm:$0xff]
      %v373 = vld [vmem:[%s1 + $0x1c0] sm:$0xff]
      %v374 = vld [vmem:[%s1 + $0x1c8] sm:$0xff]
      %v375 = vld [vmem:[%s1 + $0x1d0] sm:$0xff]
      %v376 = vld [vmem:[%s1 + $0x1d8] sm:$0xff]
      %v377 = vld [vmem:[%s1 + $0x1e0] sm:$0xff]
      %v378 = vld [vmem:[%s1 + $0x1e8] sm:$0xff]
      %v379 = vld [vmem:[%s1 + $0x1f0] sm:$0xff]
      %v380 = vld [vmem:[%s1 + $0x1f8] sm:$0xff]
      %s381 = scalar_lea.vmem %s1, 512
      %v382 = vld [vmem:[%s381] sm:$0xff]
      %v383 = vld [vmem:[%s381 + $0x8] sm:$0xff]
      %v384 = vld [vmem:[%s381 + $0x10] sm:$0xff]
      %v385 = vld [vmem:[%s381 + $0x18] sm:$0xff]
      %v386 = vld [vmem:[%s381 + $0x20] sm:$0xff]
      %v387 = vld [vmem:[%s381 + $0x28] sm:$0xff]
      %v388 = vld [vmem:[%s381 + $0x30] sm:$0xff]
      %v389 = vld [vmem:[%s381 + $0x38] sm:$0xff]
      %v390 = vld [vmem:[%s381 + $0x40] sm:$0xff]
      %v391 = vld [vmem:[%s381 + $0x48] sm:$0xff]
      %v392 = vld [vmem:[%s381 + $0x50] sm:$0xff]
      %v393 = vld [vmem:[%s381 + $0x58] sm:$0xff]
      %v394 = vld [vmem:[%s381 + $0x60] sm:$0xff]
      %v395 = vld [vmem:[%s381 + $0x68] sm:$0xff]
      %v396 = vld [vmem:[%s381 + $0x70] sm:$0xff]
      %v397 = vld [vmem:[%s381 + $0x78] sm:$0xff]
      %v398 = vld [vmem:[%s381 + $0x80] sm:$0xff]
      %v399 = vld [vmem:[%s381 + $0x88] sm:$0xff]
      %v400 = vld [vmem:[%s381 + $0x90] sm:$0xff]
      %v401 = vld [vmem:[%s381 + $0x98] sm:$0xff]
      %v402 = vld [vmem:[%s381 + $0xa0] sm:$0xff]
      %v403 = vld [vmem:[%s381 + $0xa8] sm:$0xff]
      %v404 = vld [vmem:[%s381 + $0xb0] sm:$0xff]
      %v405 = vld [vmem:[%s381 + $0xb8] sm:$0xff]
      %v406 = vld [vmem:[%s381 + $0xc0] sm:$0xff]
      %v407 = vld [vmem:[%s381 + $0xc8] sm:$0xff]
      %v408 = vld [vmem:[%s381 + $0xd0] sm:$0xff]
      %v409 = vld [vmem:[%s381 + $0xd8] sm:$0xff]
      %v410 = vld [vmem:[%s381 + $0xe0] sm:$0xff]
      %v411 = vld [vmem:[%s381 + $0xe8] sm:$0xff]
      %v412 = vld [vmem:[%s381 + $0xf0] sm:$0xff]
      %v413 = vld [vmem:[%s381 + $0xf8] sm:$0xff]
      %v414 = vld [vmem:[%s381 + $0x100] sm:$0xff]
      %v415 = vld [vmem:[%s381 + $0x108] sm:$0xff]
      %v416 = vld [vmem:[%s381 + $0x110] sm:$0xff]
      %v417 = vld [vmem:[%s381 + $0x118] sm:$0xff]
      %v418 = vld [vmem:[%s381 + $0x120] sm:$0xff]
      %v419 = vld [vmem:[%s381 + $0x128] sm:$0xff]
      %v420 = vld [vmem:[%s381 + $0x130] sm:$0xff]
      %v421 = vld [vmem:[%s381 + $0x138] sm:$0xff]
      %v422 = vld [vmem:[%s381 + $0x140] sm:$0xff]
      %v423 = vld [vmem:[%s381 + $0x148] sm:$0xff]
      %v424 = vld [vmem:[%s381 + $0x150] sm:$0xff]
      %v425 = vld [vmem:[%s381 + $0x158] sm:$0xff]
      %v426 = vld [vmem:[%s381 + $0x160] sm:$0xff]
      %v427 = vld [vmem:[%s381 + $0x168] sm:$0xff]
      %v428 = vld [vmem:[%s381 + $0x170] sm:$0xff]
      %v429 = vld [vmem:[%s381 + $0x178] sm:$0xff]
      %v430 = vld [vmem:[%s381 + $0x180] sm:$0xff]
      %v431 = vld [vmem:[%s381 + $0x188] sm:$0xff]
      %v432 = vld [vmem:[%s381 + $0x190] sm:$0xff]
      %v433 = vld [vmem:[%s381 + $0x198] sm:$0xff]
      %v434 = vld [vmem:[%s381 + $0x1a0] sm:$0xff]
      %v435 = vld [vmem:[%s381 + $0x1a8] sm:$0xff]
      %v436 = vld [vmem:[%s381 + $0x1b0] sm:$0xff]
      %v437 = vld [vmem:[%s381 + $0x1b8] sm:$0xff]
      %v438 = vld [vmem:[%s381 + $0x1c0] sm:$0xff]
      %v439 = vld [vmem:[%s381 + $0x1c8] sm:$0xff]
      %v440 = vld [vmem:[%s381 + $0x1d0] sm:$0xff]
      %v441 = vld [vmem:[%s381 + $0x1d8] sm:$0xff]
      %v442 = vld [vmem:[%s381 + $0x1e0] sm:$0xff]
      %v443 = vld [vmem:[%s381 + $0x1e8] sm:$0xff]
      %v444 = vld [vmem:[%s381 + $0x1f0] sm:$0xff]
      %v445 = vld [vmem:[%s381 + $0x1f8] sm:$0xff]
      %v452 = vunpack.c.l.b16 %v309
      %v453 = vunpack.c.h.b16 %v309
      %v454 = vunpack.c.l.b16 %v310
      %v455 = vunpack.c.h.b16 %v310
      %v456 = vunpack.c.l.b16 %v311
      %v457 = vunpack.c.h.b16 %v311
      %v458 = vunpack.c.l.b16 %v312
      %v459 = vunpack.c.h.b16 %v312
      %v460 = vunpack.c.l.b16 %v313
      %v461 = vunpack.c.h.b16 %v313
      %v462 = vunpack.c.l.b16 %v314
      %v463 = vunpack.c.h.b16 %v314
      %v464 = vpack.c.b16 %v456, %v452
      %v465 = vpack.c.b16 %v457, %v453
      %v466 = vpack.c.b16 %v458, %v454
      %v467 = vpack.c.b16 %v459, %v455
      %v468 = vpack.c.b16 %v460, %v460
      %v469 = vpack.c.b16 %v461, %v461
      %v470 = vpack.c.b16 %v462, %v462
      %v471 = vpack.c.b16 %v463, %v463
      %vm472 = vsmask.f32 7424
      %v474 = vshrl.u32 %v464, 16
      %v476 = vshll.u32 %v464, 16
      %v478 = vrot.slane %v476, 1
      %v479 = vor.u32 %v474, %v478
      %v481 = vshll.u32 %v468, 16
      %v483 = vrot.slane %v481, 1
      %v484 = vsel %vm472, %v479, %v483
      %v486 = vshrl.u32 %v465, 16
      %v488 = vshll.u32 %v465, 16
      %v490 = vrot.slane %v488, 1
      %v491 = vor.u32 %v486, %v490
      %v493 = vshll.u32 %v469, 16
      %v495 = vrot.slane %v493, 1
      %v496 = vsel %vm472, %v491, %v495
      %v498 = vshrl.u32 %v466, 16
      %v500 = vshll.u32 %v466, 16
      %v502 = vrot.slane %v500, 1
      %v503 = vor.u32 %v498, %v502
      %v505 = vshll.u32 %v470, 16
      %v507 = vrot.slane %v505, 1
      %v508 = vsel %vm472, %v503, %v507
      %v510 = vshrl.u32 %v467, 16
      %v512 = vshll.u32 %v467, 16
      %v514 = vrot.slane %v512, 1
      %v515 = vor.u32 %v510, %v514
      %v517 = vshll.u32 %v471, 16
      %v519 = vrot.slane %v517, 1
      %v520 = vsel %vm472, %v515, %v519
      %v521 = vshrl.u32 %v468, 16
      %v523 = vor.u32 %v521, %v483
      %v524 = vshrl.u32 %v469, 16
      %v526 = vor.u32 %v524, %v495
      %v527 = vshrl.u32 %v470, 16
      %v529 = vor.u32 %v527, %v507
      %v530 = vshrl.u32 %v471, 16
      %v532 = vor.u32 %v530, %v519
      %v605 = vunpack.c.l.b16 %v382
      %v606 = vunpack.c.h.b16 %v382
      %v607 = vunpack.c.l.b16 %v383
      %v608 = vunpack.c.h.b16 %v383
      %v609 = vunpack.c.l.b16 %v384
      %v610 = vunpack.c.h.b16 %v384
      %v611 = vunpack.c.l.b16 %v385
      %v612 = vunpack.c.h.b16 %v385
      %v613 = vunpack.c.l.b16 %v386
      %v614 = vunpack.c.h.b16 %v386
      %v615 = vunpack.c.l.b16 %v387
      %v616 = vunpack.c.h.b16 %v387
      %v617 = vunpack.c.l.b16 %v388
      %v618 = vunpack.c.h.b16 %v388
      %v619 = vunpack.c.l.b16 %v389
      %v620 = vunpack.c.h.b16 %v389
      %v621 = vunpack.c.l.b16 %v390
      %v622 = vunpack.c.h.b16 %v390
      %v623 = vunpack.c.l.b16 %v391
      %v624 = vunpack.c.h.b16 %v391
      %v625 = vunpack.c.l.b16 %v392
      %v626 = vunpack.c.h.b16 %v392
      %v627 = vunpack.c.l.b16 %v393
      %v628 = vunpack.c.h.b16 %v393
      %v629 = vunpack.c.l.b16 %v394
      %v630 = vunpack.c.h.b16 %v394
      %v631 = vunpack.c.l.b16 %v395
      %v632 = vunpack.c.h.b16 %v395
      %v633 = vunpack.c.l.b16 %v396
      %v634 = vunpack.c.h.b16 %v396
      %v635 = vunpack.c.l.b16 %v397
      %v636 = vunpack.c.h.b16 %v397
      %v637 = vunpack.c.l.b16 %v398
      %v638 = vunpack.c.h.b16 %v398
      %v639 = vunpack.c.l.b16 %v399
      %v640 = vunpack.c.h.b16 %v399
      %v641 = vunpack.c.l.b16 %v400
      %v642 = vunpack.c.h.b16 %v400
      %v643 = vunpack.c.l.b16 %v401
      %v644 = vunpack.c.h.b16 %v401
      %v645 = vunpack.c.l.b16 %v402
      %v646 = vunpack.c.h.b16 %v402
      %v647 = vunpack.c.l.b16 %v403
      %v648 = vunpack.c.h.b16 %v403
      %v649 = vunpack.c.l.b16 %v404
      %v650 = vunpack.c.h.b16 %v404
      %v651 = vunpack.c.l.b16 %v405
      %v652 = vunpack.c.h.b16 %v405
      %v653 = vunpack.c.l.b16 %v406
      %v654 = vunpack.c.h.b16 %v406
      %v655 = vunpack.c.l.b16 %v407
      %v656 = vunpack.c.h.b16 %v407
      %v657 = vunpack.c.l.b16 %v408
      %v658 = vunpack.c.h.b16 %v408
      %v659 = vunpack.c.l.b16 %v409
      %v660 = vunpack.c.h.b16 %v409
      %v661 = vunpack.c.l.b16 %v410
      %v662 = vunpack.c.h.b16 %v410
      %v663 = vunpack.c.l.b16 %v411
      %v664 = vunpack.c.h.b16 %v411
      %v665 = vunpack.c.l.b16 %v412
      %v666 = vunpack.c.h.b16 %v412
      %v667 = vunpack.c.l.b16 %v413
      %v668 = vunpack.c.h.b16 %v413
      %v669 = vunpack.c.l.b16 %v414
      %v670 = vunpack.c.h.b16 %v414
      %v671 = vunpack.c.l.b16 %v415
      %v672 = vunpack.c.h.b16 %v415
      %v673 = vunpack.c.l.b16 %v416
      %v674 = vunpack.c.h.b16 %v416
      %v675 = vunpack.c.l.b16 %v417
      %v676 = vunpack.c.h.b16 %v417
      %v677 = vunpack.c.l.b16 %v418
      %v678 = vunpack.c.h.b16 %v418
      %v679 = vunpack.c.l.b16 %v419
      %v680 = vunpack.c.h.b16 %v419
      %v681 = vunpack.c.l.b16 %v420
      %v682 = vunpack.c.h.b16 %v420
      %v683 = vunpack.c.l.b16 %v421
      %v684 = vunpack.c.h.b16 %v421
      %v685 = vunpack.c.l.b16 %v422
      %v686 = vunpack.c.h.b16 %v422
      %v687 = vunpack.c.l.b16 %v423
      %v688 = vunpack.c.h.b16 %v423
      %v689 = vunpack.c.l.b16 %v424
      %v690 = vunpack.c.h.b16 %v424
      %v691 = vunpack.c.l.b16 %v425
      %v692 = vunpack.c.h.b16 %v425
      %v693 = vunpack.c.l.b16 %v426
      %v694 = vunpack.c.h.b16 %v426
      %v695 = vunpack.c.l.b16 %v427
      %v696 = vunpack.c.h.b16 %v427
      %v697 = vunpack.c.l.b16 %v428
      %v698 = vunpack.c.h.b16 %v428
      %v699 = vunpack.c.l.b16 %v429
      %v700 = vunpack.c.h.b16 %v429
      %v701 = vunpack.c.l.b16 %v430
      %v702 = vunpack.c.h.b16 %v430
      %v703 = vunpack.c.l.b16 %v431
      %v704 = vunpack.c.h.b16 %v431
      %v705 = vunpack.c.l.b16 %v432
      %v706 = vunpack.c.h.b16 %v432
      %v707 = vunpack.c.l.b16 %v433
      %v708 = vunpack.c.h.b16 %v433
      %v709 = vunpack.c.l.b16 %v434
      %v710 = vunpack.c.h.b16 %v434
      %v711 = vunpack.c.l.b16 %v435
      %v712 = vunpack.c.h.b16 %v435
      %v713 = vunpack.c.l.b16 %v436
      %v714 = vunpack.c.h.b16 %v436
      %v715 = vunpack.c.l.b16 %v437
      %v716 = vunpack.c.h.b16 %v437
      %v717 = vunpack.c.l.b16 %v438
      %v718 = vunpack.c.h.b16 %v438
      %v719 = vunpack.c.l.b16 %v439
      %v720 = vunpack.c.h.b16 %v439
      %v721 = vunpack.c.l.b16 %v440
      %v722 = vunpack.c.h.b16 %v440
      %v723 = vunpack.c.l.b16 %v441
      %v724 = vunpack.c.h.b16 %v441
      %v725 = vunpack.c.l.b16 %v442
      %v726 = vunpack.c.h.b16 %v442
      %v727 = vunpack.c.l.b16 %v443
      %v728 = vunpack.c.h.b16 %v443
      %v729 = vunpack.c.l.b16 %v444
      %v730 = vunpack.c.h.b16 %v444
      %v731 = vunpack.c.l.b16 %v445
      %v732 = vunpack.c.h.b16 %v445
      %v733 = vpack.c.b16 %v607, %v605
      %v734 = vpack.c.b16 %v608, %v606
      %v735 = vpack.c.b16 %v611, %v609
      %v736 = vpack.c.b16 %v612, %v610
      %v737 = vpack.c.b16 %v615, %v613
      %v738 = vpack.c.b16 %v616, %v614
      %v739 = vpack.c.b16 %v619, %v617
      %v740 = vpack.c.b16 %v620, %v618
      %v741 = vpack.c.b16 %v623, %v621
      %v742 = vpack.c.b16 %v624, %v622
      %v743 = vpack.c.b16 %v627, %v625
      %v744 = vpack.c.b16 %v628, %v626
      %v745 = vpack.c.b16 %v631, %v629
      %v746 = vpack.c.b16 %v632, %v630
      %v747 = vpack.c.b16 %v635, %v633
      %v748 = vpack.c.b16 %v636, %v634
      %v749 = vpack.c.b16 %v639, %v637
      %v750 = vpack.c.b16 %v640, %v638
      %v751 = vpack.c.b16 %v643, %v641
      %v752 = vpack.c.b16 %v644, %v642
      %v753 = vpack.c.b16 %v647, %v645
      %v754 = vpack.c.b16 %v648, %v646
      %v755 = vpack.c.b16 %v651, %v649
      %v756 = vpack.c.b16 %v652, %v650
      %v757 = vpack.c.b16 %v655, %v653
      %v758 = vpack.c.b16 %v656, %v654
      %v759 = vpack.c.b16 %v659, %v657
      %v760 = vpack.c.b16 %v660, %v658
      %v761 = vpack.c.b16 %v663, %v661
      %v762 = vpack.c.b16 %v664, %v662
      %v763 = vpack.c.b16 %v667, %v665
      %v764 = vpack.c.b16 %v668, %v666
      %v765 = vpack.c.b16 %v671, %v669
      %v766 = vpack.c.b16 %v672, %v670
      %v767 = vpack.c.b16 %v675, %v673
      %v768 = vpack.c.b16 %v676, %v674
      %v769 = vpack.c.b16 %v679, %v677
      %v770 = vpack.c.b16 %v680, %v678
      %v771 = vpack.c.b16 %v683, %v681
      %v772 = vpack.c.b16 %v684, %v682
      %v773 = vpack.c.b16 %v687, %v685
      %v774 = vpack.c.b16 %v688, %v686
      %v775 = vpack.c.b16 %v691, %v689
      %v776 = vpack.c.b16 %v692, %v690
      %v777 = vpack.c.b16 %v695, %v693
      %v778 = vpack.c.b16 %v696, %v694
      %v779 = vpack.c.b16 %v699, %v697
      %v780 = vpack.c.b16 %v700, %v698
      %v781 = vpack.c.b16 %v703, %v701
      %v782 = vpack.c.b16 %v704, %v702
      %v783 = vpack.c.b16 %v707, %v705
      %v784 = vpack.c.b16 %v708, %v706
      %v785 = vpack.c.b16 %v711, %v709
      %v786 = vpack.c.b16 %v712, %v710
      %v787 = vpack.c.b16 %v715, %v713
      %v788 = vpack.c.b16 %v716, %v714
      %v789 = vpack.c.b16 %v719, %v717
      %v790 = vpack.c.b16 %v720, %v718
      %v791 = vpack.c.b16 %v723, %v721
      %v792 = vpack.c.b16 %v724, %v722
      %v793 = vpack.c.b16 %v727, %v725
      %v794 = vpack.c.b16 %v728, %v726
      %v795 = vpack.c.b16 %v731, %v729
      %v796 = vpack.c.b16 %v732, %v730
      %861 = vmatprep.subr.bf16.mxu0 %v734
      %862 = vmatpush1.bf16.msra.mxu0 %v733
      %863 = vmatprep.subr.bf16.mxu0 %v736
      %864 = vmatpush1.bf16.msra.mxu0 %v735
      %865 = vmatprep.subr.bf16.mxu0 %v738
      %866 = vmatpush1.bf16.msra.mxu0 %v737
      %867 = vmatprep.subr.bf16.mxu0 %v740
      %868 = vmatpush1.bf16.msra.mxu0 %v739
      %869 = vmatprep.subr.bf16.mxu0 %v742
      %870 = vmatpush1.bf16.msra.mxu0 %v741
      %871 = vmatprep.subr.bf16.mxu0 %v744
      %872 = vmatpush1.bf16.msra.mxu0 %v743
      %873 = vmatprep.subr.bf16.mxu0 %v746
      %874 = vmatpush1.bf16.msra.mxu0 %v745
      %875 = vmatprep.subr.bf16.mxu0 %v748
      %876 = vmatpush1.bf16.msra.mxu0 %v747
      %877 = vmatprep.subr.bf16.mxu0 %v750
      %878 = vmatpush1.bf16.msra.mxu0 %v749
      %879 = vmatprep.subr.bf16.mxu0 %v752
      %880 = vmatpush1.bf16.msra.mxu0 %v751
      %881 = vmatprep.subr.bf16.mxu0 %v754
      %882 = vmatpush1.bf16.msra.mxu0 %v753
      %883 = vmatprep.subr.bf16.mxu0 %v756
      %884 = vmatpush1.bf16.msra.mxu0 %v755
      %885 = vmatprep.subr.bf16.mxu0 %v758
      %886 = vmatpush1.bf16.msra.mxu0 %v757
      %887 = vmatprep.subr.bf16.mxu0 %v760
      %888 = vmatpush1.bf16.msra.mxu0 %v759
      %889 = vmatprep.subr.bf16.mxu0 %v762
      %890 = vmatpush1.bf16.msra.mxu0 %v761
      %891 = vmatprep.subr.bf16.mxu0 %v764
      %892 = vmatpush1.bf16.msra.mxu0 %v763
      %893 = vmatprep.mubr.bf16.mxu0 %v496
      %894 = vmatmul.mubr.bf16.gmra.mrb[0].mxu0 %v484
      %v895 = vpop.f32.mrb[0].mxu0
      %v896 = vadd.f32 0.0, %v895
      %v897 = vpop.f32.mrb[0].mxu0
      %v898 = vadd.f32 0.0, %v897
      %v899 = vpop.f32.mrb[0].mxu0
      %v900 = vadd.f32 0.0, %v899
      %v901 = vpop.f32.mrb[0].mxu0
      %v902 = vadd.f32 0.0, %v901
      %903 = vmatprep.mubr.bf16.mxu0 %v526
      %904 = vmatmul.mubr.bf16.gmra.mrb[0].mxu0 %v523
      %v905 = vpop.f32.mrb[0].mxu0
      %v906 = vadd.f32 0.0, %v905
      %v907 = vpop.f32.mrb[0].mxu0
      %v908 = vadd.f32 0.0, %v907
      %v909 = vpop.f32.mrb[0].mxu0
      %v910 = vpop.f32.mrb[0].mxu0
      %911 = vdwg.mxu0
      %912 = vmatprep.subr.bf16.mxu0 %v766
      %913 = vmatpush1.bf16.msra.mxu0 %v765
      %914 = vmatprep.subr.bf16.mxu0 %v768
      %915 = vmatpush1.bf16.msra.mxu0 %v767
      %916 = vmatprep.subr.bf16.mxu0 %v770
      %917 = vmatpush1.bf16.msra.mxu0 %v769
      %918 = vmatprep.subr.bf16.mxu0 %v772
      %919 = vmatpush1.bf16.msra.mxu0 %v771
      %920 = vmatprep.subr.bf16.mxu0 %v774
      %921 = vmatpush1.bf16.msra.mxu0 %v773
      %922 = vmatprep.subr.bf16.mxu0 %v776
      %923 = vmatpush1.bf16.msra.mxu0 %v775
      %924 = vmatprep.subr.bf16.mxu0 %v778
      %925 = vmatpush1.bf16.msra.mxu0 %v777
      %926 = vmatprep.subr.bf16.mxu0 %v780
      %927 = vmatpush1.bf16.msra.mxu0 %v779
      %928 = vmatprep.subr.bf16.mxu0 %v782
      %929 = vmatpush1.bf16.msra.mxu0 %v781
      %930 = vmatprep.subr.bf16.mxu0 %v784
      %931 = vmatpush1.bf16.msra.mxu0 %v783
      %932 = vmatprep.subr.bf16.mxu0 %v786
      %933 = vmatpush1.bf16.msra.mxu0 %v785
      %934 = vmatprep.subr.bf16.mxu0 %v788
      %935 = vmatpush1.bf16.msra.mxu0 %v787
      %936 = vmatprep.subr.bf16.mxu0 %v790
      %937 = vmatpush1.bf16.msra.mxu0 %v789
      %938 = vmatprep.subr.bf16.mxu0 %v792
      %939 = vmatpush1.bf16.msra.mxu0 %v791
      %940 = vmatprep.subr.bf16.mxu0 %v794
      %941 = vmatpush1.bf16.msra.mxu0 %v793
      %942 = vmatprep.subr.bf16.mxu0 %v796
      %943 = vmatpush1.bf16.msra.mxu0 %v795
      %944 = vmatprep.mubr.bf16.mxu0 %v520
      %945 = vmatmul.mubr.bf16.gmra.mrb[0].mxu0 %v508
      %v946 = vpop.f32.mrb[0].mxu0
      %v947 = vadd.f32 %v896, %v946
      %v948 = vpop.f32.mrb[0].mxu0
      %v949 = vadd.f32 %v898, %v948
      %v950 = vpop.f32.mrb[0].mxu0
      %v951 = vadd.f32 %v900, %v950
      %v952 = vpop.f32.mrb[0].mxu0
      %v953 = vadd.f32 %v902, %v952
      %954 = vmatprep.mubr.bf16.mxu0 %v532
      %955 = vmatmul.mubr.bf16.gmra.mrb[0].mxu0 %v529
      %v956 = vpop.f32.mrb[0].mxu0
      %v957 = vadd.f32 %v906, %v956
      %v958 = vpop.f32.mrb[0].mxu0
      %v959 = vadd.f32 %v908, %v958
      %v960 = vpop.f32.mrb[0].mxu0
      %v961 = vpop.f32.mrb[0].mxu0
      %962 = vdwg.mxu0
      %v1035 = vunpack.c.l.b16 %v317
      %v1036 = vunpack.c.h.b16 %v317
      %v1037 = vunpack.c.l.b16 %v318
      %v1038 = vunpack.c.h.b16 %v318
      %v1039 = vunpack.c.l.b16 %v319
      %v1040 = vunpack.c.h.b16 %v319
      %v1041 = vunpack.c.l.b16 %v320
      %v1042 = vunpack.c.h.b16 %v320
      %v1043 = vunpack.c.l.b16 %v321
      %v1044 = vunpack.c.h.b16 %v321
      %v1045 = vunpack.c.l.b16 %v322
      %v1046 = vunpack.c.h.b16 %v322
      %v1047 = vunpack.c.l.b16 %v323
      %v1048 = vunpack.c.h.b16 %v323
      %v1049 = vunpack.c.l.b16 %v324
      %v1050 = vunpack.c.h.b16 %v324
      %v1051 = vunpack.c.l.b16 %v325
      %v1052 = vunpack.c.h.b16 %v325
      %v1053 = vunpack.c.l.b16 %v326
      %v1054 = vunpack.c.h.b16 %v326
      %v1055 = vunpack.c.l.b16 %v327
      %v1056 = vunpack.c.h.b16 %v327
      %v1057 = vunpack.c.l.b16 %v328
      %v1058 = vunpack.c.h.b16 %v328
      %v1059 = vunpack.c.l.b16 %v329
      %v1060 = vunpack.c.h.b16 %v329
      %v1061 = vunpack.c.l.b16 %v330
      %v1062 = vunpack.c.h.b16 %v330
      %v1063 = vunpack.c.l.b16 %v331
      %v1064 = vunpack.c.h.b16 %v331
      %v1065 = vunpack.c.l.b16 %v332
      %v1066 = vunpack.c.h.b16 %v332
      %v1067 = vunpack.c.l.b16 %v333
      %v1068 = vunpack.c.h.b16 %v333
      %v1069 = vunpack.c.l.b16 %v334
      %v1070 = vunpack.c.h.b16 %v334
      %v1071 = vunpack.c.l.b16 %v335
      %v1072 = vunpack.c.h.b16 %v335
      %v1073 = vunpack.c.l.b16 %v336
      %v1074 = vunpack.c.h.b16 %v336
      %v1075 = vunpack.c.l.b16 %v337
      %v1076 = vunpack.c.h.b16 %v337
      %v1077 = vunpack.c.l.b16 %v338
      %v1078 = vunpack.c.h.b16 %v338
      %v1079 = vunpack.c.l.b16 %v339
      %v1080 = vunpack.c.h.b16 %v339
      %v1081 = vunpack.c.l.b16 %v340
      %v1082 = vunpack.c.h.b16 %v340
      %v1083 = vunpack.c.l.b16 %v341
      %v1084 = vunpack.c.h.b16 %v341
      %v1085 = vunpack.c.l.b16 %v342
      %v1086 = vunpack.c.h.b16 %v342
      %v1087 = vunpack.c.l.b16 %v343
      %v1088 = vunpack.c.h.b16 %v343
      %v1089 = vunpack.c.l.b16 %v344
      %v1090 = vunpack.c.h.b16 %v344
      %v1091 = vunpack.c.l.b16 %v345
      %v1092 = vunpack.c.h.b16 %v345
      %v1093 = vunpack.c.l.b16 %v346
      %v1094 = vunpack.c.h.b16 %v346
      %v1095 = vunpack.c.l.b16 %v347
      %v1096 = vunpack.c.h.b16 %v347
      %v1097 = vunpack.c.l.b16 %v348
      %v1098 = vunpack.c.h.b16 %v348
      %v1099 = vunpack.c.l.b16 %v349
      %v1100 = vunpack.c.h.b16 %v349
      %v1101 = vunpack.c.l.b16 %v350
      %v1102 = vunpack.c.h.b16 %v350
      %v1103 = vunpack.c.l.b16 %v351
      %v1104 = vunpack.c.h.b16 %v351
      %v1105 = vunpack.c.l.b16 %v352
      %v1106 = vunpack.c.h.b16 %v352
      %v1107 = vunpack.c.l.b16 %v353
      %v1108 = vunpack.c.h.b16 %v353
      %v1109 = vunpack.c.l.b16 %v354
      %v1110 = vunpack.c.h.b16 %v354
      %v1111 = vunpack.c.l.b16 %v355
      %v1112 = vunpack.c.h.b16 %v355
      %v1113 = vunpack.c.l.b16 %v356
      %v1114 = vunpack.c.h.b16 %v356
      %v1115 = vunpack.c.l.b16 %v357
      %v1116 = vunpack.c.h.b16 %v357
      %v1117 = vunpack.c.l.b16 %v358
      %v1118 = vunpack.c.h.b16 %v358
      %v1119 = vunpack.c.l.b16 %v359
      %v1120 = vunpack.c.h.b16 %v359
      %v1121 = vunpack.c.l.b16 %v360
      %v1122 = vunpack.c.h.b16 %v360
      %v1123 = vunpack.c.l.b16 %v361
      %v1124 = vunpack.c.h.b16 %v361
      %v1125 = vunpack.c.l.b16 %v362
      %v1126 = vunpack.c.h.b16 %v362
      %v1127 = vunpack.c.l.b16 %v363
      %v1128 = vunpack.c.h.b16 %v363
      %v1129 = vunpack.c.l.b16 %v364
      %v1130 = vunpack.c.h.b16 %v364
      %v1131 = vunpack.c.l.b16 %v365
      %v1132 = vunpack.c.h.b16 %v365
      %v1133 = vunpack.c.l.b16 %v366
      %v1134 = vunpack.c.h.b16 %v366
      %v1135 = vunpack.c.l.b16 %v367
      %v1136 = vunpack.c.h.b16 %v367
      %v1137 = vunpack.c.l.b16 %v368
      %v1138 = vunpack.c.h.b16 %v368
      %v1139 = vunpack.c.l.b16 %v369
      %v1140 = vunpack.c.h.b16 %v369
      %v1141 = vunpack.c.l.b16 %v370
      %v1142 = vunpack.c.h.b16 %v370
      %v1143 = vunpack.c.l.b16 %v371
      %v1144 = vunpack.c.h.b16 %v371
      %v1145 = vunpack.c.l.b16 %v372
      %v1146 = vunpack.c.h.b16 %v372
      %v1147 = vunpack.c.l.b16 %v373
      %v1148 = vunpack.c.h.b16 %v373
      %v1149 = vunpack.c.l.b16 %v374
      %v1150 = vunpack.c.h.b16 %v374
      %v1151 = vunpack.c.l.b16 %v375
      %v1152 = vunpack.c.h.b16 %v375
      %v1153 = vunpack.c.l.b16 %v376
      %v1154 = vunpack.c.h.b16 %v376
      %v1155 = vunpack.c.l.b16 %v377
      %v1156 = vunpack.c.h.b16 %v377
      %v1157 = vunpack.c.l.b16 %v378
      %v1158 = vunpack.c.h.b16 %v378
      %v1159 = vunpack.c.l.b16 %v379
      %v1160 = vunpack.c.h.b16 %v379
      %v1161 = vunpack.c.l.b16 %v380
      %v1162 = vunpack.c.h.b16 %v380
      %v1163 = vpack.c.b16 %v1037, %v1035
      %v1164 = vpack.c.b16 %v1038, %v1036
      %v1165 = vpack.c.b16 %v1041, %v1039
      %v1166 = vpack.c.b16 %v1042, %v1040
      %v1167 = vpack.c.b16 %v1045, %v1043
      %v1168 = vpack.c.b16 %v1046, %v1044
      %v1169 = vpack.c.b16 %v1049, %v1047
      %v1170 = vpack.c.b16 %v1050, %v1048
      %v1171 = vpack.c.b16 %v1053, %v1051
      %v1172 = vpack.c.b16 %v1054, %v1052
      %v1173 = vpack.c.b16 %v1057, %v1055
      %v1174 = vpack.c.b16 %v1058, %v1056
      %v1175 = vpack.c.b16 %v1061, %v1059
      %v1176 = vpack.c.b16 %v1062, %v1060
      %v1177 = vpack.c.b16 %v1065, %v1063
      %v1178 = vpack.c.b16 %v1066, %v1064
      %v1179 = vpack.c.b16 %v1069, %v1067
      %v1180 = vpack.c.b16 %v1070, %v1068
      %v1181 = vpack.c.b16 %v1073, %v1071
      %v1182 = vpack.c.b16 %v1074, %v1072
      %v1183 = vpack.c.b16 %v1077, %v1075
      %v1184 = vpack.c.b16 %v1078, %v1076
      %v1185 = vpack.c.b16 %v1081, %v1079
      %v1186 = vpack.c.b16 %v1082, %v1080
      %v1187 = vpack.c.b16 %v1085, %v1083
      %v1188 = vpack.c.b16 %v1086, %v1084
      %v1189 = vpack.c.b16 %v1089, %v1087
      %v1190 = vpack.c.b16 %v1090, %v1088
      %v1191 = vpack.c.b16 %v1093, %v1091
      %v1192 = vpack.c.b16 %v1094, %v1092
      %v1193 = vpack.c.b16 %v1097, %v1095
      %v1194 = vpack.c.b16 %v1098, %v1096
      %v1195 = vpack.c.b16 %v1101, %v1099
      %v1196 = vpack.c.b16 %v1102, %v1100
      %v1197 = vpack.c.b16 %v1105, %v1103
      %v1198 = vpack.c.b16 %v1106, %v1104
      %v1199 = vpack.c.b16 %v1109, %v1107
      %v1200 = vpack.c.b16 %v1110, %v1108
      %v1201 = vpack.c.b16 %v1113, %v1111
      %v1202 = vpack.c.b16 %v1114, %v1112
      %v1203 = vpack.c.b16 %v1117, %v1115
      %v1204 = vpack.c.b16 %v1118, %v1116
      %v1205 = vpack.c.b16 %v1121, %v1119
      %v1206 = vpack.c.b16 %v1122, %v1120
      %v1207 = vpack.c.b16 %v1125, %v1123
      %v1208 = vpack.c.b16 %v1126, %v1124
      %v1209 = vpack.c.b16 %v1129, %v1127
      %v1210 = vpack.c.b16 %v1130, %v1128
      %v1211 = vpack.c.b16 %v1133, %v1131
      %v1212 = vpack.c.b16 %v1134, %v1132
      %v1213 = vpack.c.b16 %v1137, %v1135
      %v1214 = vpack.c.b16 %v1138, %v1136
      %v1215 = vpack.c.b16 %v1141, %v1139
      %v1216 = vpack.c.b16 %v1142, %v1140
      %v1217 = vpack.c.b16 %v1145, %v1143
      %v1218 = vpack.c.b16 %v1146, %v1144
      %v1219 = vpack.c.b16 %v1149, %v1147
      %v1220 = vpack.c.b16 %v1150, %v1148
      %v1221 = vpack.c.b16 %v1153, %v1151
      %v1222 = vpack.c.b16 %v1154, %v1152
      %v1223 = vpack.c.b16 %v1157, %v1155
      %v1224 = vpack.c.b16 %v1158, %v1156
      %v1225 = vpack.c.b16 %v1161, %v1159
      %v1226 = vpack.c.b16 %v1162, %v1160
      %1291 = vmatprep.subr.bf16.mxu0 %v1164
      %1292 = vmatpush1.bf16.msra.mxu0 %v1163
      %1293 = vmatprep.subr.bf16.mxu0 %v1166
      %1294 = vmatpush1.bf16.msra.mxu0 %v1165
      %1295 = vmatprep.subr.bf16.mxu0 %v1168
      %1296 = vmatpush1.bf16.msra.mxu0 %v1167
      %1297 = vmatprep.subr.bf16.mxu0 %v1170
      %1298 = vmatpush1.bf16.msra.mxu0 %v1169
      %1299 = vmatprep.subr.bf16.mxu0 %v1172
      %1300 = vmatpush1.bf16.msra.mxu0 %v1171
      %1301 = vmatprep.subr.bf16.mxu0 %v1174
      %1302 = vmatpush1.bf16.msra.mxu0 %v1173
      %1303 = vmatprep.subr.bf16.mxu0 %v1176
      %1304 = vmatpush1.bf16.msra.mxu0 %v1175
      %1305 = vmatprep.subr.bf16.mxu0 %v1178
      %1306 = vmatpush1.bf16.msra.mxu0 %v1177
      %1307 = vmatprep.subr.bf16.mxu0 %v1180
      %1308 = vmatpush1.bf16.msra.mxu0 %v1179
      %1309 = vmatprep.subr.bf16.mxu0 %v1182
      %1310 = vmatpush1.bf16.msra.mxu0 %v1181
      %1311 = vmatprep.subr.bf16.mxu0 %v1184
      %1312 = vmatpush1.bf16.msra.mxu0 %v1183
      %1313 = vmatprep.subr.bf16.mxu0 %v1186
      %1314 = vmatpush1.bf16.msra.mxu0 %v1185
      %1315 = vmatprep.subr.bf16.mxu0 %v1188
      %1316 = vmatpush1.bf16.msra.mxu0 %v1187
      %1317 = vmatprep.subr.bf16.mxu0 %v1190
      %1318 = vmatpush1.bf16.msra.mxu0 %v1189
      %1319 = vmatprep.subr.bf16.mxu0 %v1192
      %1320 = vmatpush1.bf16.msra.mxu0 %v1191
      %1321 = vmatprep.subr.bf16.mxu0 %v1194
      %1322 = vmatpush1.bf16.msra.mxu0 %v1193
      %1323 = vmatprep.mubr.bf16.mxu0 %v465
      %1324 = vmatmul.mubr.bf16.gmra.mrb[0].mxu0 %v464
      %v1325 = vpop.f32.mrb[0].mxu0
      %v1326 = vadd.f32 %v947, %v1325
      %v1327 = vpop.f32.mrb[0].mxu0
      %v1328 = vadd.f32 %v949, %v1327
      %v1329 = vpop.f32.mrb[0].mxu0
      %v1330 = vadd.f32 %v951, %v1329
      %v1331 = vpop.f32.mrb[0].mxu0
      %v1332 = vadd.f32 %v953, %v1331
      %1333 = vmatprep.mubr.bf16.mxu0 %v469
      %1334 = vmatmul.mubr.bf16.gmra.mrb[0].mxu0 %v468
      %v1335 = vpop.f32.mrb[0].mxu0
      %v1336 = vadd.f32 %v957, %v1335
      %v1337 = vpop.f32.mrb[0].mxu0
      %v1338 = vadd.f32 %v959, %v1337
      %v1339 = vpop.f32.mrb[0].mxu0
      %v1340 = vpop.f32.mrb[0].mxu0
      %1341 = vdwg.mxu0
      %1342 = vmatprep.subr.bf16.mxu0 %v1196
      %1343 = vmatpush1.bf16.msra.mxu0 %v1195
      %1344 = vmatprep.subr.bf16.mxu0 %v1198
      %1345 = vmatpush1.bf16.msra.mxu0 %v1197
      %1346 = vmatprep.subr.bf16.mxu0 %v1200
      %1347 = vmatpush1.bf16.msra.mxu0 %v1199
      %1348 = vmatprep.subr.bf16.mxu0 %v1202
      %1349 = vmatpush1.bf16.msra.mxu0 %v1201
      %1350 = vmatprep.subr.bf16.mxu0 %v1204
      %1351 = vmatpush1.bf16.msra.mxu0 %v1203
      %1352 = vmatprep.subr.bf16.mxu0 %v1206
      %1353 = vmatpush1.bf16.msra.mxu0 %v1205
      %1354 = vmatprep.subr.bf16.mxu0 %v1208
      %1355 = vmatpush1.bf16.msra.mxu0 %v1207
      %1356 = vmatprep.subr.bf16.mxu0 %v1210
      %1357 = vmatpush1.bf16.msra.mxu0 %v1209
      %1358 = vmatprep.subr.bf16.mxu0 %v1212
      %1359 = vmatpush1.bf16.msra.mxu0 %v1211
      %1360 = vmatprep.subr.bf16.mxu0 %v1214
      %1361 = vmatpush1.bf16.msra.mxu0 %v1213
      %1362 = vmatprep.subr.bf16.mxu0 %v1216
      %1363 = vmatpush1.bf16.msra.mxu0 %v1215
      %1364 = vmatprep.subr.bf16.mxu0 %v1218
      %1365 = vmatpush1.bf16.msra.mxu0 %v1217
      %1366 = vmatprep.subr.bf16.mxu0 %v1220
      %1367 = vmatpush1.bf16.msra.mxu0 %v1219
      %1368 = vmatprep.subr.bf16.mxu0 %v1222
      %1369 = vmatpush1.bf16.msra.mxu0 %v1221
      %1370 = vmatprep.subr.bf16.mxu0 %v1224
      %1371 = vmatpush1.bf16.msra.mxu0 %v1223
      %1372 = vmatprep.subr.bf16.mxu0 %v1226
      %1373 = vmatpush1.bf16.msra.mxu0 %v1225
      %1374 = vmatprep.mubr.bf16.mxu0 %v467
      %1375 = vmatmul.mubr.bf16.gmra.mrb[0].mxu0 %v466
      %v1376 = vpop.f32.mrb[0].mxu0
      %v1377 = vadd.f32 %v1326, %v1376
      %v1378 = vpop.f32.mrb[0].mxu0
      %v1379 = vadd.f32 %v1328, %v1378
      %v1380 = vpop.f32.mrb[0].mxu0
      %v1381 = vadd.f32 %v1330, %v1380
      %v1382 = vpop.f32.mrb[0].mxu0
      %v1383 = vadd.f32 %v1332, %v1382
      %1384 = vmatprep.mubr.bf16.mxu0 %v471
      %1385 = vmatmul.mubr.bf16.gmra.mrb[0].mxu0 %v470
      %v1386 = vpop.f32.mrb[0].mxu0
      %v1387 = vadd.f32 %v1336, %v1386
      %v1388 = vpop.f32.mrb[0].mxu0
      %v1389 = vadd.f32 %v1338, %v1388
      %v1390 = vpop.f32.mrb[0].mxu0
      %v1391 = vpop.f32.mrb[0].mxu0
      %1392 = vdwg.mxu0
      %s1393 = scalar_lea.vmem %s1, 1024
      %v1394 = vld [vmem:[%s1393] sm:$0xff]
      %v1395 = vld [vmem:[%s1393 + $0x8] sm:$0xff]
      %v1396 = vld [vmem:[%s1393 + $0x10] sm:$0xff]
      %v1397 = vld [vmem:[%s1393 + $0x18] sm:$0xff]
      %v1398 = vld [vmem:[%s1393 + $0x20] sm:$0xff]
      %v1399 = vld [vmem:[%s1393 + $0x28] sm:$0xff]
      %v1400 = vld [vmem:[%s1393 + $0x30] sm:$0xff]
      %v1401 = vld [vmem:[%s1393 + $0x38] sm:$0xff]
      %v1402 = vld [vmem:[%s1393 + $0x40] sm:$0xff]
      %v1403 = vld [vmem:[%s1393 + $0x48] sm:$0xff]
      %v1404 = vld [vmem:[%s1393 + $0x50] sm:$0xff]
      %v1405 = vld [vmem:[%s1393 + $0x58] sm:$0xff]
      %v1406 = vld [vmem:[%s1393 + $0x60] sm:$0xff]
      %v1407 = vld [vmem:[%s1393 + $0x68] sm:$0xff]
      %v1408 = vld [vmem:[%s1393 + $0x70] sm:$0xff]
      %v1409 = vld [vmem:[%s1393 + $0x78] sm:$0xff]
      %v1410 = vld [vmem:[%s1393 + $0x80] sm:$0xff]
      %v1411 = vld [vmem:[%s1393 + $0x88] sm:$0xff]
      %v1412 = vld [vmem:[%s1393 + $0x90] sm:$0xff]
      %v1413 = vld [vmem:[%s1393 + $0x98] sm:$0xff]
      %v1414 = vld [vmem:[%s1393 + $0xa0] sm:$0xff]
      %v1415 = vld [vmem:[%s1393 + $0xa8] sm:$0xff]
      %v1416 = vld [vmem:[%s1393 + $0xb0] sm:$0xff]
      %v1417 = vld [vmem:[%s1393 + $0xb8] sm:$0xff]
      %v1418 = vld [vmem:[%s1393 + $0xc0] sm:$0xff]
      %v1419 = vld [vmem:[%s1393 + $0xc8] sm:$0xff]
      %v1420 = vld [vmem:[%s1393 + $0xd0] sm:$0xff]
      %v1421 = vld [vmem:[%s1393 + $0xd8] sm:$0xff]
      %v1422 = vld [vmem:[%s1393 + $0xe0] sm:$0xff]
      %v1423 = vld [vmem:[%s1393 + $0xe8] sm:$0xff]
      %v1424 = vld [vmem:[%s1393 + $0xf0] sm:$0xff]
      %v1425 = vld [vmem:[%s1393 + $0xf8] sm:$0xff]
      %v1426 = vld [vmem:[%s1393 + $0x100] sm:$0xff]
      %v1427 = vld [vmem:[%s1393 + $0x108] sm:$0xff]
      %v1428 = vld [vmem:[%s1393 + $0x110] sm:$0xff]
      %v1429 = vld [vmem:[%s1393 + $0x118] sm:$0xff]
      %v1430 = vld [vmem:[%s1393 + $0x120] sm:$0xff]
      %v1431 = vld [vmem:[%s1393 + $0x128] sm:$0xff]
      %v1432 = vld [vmem:[%s1393 + $0x130] sm:$0xff]
      %v1433 = vld [vmem:[%s1393 + $0x138] sm:$0xff]
      %v1434 = vld [vmem:[%s1393 + $0x140] sm:$0xff]
      %v1435 = vld [vmem:[%s1393 + $0x148] sm:$0xff]
      %v1436 = vld [vmem:[%s1393 + $0x150] sm:$0xff]
      %v1437 = vld [vmem:[%s1393 + $0x158] sm:$0xff]
      %v1438 = vld [vmem:[%s1393 + $0x160] sm:$0xff]
      %v1439 = vld [vmem:[%s1393 + $0x168] sm:$0xff]
      %v1440 = vld [vmem:[%s1393 + $0x170] sm:$0xff]
      %v1441 = vld [vmem:[%s1393 + $0x178] sm:$0xff]
      %v1442 = vld [vmem:[%s1393 + $0x180] sm:$0xff]
      %v1443 = vld [vmem:[%s1393 + $0x188] sm:$0xff]
      %v1444 = vld [vmem:[%s1393 + $0x190] sm:$0xff]
      %v1445 = vld [vmem:[%s1393 + $0x198] sm:$0xff]
      %v1446 = vld [vmem:[%s1393 + $0x1a0] sm:$0xff]
      %v1447 = vld [vmem:[%s1393 + $0x1a8] sm:$0xff]
      %v1448 = vld [vmem:[%s1393 + $0x1b0] sm:$0xff]
      %v1449 = vld [vmem:[%s1393 + $0x1b8] sm:$0xff]
      %v1450 = vld [vmem:[%s1393 + $0x1c0] sm:$0xff]
      %v1451 = vld [vmem:[%s1393 + $0x1c8] sm:$0xff]
      %v1452 = vld [vmem:[%s1393 + $0x1d0] sm:$0xff]
      %v1453 = vld [vmem:[%s1393 + $0x1d8] sm:$0xff]
      %v1454 = vld [vmem:[%s1393 + $0x1e0] sm:$0xff]
      %v1455 = vld [vmem:[%s1393 + $0x1e8] sm:$0xff]
      %v1456 = vld [vmem:[%s1393 + $0x1f0] sm:$0xff]
      %v1457 = vld [vmem:[%s1393 + $0x1f8] sm:$0xff]
      %v1460 = vunpack.c.l.b16 %v315
      %v1461 = vunpack.c.h.b16 %v315
      %v1462 = vunpack.c.l.b16 %v316
      %v1463 = vunpack.c.h.b16 %v316
      %v1464 = vpack.c.b16 %v1460, %v460
      %v1465 = vpack.c.b16 %v1461, %v461
      %v1466 = vpack.c.b16 %v1462, %v462
      %v1467 = vpack.c.b16 %v1463, %v463
      %vm1468 = vsmask.f32 5376
      %v1469 = vrot.slane %v474, 2
      %v1470 = vrot.slane %v476, 3
      %v1471 = vor.u32 %v1469, %v1470
      %v1473 = vshrl.u32 %v1464, 16
      %v1475 = vrot.slane %v1473, 2
      %v1476 = vshll.u32 %v1464, 16
      %v1478 = vrot.slane %v1476, 3
      %v1479 = vor.u32 %v1475, %v1478
      %v1480 = vsel %vm1468, %v1471, %v1479
      %v1481 = vrot.slane %v486, 2
      %v1482 = vrot.slane %v488, 3
      %v1483 = vor.u32 %v1481, %v1482
      %v1485 = vshrl.u32 %v1465, 16
      %v1487 = vrot.slane %v1485, 2
      %v1488 = vshll.u32 %v1465, 16
      %v1490 = vrot.slane %v1488, 3
      %v1491 = vor.u32 %v1487, %v1490
      %v1492 = vsel %vm1468, %v1483, %v1491
      %v1493 = vrot.slane %v498, 2
      %v1494 = vrot.slane %v500, 3
      %v1495 = vor.u32 %v1493, %v1494
      %v1497 = vshrl.u32 %v1466, 16
      %v1499 = vrot.slane %v1497, 2
      %v1500 = vshll.u32 %v1466, 16
      %v1502 = vrot.slane %v1500, 3
      %v1503 = vor.u32 %v1499, %v1502
      %v1504 = vsel %vm1468, %v1495, %v1503
      %v1505 = vrot.slane %v510, 2
      %v1506 = vrot.slane %v512, 3
      %v1507 = vor.u32 %v1505, %v1506
      %v1509 = vshrl.u32 %v1467, 16
      %v1511 = vrot.slane %v1509, 2
      %v1512 = vshll.u32 %v1467, 16
      %v1514 = vrot.slane %v1512, 3
      %v1515 = vor.u32 %v1511, %v1514
      %v1516 = vsel %vm1468, %v1507, %v1515
      %v1589 = vunpack.c.l.b16 %v1394
      %v1590 = vunpack.c.h.b16 %v1394
      %v1591 = vunpack.c.l.b16 %v1395
      %v1592 = vunpack.c.h.b16 %v1395
      %v1593 = vunpack.c.l.b16 %v1396
      %v1594 = vunpack.c.h.b16 %v1396
      %v1595 = vunpack.c.l.b16 %v1397
      %v1596 = vunpack.c.h.b16 %v1397
      %v1597 = vunpack.c.l.b16 %v1398
      %v1598 = vunpack.c.h.b16 %v1398
      %v1599 = vunpack.c.l.b16 %v1399
      %v1600 = vunpack.c.h.b16 %v1399
      %v1601 = vunpack.c.l.b16 %v1400
      %v1602 = vunpack.c.h.b16 %v1400
      %v1603 = vunpack.c.l.b16 %v1401
      %v1604 = vunpack.c.h.b16 %v1401
      %v1605 = vunpack.c.l.b16 %v1402
      %v1606 = vunpack.c.h.b16 %v1402
      %v1607 = vunpack.c.l.b16 %v1403
      %v1608 = vunpack.c.h.b16 %v1403
      %v1609 = vunpack.c.l.b16 %v1404
      %v1610 = vunpack.c.h.b16 %v1404
      %v1611 = vunpack.c.l.b16 %v1405
      %v1612 = vunpack.c.h.b16 %v1405
      %v1613 = vunpack.c.l.b16 %v1406
      %v1614 = vunpack.c.h.b16 %v1406
      %v1615 = vunpack.c.l.b16 %v1407
      %v1616 = vunpack.c.h.b16 %v1407
      %v1617 = vunpack.c.l.b16 %v1408
      %v1618 = vunpack.c.h.b16 %v1408
      %v1619 = vunpack.c.l.b16 %v1409
      %v1620 = vunpack.c.h.b16 %v1409
      %v1621 = vunpack.c.l.b16 %v1410
      %v1622 = vunpack.c.h.b16 %v1410
      %v1623 = vunpack.c.l.b16 %v1411
      %v1624 = vunpack.c.h.b16 %v1411
      %v1625 = vunpack.c.l.b16 %v1412
      %v1626 = vunpack.c.h.b16 %v1412
      %v1627 = vunpack.c.l.b16 %v1413
      %v1628 = vunpack.c.h.b16 %v1413
      %v1629 = vunpack.c.l.b16 %v1414
      %v1630 = vunpack.c.h.b16 %v1414
      %v1631 = vunpack.c.l.b16 %v1415
      %v1632 = vunpack.c.h.b16 %v1415
      %v1633 = vunpack.c.l.b16 %v1416
      %v1634 = vunpack.c.h.b16 %v1416
      %v1635 = vunpack.c.l.b16 %v1417
      %v1636 = vunpack.c.h.b16 %v1417
      %v1637 = vunpack.c.l.b16 %v1418
      %v1638 = vunpack.c.h.b16 %v1418
      %v1639 = vunpack.c.l.b16 %v1419
      %v1640 = vunpack.c.h.b16 %v1419
      %v1641 = vunpack.c.l.b16 %v1420
      %v1642 = vunpack.c.h.b16 %v1420
      %v1643 = vunpack.c.l.b16 %v1421
      %v1644 = vunpack.c.h.b16 %v1421
      %v1645 = vunpack.c.l.b16 %v1422
      %v1646 = vunpack.c.h.b16 %v1422
      %v1647 = vunpack.c.l.b16 %v1423
      %v1648 = vunpack.c.h.b16 %v1423
      %v1649 = vunpack.c.l.b16 %v1424
      %v1650 = vunpack.c.h.b16 %v1424
      %v1651 = vunpack.c.l.b16 %v1425
      %v1652 = vunpack.c.h.b16 %v1425
      %v1653 = vunpack.c.l.b16 %v1426
      %v1654 = vunpack.c.h.b16 %v1426
      %v1655 = vunpack.c.l.b16 %v1427
      %v1656 = vunpack.c.h.b16 %v1427
      %v1657 = vunpack.c.l.b16 %v1428
      %v1658 = vunpack.c.h.b16 %v1428
      %v1659 = vunpack.c.l.b16 %v1429
      %v1660 = vunpack.c.h.b16 %v1429
      %v1661 = vunpack.c.l.b16 %v1430
      %v1662 = vunpack.c.h.b16 %v1430
      %v1663 = vunpack.c.l.b16 %v1431
      %v1664 = vunpack.c.h.b16 %v1431
      %v1665 = vunpack.c.l.b16 %v1432
      %v1666 = vunpack.c.h.b16 %v1432
      %v1667 = vunpack.c.l.b16 %v1433
      %v1668 = vunpack.c.h.b16 %v1433
      %v1669 = vunpack.c.l.b16 %v1434
      %v1670 = vunpack.c.h.b16 %v1434
      %v1671 = vunpack.c.l.b16 %v1435
      %v1672 = vunpack.c.h.b16 %v1435
      %v1673 = vunpack.c.l.b16 %v1436
      %v1674 = vunpack.c.h.b16 %v1436
      %v1675 = vunpack.c.l.b16 %v1437
      %v1676 = vunpack.c.h.b16 %v1437
      %v1677 = vunpack.c.l.b16 %v1438
      %v1678 = vunpack.c.h.b16 %v1438
      %v1679 = vunpack.c.l.b16 %v1439
      %v1680 = vunpack.c.h.b16 %v1439
      %v1681 = vunpack.c.l.b16 %v1440
      %v1682 = vunpack.c.h.b16 %v1440
      %v1683 = vunpack.c.l.b16 %v1441
      %v1684 = vunpack.c.h.b16 %v1441
      %v1685 = vunpack.c.l.b16 %v1442
      %v1686 = vunpack.c.h.b16 %v1442
      %v1687 = vunpack.c.l.b16 %v1443
      %v1688 = vunpack.c.h.b16 %v1443
      %v1689 = vunpack.c.l.b16 %v1444
      %v1690 = vunpack.c.h.b16 %v1444
      %v1691 = vunpack.c.l.b16 %v1445
      %v1692 = vunpack.c.h.b16 %v1445
      %v1693 = vunpack.c.l.b16 %v1446
      %v1694 = vunpack.c.h.b16 %v1446
      %v1695 = vunpack.c.l.b16 %v1447
      %v1696 = vunpack.c.h.b16 %v1447
      %v1697 = vunpack.c.l.b16 %v1448
      %v1698 = vunpack.c.h.b16 %v1448
      %v1699 = vunpack.c.l.b16 %v1449
      %v1700 = vunpack.c.h.b16 %v1449
      %v1701 = vunpack.c.l.b16 %v1450
      %v1702 = vunpack.c.h.b16 %v1450
      %v1703 = vunpack.c.l.b16 %v1451
      %v1704 = vunpack.c.h.b16 %v1451
      %v1705 = vunpack.c.l.b16 %v1452
      %v1706 = vunpack.c.h.b16 %v1452
      %v1707 = vunpack.c.l.b16 %v1453
      %v1708 = vunpack.c.h.b16 %v1453
      %v1709 = vunpack.c.l.b16 %v1454
      %v1710 = vunpack.c.h.b16 %v1454
      %v1711 = vunpack.c.l.b16 %v1455
      %v1712 = vunpack.c.h.b16 %v1455
      %v1713 = vunpack.c.l.b16 %v1456
      %v1714 = vunpack.c.h.b16 %v1456
      %v1715 = vunpack.c.l.b16 %v1457
      %v1716 = vunpack.c.h.b16 %v1457
      %v1717 = vpack.c.b16 %v1591, %v1589
      %v1718 = vpack.c.b16 %v1592, %v1590
      %v1719 = vpack.c.b16 %v1595, %v1593
      %v1720 = vpack.c.b16 %v1596, %v1594
      %v1721 = vpack.c.b16 %v1599, %v1597
      %v1722 = vpack.c.b16 %v1600, %v1598
      %v1723 = vpack.c.b16 %v1603, %v1601
      %v1724 = vpack.c.b16 %v1604, %v1602
      %v1725 = vpack.c.b16 %v1607, %v1605
      %v1726 = vpack.c.b16 %v1608, %v1606
      %v1727 = vpack.c.b16 %v1611, %v1609
      %v1728 = vpack.c.b16 %v1612, %v1610
      %v1729 = vpack.c.b16 %v1615, %v1613
      %v1730 = vpack.c.b16 %v1616, %v1614
      %v1731 = vpack.c.b16 %v1619, %v1617
      %v1732 = vpack.c.b16 %v1620, %v1618
      %v1733 = vpack.c.b16 %v1623, %v1621
      %v1734 = vpack.c.b16 %v1624, %v1622
      %v1735 = vpack.c.b16 %v1627, %v1625
      %v1736 = vpack.c.b16 %v1628, %v1626
      %v1737 = vpack.c.b16 %v1631, %v1629
      %v1738 = vpack.c.b16 %v1632, %v1630
      %v1739 = vpack.c.b16 %v1635, %v1633
      %v1740 = vpack.c.b16 %v1636, %v1634
      %v1741 = vpack.c.b16 %v1639, %v1637
      %v1742 = vpack.c.b16 %v1640, %v1638
      %v1743 = vpack.c.b16 %v1643, %v1641
      %v1744 = vpack.c.b16 %v1644, %v1642
      %v1745 = vpack.c.b16 %v1647, %v1645
      %v1746 = vpack.c.b16 %v1648, %v1646
      %v1747 = vpack.c.b16 %v1651, %v1649
      %v1748 = vpack.c.b16 %v1652, %v1650
      %v1749 = vpack.c.b16 %v1655, %v1653
      %v1750 = vpack.c.b16 %v1656, %v1654
      %v1751 = vpack.c.b16 %v1659, %v1657
      %v1752 = vpack.c.b16 %v1660, %v1658
      %v1753 = vpack.c.b16 %v1663, %v1661
      %v1754 = vpack.c.b16 %v1664, %v1662
      %v1755 = vpack.c.b16 %v1667, %v1665
      %v1756 = vpack.c.b16 %v1668, %v1666
      %v1757 = vpack.c.b16 %v1671, %v1669
      %v1758 = vpack.c.b16 %v1672, %v1670
      %v1759 = vpack.c.b16 %v1675, %v1673
      %v1760 = vpack.c.b16 %v1676, %v1674
      %v1761 = vpack.c.b16 %v1679, %v1677
      %v1762 = vpack.c.b16 %v1680, %v1678
      %v1763 = vpack.c.b16 %v1683, %v1681
      %v1764 = vpack.c.b16 %v1684, %v1682
      %v1765 = vpack.c.b16 %v1687, %v1685
      %v1766 = vpack.c.b16 %v1688, %v1686
      %v1767 = vpack.c.b16 %v1691, %v1689
      %v1768 = vpack.c.b16 %v1692, %v1690
      %v1769 = vpack.c.b16 %v1695, %v1693
      %v1770 = vpack.c.b16 %v1696, %v1694
      %v1771 = vpack.c.b16 %v1699, %v1697
      %v1772 = vpack.c.b16 %v1700, %v1698
      %v1773 = vpack.c.b16 %v1703, %v1701
      %v1774 = vpack.c.b16 %v1704, %v1702
      %v1775 = vpack.c.b16 %v1707, %v1705
      %v1776 = vpack.c.b16 %v1708, %v1706
      %v1777 = vpack.c.b16 %v1711, %v1709
      %v1778 = vpack.c.b16 %v1712, %v1710
      %v1779 = vpack.c.b16 %v1715, %v1713
      %v1780 = vpack.c.b16 %v1716, %v1714
      %1845 = vmatprep.subr.bf16.mxu0 %v1718
      %1846 = vmatpush1.bf16.msra.mxu0 %v1717
      %1847 = vmatprep.subr.bf16.mxu0 %v1720
      %1848 = vmatpush1.bf16.msra.mxu0 %v1719
      %1849 = vmatprep.subr.bf16.mxu0 %v1722
      %1850 = vmatpush1.bf16.msra.mxu0 %v1721
      %1851 = vmatprep.subr.bf16.mxu0 %v1724
      %1852 = vmatpush1.bf16.msra.mxu0 %v1723
      %1853 = vmatprep.subr.bf16.mxu0 %v1726
      %1854 = vmatpush1.bf16.msra.mxu0 %v1725
      %1855 = vmatprep.subr.bf16.mxu0 %v1728
      %1856 = vmatpush1.bf16.msra.mxu0 %v1727
      %1857 = vmatprep.subr.bf16.mxu0 %v1730
      %1858 = vmatpush1.bf16.msra.mxu0 %v1729
      %1859 = vmatprep.subr.bf16.mxu0 %v1732
      %1860 = vmatpush1.bf16.msra.mxu0 %v1731
      %1861 = vmatprep.subr.bf16.mxu0 %v1734
      %1862 = vmatpush1.bf16.msra.mxu0 %v1733
      %1863 = vmatprep.subr.bf16.mxu0 %v1736
      %1864 = vmatpush1.bf16.msra.mxu0 %v1735
      %1865 = vmatprep.subr.bf16.mxu0 %v1738
      %1866 = vmatpush1.bf16.msra.mxu0 %v1737
      %1867 = vmatprep.subr.bf16.mxu0 %v1740
      %1868 = vmatpush1.bf16.msra.mxu0 %v1739
      %1869 = vmatprep.subr.bf16.mxu0 %v1742
      %1870 = vmatpush1.bf16.msra.mxu0 %v1741
      %1871 = vmatprep.subr.bf16.mxu0 %v1744
      %1872 = vmatpush1.bf16.msra.mxu0 %v1743
      %1873 = vmatprep.subr.bf16.mxu0 %v1746
      %1874 = vmatpush1.bf16.msra.mxu0 %v1745
      %1875 = vmatprep.subr.bf16.mxu0 %v1748
      %1876 = vmatpush1.bf16.msra.mxu0 %v1747
      %1877 = vmatprep.mubr.bf16.mxu0 %v1492
      %1878 = vmatmul.mubr.bf16.gmra.mrb[0].mxu0 %v1480
      %v1879 = vpop.f32.mrb[0].mxu0
      %v1880 = vadd.f32 0.0, %v1879
      %v1881 = vpop.f32.mrb[0].mxu0
      %v1882 = vadd.f32 0.0, %v1881
      %v1883 = vpop.f32.mrb[0].mxu0
      %v1884 = vadd.f32 0.0, %v1883
      %v1885 = vpop.f32.mrb[0].mxu0
      %v1886 = vadd.f32 0.0, %v1885
      %1887 = vmatprep.mubr.bf16.mxu0 %v1491
      %1888 = vmatmul.mubr.bf16.gmra.mrb[0].mxu0 %v1479
      %v1889 = vpop.f32.mrb[0].mxu0
      %v1890 = vadd.f32 0.0, %v1889
      %v1891 = vpop.f32.mrb[0].mxu0
      %v1892 = vadd.f32 0.0, %v1891
      %v1893 = vpop.f32.mrb[0].mxu0
      %v1894 = vpop.f32.mrb[0].mxu0
      %1895 = vdwg.mxu0
      %1896 = vmatprep.subr.bf16.mxu0 %v1750
      %1897 = vmatpush1.bf16.msra.mxu0 %v1749
      %1898 = vmatprep.subr.bf16.mxu0 %v1752
      %1899 = vmatpush1.bf16.msra.mxu0 %v1751
      %1900 = vmatprep.subr.bf16.mxu0 %v1754
      %1901 = vmatpush1.bf16.msra.mxu0 %v1753
      %1902 = vmatprep.subr.bf16.mxu0 %v1756
      %1903 = vmatpush1.bf16.msra.mxu0 %v1755
      %1904 = vmatprep.subr.bf16.mxu0 %v1758
      %1905 = vmatpush1.bf16.msra.mxu0 %v1757
      %1906 = vmatprep.subr.bf16.mxu0 %v1760
      %1907 = vmatpush1.bf16.msra.mxu0 %v1759
      %1908 = vmatprep.subr.bf16.mxu0 %v1762
      %1909 = vmatpush1.bf16.msra.mxu0 %v1761
      %1910 = vmatprep.subr.bf16.mxu0 %v1764
      %1911 = vmatpush1.bf16.msra.mxu0 %v1763
      %1912 = vmatprep.subr.bf16.mxu0 %v1766
      %1913 = vmatpush1.bf16.msra.mxu0 %v1765
      %1914 = vmatprep.subr.bf16.mxu0 %v1768
      %1915 = vmatpush1.bf16.msra.mxu0 %v1767
      %1916 = vmatprep.subr.bf16.mxu0 %v1770
      %1917 = vmatpush1.bf16.msra.mxu0 %v1769
      %1918 = vmatprep.subr.bf16.mxu0 %v1772
      %1919 = vmatpush1.bf16.msra.mxu0 %v1771
      %1920 = vmatprep.subr.bf16.mxu0 %v1774
      %1921 = vmatpush1.bf16.msra.mxu0 %v1773
      %1922 = vmatprep.subr.bf16.mxu0 %v1776
      %1923 = vmatpush1.bf16.msra.mxu0 %v1775
      %1924 = vmatprep.subr.bf16.mxu0 %v1778
      %1925 = vmatpush1.bf16.msra.mxu0 %v1777
      %1926 = vmatprep.subr.bf16.mxu0 %v1780
      %1927 = vmatpush1.bf16.msra.mxu0 %v1779
      %1928 = vmatprep.mubr.bf16.mxu0 %v1516
      %1929 = vmatmul.mubr.bf16.gmra.mrb[0].mxu0 %v1504
      %v1930 = vpop.f32.mrb[0].mxu0
      %v1931 = vadd.f32 %v1880, %v1930
      %v1932 = vpop.f32.mrb[0].mxu0
      %v1933 = vadd.f32 %v1882, %v1932
      %v1934 = vpop.f32.mrb[0].mxu0
      %v1935 = vadd.f32 %v1884, %v1934
      %v1936 = vpop.f32.mrb[0].mxu0
      %v1937 = vadd.f32 %v1886, %v1936
      %1938 = vmatprep.mubr.bf16.mxu0 %v1515
      %1939 = vmatmul.mubr.bf16.gmra.mrb[0].mxu0 %v1503
      %v1940 = vpop.f32.mrb[0].mxu0
      %v1941 = vadd.f32 %v1890, %v1940
      %v1942 = vpop.f32.mrb[0].mxu0
      %v1943 = vadd.f32 %v1892, %v1942
      %v1944 = vpop.f32.mrb[0].mxu0
      %v1945 = vpop.f32.mrb[0].mxu0
      %1946 = vdwg.mxu0
      %v1947 = vadd.f32 %v1377, %v1931
      %v1948 = vadd.f32 %v1379, %v1933
      %v1949 = vadd.f32 %v1381, %v1935
      %v1950 = vadd.f32 %v1383, %v1937
      %v1951 = vadd.f32 %v1387, %v1941
      %v1952 = vadd.f32 %v1389, %v1943
      %s1953 = scalar_lea.vmem %s1, 1536
      %v1954 = vld [vmem:[%s1953] sm:$0xff]
      %v1955 = vld [vmem:[%s1953 + $0x8] sm:$0xff]
      %v1956 = vld [vmem:[%s1953 + $0x10] sm:$0xff]
      %v1957 = vld [vmem:[%s1953 + $0x18] sm:$0xff]
      %v1958 = vld [vmem:[%s1953 + $0x20] sm:$0xff]
      %v1959 = vld [vmem:[%s1953 + $0x28] sm:$0xff]
      %v1960 = vld [vmem:[%s1953 + $0x30] sm:$0xff]
      %v1961 = vld [vmem:[%s1953 + $0x38] sm:$0xff]
      %v1962 = vld [vmem:[%s1953 + $0x40] sm:$0xff]
      %v1963 = vld [vmem:[%s1953 + $0x48] sm:$0xff]
      %v1964 = vld [vmem:[%s1953 + $0x50] sm:$0xff]
      %v1965 = vld [vmem:[%s1953 + $0x58] sm:$0xff]
      %v1966 = vld [vmem:[%s1953 + $0x60] sm:$0xff]
      %v1967 = vld [vmem:[%s1953 + $0x68] sm:$0xff]
      %v1968 = vld [vmem:[%s1953 + $0x70] sm:$0xff]
      %v1969 = vld [vmem:[%s1953 + $0x78] sm:$0xff]
      %v1970 = vld [vmem:[%s1953 + $0x80] sm:$0xff]
      %v1971 = vld [vmem:[%s1953 + $0x88] sm:$0xff]
      %v1972 = vld [vmem:[%s1953 + $0x90] sm:$0xff]
      %v1973 = vld [vmem:[%s1953 + $0x98] sm:$0xff]
      %v1974 = vld [vmem:[%s1953 + $0xa0] sm:$0xff]
      %v1975 = vld [vmem:[%s1953 + $0xa8] sm:$0xff]
      %v1976 = vld [vmem:[%s1953 + $0xb0] sm:$0xff]
      %v1977 = vld [vmem:[%s1953 + $0xb8] sm:$0xff]
      %v1978 = vld [vmem:[%s1953 + $0xc0] sm:$0xff]
      %v1979 = vld [vmem:[%s1953 + $0xc8] sm:$0xff]
      %v1980 = vld [vmem:[%s1953 + $0xd0] sm:$0xff]
      %v1981 = vld [vmem:[%s1953 + $0xd8] sm:$0xff]
      %v1982 = vld [vmem:[%s1953 + $0xe0] sm:$0xff]
      %v1983 = vld [vmem:[%s1953 + $0xe8] sm:$0xff]
      %v1984 = vld [vmem:[%s1953 + $0xf0] sm:$0xff]
      %v1985 = vld [vmem:[%s1953 + $0xf8] sm:$0xff]
      %v1986 = vld [vmem:[%s1953 + $0x100] sm:$0xff]
      %v1987 = vld [vmem:[%s1953 + $0x108] sm:$0xff]
      %v1988 = vld [vmem:[%s1953 + $0x110] sm:$0xff]
      %v1989 = vld [vmem:[%s1953 + $0x118] sm:$0xff]
      %v1990 = vld [vmem:[%s1953 + $0x120] sm:$0xff]
      %v1991 = vld [vmem:[%s1953 + $0x128] sm:$0xff]
      %v1992 = vld [vmem:[%s1953 + $0x130] sm:$0xff]
      %v1993 = vld [vmem:[%s1953 + $0x138] sm:$0xff]
      %v1994 = vld [vmem:[%s1953 + $0x140] sm:$0xff]
      %v1995 = vld [vmem:[%s1953 + $0x148] sm:$0xff]
      %v1996 = vld [vmem:[%s1953 + $0x150] sm:$0xff]
      %v1997 = vld [vmem:[%s1953 + $0x158] sm:$0xff]
      %v1998 = vld [vmem:[%s1953 + $0x160] sm:$0xff]
      %v1999 = vld [vmem:[%s1953 + $0x168] sm:$0xff]
      %v2000 = vld [vmem:[%s1953 + $0x170] sm:$0xff]
      %v2001 = vld [vmem:[%s1953 + $0x178] sm:$0xff]
      %v2002 = vld [vmem:[%s1953 + $0x180] sm:$0xff]
      %v2003 = vld [vmem:[%s1953 + $0x188] sm:$0xff]
      %v2004 = vld [vmem:[%s1953 + $0x190] sm:$0xff]
      %v2005 = vld [vmem:[%s1953 + $0x198] sm:$0xff]
      %v2006 = vld [vmem:[%s1953 + $0x1a0] sm:$0xff]
      %v2007 = vld [vmem:[%s1953 + $0x1a8] sm:$0xff]
      %v2008 = vld [vmem:[%s1953 + $0x1b0] sm:$0xff]
      %v2009 = vld [vmem:[%s1953 + $0x1b8] sm:$0xff]
      %v2010 = vld [vmem:[%s1953 + $0x1c0] sm:$0xff]
      %v2011 = vld [vmem:[%s1953 + $0x1c8] sm:$0xff]
      %v2012 = vld [vmem:[%s1953 + $0x1d0] sm:$0xff]
      %v2013 = vld [vmem:[%s1953 + $0x1d8] sm:$0xff]
      %v2014 = vld [vmem:[%s1953 + $0x1e0] sm:$0xff]
      %v2015 = vld [vmem:[%s1953 + $0x1e8] sm:$0xff]
      %v2016 = vld [vmem:[%s1953 + $0x1f0] sm:$0xff]
      %v2017 = vld [vmem:[%s1953 + $0x1f8] sm:$0xff]
      %vm2018 = vcmask 1044480
      %v2019 = vrot.slane %v464, 3
      %v2020 = vrot.slane %v1464, 3
      %v2021 = vsel %vm2018, %v2019, %v2020
      %v2022 = vrot.slane %v465, 3
      %v2023 = vrot.slane %v1465, 3
      %v2024 = vsel %vm2018, %v2022, %v2023
      %v2025 = vrot.slane %v466, 3
      %v2026 = vrot.slane %v1466, 3
      %v2027 = vsel %vm2018, %v2025, %v2026
      %v2028 = vrot.slane %v467, 3
      %v2029 = vrot.slane %v1467, 3
      %v2030 = vsel %vm2018, %v2028, %v2029
      %v2103 = vunpack.c.l.b16 %v1954
      %v2104 = vunpack.c.h.b16 %v1954
      %v2105 = vunpack.c.l.b16 %v1955
      %v2106 = vunpack.c.h.b16 %v1955
      %v2107 = vunpack.c.l.b16 %v1956
      %v2108 = vunpack.c.h.b16 %v1956
      %v2109 = vunpack.c.l.b16 %v1957
      %v2110 = vunpack.c.h.b16 %v1957
      %v2111 = vunpack.c.l.b16 %v1958
      %v2112 = vunpack.c.h.b16 %v1958
      %v2113 = vunpack.c.l.b16 %v1959
      %v2114 = vunpack.c.h.b16 %v1959
      %v2115 = vunpack.c.l.b16 %v1960
      %v2116 = vunpack.c.h.b16 %v1960
      %v2117 = vunpack.c.l.b16 %v1961
      %v2118 = vunpack.c.h.b16 %v1961
      %v2119 = vunpack.c.l.b16 %v1962
      %v2120 = vunpack.c.h.b16 %v1962
      %v2121 = vunpack.c.l.b16 %v1963
      %v2122 = vunpack.c.h.b16 %v1963
      %v2123 = vunpack.c.l.b16 %v1964
      %v2124 = vunpack.c.h.b16 %v1964
      %v2125 = vunpack.c.l.b16 %v1965
      %v2126 = vunpack.c.h.b16 %v1965
      %v2127 = vunpack.c.l.b16 %v1966
      %v2128 = vunpack.c.h.b16 %v1966
      %v2129 = vunpack.c.l.b16 %v1967
      %v2130 = vunpack.c.h.b16 %v1967
      %v2131 = vunpack.c.l.b16 %v1968
      %v2132 = vunpack.c.h.b16 %v1968
      %v2133 = vunpack.c.l.b16 %v1969
      %v2134 = vunpack.c.h.b16 %v1969
      %v2135 = vunpack.c.l.b16 %v1970
      %v2136 = vunpack.c.h.b16 %v1970
      %v2137 = vunpack.c.l.b16 %v1971
      %v2138 = vunpack.c.h.b16 %v1971
      %v2139 = vunpack.c.l.b16 %v1972
      %v2140 = vunpack.c.h.b16 %v1972
      %v2141 = vunpack.c.l.b16 %v1973
      %v2142 = vunpack.c.h.b16 %v1973
      %v2143 = vunpack.c.l.b16 %v1974
      %v2144 = vunpack.c.h.b16 %v1974
      %v2145 = vunpack.c.l.b16 %v1975
      %v2146 = vunpack.c.h.b16 %v1975
      %v2147 = vunpack.c.l.b16 %v1976
      %v2148 = vunpack.c.h.b16 %v1976
      %v2149 = vunpack.c.l.b16 %v1977
      %v2150 = vunpack.c.h.b16 %v1977
      %v2151 = vunpack.c.l.b16 %v1978
      %v2152 = vunpack.c.h.b16 %v1978
      %v2153 = vunpack.c.l.b16 %v1979
      %v2154 = vunpack.c.h.b16 %v1979
      %v2155 = vunpack.c.l.b16 %v1980
      %v2156 = vunpack.c.h.b16 %v1980
      %v2157 = vunpack.c.l.b16 %v1981
      %v2158 = vunpack.c.h.b16 %v1981
      %v2159 = vunpack.c.l.b16 %v1982
      %v2160 = vunpack.c.h.b16 %v1982
      %v2161 = vunpack.c.l.b16 %v1983
      %v2162 = vunpack.c.h.b16 %v1983
      %v2163 = vunpack.c.l.b16 %v1984
      %v2164 = vunpack.c.h.b16 %v1984
      %v2165 = vunpack.c.l.b16 %v1985
      %v2166 = vunpack.c.h.b16 %v1985
      %v2167 = vunpack.c.l.b16 %v1986
      %v2168 = vunpack.c.h.b16 %v1986
      %v2169 = vunpack.c.l.b16 %v1987
      %v2170 = vunpack.c.h.b16 %v1987
      %v2171 = vunpack.c.l.b16 %v1988
      %v2172 = vunpack.c.h.b16 %v1988
      %v2173 = vunpack.c.l.b16 %v1989
      %v2174 = vunpack.c.h.b16 %v1989
      %v2175 = vunpack.c.l.b16 %v1990
      %v2176 = vunpack.c.h.b16 %v1990
      %v2177 = vunpack.c.l.b16 %v1991
      %v2178 = vunpack.c.h.b16 %v1991
      %v2179 = vunpack.c.l.b16 %v1992
      %v2180 = vunpack.c.h.b16 %v1992
      %v2181 = vunpack.c.l.b16 %v1993
      %v2182 = vunpack.c.h.b16 %v1993
      %v2183 = vunpack.c.l.b16 %v1994
      %v2184 = vunpack.c.h.b16 %v1994
      %v2185 = vunpack.c.l.b16 %v1995
      %v2186 = vunpack.c.h.b16 %v1995
      %v2187 = vunpack.c.l.b16 %v1996
      %v2188 = vunpack.c.h.b16 %v1996
      %v2189 = vunpack.c.l.b16 %v1997
      %v2190 = vunpack.c.h.b16 %v1997
      %v2191 = vunpack.c.l.b16 %v1998
      %v2192 = vunpack.c.h.b16 %v1998
      %v2193 = vunpack.c.l.b16 %v1999
      %v2194 = vunpack.c.h.b16 %v1999
      %v2195 = vunpack.c.l.b16 %v2000
      %v2196 = vunpack.c.h.b16 %v2000
      %v2197 = vunpack.c.l.b16 %v2001
      %v2198 = vunpack.c.h.b16 %v2001
      %v2199 = vunpack.c.l.b16 %v2002
      %v2200 = vunpack.c.h.b16 %v2002
      %v2201 = vunpack.c.l.b16 %v2003
      %v2202 = vunpack.c.h.b16 %v2003
      %v2203 = vunpack.c.l.b16 %v2004
      %v2204 = vunpack.c.h.b16 %v2004
      %v2205 = vunpack.c.l.b16 %v2005
      %v2206 = vunpack.c.h.b16 %v2005
      %v2207 = vunpack.c.l.b16 %v2006
      %v2208 = vunpack.c.h.b16 %v2006
      %v2209 = vunpack.c.l.b16 %v2007
      %v2210 = vunpack.c.h.b16 %v2007
      %v2211 = vunpack.c.l.b16 %v2008
      %v2212 = vunpack.c.h.b16 %v2008
      %v2213 = vunpack.c.l.b16 %v2009
      %v2214 = vunpack.c.h.b16 %v2009
      %v2215 = vunpack.c.l.b16 %v2010
      %v2216 = vunpack.c.h.b16 %v2010
      %v2217 = vunpack.c.l.b16 %v2011
      %v2218 = vunpack.c.h.b16 %v2011
      %v2219 = vunpack.c.l.b16 %v2012
      %v2220 = vunpack.c.h.b16 %v2012
      %v2221 = vunpack.c.l.b16 %v2013
      %v2222 = vunpack.c.h.b16 %v2013
      %v2223 = vunpack.c.l.b16 %v2014
      %v2224 = vunpack.c.h.b16 %v2014
      %v2225 = vunpack.c.l.b16 %v2015
      %v2226 = vunpack.c.h.b16 %v2015
      %v2227 = vunpack.c.l.b16 %v2016
      %v2228 = vunpack.c.h.b16 %v2016
      %v2229 = vunpack.c.l.b16 %v2017
      %v2230 = vunpack.c.h.b16 %v2017
      %v2231 = vpack.c.b16 %v2105, %v2103
      %v2232 = vpack.c.b16 %v2106, %v2104
      %v2233 = vpack.c.b16 %v2109, %v2107
      %v2234 = vpack.c.b16 %v2110, %v2108
      %v2235 = vpack.c.b16 %v2113, %v2111
      %v2236 = vpack.c.b16 %v2114, %v2112
      %v2237 = vpack.c.b16 %v2117, %v2115
      %v2238 = vpack.c.b16 %v2118, %v2116
      %v2239 = vpack.c.b16 %v2121, %v2119
      %v2240 = vpack.c.b16 %v2122, %v2120
      %v2241 = vpack.c.b16 %v2125, %v2123
      %v2242 = vpack.c.b16 %v2126, %v2124
      %v2243 = vpack.c.b16 %v2129, %v2127
      %v2244 = vpack.c.b16 %v2130, %v2128
      %v2245 = vpack.c.b16 %v2133, %v2131
      %v2246 = vpack.c.b16 %v2134, %v2132
      %v2247 = vpack.c.b16 %v2137, %v2135
      %v2248 = vpack.c.b16 %v2138, %v2136
      %v2249 = vpack.c.b16 %v2141, %v2139
      %v2250 = vpack.c.b16 %v2142, %v2140
      %v2251 = vpack.c.b16 %v2145, %v2143
      %v2252 = vpack.c.b16 %v2146, %v2144
      %v2253 = vpack.c.b16 %v2149, %v2147
      %v2254 = vpack.c.b16 %v2150, %v2148
      %v2255 = vpack.c.b16 %v2153, %v2151
      %v2256 = vpack.c.b16 %v2154, %v2152
      %v2257 = vpack.c.b16 %v2157, %v2155
      %v2258 = vpack.c.b16 %v2158, %v2156
      %v2259 = vpack.c.b16 %v2161, %v2159
      %v2260 = vpack.c.b16 %v2162, %v2160
      %v2261 = vpack.c.b16 %v2165, %v2163
      %v2262 = vpack.c.b16 %v2166, %v2164
      %v2263 = vpack.c.b16 %v2169, %v2167
      %v2264 = vpack.c.b16 %v2170, %v2168
      %v2265 = vpack.c.b16 %v2173, %v2171
      %v2266 = vpack.c.b16 %v2174, %v2172
      %v2267 = vpack.c.b16 %v2177, %v2175
      %v2268 = vpack.c.b16 %v2178, %v2176
      %v2269 = vpack.c.b16 %v2181, %v2179
      %v2270 = vpack.c.b16 %v2182, %v2180
      %v2271 = vpack.c.b16 %v2185, %v2183
      %v2272 = vpack.c.b16 %v2186, %v2184
      %v2273 = vpack.c.b16 %v2189, %v2187
      %v2274 = vpack.c.b16 %v2190, %v2188
      %v2275 = vpack.c.b16 %v2193, %v2191
      %v2276 = vpack.c.b16 %v2194, %v2192
      %v2277 = vpack.c.b16 %v2197, %v2195
      %v2278 = vpack.c.b16 %v2198, %v2196
      %v2279 = vpack.c.b16 %v2201, %v2199
      %v2280 = vpack.c.b16 %v2202, %v2200
      %v2281 = vpack.c.b16 %v2205, %v2203
      %v2282 = vpack.c.b16 %v2206, %v2204
      %v2283 = vpack.c.b16 %v2209, %v2207
      %v2284 = vpack.c.b16 %v2210, %v2208
      %v2285 = vpack.c.b16 %v2213, %v2211
      %v2286 = vpack.c.b16 %v2214, %v2212
      %v2287 = vpack.c.b16 %v2217, %v2215
      %v2288 = vpack.c.b16 %v2218, %v2216
      %v2289 = vpack.c.b16 %v2221, %v2219
      %v2290 = vpack.c.b16 %v2222, %v2220
      %v2291 = vpack.c.b16 %v2225, %v2223
      %v2292 = vpack.c.b16 %v2226, %v2224
      %v2293 = vpack.c.b16 %v2229, %v2227
      %v2294 = vpack.c.b16 %v2230, %v2228
      %2359 = vmatprep.subr.bf16.mxu0 %v2232
      %2360 = vmatpush1.bf16.msra.mxu0 %v2231
      %2361 = vmatprep.subr.bf16.mxu0 %v2234
      %2362 = vmatpush1.bf16.msra.mxu0 %v2233
      %2363 = vmatprep.subr.bf16.mxu0 %v2236
      %2364 = vmatpush1.bf16.msra.mxu0 %v2235
      %2365 = vmatprep.subr.bf16.mxu0 %v2238
      %2366 = vmatpush1.bf16.msra.mxu0 %v2237
      %2367 = vmatprep.subr.bf16.mxu0 %v2240
      %2368 = vmatpush1.bf16.msra.mxu0 %v2239
      %2369 = vmatprep.subr.bf16.mxu0 %v2242
      %2370 = vmatpush1.bf16.msra.mxu0 %v2241
      %2371 = vmatprep.subr.bf16.mxu0 %v2244
      %2372 = vmatpush1.bf16.msra.mxu0 %v2243
      %2373 = vmatprep.subr.bf16.mxu0 %v2246
      %2374 = vmatpush1.bf16.msra.mxu0 %v2245
      %2375 = vmatprep.subr.bf16.mxu0 %v2248
      %2376 = vmatpush1.bf16.msra.mxu0 %v2247
      %2377 = vmatprep.subr.bf16.mxu0 %v2250
      %2378 = vmatpush1.bf16.msra.mxu0 %v2249
      %2379 = vmatprep.subr.bf16.mxu0 %v2252
      %2380 = vmatpush1.bf16.msra.mxu0 %v2251
      %2381 = vmatprep.subr.bf16.mxu0 %v2254
      %2382 = vmatpush1.bf16.msra.mxu0 %v2253
      %2383 = vmatprep.subr.bf16.mxu0 %v2256
      %2384 = vmatpush1.bf16.msra.mxu0 %v2255
      %2385 = vmatprep.subr.bf16.mxu0 %v2258
      %2386 = vmatpush1.bf16.msra.mxu0 %v2257
      %2387 = vmatprep.subr.bf16.mxu0 %v2260
      %2388 = vmatpush1.bf16.msra.mxu0 %v2259
      %2389 = vmatprep.subr.bf16.mxu0 %v2262
      %2390 = vmatpush1.bf16.msra.mxu0 %v2261
      %2391 = vmatprep.mubr.bf16.mxu0 %v2024
      %2392 = vmatmul.mubr.bf16.gmra.mrb[0].mxu0 %v2021
      %v2393 = vpop.f32.mrb[0].mxu0
      %v2394 = vadd.f32 0.0, %v2393
      %v2395 = vpop.f32.mrb[0].mxu0
      %v2396 = vadd.f32 0.0, %v2395
      %v2397 = vpop.f32.mrb[0].mxu0
      %v2398 = vadd.f32 0.0, %v2397
      %v2399 = vpop.f32.mrb[0].mxu0
      %v2400 = vadd.f32 0.0, %v2399
      %2401 = vmatprep.mubr.bf16.mxu0 %v2023
      %2402 = vmatmul.mubr.bf16.gmra.mrb[0].mxu0 %v2020
      %v2403 = vpop.f32.mrb[0].mxu0
      %v2404 = vadd.f32 0.0, %v2403
      %v2405 = vpop.f32.mrb[0].mxu0
      %v2406 = vadd.f32 0.0, %v2405
      %v2407 = vpop.f32.mrb[0].mxu0
      %v2408 = vpop.f32.mrb[0].mxu0
      %2409 = vdwg.mxu0
      %2410 = vmatprep.subr.bf16.mxu0 %v2264
      %2411 = vmatpush1.bf16.msra.mxu0 %v2263
      %2412 = vmatprep.subr.bf16.mxu0 %v2266
      %2413 = vmatpush1.bf16.msra.mxu0 %v2265
      %2414 = vmatprep.subr.bf16.mxu0 %v2268
      %2415 = vmatpush1.bf16.msra.mxu0 %v2267
      %2416 = vmatprep.subr.bf16.mxu0 %v2270
      %2417 = vmatpush1.bf16.msra.mxu0 %v2269
      %2418 = vmatprep.subr.bf16.mxu0 %v2272
      %2419 = vmatpush1.bf16.msra.mxu0 %v2271
      %2420 = vmatprep.subr.bf16.mxu0 %v2274
      %2421 = vmatpush1.bf16.msra.mxu0 %v2273
      %2422 = vmatprep.subr.bf16.mxu0 %v2276
      %2423 = vmatpush1.bf16.msra.mxu0 %v2275
      %2424 = vmatprep.subr.bf16.mxu0 %v2278
      %2425 = vmatpush1.bf16.msra.mxu0 %v2277
      %2426 = vmatprep.subr.bf16.mxu0 %v2280
      %2427 = vmatpush1.bf16.msra.mxu0 %v2279
      %2428 = vmatprep.subr.bf16.mxu0 %v2282
      %2429 = vmatpush1.bf16.msra.mxu0 %v2281
      %2430 = vmatprep.subr.bf16.mxu0 %v2284
      %2431 = vmatpush1.bf16.msra.mxu0 %v2283
      %2432 = vmatprep.subr.bf16.mxu0 %v2286
      %2433 = vmatpush1.bf16.msra.mxu0 %v2285
      %2434 = vmatprep.subr.bf16.mxu0 %v2288
      %2435 = vmatpush1.bf16.msra.mxu0 %v2287
      %2436 = vmatprep.subr.bf16.mxu0 %v2290
      %2437 = vmatpush1.bf16.msra.mxu0 %v2289
      %2438 = vmatprep.subr.bf16.mxu0 %v2292
      %2439 = vmatpush1.bf16.msra.mxu0 %v2291
      %2440 = vmatprep.subr.bf16.mxu0 %v2294
      %2441 = vmatpush1.bf16.msra.mxu0 %v2293
      %2442 = vmatprep.mubr.bf16.mxu0 %v2030
      %2443 = vmatmul.mubr.bf16.gmra.mrb[0].mxu0 %v2027
      %v2444 = vpop.f32.mrb[0].mxu0
      %v2445 = vadd.f32 %v2394, %v2444
      %v2446 = vpop.f32.mrb[0].mxu0
      %v2447 = vadd.f32 %v2396, %v2446
      %v2448 = vpop.f32.mrb[0].mxu0
      %v2449 = vadd.f32 %v2398, %v2448
      %v2450 = vpop.f32.mrb[0].mxu0
      %v2451 = vadd.f32 %v2400, %v2450
      %2452 = vmatprep.mubr.bf16.mxu0 %v2029
      %2453 = vmatmul.mubr.bf16.gmra.mrb[0].mxu0 %v2026
      %v2454 = vpop.f32.mrb[0].mxu0
      %v2455 = vadd.f32 %v2404, %v2454
      %v2456 = vpop.f32.mrb[0].mxu0
      %v2457 = vadd.f32 %v2406, %v2456
      %v2458 = vpop.f32.mrb[0].mxu0
      %v2459 = vpop.f32.mrb[0].mxu0
      %2460 = vdwg.mxu0
      %v2461 = vadd.f32 %v1947, %v2445
      %v2462 = vadd.f32 %v1948, %v2447
      %v2463 = vadd.f32 %v1949, %v2449
      %v2464 = vadd.f32 %v1950, %v2451
      %v2465 = vadd.f32 %v1951, %v2455
      %v2466 = vadd.f32 %v1952, %v2457
      %v2467 = vld [vmem:[%s2] sm:$0x3]
      %v2469 = vlaneseq
      %v2470 = vshrl.u32 %v2469, 7
      %v2471 = vsub.s32 0, %v2470
      %v2472 = vrot.slane %v2467, %v2471
      %v2473 = vlaneseq
      %v2474 = vshrl.u32 %v2473, 7
      %v2475 = vsub.s32 1, %v2474
      %v2476 = vrot.slane %v2467, %v2475
      %v2479 = vadd.f32 %v2461, %v2472
      %v2480 = vadd.f32 %v2462, %v2476
      %v2481 = vadd.f32 %v2463, %v2472
      %v2482 = vadd.f32 %v2464, %v2476
      %v2483 = vadd.f32 %v2465, %v2472
      %v2484 = vadd.f32 %v2466, %v2476
      %2485 = vst [vmem:[%s244] sm:$0xff] %v2479
      %2486 = vst [vmem:[%s244 + $0x8] sm:$0xff] %v2480
      %2487 = vst [vmem:[%s244 + $0x10] sm:$0xff] %v2481
      %2488 = vst [vmem:[%s244 + $0x18] sm:$0xff] %v2482
      %2489 = vst [vmem:[%s244 + $0x20] sm:$0xf] %v2483
      %2490 = vst [vmem:[%s244 + $0x28] sm:$0xf] %v2484
      %v2491 = vsel %vm306, 1, 0
      %v2492 = vsel %vm307, 1, 0
      %v2493 = vsel %vm308, 1, 0
      %vm2494 = vcmp.eq.s32.totalorder %v2491, 1
      %vm2495 = vcmp.eq.s32.totalorder %v2492, 1
      %vm2496 = vcmp.eq.s32.totalorder %v2493, 1
      %v2497 = vsel %vm2494, %v2479, 0.0
      %v2498 = vsel %vm2494, %v2480, 0.0
      %v2499 = vsel %vm2495, %v2481, 0.0
      %v2500 = vsel %vm2495, %v2482, 0.0
      %v2501 = vsel %vm2496, %v2483, 0.0
      %v2502 = vsel %vm2496, %v2484, 0.0
      %v2503 = vadd.f32 %v2497, %v2499
      %vm2504 = vcmask 1043456
      %v2505 = vsel %vm2504, %v2501, 0.0
      %v2506 = vadd.f32 %v2503, %v2505
      %v2507 = vrot.slane %v2506, 4
      %v2508 = vadd.f32 %v2506, %v2507
      %v2509 = vrot.slane %v2508, 2
      %v2510 = vadd.f32 %v2508, %v2509
      %v2511 = vrot.slane %v2510, 1
      %v2512 = vadd.f32 %v2510, %v2511
      %v2513 = vadd.f32 %v2498, %v2500
      %v2514 = vsel %vm2504, %v2502, 0.0
      %v2515 = vadd.f32 %v2513, %v2514
      %v2516 = vrot.slane %v2515, 4
      %v2517 = vadd.f32 %v2515, %v2516
      %v2518 = vrot.slane %v2517, 2
      %v2519 = vadd.f32 %v2517, %v2518
      %v2520 = vrot.slane %v2519, 1
      %v2521 = vadd.f32 %v2519, %v2520
      %v2522 = vadd.f32 %v2512, 0.0
      %v2523 = vadd.f32 %v2521, 0.0
      %v2524 = vmul.f32 %v2497, %v2497
      %v2525 = vmul.f32 %v2498, %v2498
      %v2526 = vmul.f32 %v2499, %v2499
      %v2527 = vmul.f32 %v2500, %v2500
      %v2528 = vmul.f32 %v2501, %v2501
      %v2529 = vmul.f32 %v2502, %v2502
      %v2530 = vadd.f32 %v2524, %v2526
      %v2531 = vsel %vm2504, %v2528, 0.0
      %v2532 = vadd.f32 %v2530, %v2531
      %v2533 = vrot.slane %v2532, 4
      %v2534 = vadd.f32 %v2532, %v2533
      %v2535 = vrot.slane %v2534, 2
      %v2536 = vadd.f32 %v2534, %v2535
      %v2537 = vrot.slane %v2536, 1
      %v2538 = vadd.f32 %v2536, %v2537
      %v2539 = vadd.f32 %v2525, %v2527
      %v2540 = vsel %vm2504, %v2529, 0.0
      %v2541 = vadd.f32 %v2539, %v2540
      %v2542 = vrot.slane %v2541, 4
      %v2543 = vadd.f32 %v2541, %v2542
      %v2544 = vrot.slane %v2543, 2
      %v2545 = vadd.f32 %v2543, %v2544
      %v2546 = vrot.slane %v2545, 1
      %v2547 = vadd.f32 %v2545, %v2546
      %v2548 = vadd.f32 %v2538, 0.0
      %v2549 = vadd.f32 %v2547, 0.0
      %s2550 = scalar_lea.vmem %s237, 64
      %v2551 = vld [vmem:[%s2550] sm:$0xff]
      %v2552 = vld [vmem:[%s2550 + $0x8] sm:$0xff]
      %v2553 = vld [vmem:[%s2550 + $0x10] sm:$0xff]
      %v2554 = vld [vmem:[%s2550 + $0x18] sm:$0xff]
      %v2555 = vld [vmem:[%s2550 + $0x20] sm:$0xff]
      %v2556 = vld [vmem:[%s2550 + $0x28] sm:$0xff]
      %v2557 = vld [vmem:[%s2550 + $0x30] sm:$0x77]
      %v2558 = vld [vmem:[%s2550 + $0x38] sm:$0x77]
      %v2559 = vld [vmem:[%s1] sm:$0xff]
      %v2560 = vld [vmem:[%s1 + $0x8] sm:$0xff]
      %v2561 = vld [vmem:[%s1 + $0x10] sm:$0xff]
      %v2562 = vld [vmem:[%s1 + $0x18] sm:$0xff]
      %v2563 = vld [vmem:[%s1 + $0x20] sm:$0xff]
      %v2564 = vld [vmem:[%s1 + $0x28] sm:$0xff]
      %v2565 = vld [vmem:[%s1 + $0x30] sm:$0xff]
      %v2566 = vld [vmem:[%s1 + $0x38] sm:$0xff]
      %v2567 = vld [vmem:[%s1 + $0x40] sm:$0xff]
      %v2568 = vld [vmem:[%s1 + $0x48] sm:$0xff]
      %v2569 = vld [vmem:[%s1 + $0x50] sm:$0xff]
      %v2570 = vld [vmem:[%s1 + $0x58] sm:$0xff]
      %v2571 = vld [vmem:[%s1 + $0x60] sm:$0xff]
      %v2572 = vld [vmem:[%s1 + $0x68] sm:$0xff]
      %v2573 = vld [vmem:[%s1 + $0x70] sm:$0xff]
      %v2574 = vld [vmem:[%s1 + $0x78] sm:$0xff]
      %v2575 = vld [vmem:[%s1 + $0x80] sm:$0xff]
      %v2576 = vld [vmem:[%s1 + $0x88] sm:$0xff]
      %v2577 = vld [vmem:[%s1 + $0x90] sm:$0xff]
      %v2578 = vld [vmem:[%s1 + $0x98] sm:$0xff]
      %v2579 = vld [vmem:[%s1 + $0xa0] sm:$0xff]
      %v2580 = vld [vmem:[%s1 + $0xa8] sm:$0xff]
      %v2581 = vld [vmem:[%s1 + $0xb0] sm:$0xff]
      %v2582 = vld [vmem:[%s1 + $0xb8] sm:$0xff]
      %v2583 = vld [vmem:[%s1 + $0xc0] sm:$0xff]
      %v2584 = vld [vmem:[%s1 + $0xc8] sm:$0xff]
      %v2585 = vld [vmem:[%s1 + $0xd0] sm:$0xff]
      %v2586 = vld [vmem:[%s1 + $0xd8] sm:$0xff]
      %v2587 = vld [vmem:[%s1 + $0xe0] sm:$0xff]
      %v2588 = vld [vmem:[%s1 + $0xe8] sm:$0xff]
      %v2589 = vld [vmem:[%s1 + $0xf0] sm:$0xff]
      %v2590 = vld [vmem:[%s1 + $0xf8] sm:$0xff]
      %v2591 = vld [vmem:[%s1 + $0x100] sm:$0xff]
      %v2592 = vld [vmem:[%s1 + $0x108] sm:$0xff]
      %v2593 = vld [vmem:[%s1 + $0x110] sm:$0xff]
      %v2594 = vld [vmem:[%s1 + $0x118] sm:$0xff]
      %v2595 = vld [vmem:[%s1 + $0x120] sm:$0xff]
      %v2596 = vld [vmem:[%s1 + $0x128] sm:$0xff]
      %v2597 = vld [vmem:[%s1 + $0x130] sm:$0xff]
      %v2598 = vld [vmem:[%s1 + $0x138] sm:$0xff]
      %v2599 = vld [vmem:[%s1 + $0x140] sm:$0xff]
      %v2600 = vld [vmem:[%s1 + $0x148] sm:$0xff]
      %v2601 = vld [vmem:[%s1 + $0x150] sm:$0xff]
      %v2602 = vld [vmem:[%s1 + $0x158] sm:$0xff]
      %v2603 = vld [vmem:[%s1 + $0x160] sm:$0xff]
      %v2604 = vld [vmem:[%s1 + $0x168] sm:$0xff]
      %v2605 = vld [vmem:[%s1 + $0x170] sm:$0xff]
      %v2606 = vld [vmem:[%s1 + $0x178] sm:$0xff]
      %v2607 = vld [vmem:[%s1 + $0x180] sm:$0xff]
      %v2608 = vld [vmem:[%s1 + $0x188] sm:$0xff]
      %v2609 = vld [vmem:[%s1 + $0x190] sm:$0xff]
      %v2610 = vld [vmem:[%s1 + $0x198] sm:$0xff]
      %v2611 = vld [vmem:[%s1 + $0x1a0] sm:$0xff]
      %v2612 = vld [vmem:[%s1 + $0x1a8] sm:$0xff]
      %v2613 = vld [vmem:[%s1 + $0x1b0] sm:$0xff]
      %v2614 = vld [vmem:[%s1 + $0x1b8] sm:$0xff]
      %v2615 = vld [vmem:[%s1 + $0x1c0] sm:$0xff]
      %v2616 = vld [vmem:[%s1 + $0x1c8] sm:$0xff]
      %v2617 = vld [vmem:[%s1 + $0x1d0] sm:$0xff]
      %v2618 = vld [vmem:[%s1 + $0x1d8] sm:$0xff]
      %v2619 = vld [vmem:[%s1 + $0x1e0] sm:$0xff]
      %v2620 = vld [vmem:[%s1 + $0x1e8] sm:$0xff]
      %v2621 = vld [vmem:[%s1 + $0x1f0] sm:$0xff]
      %v2622 = vld [vmem:[%s1 + $0x1f8] sm:$0xff]
      %v2623 = vld [vmem:[%s381] sm:$0xff]
      %v2624 = vld [vmem:[%s381 + $0x8] sm:$0xff]
      %v2625 = vld [vmem:[%s381 + $0x10] sm:$0xff]
      %v2626 = vld [vmem:[%s381 + $0x18] sm:$0xff]
      %v2627 = vld [vmem:[%s381 + $0x20] sm:$0xff]
      %v2628 = vld [vmem:[%s381 + $0x28] sm:$0xff]
      %v2629 = vld [vmem:[%s381 + $0x30] sm:$0xff]
      %v2630 = vld [vmem:[%s381 + $0x38] sm:$0xff]
      %v2631 = vld [vmem:[%s381 + $0x40] sm:$0xff]
      %v2632 = vld [vmem:[%s381 + $0x48] sm:$0xff]
      %v2633 = vld [vmem:[%s381 + $0x50] sm:$0xff]
      %v2634 = vld [vmem:[%s381 + $0x58] sm:$0xff]
      %v2635 = vld [vmem:[%s381 + $0x60] sm:$0xff]
      %v2636 = vld [vmem:[%s381 + $0x68] sm:$0xff]
      %v2637 = vld [vmem:[%s381 + $0x70] sm:$0xff]
      %v2638 = vld [vmem:[%s381 + $0x78] sm:$0xff]
      %v2639 = vld [vmem:[%s381 + $0x80] sm:$0xff]
      %v2640 = vld [vmem:[%s381 + $0x88] sm:$0xff]
      %v2641 = vld [vmem:[%s381 + $0x90] sm:$0xff]
      %v2642 = vld [vmem:[%s381 + $0x98] sm:$0xff]
      %v2643 = vld [vmem:[%s381 + $0xa0] sm:$0xff]
      %v2644 = vld [vmem:[%s381 + $0xa8] sm:$0xff]
      %v2645 = vld [vmem:[%s381 + $0xb0] sm:$0xff]
      %v2646 = vld [vmem:[%s381 + $0xb8] sm:$0xff]
      %v2647 = vld [vmem:[%s381 + $0xc0] sm:$0xff]
      %v2648 = vld [vmem:[%s381 + $0xc8] sm:$0xff]
      %v2649 = vld [vmem:[%s381 + $0xd0] sm:$0xff]
      %v2650 = vld [vmem:[%s381 + $0xd8] sm:$0xff]
      %v2651 = vld [vmem:[%s381 + $0xe0] sm:$0xff]
      %v2652 = vld [vmem:[%s381 + $0xe8] sm:$0xff]
      %v2653 = vld [vmem:[%s381 + $0xf0] sm:$0xff]
      %v2654 = vld [vmem:[%s381 + $0xf8] sm:$0xff]
      %v2655 = vld [vmem:[%s381 + $0x100] sm:$0xff]
      %v2656 = vld [vmem:[%s381 + $0x108] sm:$0xff]
      %v2657 = vld [vmem:[%s381 + $0x110] sm:$0xff]
      %v2658 = vld [vmem:[%s381 + $0x118] sm:$0xff]
      %v2659 = vld [vmem:[%s381 + $0x120] sm:$0xff]
      %v2660 = vld [vmem:[%s381 + $0x128] sm:$0xff]
      %v2661 = vld [vmem:[%s381 + $0x130] sm:$0xff]
      %v2662 = vld [vmem:[%s381 + $0x138] sm:$0xff]
      %v2663 = vld [vmem:[%s381 + $0x140] sm:$0xff]
      %v2664 = vld [vmem:[%s381 + $0x148] sm:$0xff]
      %v2665 = vld [vmem:[%s381 + $0x150] sm:$0xff]
      %v2666 = vld [vmem:[%s381 + $0x158] sm:$0xff]
      %v2667 = vld [vmem:[%s381 + $0x160] sm:$0xff]
      %v2668 = vld [vmem:[%s381 + $0x168] sm:$0xff]
      %v2669 = vld [vmem:[%s381 + $0x170] sm:$0xff]
      %v2670 = vld [vmem:[%s381 + $0x178] sm:$0xff]
      %v2671 = vld [vmem:[%s381 + $0x180] sm:$0xff]
      %v2672 = vld [vmem:[%s381 + $0x188] sm:$0xff]
      %v2673 = vld [vmem:[%s381 + $0x190] sm:$0xff]
      %v2674 = vld [vmem:[%s381 + $0x198] sm:$0xff]
      %v2675 = vld [vmem:[%s381 + $0x1a0] sm:$0xff]
      %v2676 = vld [vmem:[%s381 + $0x1a8] sm:$0xff]
      %v2677 = vld [vmem:[%s381 + $0x1b0] sm:$0xff]
      %v2678 = vld [vmem:[%s381 + $0x1b8] sm:$0xff]
      %v2679 = vld [vmem:[%s381 + $0x1c0] sm:$0xff]
      %v2680 = vld [vmem:[%s381 + $0x1c8] sm:$0xff]
      %v2681 = vld [vmem:[%s381 + $0x1d0] sm:$0xff]
      %v2682 = vld [vmem:[%s381 + $0x1d8] sm:$0xff]
      %v2683 = vld [vmem:[%s381 + $0x1e0] sm:$0xff]
      %v2684 = vld [vmem:[%s381 + $0x1e8] sm:$0xff]
      %v2685 = vld [vmem:[%s381 + $0x1f0] sm:$0xff]
      %v2686 = vld [vmem:[%s381 + $0x1f8] sm:$0xff]
      %v2693 = vunpack.c.l.b16 %v2551
      %v2694 = vunpack.c.h.b16 %v2551
      %v2695 = vunpack.c.l.b16 %v2552
      %v2696 = vunpack.c.h.b16 %v2552
      %v2697 = vunpack.c.l.b16 %v2553
      %v2698 = vunpack.c.h.b16 %v2553
      %v2699 = vunpack.c.l.b16 %v2554
      %v2700 = vunpack.c.h.b16 %v2554
      %v2701 = vunpack.c.l.b16 %v2555
      %v2702 = vunpack.c.h.b16 %v2555
      %v2703 = vunpack.c.l.b16 %v2556
      %v2704 = vunpack.c.h.b16 %v2556
      %v2705 = vpack.c.b16 %v2697, %v2693
      %v2706 = vpack.c.b16 %v2698, %v2694
      %v2707 = vpack.c.b16 %v2699, %v2695
      %v2708 = vpack.c.b16 %v2700, %v2696
      %v2709 = vpack.c.b16 %v2701, %v2701
      %v2710 = vpack.c.b16 %v2702, %v2702
      %v2711 = vpack.c.b16 %v2703, %v2703
      %v2712 = vpack.c.b16 %v2704, %v2704
      %v2714 = vshrl.u32 %v2705, 16
      %v2716 = vshll.u32 %v2705, 16
      %v2718 = vrot.slane %v2716, 1
      %v2719 = vor.u32 %v2714, %v2718
      %v2721 = vshll.u32 %v2709, 16
      %v2723 = vrot.slane %v2721, 1
      %v2724 = vsel %vm472, %v2719, %v2723
      %v2726 = vshrl.u32 %v2706, 16
      %v2728 = vshll.u32 %v2706, 16
      %v2730 = vrot.slane %v2728, 1
      %v2731 = vor.u32 %v2726, %v2730
      %v2733 = vshll.u32 %v2710, 16
      %v2735 = vrot.slane %v2733, 1
      %v2736 = vsel %vm472, %v2731, %v2735
      %v2738 = vshrl.u32 %v2707, 16
      %v2740 = vshll.u32 %v2707, 16
      %v2742 = vrot.slane %v2740, 1
      %v2743 = vor.u32 %v2738, %v2742
      %v2745 = vshll.u32 %v2711, 16
      %v2747 = vrot.slane %v2745, 1
      %v2748 = vsel %vm472, %v2743, %v2747
      %v2750 = vshrl.u32 %v2708, 16
      %v2752 = vshll.u32 %v2708, 16
      %v2754 = vrot.slane %v2752, 1
      %v2755 = vor.u32 %v2750, %v2754
      %v2757 = vshll.u32 %v2712, 16
      %v2759 = vrot.slane %v2757, 1
      %v2760 = vsel %vm472, %v2755, %v2759
      %v2761 = vshrl.u32 %v2709, 16
      %v2763 = vor.u32 %v2761, %v2723
      %v2764 = vshrl.u32 %v2710, 16
      %v2766 = vor.u32 %v2764, %v2735
      %v2767 = vshrl.u32 %v2711, 16
      %v2769 = vor.u32 %v2767, %v2747
      %v2770 = vshrl.u32 %v2712, 16
      %v2772 = vor.u32 %v2770, %v2759
      %v2845 = vunpack.c.l.b16 %v2623
      %v2846 = vunpack.c.h.b16 %v2623
      %v2847 = vunpack.c.l.b16 %v2624
      %v2848 = vunpack.c.h.b16 %v2624
      %v2849 = vunpack.c.l.b16 %v2625
      %v2850 = vunpack.c.h.b16 %v2625
      %v2851 = vunpack.c.l.b16 %v2626
      %v2852 = vunpack.c.h.b16 %v2626
      %v2853 = vunpack.c.l.b16 %v2627
      %v2854 = vunpack.c.h.b16 %v2627
      %v2855 = vunpack.c.l.b16 %v2628
      %v2856 = vunpack.c.h.b16 %v2628
      %v2857 = vunpack.c.l.b16 %v2629
      %v2858 = vunpack.c.h.b16 %v2629
      %v2859 = vunpack.c.l.b16 %v2630
      %v2860 = vunpack.c.h.b16 %v2630
      %v2861 = vunpack.c.l.b16 %v2631
      %v2862 = vunpack.c.h.b16 %v2631
      %v2863 = vunpack.c.l.b16 %v2632
      %v2864 = vunpack.c.h.b16 %v2632
      %v2865 = vunpack.c.l.b16 %v2633
      %v2866 = vunpack.c.h.b16 %v2633
      %v2867 = vunpack.c.l.b16 %v2634
      %v2868 = vunpack.c.h.b16 %v2634
      %v2869 = vunpack.c.l.b16 %v2635
      %v2870 = vunpack.c.h.b16 %v2635
      %v2871 = vunpack.c.l.b16 %v2636
      %v2872 = vunpack.c.h.b16 %v2636
      %v2873 = vunpack.c.l.b16 %v2637
      %v2874 = vunpack.c.h.b16 %v2637
      %v2875 = vunpack.c.l.b16 %v2638
      %v2876 = vunpack.c.h.b16 %v2638
      %v2877 = vunpack.c.l.b16 %v2639
      %v2878 = vunpack.c.h.b16 %v2639
      %v2879 = vunpack.c.l.b16 %v2640
      %v2880 = vunpack.c.h.b16 %v2640
      %v2881 = vunpack.c.l.b16 %v2641
      %v2882 = vunpack.c.h.b16 %v2641
      %v2883 = vunpack.c.l.b16 %v2642
      %v2884 = vunpack.c.h.b16 %v2642
      %v2885 = vunpack.c.l.b16 %v2643
      %v2886 = vunpack.c.h.b16 %v2643
      %v2887 = vunpack.c.l.b16 %v2644
      %v2888 = vunpack.c.h.b16 %v2644
      %v2889 = vunpack.c.l.b16 %v2645
      %v2890 = vunpack.c.h.b16 %v2645
      %v2891 = vunpack.c.l.b16 %v2646
      %v2892 = vunpack.c.h.b16 %v2646
      %v2893 = vunpack.c.l.b16 %v2647
      %v2894 = vunpack.c.h.b16 %v2647
      %v2895 = vunpack.c.l.b16 %v2648
      %v2896 = vunpack.c.h.b16 %v2648
      %v2897 = vunpack.c.l.b16 %v2649
      %v2898 = vunpack.c.h.b16 %v2649
      %v2899 = vunpack.c.l.b16 %v2650
      %v2900 = vunpack.c.h.b16 %v2650
      %v2901 = vunpack.c.l.b16 %v2651
      %v2902 = vunpack.c.h.b16 %v2651
      %v2903 = vunpack.c.l.b16 %v2652
      %v2904 = vunpack.c.h.b16 %v2652
      %v2905 = vunpack.c.l.b16 %v2653
      %v2906 = vunpack.c.h.b16 %v2653
      %v2907 = vunpack.c.l.b16 %v2654
      %v2908 = vunpack.c.h.b16 %v2654
      %v2909 = vunpack.c.l.b16 %v2655
      %v2910 = vunpack.c.h.b16 %v2655
      %v2911 = vunpack.c.l.b16 %v2656
      %v2912 = vunpack.c.h.b16 %v2656
      %v2913 = vunpack.c.l.b16 %v2657
      %v2914 = vunpack.c.h.b16 %v2657
      %v2915 = vunpack.c.l.b16 %v2658
      %v2916 = vunpack.c.h.b16 %v2658
      %v2917 = vunpack.c.l.b16 %v2659
      %v2918 = vunpack.c.h.b16 %v2659
      %v2919 = vunpack.c.l.b16 %v2660
      %v2920 = vunpack.c.h.b16 %v2660
      %v2921 = vunpack.c.l.b16 %v2661
      %v2922 = vunpack.c.h.b16 %v2661
      %v2923 = vunpack.c.l.b16 %v2662
      %v2924 = vunpack.c.h.b16 %v2662
      %v2925 = vunpack.c.l.b16 %v2663
      %v2926 = vunpack.c.h.b16 %v2663
      %v2927 = vunpack.c.l.b16 %v2664
      %v2928 = vunpack.c.h.b16 %v2664
      %v2929 = vunpack.c.l.b16 %v2665
      %v2930 = vunpack.c.h.b16 %v2665
      %v2931 = vunpack.c.l.b16 %v2666
      %v2932 = vunpack.c.h.b16 %v2666
      %v2933 = vunpack.c.l.b16 %v2667
      %v2934 = vunpack.c.h.b16 %v2667
      %v2935 = vunpack.c.l.b16 %v2668
      %v2936 = vunpack.c.h.b16 %v2668
      %v2937 = vunpack.c.l.b16 %v2669
      %v2938 = vunpack.c.h.b16 %v2669
      %v2939 = vunpack.c.l.b16 %v2670
      %v2940 = vunpack.c.h.b16 %v2670
      %v2941 = vunpack.c.l.b16 %v2671
      %v2942 = vunpack.c.h.b16 %v2671
      %v2943 = vunpack.c.l.b16 %v2672
      %v2944 = vunpack.c.h.b16 %v2672
      %v2945 = vunpack.c.l.b16 %v2673
      %v2946 = vunpack.c.h.b16 %v2673
      %v2947 = vunpack.c.l.b16 %v2674
      %v2948 = vunpack.c.h.b16 %v2674
      %v2949 = vunpack.c.l.b16 %v2675
      %v2950 = vunpack.c.h.b16 %v2675
      %v2951 = vunpack.c.l.b16 %v2676
      %v2952 = vunpack.c.h.b16 %v2676
      %v2953 = vunpack.c.l.b16 %v2677
      %v2954 = vunpack.c.h.b16 %v2677
      %v2955 = vunpack.c.l.b16 %v2678
      %v2956 = vunpack.c.h.b16 %v2678
      %v2957 = vunpack.c.l.b16 %v2679
      %v2958 = vunpack.c.h.b16 %v2679
      %v2959 = vunpack.c.l.b16 %v2680
      %v2960 = vunpack.c.h.b16 %v2680
      %v2961 = vunpack.c.l.b16 %v2681
      %v2962 = vunpack.c.h.b16 %v2681
      %v2963 = vunpack.c.l.b16 %v2682
      %v2964 = vunpack.c.h.b16 %v2682
      %v2965 = vunpack.c.l.b16 %v2683
      %v2966 = vunpack.c.h.b16 %v2683
      %v2967 = vunpack.c.l.b16 %v2684
      %v2968 = vunpack.c.h.b16 %v2684
      %v2969 = vunpack.c.l.b16 %v2685
      %v2970 = vunpack.c.h.b16 %v2685
      %v2971 = vunpack.c.l.b16 %v2686
      %v2972 = vunpack.c.h.b16 %v2686
      %v2973 = vpack.c.b16 %v2847, %v2845
      %v2974 = vpack.c.b16 %v2848, %v2846
      %v2975 = vpack.c.b16 %v2851, %v2849
      %v2976 = vpack.c.b16 %v2852, %v2850
      %v2977 = vpack.c.b16 %v2855, %v2853
      %v2978 = vpack.c.b16 %v2856, %v2854
      %v2979 = vpack.c.b16 %v2859, %v2857
      %v2980 = vpack.c.b16 %v2860, %v2858
      %v2981 = vpack.c.b16 %v2863, %v2861
      %v2982 = vpack.c.b16 %v2864, %v2862
      %v2983 = vpack.c.b16 %v2867, %v2865
      %v2984 = vpack.c.b16 %v2868, %v2866
      %v2985 = vpack.c.b16 %v2871, %v2869
      %v2986 = vpack.c.b16 %v2872, %v2870
      %v2987 = vpack.c.b16 %v2875, %v2873
      %v2988 = vpack.c.b16 %v2876, %v2874
      %v2989 = vpack.c.b16 %v2879, %v2877
      %v2990 = vpack.c.b16 %v2880, %v2878
      %v2991 = vpack.c.b16 %v2883, %v2881
      %v2992 = vpack.c.b16 %v2884, %v2882
      %v2993 = vpack.c.b16 %v2887, %v2885
      %v2994 = vpack.c.b16 %v2888, %v2886
      %v2995 = vpack.c.b16 %v2891, %v2889
      %v2996 = vpack.c.b16 %v2892, %v2890
      %v2997 = vpack.c.b16 %v2895, %v2893
      %v2998 = vpack.c.b16 %v2896, %v2894
      %v2999 = vpack.c.b16 %v2899, %v2897
      %v3000 = vpack.c.b16 %v2900, %v2898
      %v3001 = vpack.c.b16 %v2903, %v2901
      %v3002 = vpack.c.b16 %v2904, %v2902
      %v3003 = vpack.c.b16 %v2907, %v2905
      %v3004 = vpack.c.b16 %v2908, %v2906
      %v3005 = vpack.c.b16 %v2911, %v2909
      %v3006 = vpack.c.b16 %v2912, %v2910
      %v3007 = vpack.c.b16 %v2915, %v2913
      %v3008 = vpack.c.b16 %v2916, %v2914
      %v3009 = vpack.c.b16 %v2919, %v2917
      %v3010 = vpack.c.b16 %v2920, %v2918
      %v3011 = vpack.c.b16 %v2923, %v2921
      %v3012 = vpack.c.b16 %v2924, %v2922
      %v3013 = vpack.c.b16 %v2927, %v2925
      %v3014 = vpack.c.b16 %v2928, %v2926
      %v3015 = vpack.c.b16 %v2931, %v2929
      %v3016 = vpack.c.b16 %v2932, %v2930
      %v3017 = vpack.c.b16 %v2935, %v2933
      %v3018 = vpack.c.b16 %v2936, %v2934
      %v3019 = vpack.c.b16 %v2939, %v2937
      %v3020 = vpack.c.b16 %v2940, %v2938
      %v3021 = vpack.c.b16 %v2943, %v2941
      %v3022 = vpack.c.b16 %v2944, %v2942
      %v3023 = vpack.c.b16 %v2947, %v2945
      %v3024 = vpack.c.b16 %v2948, %v2946
      %v3025 = vpack.c.b16 %v2951, %v2949
      %v3026 = vpack.c.b16 %v2952, %v2950
      %v3027 = vpack.c.b16 %v2955, %v2953
      %v3028 = vpack.c.b16 %v2956, %v2954
      %v3029 = vpack.c.b16 %v2959, %v2957
      %v3030 = vpack.c.b16 %v2960, %v2958
      %v3031 = vpack.c.b16 %v2963, %v2961
      %v3032 = vpack.c.b16 %v2964, %v2962
      %v3033 = vpack.c.b16 %v2967, %v2965
      %v3034 = vpack.c.b16 %v2968, %v2966
      %v3035 = vpack.c.b16 %v2971, %v2969
      %v3036 = vpack.c.b16 %v2972, %v2970
      %3101 = vmatprep.subr.bf16.mxu0 %v2974
      %3102 = vmatpush1.bf16.msra.mxu0 %v2973
      %3103 = vmatprep.subr.bf16.mxu0 %v2976
      %3104 = vmatpush1.bf16.msra.mxu0 %v2975
      %3105 = vmatprep.subr.bf16.mxu0 %v2978
      %3106 = vmatpush1.bf16.msra.mxu0 %v2977
      %3107 = vmatprep.subr.bf16.mxu0 %v2980
      %3108 = vmatpush1.bf16.msra.mxu0 %v2979
      %3109 = vmatprep.subr.bf16.mxu0 %v2982
      %3110 = vmatpush1.bf16.msra.mxu0 %v2981
      %3111 = vmatprep.subr.bf16.mxu0 %v2984
      %3112 = vmatpush1.bf16.msra.mxu0 %v2983
      %3113 = vmatprep.subr.bf16.mxu0 %v2986
      %3114 = vmatpush1.bf16.msra.mxu0 %v2985
      %3115 = vmatprep.subr.bf16.mxu0 %v2988
      %3116 = vmatpush1.bf16.msra.mxu0 %v2987
      %3117 = vmatprep.subr.bf16.mxu0 %v2990
      %3118 = vmatpush1.bf16.msra.mxu0 %v2989
      %3119 = vmatprep.subr.bf16.mxu0 %v2992
      %3120 = vmatpush1.bf16.msra.mxu0 %v2991
      %3121 = vmatprep.subr.bf16.mxu0 %v2994
      %3122 = vmatpush1.bf16.msra.mxu0 %v2993
      %3123 = vmatprep.subr.bf16.mxu0 %v2996
      %3124 = vmatpush1.bf16.msra.mxu0 %v2995
      %3125 = vmatprep.subr.bf16.mxu0 %v2998
      %3126 = vmatpush1.bf16.msra.mxu0 %v2997
      %3127 = vmatprep.subr.bf16.mxu0 %v3000
      %3128 = vmatpush1.bf16.msra.mxu0 %v2999
      %3129 = vmatprep.subr.bf16.mxu0 %v3002
      %3130 = vmatpush1.bf16.msra.mxu0 %v3001
      %3131 = vmatprep.subr.bf16.mxu0 %v3004
      %3132 = vmatpush1.bf16.msra.mxu0 %v3003
      %3133 = vmatprep.mubr.bf16.mxu0 %v2736
      %3134 = vmatmul.mubr.bf16.gmra.mrb[0].mxu0 %v2724
      %v3135 = vpop.f32.mrb[0].mxu0
      %v3136 = vadd.f32 0.0, %v3135
      %v3137 = vpop.f32.mrb[0].mxu0
      %v3138 = vadd.f32 0.0, %v3137
      %v3139 = vpop.f32.mrb[0].mxu0
      %v3140 = vadd.f32 0.0, %v3139
      %v3141 = vpop.f32.mrb[0].mxu0
      %v3142 = vadd.f32 0.0, %v3141
      %3143 = vmatprep.mubr.bf16.mxu0 %v2766
      %3144 = vmatmul.mubr.bf16.gmra.mrb[0].mxu0 %v2763
      %v3145 = vpop.f32.mrb[0].mxu0
      %v3146 = vadd.f32 0.0, %v3145
      %v3147 = vpop.f32.mrb[0].mxu0
      %v3148 = vadd.f32 0.0, %v3147
      %v3149 = vpop.f32.mrb[0].mxu0
      %v3150 = vpop.f32.mrb[0].mxu0
      %3151 = vdwg.mxu0
      %3152 = vmatprep.subr.bf16.mxu0 %v3006
      %3153 = vmatpush1.bf16.msra.mxu0 %v3005
      %3154 = vmatprep.subr.bf16.mxu0 %v3008
      %3155 = vmatpush1.bf16.msra.mxu0 %v3007
      %3156 = vmatprep.subr.bf16.mxu0 %v3010
      %3157 = vmatpush1.bf16.msra.mxu0 %v3009
      %3158 = vmatprep.subr.bf16.mxu0 %v3012
      %3159 = vmatpush1.bf16.msra.mxu0 %v3011
      %3160 = vmatprep.subr.bf16.mxu0 %v3014
      %3161 = vmatpush1.bf16.msra.mxu0 %v3013
      %3162 = vmatprep.subr.bf16.mxu0 %v3016
      %3163 = vmatpush1.bf16.msra.mxu0 %v3015
      %3164 = vmatprep.subr.bf16.mxu0 %v3018
      %3165 = vmatpush1.bf16.msra.mxu0 %v3017
      %3166 = vmatprep.subr.bf16.mxu0 %v3020
      %3167 = vmatpush1.bf16.msra.mxu0 %v3019
      %3168 = vmatprep.subr.bf16.mxu0 %v3022
      %3169 = vmatpush1.bf16.msra.mxu0 %v3021
      %3170 = vmatprep.subr.bf16.mxu0 %v3024
      %3171 = vmatpush1.bf16.msra.mxu0 %v3023
      %3172 = vmatprep.subr.bf16.mxu0 %v3026
      %3173 = vmatpush1.bf16.msra.mxu0 %v3025
      %3174 = vmatprep.subr.bf16.mxu0 %v3028
      %3175 = vmatpush1.bf16.msra.mxu0 %v3027
      %3176 = vmatprep.subr.bf16.mxu0 %v3030
      %3177 = vmatpush1.bf16.msra.mxu0 %v3029
      %3178 = vmatprep.subr.bf16.mxu0 %v3032
      %3179 = vmatpush1.bf16.msra.mxu0 %v3031
      %3180 = vmatprep.subr.bf16.mxu0 %v3034
      %3181 = vmatpush1.bf16.msra.mxu0 %v3033
      %3182 = vmatprep.subr.bf16.mxu0 %v3036
      %3183 = vmatpush1.bf16.msra.mxu0 %v3035
      %3184 = vmatprep.mubr.bf16.mxu0 %v2760
      %3185 = vmatmul.mubr.bf16.gmra.mrb[0].mxu0 %v2748
      %v3186 = vpop.f32.mrb[0].mxu0
      %v3187 = vadd.f32 %v3136, %v3186
      %v3188 = vpop.f32.mrb[0].mxu0
      %v3189 = vadd.f32 %v3138, %v3188
      %v3190 = vpop.f32.mrb[0].mxu0
      %v3191 = vadd.f32 %v3140, %v3190
      %v3192 = vpop.f32.mrb[0].mxu0
      %v3193 = vadd.f32 %v3142, %v3192
      %3194 = vmatprep.mubr.bf16.mxu0 %v2772
      %3195 = vmatmul.mubr.bf16.gmra.mrb[0].mxu0 %v2769
      %v3196 = vpop.f32.mrb[0].mxu0
      %v3197 = vadd.f32 %v3146, %v3196
      %v3198 = vpop.f32.mrb[0].mxu0
      %v3199 = vadd.f32 %v3148, %v3198
      %v3200 = vpop.f32.mrb[0].mxu0
      %v3201 = vpop.f32.mrb[0].mxu0
      %3202 = vdwg.mxu0
      %v3275 = vunpack.c.l.b16 %v2559
      %v3276 = vunpack.c.h.b16 %v2559
      %v3277 = vunpack.c.l.b16 %v2560
      %v3278 = vunpack.c.h.b16 %v2560
      %v3279 = vunpack.c.l.b16 %v2561
      %v3280 = vunpack.c.h.b16 %v2561
      %v3281 = vunpack.c.l.b16 %v2562
      %v3282 = vunpack.c.h.b16 %v2562
      %v3283 = vunpack.c.l.b16 %v2563
      %v3284 = vunpack.c.h.b16 %v2563
      %v3285 = vunpack.c.l.b16 %v2564
      %v3286 = vunpack.c.h.b16 %v2564
      %v3287 = vunpack.c.l.b16 %v2565
      %v3288 = vunpack.c.h.b16 %v2565
      %v3289 = vunpack.c.l.b16 %v2566
      %v3290 = vunpack.c.h.b16 %v2566
      %v3291 = vunpack.c.l.b16 %v2567
      %v3292 = vunpack.c.h.b16 %v2567
      %v3293 = vunpack.c.l.b16 %v2568
      %v3294 = vunpack.c.h.b16 %v2568
      %v3295 = vunpack.c.l.b16 %v2569
      %v3296 = vunpack.c.h.b16 %v2569
      %v3297 = vunpack.c.l.b16 %v2570
      %v3298 = vunpack.c.h.b16 %v2570
      %v3299 = vunpack.c.l.b16 %v2571
      %v3300 = vunpack.c.h.b16 %v2571
      %v3301 = vunpack.c.l.b16 %v2572
      %v3302 = vunpack.c.h.b16 %v2572
      %v3303 = vunpack.c.l.b16 %v2573
      %v3304 = vunpack.c.h.b16 %v2573
      %v3305 = vunpack.c.l.b16 %v2574
      %v3306 = vunpack.c.h.b16 %v2574
      %v3307 = vunpack.c.l.b16 %v2575
      %v3308 = vunpack.c.h.b16 %v2575
      %v3309 = vunpack.c.l.b16 %v2576
      %v3310 = vunpack.c.h.b16 %v2576
      %v3311 = vunpack.c.l.b16 %v2577
      %v3312 = vunpack.c.h.b16 %v2577
      %v3313 = vunpack.c.l.b16 %v2578
      %v3314 = vunpack.c.h.b16 %v2578
      %v3315 = vunpack.c.l.b16 %v2579
      %v3316 = vunpack.c.h.b16 %v2579
      %v3317 = vunpack.c.l.b16 %v2580
      %v3318 = vunpack.c.h.b16 %v2580
      %v3319 = vunpack.c.l.b16 %v2581
      %v3320 = vunpack.c.h.b16 %v2581
      %v3321 = vunpack.c.l.b16 %v2582
      %v3322 = vunpack.c.h.b16 %v2582
      %v3323 = vunpack.c.l.b16 %v2583
      %v3324 = vunpack.c.h.b16 %v2583
      %v3325 = vunpack.c.l.b16 %v2584
      %v3326 = vunpack.c.h.b16 %v2584
      %v3327 = vunpack.c.l.b16 %v2585
      %v3328 = vunpack.c.h.b16 %v2585
      %v3329 = vunpack.c.l.b16 %v2586
      %v3330 = vunpack.c.h.b16 %v2586
      %v3331 = vunpack.c.l.b16 %v2587
      %v3332 = vunpack.c.h.b16 %v2587
      %v3333 = vunpack.c.l.b16 %v2588
      %v3334 = vunpack.c.h.b16 %v2588
      %v3335 = vunpack.c.l.b16 %v2589
      %v3336 = vunpack.c.h.b16 %v2589
      %v3337 = vunpack.c.l.b16 %v2590
      %v3338 = vunpack.c.h.b16 %v2590
      %v3339 = vunpack.c.l.b16 %v2591
      %v3340 = vunpack.c.h.b16 %v2591
      %v3341 = vunpack.c.l.b16 %v2592
      %v3342 = vunpack.c.h.b16 %v2592
      %v3343 = vunpack.c.l.b16 %v2593
      %v3344 = vunpack.c.h.b16 %v2593
      %v3345 = vunpack.c.l.b16 %v2594
      %v3346 = vunpack.c.h.b16 %v2594
      %v3347 = vunpack.c.l.b16 %v2595
      %v3348 = vunpack.c.h.b16 %v2595
      %v3349 = vunpack.c.l.b16 %v2596
      %v3350 = vunpack.c.h.b16 %v2596
      %v3351 = vunpack.c.l.b16 %v2597
      %v3352 = vunpack.c.h.b16 %v2597
      %v3353 = vunpack.c.l.b16 %v2598
      %v3354 = vunpack.c.h.b16 %v2598
      %v3355 = vunpack.c.l.b16 %v2599
      %v3356 = vunpack.c.h.b16 %v2599
      %v3357 = vunpack.c.l.b16 %v2600
      %v3358 = vunpack.c.h.b16 %v2600
      %v3359 = vunpack.c.l.b16 %v2601
      %v3360 = vunpack.c.h.b16 %v2601
      %v3361 = vunpack.c.l.b16 %v2602
      %v3362 = vunpack.c.h.b16 %v2602
      %v3363 = vunpack.c.l.b16 %v2603
      %v3364 = vunpack.c.h.b16 %v2603
      %v3365 = vunpack.c.l.b16 %v2604
      %v3366 = vunpack.c.h.b16 %v2604
      %v3367 = vunpack.c.l.b16 %v2605
      %v3368 = vunpack.c.h.b16 %v2605
      %v3369 = vunpack.c.l.b16 %v2606
      %v3370 = vunpack.c.h.b16 %v2606
      %v3371 = vunpack.c.l.b16 %v2607
      %v3372 = vunpack.c.h.b16 %v2607
      %v3373 = vunpack.c.l.b16 %v2608
      %v3374 = vunpack.c.h.b16 %v2608
      %v3375 = vunpack.c.l.b16 %v2609
      %v3376 = vunpack.c.h.b16 %v2609
      %v3377 = vunpack.c.l.b16 %v2610
      %v3378 = vunpack.c.h.b16 %v2610
      %v3379 = vunpack.c.l.b16 %v2611
      %v3380 = vunpack.c.h.b16 %v2611
      %v3381 = vunpack.c.l.b16 %v2612
      %v3382 = vunpack.c.h.b16 %v2612
      %v3383 = vunpack.c.l.b16 %v2613
      %v3384 = vunpack.c.h.b16 %v2613
      %v3385 = vunpack.c.l.b16 %v2614
      %v3386 = vunpack.c.h.b16 %v2614
      %v3387 = vunpack.c.l.b16 %v2615
      %v3388 = vunpack.c.h.b16 %v2615
      %v3389 = vunpack.c.l.b16 %v2616
      %v3390 = vunpack.c.h.b16 %v2616
      %v3391 = vunpack.c.l.b16 %v2617
      %v3392 = vunpack.c.h.b16 %v2617
      %v3393 = vunpack.c.l.b16 %v2618
      %v3394 = vunpack.c.h.b16 %v2618
      %v3395 = vunpack.c.l.b16 %v2619
      %v3396 = vunpack.c.h.b16 %v2619
      %v3397 = vunpack.c.l.b16 %v2620
      %v3398 = vunpack.c.h.b16 %v2620
      %v3399 = vunpack.c.l.b16 %v2621
      %v3400 = vunpack.c.h.b16 %v2621
      %v3401 = vunpack.c.l.b16 %v2622
      %v3402 = vunpack.c.h.b16 %v2622
      %v3403 = vpack.c.b16 %v3277, %v3275
      %v3404 = vpack.c.b16 %v3278, %v3276
      %v3405 = vpack.c.b16 %v3281, %v3279
      %v3406 = vpack.c.b16 %v3282, %v3280
      %v3407 = vpack.c.b16 %v3285, %v3283
      %v3408 = vpack.c.b16 %v3286, %v3284
      %v3409 = vpack.c.b16 %v3289, %v3287
      %v3410 = vpack.c.b16 %v3290, %v3288
      %v3411 = vpack.c.b16 %v3293, %v3291
      %v3412 = vpack.c.b16 %v3294, %v3292
      %v3413 = vpack.c.b16 %v3297, %v3295
      %v3414 = vpack.c.b16 %v3298, %v3296
      %v3415 = vpack.c.b16 %v3301, %v3299
      %v3416 = vpack.c.b16 %v3302, %v3300
      %v3417 = vpack.c.b16 %v3305, %v3303
      %v3418 = vpack.c.b16 %v3306, %v3304
      %v3419 = vpack.c.b16 %v3309, %v3307
      %v3420 = vpack.c.b16 %v3310, %v3308
      %v3421 = vpack.c.b16 %v3313, %v3311
      %v3422 = vpack.c.b16 %v3314, %v3312
      %v3423 = vpack.c.b16 %v3317, %v3315
      %v3424 = vpack.c.b16 %v3318, %v3316
      %v3425 = vpack.c.b16 %v3321, %v3319
      %v3426 = vpack.c.b16 %v3322, %v3320
      %v3427 = vpack.c.b16 %v3325, %v3323
      %v3428 = vpack.c.b16 %v3326, %v3324
      %v3429 = vpack.c.b16 %v3329, %v3327
      %v3430 = vpack.c.b16 %v3330, %v3328
      %v3431 = vpack.c.b16 %v3333, %v3331
      %v3432 = vpack.c.b16 %v3334, %v3332
      %v3433 = vpack.c.b16 %v3337, %v3335
      %v3434 = vpack.c.b16 %v3338, %v3336
      %v3435 = vpack.c.b16 %v3341, %v3339
      %v3436 = vpack.c.b16 %v3342, %v3340
      %v3437 = vpack.c.b16 %v3345, %v3343
      %v3438 = vpack.c.b16 %v3346, %v3344
      %v3439 = vpack.c.b16 %v3349, %v3347
      %v3440 = vpack.c.b16 %v3350, %v3348
      %v3441 = vpack.c.b16 %v3353, %v3351
      %v3442 = vpack.c.b16 %v3354, %v3352
      %v3443 = vpack.c.b16 %v3357, %v3355
      %v3444 = vpack.c.b16 %v3358, %v3356
      %v3445 = vpack.c.b16 %v3361, %v3359
      %v3446 = vpack.c.b16 %v3362, %v3360
      %v3447 = vpack.c.b16 %v3365, %v3363
      %v3448 = vpack.c.b16 %v3366, %v3364
      %v3449 = vpack.c.b16 %v3369, %v3367
      %v3450 = vpack.c.b16 %v3370, %v3368
      %v3451 = vpack.c.b16 %v3373, %v3371
      %v3452 = vpack.c.b16 %v3374, %v3372
      %v3453 = vpack.c.b16 %v3377, %v3375
      %v3454 = vpack.c.b16 %v3378, %v3376
      %v3455 = vpack.c.b16 %v3381, %v3379
      %v3456 = vpack.c.b16 %v3382, %v3380
      %v3457 = vpack.c.b16 %v3385, %v3383
      %v3458 = vpack.c.b16 %v3386, %v3384
      %v3459 = vpack.c.b16 %v3389, %v3387
      %v3460 = vpack.c.b16 %v3390, %v3388
      %v3461 = vpack.c.b16 %v3393, %v3391
      %v3462 = vpack.c.b16 %v3394, %v3392
      %v3463 = vpack.c.b16 %v3397, %v3395
      %v3464 = vpack.c.b16 %v3398, %v3396
      %v3465 = vpack.c.b16 %v3401, %v3399
      %v3466 = vpack.c.b16 %v3402, %v3400
      %3531 = vmatprep.subr.bf16.mxu0 %v3404
      %3532 = vmatpush1.bf16.msra.mxu0 %v3403
      %3533 = vmatprep.subr.bf16.mxu0 %v3406
      %3534 = vmatpush1.bf16.msra.mxu0 %v3405
      %3535 = vmatprep.subr.bf16.mxu0 %v3408
      %3536 = vmatpush1.bf16.msra.mxu0 %v3407
      %3537 = vmatprep.subr.bf16.mxu0 %v3410
      %3538 = vmatpush1.bf16.msra.mxu0 %v3409
      %3539 = vmatprep.subr.bf16.mxu0 %v3412
      %3540 = vmatpush1.bf16.msra.mxu0 %v3411
      %3541 = vmatprep.subr.bf16.mxu0 %v3414
      %3542 = vmatpush1.bf16.msra.mxu0 %v3413
      %3543 = vmatprep.subr.bf16.mxu0 %v3416
      %3544 = vmatpush1.bf16.msra.mxu0 %v3415
      %3545 = vmatprep.subr.bf16.mxu0 %v3418
      %3546 = vmatpush1.bf16.msra.mxu0 %v3417
      %3547 = vmatprep.subr.bf16.mxu0 %v3420
      %3548 = vmatpush1.bf16.msra.mxu0 %v3419
      %3549 = vmatprep.subr.bf16.mxu0 %v3422
      %3550 = vmatpush1.bf16.msra.mxu0 %v3421
      %3551 = vmatprep.subr.bf16.mxu0 %v3424
      %3552 = vmatpush1.bf16.msra.mxu0 %v3423
      %3553 = vmatprep.subr.bf16.mxu0 %v3426
      %3554 = vmatpush1.bf16.msra.mxu0 %v3425
      %3555 = vmatprep.subr.bf16.mxu0 %v3428
      %3556 = vmatpush1.bf16.msra.mxu0 %v3427
      %3557 = vmatprep.subr.bf16.mxu0 %v3430
      %3558 = vmatpush1.bf16.msra.mxu0 %v3429
      %3559 = vmatprep.subr.bf16.mxu0 %v3432
      %3560 = vmatpush1.bf16.msra.mxu0 %v3431
      %3561 = vmatprep.subr.bf16.mxu0 %v3434
      %3562 = vmatpush1.bf16.msra.mxu0 %v3433
      %3563 = vmatprep.mubr.bf16.mxu0 %v2706
      %3564 = vmatmul.mubr.bf16.gmra.mrb[0].mxu0 %v2705
      %v3565 = vpop.f32.mrb[0].mxu0
      %v3566 = vadd.f32 %v3187, %v3565
      %v3567 = vpop.f32.mrb[0].mxu0
      %v3568 = vadd.f32 %v3189, %v3567
      %v3569 = vpop.f32.mrb[0].mxu0
      %v3570 = vadd.f32 %v3191, %v3569
      %v3571 = vpop.f32.mrb[0].mxu0
      %v3572 = vadd.f32 %v3193, %v3571
      %3573 = vmatprep.mubr.bf16.mxu0 %v2710
      %3574 = vmatmul.mubr.bf16.gmra.mrb[0].mxu0 %v2709
      %v3575 = vpop.f32.mrb[0].mxu0
      %v3576 = vadd.f32 %v3197, %v3575
      %v3577 = vpop.f32.mrb[0].mxu0
      %v3578 = vadd.f32 %v3199, %v3577
      %v3579 = vpop.f32.mrb[0].mxu0
      %v3580 = vpop.f32.mrb[0].mxu0
      %3581 = vdwg.mxu0
      %3582 = vmatprep.subr.bf16.mxu0 %v3436
      %3583 = vmatpush1.bf16.msra.mxu0 %v3435
      %3584 = vmatprep.subr.bf16.mxu0 %v3438
      %3585 = vmatpush1.bf16.msra.mxu0 %v3437
      %3586 = vmatprep.subr.bf16.mxu0 %v3440
      %3587 = vmatpush1.bf16.msra.mxu0 %v3439
      %3588 = vmatprep.subr.bf16.mxu0 %v3442
      %3589 = vmatpush1.bf16.msra.mxu0 %v3441
      %3590 = vmatprep.subr.bf16.mxu0 %v3444
      %3591 = vmatpush1.bf16.msra.mxu0 %v3443
      %3592 = vmatprep.subr.bf16.mxu0 %v3446
      %3593 = vmatpush1.bf16.msra.mxu0 %v3445
      %3594 = vmatprep.subr.bf16.mxu0 %v3448
      %3595 = vmatpush1.bf16.msra.mxu0 %v3447
      %3596 = vmatprep.subr.bf16.mxu0 %v3450
      %3597 = vmatpush1.bf16.msra.mxu0 %v3449
      %3598 = vmatprep.subr.bf16.mxu0 %v3452
      %3599 = vmatpush1.bf16.msra.mxu0 %v3451
      %3600 = vmatprep.subr.bf16.mxu0 %v3454
      %3601 = vmatpush1.bf16.msra.mxu0 %v3453
      %3602 = vmatprep.subr.bf16.mxu0 %v3456
      %3603 = vmatpush1.bf16.msra.mxu0 %v3455
      %3604 = vmatprep.subr.bf16.mxu0 %v3458
      %3605 = vmatpush1.bf16.msra.mxu0 %v3457
      %3606 = vmatprep.subr.bf16.mxu0 %v3460
      %3607 = vmatpush1.bf16.msra.mxu0 %v3459
      %3608 = vmatprep.subr.bf16.mxu0 %v3462
      %3609 = vmatpush1.bf16.msra.mxu0 %v3461
      %3610 = vmatprep.subr.bf16.mxu0 %v3464
      %3611 = vmatpush1.bf16.msra.mxu0 %v3463
      %3612 = vmatprep.subr.bf16.mxu0 %v3466
      %3613 = vmatpush1.bf16.msra.mxu0 %v3465
      %3614 = vmatprep.mubr.bf16.mxu0 %v2708
      %3615 = vmatmul.mubr.bf16.gmra.mrb[0].mxu0 %v2707
      %v3616 = vpop.f32.mrb[0].mxu0
      %v3617 = vadd.f32 %v3566, %v3616
      %v3618 = vpop.f32.mrb[0].mxu0
      %v3619 = vadd.f32 %v3568, %v3618
      %v3620 = vpop.f32.mrb[0].mxu0
      %v3621 = vadd.f32 %v3570, %v3620
      %v3622 = vpop.f32.mrb[0].mxu0
      %v3623 = vadd.f32 %v3572, %v3622
      %3624 = vmatprep.mubr.bf16.mxu0 %v2712
      %3625 = vmatmul.mubr.bf16.gmra.mrb[0].mxu0 %v2711
      %v3626 = vpop.f32.mrb[0].mxu0
      %v3627 = vadd.f32 %v3576, %v3626
      %v3628 = vpop.f32.mrb[0].mxu0
      %v3629 = vadd.f32 %v3578, %v3628
      %v3630 = vpop.f32.mrb[0].mxu0
      %v3631 = vpop.f32.mrb[0].mxu0
      %3632 = vdwg.mxu0
      %v3633 = vld [vmem:[%s1393] sm:$0xff]
      %v3634 = vld [vmem:[%s1393 + $0x8] sm:$0xff]
      %v3635 = vld [vmem:[%s1393 + $0x10] sm:$0xff]
      %v3636 = vld [vmem:[%s1393 + $0x18] sm:$0xff]
      %v3637 = vld [vmem:[%s1393 + $0x20] sm:$0xff]
      %v3638 = vld [vmem:[%s1393 + $0x28] sm:$0xff]
      %v3639 = vld [vmem:[%s1393 + $0x30] sm:$0xff]
      %v3640 = vld [vmem:[%s1393 + $0x38] sm:$0xff]
      %v3641 = vld [vmem:[%s1393 + $0x40] sm:$0xff]
      %v3642 = vld [vmem:[%s1393 + $0x48] sm:$0xff]
      %v3643 = vld [vmem:[%s1393 + $0x50] sm:$0xff]
      %v3644 = vld [vmem:[%s1393 + $0x58] sm:$0xff]
      %v3645 = vld [vmem:[%s1393 + $0x60] sm:$0xff]
      %v3646 = vld [vmem:[%s1393 + $0x68] sm:$0xff]
      %v3647 = vld [vmem:[%s1393 + $0x70] sm:$0xff]
      %v3648 = vld [vmem:[%s1393 + $0x78] sm:$0xff]
      %v3649 = vld [vmem:[%s1393 + $0x80] sm:$0xff]
      %v3650 = vld [vmem:[%s1393 + $0x88] sm:$0xff]
      %v3651 = vld [vmem:[%s1393 + $0x90] sm:$0xff]
      %v3652 = vld [vmem:[%s1393 + $0x98] sm:$0xff]
      %v3653 = vld [vmem:[%s1393 + $0xa0] sm:$0xff]
      %v3654 = vld [vmem:[%s1393 + $0xa8] sm:$0xff]
      %v3655 = vld [vmem:[%s1393 + $0xb0] sm:$0xff]
      %v3656 = vld [vmem:[%s1393 + $0xb8] sm:$0xff]
      %v3657 = vld [vmem:[%s1393 + $0xc0] sm:$0xff]
      %v3658 = vld [vmem:[%s1393 + $0xc8] sm:$0xff]
      %v3659 = vld [vmem:[%s1393 + $0xd0] sm:$0xff]
      %v3660 = vld [vmem:[%s1393 + $0xd8] sm:$0xff]
      %v3661 = vld [vmem:[%s1393 + $0xe0] sm:$0xff]
      %v3662 = vld [vmem:[%s1393 + $0xe8] sm:$0xff]
      %v3663 = vld [vmem:[%s1393 + $0xf0] sm:$0xff]
      %v3664 = vld [vmem:[%s1393 + $0xf8] sm:$0xff]
      %v3665 = vld [vmem:[%s1393 + $0x100] sm:$0xff]
      %v3666 = vld [vmem:[%s1393 + $0x108] sm:$0xff]
      %v3667 = vld [vmem:[%s1393 + $0x110] sm:$0xff]
      %v3668 = vld [vmem:[%s1393 + $0x118] sm:$0xff]
      %v3669 = vld [vmem:[%s1393 + $0x120] sm:$0xff]
      %v3670 = vld [vmem:[%s1393 + $0x128] sm:$0xff]
      %v3671 = vld [vmem:[%s1393 + $0x130] sm:$0xff]
      %v3672 = vld [vmem:[%s1393 + $0x138] sm:$0xff]
      %v3673 = vld [vmem:[%s1393 + $0x140] sm:$0xff]
      %v3674 = vld [vmem:[%s1393 + $0x148] sm:$0xff]
      %v3675 = vld [vmem:[%s1393 + $0x150] sm:$0xff]
      %v3676 = vld [vmem:[%s1393 + $0x158] sm:$0xff]
      %v3677 = vld [vmem:[%s1393 + $0x160] sm:$0xff]
      %v3678 = vld [vmem:[%s1393 + $0x168] sm:$0xff]
      %v3679 = vld [vmem:[%s1393 + $0x170] sm:$0xff]
      %v3680 = vld [vmem:[%s1393 + $0x178] sm:$0xff]
      %v3681 = vld [vmem:[%s1393 + $0x180] sm:$0xff]
      %v3682 = vld [vmem:[%s1393 + $0x188] sm:$0xff]
      %v3683 = vld [vmem:[%s1393 + $0x190] sm:$0xff]
      %v3684 = vld [vmem:[%s1393 + $0x198] sm:$0xff]
      %v3685 = vld [vmem:[%s1393 + $0x1a0] sm:$0xff]
      %v3686 = vld [vmem:[%s1393 + $0x1a8] sm:$0xff]
      %v3687 = vld [vmem:[%s1393 + $0x1b0] sm:$0xff]
      %v3688 = vld [vmem:[%s1393 + $0x1b8] sm:$0xff]
      %v3689 = vld [vmem:[%s1393 + $0x1c0] sm:$0xff]
      %v3690 = vld [vmem:[%s1393 + $0x1c8] sm:$0xff]
      %v3691 = vld [vmem:[%s1393 + $0x1d0] sm:$0xff]
      %v3692 = vld [vmem:[%s1393 + $0x1d8] sm:$0xff]
      %v3693 = vld [vmem:[%s1393 + $0x1e0] sm:$0xff]
      %v3694 = vld [vmem:[%s1393 + $0x1e8] sm:$0xff]
      %v3695 = vld [vmem:[%s1393 + $0x1f0] sm:$0xff]
      %v3696 = vld [vmem:[%s1393 + $0x1f8] sm:$0xff]
      %v3699 = vunpack.c.l.b16 %v2557
      %v3700 = vunpack.c.h.b16 %v2557
      %v3701 = vunpack.c.l.b16 %v2558
      %v3702 = vunpack.c.h.b16 %v2558
      %v3703 = vpack.c.b16 %v3699, %v2701
      %v3704 = vpack.c.b16 %v3700, %v2702
      %v3705 = vpack.c.b16 %v3701, %v2703
      %v3706 = vpack.c.b16 %v3702, %v2704
      %v3707 = vrot.slane %v2714, 2
      %v3708 = vrot.slane %v2716, 3
      %v3709 = vor.u32 %v3707, %v3708
      %v3711 = vshrl.u32 %v3703, 16
      %v3713 = vrot.slane %v3711, 2
      %v3714 = vshll.u32 %v3703, 16
      %v3716 = vrot.slane %v3714, 3
      %v3717 = vor.u32 %v3713, %v3716
      %v3718 = vsel %vm1468, %v3709, %v3717
      %v3719 = vrot.slane %v2726, 2
      %v3720 = vrot.slane %v2728, 3
      %v3721 = vor.u32 %v3719, %v3720
      %v3723 = vshrl.u32 %v3704, 16
      %v3725 = vrot.slane %v3723, 2
      %v3726 = vshll.u32 %v3704, 16
      %v3728 = vrot.slane %v3726, 3
      %v3729 = vor.u32 %v3725, %v3728
      %v3730 = vsel %vm1468, %v3721, %v3729
      %v3731 = vrot.slane %v2738, 2
      %v3732 = vrot.slane %v2740, 3
      %v3733 = vor.u32 %v3731, %v3732
      %v3735 = vshrl.u32 %v3705, 16
      %v3737 = vrot.slane %v3735, 2
      %v3738 = vshll.u32 %v3705, 16
      %v3740 = vrot.slane %v3738, 3
      %v3741 = vor.u32 %v3737, %v3740
      %v3742 = vsel %vm1468, %v3733, %v3741
      %v3743 = vrot.slane %v2750, 2
      %v3744 = vrot.slane %v2752, 3
      %v3745 = vor.u32 %v3743, %v3744
      %v3747 = vshrl.u32 %v3706, 16
      %v3749 = vrot.slane %v3747, 2
      %v3750 = vshll.u32 %v3706, 16
      %v3752 = vrot.slane %v3750, 3
      %v3753 = vor.u32 %v3749, %v3752
      %v3754 = vsel %vm1468, %v3745, %v3753
      %v3827 = vunpack.c.l.b16 %v3633
      %v3828 = vunpack.c.h.b16 %v3633
      %v3829 = vunpack.c.l.b16 %v3634
      %v3830 = vunpack.c.h.b16 %v3634
      %v3831 = vunpack.c.l.b16 %v3635
      %v3832 = vunpack.c.h.b16 %v3635
      %v3833 = vunpack.c.l.b16 %v3636
      %v3834 = vunpack.c.h.b16 %v3636
      %v3835 = vunpack.c.l.b16 %v3637
      %v3836 = vunpack.c.h.b16 %v3637
      %v3837 = vunpack.c.l.b16 %v3638
      %v3838 = vunpack.c.h.b16 %v3638
      %v3839 = vunpack.c.l.b16 %v3639
      %v3840 = vunpack.c.h.b16 %v3639
      %v3841 = vunpack.c.l.b16 %v3640
      %v3842 = vunpack.c.h.b16 %v3640
      %v3843 = vunpack.c.l.b16 %v3641
      %v3844 = vunpack.c.h.b16 %v3641
      %v3845 = vunpack.c.l.b16 %v3642
      %v3846 = vunpack.c.h.b16 %v3642
      %v3847 = vunpack.c.l.b16 %v3643
      %v3848 = vunpack.c.h.b16 %v3643
      %v3849 = vunpack.c.l.b16 %v3644
      %v3850 = vunpack.c.h.b16 %v3644
      %v3851 = vunpack.c.l.b16 %v3645
      %v3852 = vunpack.c.h.b16 %v3645
      %v3853 = vunpack.c.l.b16 %v3646
      %v3854 = vunpack.c.h.b16 %v3646
      %v3855 = vunpack.c.l.b16 %v3647
      %v3856 = vunpack.c.h.b16 %v3647
      %v3857 = vunpack.c.l.b16 %v3648
      %v3858 = vunpack.c.h.b16 %v3648
      %v3859 = vunpack.c.l.b16 %v3649
      %v3860 = vunpack.c.h.b16 %v3649
      %v3861 = vunpack.c.l.b16 %v3650
      %v3862 = vunpack.c.h.b16 %v3650
      %v3863 = vunpack.c.l.b16 %v3651
      %v3864 = vunpack.c.h.b16 %v3651
      %v3865 = vunpack.c.l.b16 %v3652
      %v3866 = vunpack.c.h.b16 %v3652
      %v3867 = vunpack.c.l.b16 %v3653
      %v3868 = vunpack.c.h.b16 %v3653
      %v3869 = vunpack.c.l.b16 %v3654
      %v3870 = vunpack.c.h.b16 %v3654
      %v3871 = vunpack.c.l.b16 %v3655
      %v3872 = vunpack.c.h.b16 %v3655
      %v3873 = vunpack.c.l.b16 %v3656
      %v3874 = vunpack.c.h.b16 %v3656
      %v3875 = vunpack.c.l.b16 %v3657
      %v3876 = vunpack.c.h.b16 %v3657
      %v3877 = vunpack.c.l.b16 %v3658
      %v3878 = vunpack.c.h.b16 %v3658
      %v3879 = vunpack.c.l.b16 %v3659
      %v3880 = vunpack.c.h.b16 %v3659
      %v3881 = vunpack.c.l.b16 %v3660
      %v3882 = vunpack.c.h.b16 %v3660
      %v3883 = vunpack.c.l.b16 %v3661
      %v3884 = vunpack.c.h.b16 %v3661
      %v3885 = vunpack.c.l.b16 %v3662
      %v3886 = vunpack.c.h.b16 %v3662
      %v3887 = vunpack.c.l.b16 %v3663
      %v3888 = vunpack.c.h.b16 %v3663
      %v3889 = vunpack.c.l.b16 %v3664
      %v3890 = vunpack.c.h.b16 %v3664
      %v3891 = vunpack.c.l.b16 %v3665
      %v3892 = vunpack.c.h.b16 %v3665
      %v3893 = vunpack.c.l.b16 %v3666
      %v3894 = vunpack.c.h.b16 %v3666
      %v3895 = vunpack.c.l.b16 %v3667
      %v3896 = vunpack.c.h.b16 %v3667
      %v3897 = vunpack.c.l.b16 %v3668
      %v3898 = vunpack.c.h.b16 %v3668
      %v3899 = vunpack.c.l.b16 %v3669
      %v3900 = vunpack.c.h.b16 %v3669
      %v3901 = vunpack.c.l.b16 %v3670
      %v3902 = vunpack.c.h.b16 %v3670
      %v3903 = vunpack.c.l.b16 %v3671
      %v3904 = vunpack.c.h.b16 %v3671
      %v3905 = vunpack.c.l.b16 %v3672
      %v3906 = vunpack.c.h.b16 %v3672
      %v3907 = vunpack.c.l.b16 %v3673
      %v3908 = vunpack.c.h.b16 %v3673
      %v3909 = vunpack.c.l.b16 %v3674
      %v3910 = vunpack.c.h.b16 %v3674
      %v3911 = vunpack.c.l.b16 %v3675
      %v3912 = vunpack.c.h.b16 %v3675
      %v3913 = vunpack.c.l.b16 %v3676
      %v3914 = vunpack.c.h.b16 %v3676
      %v3915 = vunpack.c.l.b16 %v3677
      %v3916 = vunpack.c.h.b16 %v3677
      %v3917 = vunpack.c.l.b16 %v3678
      %v3918 = vunpack.c.h.b16 %v3678
      %v3919 = vunpack.c.l.b16 %v3679
      %v3920 = vunpack.c.h.b16 %v3679
      %v3921 = vunpack.c.l.b16 %v3680
      %v3922 = vunpack.c.h.b16 %v3680
      %v3923 = vunpack.c.l.b16 %v3681
      %v3924 = vunpack.c.h.b16 %v3681
      %v3925 = vunpack.c.l.b16 %v3682
      %v3926 = vunpack.c.h.b16 %v3682
      %v3927 = vunpack.c.l.b16 %v3683
      %v3928 = vunpack.c.h.b16 %v3683
      %v3929 = vunpack.c.l.b16 %v3684
      %v3930 = vunpack.c.h.b16 %v3684
      %v3931 = vunpack.c.l.b16 %v3685
      %v3932 = vunpack.c.h.b16 %v3685
      %v3933 = vunpack.c.l.b16 %v3686
      %v3934 = vunpack.c.h.b16 %v3686
      %v3935 = vunpack.c.l.b16 %v3687
      %v3936 = vunpack.c.h.b16 %v3687
      %v3937 = vunpack.c.l.b16 %v3688
      %v3938 = vunpack.c.h.b16 %v3688
      %v3939 = vunpack.c.l.b16 %v3689
      %v3940 = vunpack.c.h.b16 %v3689
      %v3941 = vunpack.c.l.b16 %v3690
      %v3942 = vunpack.c.h.b16 %v3690
      %v3943 = vunpack.c.l.b16 %v3691
      %v3944 = vunpack.c.h.b16 %v3691
      %v3945 = vunpack.c.l.b16 %v3692
      %v3946 = vunpack.c.h.b16 %v3692
      %v3947 = vunpack.c.l.b16 %v3693
      %v3948 = vunpack.c.h.b16 %v3693
      %v3949 = vunpack.c.l.b16 %v3694
      %v3950 = vunpack.c.h.b16 %v3694
      %v3951 = vunpack.c.l.b16 %v3695
      %v3952 = vunpack.c.h.b16 %v3695
      %v3953 = vunpack.c.l.b16 %v3696
      %v3954 = vunpack.c.h.b16 %v3696
      %v3955 = vpack.c.b16 %v3829, %v3827
      %v3956 = vpack.c.b16 %v3830, %v3828
      %v3957 = vpack.c.b16 %v3833, %v3831
      %v3958 = vpack.c.b16 %v3834, %v3832
      %v3959 = vpack.c.b16 %v3837, %v3835
      %v3960 = vpack.c.b16 %v3838, %v3836
      %v3961 = vpack.c.b16 %v3841, %v3839
      %v3962 = vpack.c.b16 %v3842, %v3840
      %v3963 = vpack.c.b16 %v3845, %v3843
      %v3964 = vpack.c.b16 %v3846, %v3844
      %v3965 = vpack.c.b16 %v3849, %v3847
      %v3966 = vpack.c.b16 %v3850, %v3848
      %v3967 = vpack.c.b16 %v3853, %v3851
      %v3968 = vpack.c.b16 %v3854, %v3852
      %v3969 = vpack.c.b16 %v3857, %v3855
      %v3970 = vpack.c.b16 %v3858, %v3856
      %v3971 = vpack.c.b16 %v3861, %v3859
      %v3972 = vpack.c.b16 %v3862, %v3860
      %v3973 = vpack.c.b16 %v3865, %v3863
      %v3974 = vpack.c.b16 %v3866, %v3864
      %v3975 = vpack.c.b16 %v3869, %v3867
      %v3976 = vpack.c.b16 %v3870, %v3868
      %v3977 = vpack.c.b16 %v3873, %v3871
      %v3978 = vpack.c.b16 %v3874, %v3872
      %v3979 = vpack.c.b16 %v3877, %v3875
      %v3980 = vpack.c.b16 %v3878, %v3876
      %v3981 = vpack.c.b16 %v3881, %v3879
      %v3982 = vpack.c.b16 %v3882, %v3880
      %v3983 = vpack.c.b16 %v3885, %v3883
      %v3984 = vpack.c.b16 %v3886, %v3884
      %v3985 = vpack.c.b16 %v3889, %v3887
      %v3986 = vpack.c.b16 %v3890, %v3888
      %v3987 = vpack.c.b16 %v3893, %v3891
      %v3988 = vpack.c.b16 %v3894, %v3892
      %v3989 = vpack.c.b16 %v3897, %v3895
      %v3990 = vpack.c.b16 %v3898, %v3896
      %v3991 = vpack.c.b16 %v3901, %v3899
      %v3992 = vpack.c.b16 %v3902, %v3900
      %v3993 = vpack.c.b16 %v3905, %v3903
      %v3994 = vpack.c.b16 %v3906, %v3904
      %v3995 = vpack.c.b16 %v3909, %v3907
      %v3996 = vpack.c.b16 %v3910, %v3908
      %v3997 = vpack.c.b16 %v3913, %v3911
      %v3998 = vpack.c.b16 %v3914, %v3912
      %v3999 = vpack.c.b16 %v3917, %v3915
      %v4000 = vpack.c.b16 %v3918, %v3916
      %v4001 = vpack.c.b16 %v3921, %v3919
      %v4002 = vpack.c.b16 %v3922, %v3920
      %v4003 = vpack.c.b16 %v3925, %v3923
      %v4004 = vpack.c.b16 %v3926, %v3924
      %v4005 = vpack.c.b16 %v3929, %v3927
      %v4006 = vpack.c.b16 %v3930, %v3928
      %v4007 = vpack.c.b16 %v3933, %v3931
      %v4008 = vpack.c.b16 %v3934, %v3932
      %v4009 = vpack.c.b16 %v3937, %v3935
      %v4010 = vpack.c.b16 %v3938, %v3936
      %v4011 = vpack.c.b16 %v3941, %v3939
      %v4012 = vpack.c.b16 %v3942, %v3940
      %v4013 = vpack.c.b16 %v3945, %v3943
      %v4014 = vpack.c.b16 %v3946, %v3944
      %v4015 = vpack.c.b16 %v3949, %v3947
      %v4016 = vpack.c.b16 %v3950, %v3948
      %v4017 = vpack.c.b16 %v3953, %v3951
      %v4018 = vpack.c.b16 %v3954, %v3952
      %4083 = vmatprep.subr.bf16.mxu0 %v3956
      %4084 = vmatpush1.bf16.msra.mxu0 %v3955
      %4085 = vmatprep.subr.bf16.mxu0 %v3958
      %4086 = vmatpush1.bf16.msra.mxu0 %v3957
      %4087 = vmatprep.subr.bf16.mxu0 %v3960
      %4088 = vmatpush1.bf16.msra.mxu0 %v3959
      %4089 = vmatprep.subr.bf16.mxu0 %v3962
      %4090 = vmatpush1.bf16.msra.mxu0 %v3961
      %4091 = vmatprep.subr.bf16.mxu0 %v3964
      %4092 = vmatpush1.bf16.msra.mxu0 %v3963
      %4093 = vmatprep.subr.bf16.mxu0 %v3966
      %4094 = vmatpush1.bf16.msra.mxu0 %v3965
      %4095 = vmatprep.subr.bf16.mxu0 %v3968
      %4096 = vmatpush1.bf16.msra.mxu0 %v3967
      %4097 = vmatprep.subr.bf16.mxu0 %v3970
      %4098 = vmatpush1.bf16.msra.mxu0 %v3969
      %4099 = vmatprep.subr.bf16.mxu0 %v3972
      %4100 = vmatpush1.bf16.msra.mxu0 %v3971
      %4101 = vmatprep.subr.bf16.mxu0 %v3974
      %4102 = vmatpush1.bf16.msra.mxu0 %v3973
      %4103 = vmatprep.subr.bf16.mxu0 %v3976
      %4104 = vmatpush1.bf16.msra.mxu0 %v3975
      %4105 = vmatprep.subr.bf16.mxu0 %v3978
      %4106 = vmatpush1.bf16.msra.mxu0 %v3977
      %4107 = vmatprep.subr.bf16.mxu0 %v3980
      %4108 = vmatpush1.bf16.msra.mxu0 %v3979
      %4109 = vmatprep.subr.bf16.mxu0 %v3982
      %4110 = vmatpush1.bf16.msra.mxu0 %v3981
      %4111 = vmatprep.subr.bf16.mxu0 %v3984
      %4112 = vmatpush1.bf16.msra.mxu0 %v3983
      %4113 = vmatprep.subr.bf16.mxu0 %v3986
      %4114 = vmatpush1.bf16.msra.mxu0 %v3985
      %4115 = vmatprep.mubr.bf16.mxu0 %v3730
      %4116 = vmatmul.mubr.bf16.gmra.mrb[0].mxu0 %v3718
      %v4117 = vpop.f32.mrb[0].mxu0
      %v4118 = vadd.f32 0.0, %v4117
      %v4119 = vpop.f32.mrb[0].mxu0
      %v4120 = vadd.f32 0.0, %v4119
      %v4121 = vpop.f32.mrb[0].mxu0
      %v4122 = vadd.f32 0.0, %v4121
      %v4123 = vpop.f32.mrb[0].mxu0
      %v4124 = vadd.f32 0.0, %v4123
      %4125 = vmatprep.mubr.bf16.mxu0 %v3729
      %4126 = vmatmul.mubr.bf16.gmra.mrb[0].mxu0 %v3717
      %v4127 = vpop.f32.mrb[0].mxu0
      %v4128 = vadd.f32 0.0, %v4127
      %v4129 = vpop.f32.mrb[0].mxu0
      %v4130 = vadd.f32 0.0, %v4129
      %v4131 = vpop.f32.mrb[0].mxu0
      %v4132 = vpop.f32.mrb[0].mxu0
      %4133 = vdwg.mxu0
      %4134 = vmatprep.subr.bf16.mxu0 %v3988
      %4135 = vmatpush1.bf16.msra.mxu0 %v3987
      %4136 = vmatprep.subr.bf16.mxu0 %v3990
      %4137 = vmatpush1.bf16.msra.mxu0 %v3989
      %4138 = vmatprep.subr.bf16.mxu0 %v3992
      %4139 = vmatpush1.bf16.msra.mxu0 %v3991
      %4140 = vmatprep.subr.bf16.mxu0 %v3994
      %4141 = vmatpush1.bf16.msra.mxu0 %v3993
      %4142 = vmatprep.subr.bf16.mxu0 %v3996
      %4143 = vmatpush1.bf16.msra.mxu0 %v3995
      %4144 = vmatprep.subr.bf16.mxu0 %v3998
      %4145 = vmatpush1.bf16.msra.mxu0 %v3997
      %4146 = vmatprep.subr.bf16.mxu0 %v4000
      %4147 = vmatpush1.bf16.msra.mxu0 %v3999
      %4148 = vmatprep.subr.bf16.mxu0 %v4002
      %4149 = vmatpush1.bf16.msra.mxu0 %v4001
      %4150 = vmatprep.subr.bf16.mxu0 %v4004
      %4151 = vmatpush1.bf16.msra.mxu0 %v4003
      %4152 = vmatprep.subr.bf16.mxu0 %v4006
      %4153 = vmatpush1.bf16.msra.mxu0 %v4005
      %4154 = vmatprep.subr.bf16.mxu0 %v4008
      %4155 = vmatpush1.bf16.msra.mxu0 %v4007
      %4156 = vmatprep.subr.bf16.mxu0 %v4010
      %4157 = vmatpush1.bf16.msra.mxu0 %v4009
      %4158 = vmatprep.subr.bf16.mxu0 %v4012
      %4159 = vmatpush1.bf16.msra.mxu0 %v4011
      %4160 = vmatprep.subr.bf16.mxu0 %v4014
      %4161 = vmatpush1.bf16.msra.mxu0 %v4013
      %4162 = vmatprep.subr.bf16.mxu0 %v4016
      %4163 = vmatpush1.bf16.msra.mxu0 %v4015
      %4164 = vmatprep.subr.bf16.mxu0 %v4018
      %4165 = vmatpush1.bf16.msra.mxu0 %v4017
      %4166 = vmatprep.mubr.bf16.mxu0 %v3754
      %4167 = vmatmul.mubr.bf16.gmra.mrb[0].mxu0 %v3742
      %v4168 = vpop.f32.mrb[0].mxu0
      %v4169 = vadd.f32 %v4118, %v4168
      %v4170 = vpop.f32.mrb[0].mxu0
      %v4171 = vadd.f32 %v4120, %v4170
      %v4172 = vpop.f32.mrb[0].mxu0
      %v4173 = vadd.f32 %v4122, %v4172
      %v4174 = vpop.f32.mrb[0].mxu0
      %v4175 = vadd.f32 %v4124, %v4174
      %4176 = vmatprep.mubr.bf16.mxu0 %v3753
      %4177 = vmatmul.mubr.bf16.gmra.mrb[0].mxu0 %v3741
      %v4178 = vpop.f32.mrb[0].mxu0
      %v4179 = vadd.f32 %v4128, %v4178
      %v4180 = vpop.f32.mrb[0].mxu0
      %v4181 = vadd.f32 %v4130, %v4180
      %v4182 = vpop.f32.mrb[0].mxu0
      %v4183 = vpop.f32.mrb[0].mxu0
      %4184 = vdwg.mxu0
      %v4185 = vadd.f32 %v3617, %v4169
      %v4186 = vadd.f32 %v3619, %v4171
      %v4187 = vadd.f32 %v3621, %v4173
      %v4188 = vadd.f32 %v3623, %v4175
      %v4189 = vadd.f32 %v3627, %v4179
      %v4190 = vadd.f32 %v3629, %v4181
      %v4191 = vld [vmem:[%s1953] sm:$0xff]
      %v4192 = vld [vmem:[%s1953 + $0x8] sm:$0xff]
      %v4193 = vld [vmem:[%s1953 + $0x10] sm:$0xff]
      %v4194 = vld [vmem:[%s1953 + $0x18] sm:$0xff]
      %v4195 = vld [vmem:[%s1953 + $0x20] sm:$0xff]
      %v4196 = vld [vmem:[%s1953 + $0x28] sm:$0xff]
      %v4197 = vld [vmem:[%s1953 + $0x30] sm:$0xff]
      %v4198 = vld [vmem:[%s1953 + $0x38] sm:$0xff]
      %v4199 = vld [vmem:[%s1953 + $0x40] sm:$0xff]
      %v4200 = vld [vmem:[%s1953 + $0x48] sm:$0xff]
      %v4201 = vld [vmem:[%s1953 + $0x50] sm:$0xff]
      %v4202 = vld [vmem:[%s1953 + $0x58] sm:$0xff]
      %v4203 = vld [vmem:[%s1953 + $0x60] sm:$0xff]
      %v4204 = vld [vmem:[%s1953 + $0x68] sm:$0xff]
      %v4205 = vld [vmem:[%s1953 + $0x70] sm:$0xff]
      %v4206 = vld [vmem:[%s1953 + $0x78] sm:$0xff]
      %v4207 = vld [vmem:[%s1953 + $0x80] sm:$0xff]
      %v4208 = vld [vmem:[%s1953 + $0x88] sm:$0xff]
      %v4209 = vld [vmem:[%s1953 + $0x90] sm:$0xff]
      %v4210 = vld [vmem:[%s1953 + $0x98] sm:$0xff]
      %v4211 = vld [vmem:[%s1953 + $0xa0] sm:$0xff]
      %v4212 = vld [vmem:[%s1953 + $0xa8] sm:$0xff]
      %v4213 = vld [vmem:[%s1953 + $0xb0] sm:$0xff]
      %v4214 = vld [vmem:[%s1953 + $0xb8] sm:$0xff]
      %v4215 = vld [vmem:[%s1953 + $0xc0] sm:$0xff]
      %v4216 = vld [vmem:[%s1953 + $0xc8] sm:$0xff]
      %v4217 = vld [vmem:[%s1953 + $0xd0] sm:$0xff]
      %v4218 = vld [vmem:[%s1953 + $0xd8] sm:$0xff]
      %v4219 = vld [vmem:[%s1953 + $0xe0] sm:$0xff]
      %v4220 = vld [vmem:[%s1953 + $0xe8] sm:$0xff]
      %v4221 = vld [vmem:[%s1953 + $0xf0] sm:$0xff]
      %v4222 = vld [vmem:[%s1953 + $0xf8] sm:$0xff]
      %v4223 = vld [vmem:[%s1953 + $0x100] sm:$0xff]
      %v4224 = vld [vmem:[%s1953 + $0x108] sm:$0xff]
      %v4225 = vld [vmem:[%s1953 + $0x110] sm:$0xff]
      %v4226 = vld [vmem:[%s1953 + $0x118] sm:$0xff]
      %v4227 = vld [vmem:[%s1953 + $0x120] sm:$0xff]
      %v4228 = vld [vmem:[%s1953 + $0x128] sm:$0xff]
      %v4229 = vld [vmem:[%s1953 + $0x130] sm:$0xff]
      %v4230 = vld [vmem:[%s1953 + $0x138] sm:$0xff]
      %v4231 = vld [vmem:[%s1953 + $0x140] sm:$0xff]
      %v4232 = vld [vmem:[%s1953 + $0x148] sm:$0xff]
      %v4233 = vld [vmem:[%s1953 + $0x150] sm:$0xff]
      %v4234 = vld [vmem:[%s1953 + $0x158] sm:$0xff]
      %v4235 = vld [vmem:[%s1953 + $0x160] sm:$0xff]
      %v4236 = vld [vmem:[%s1953 + $0x168] sm:$0xff]
      %v4237 = vld [vmem:[%s1953 + $0x170] sm:$0xff]
      %v4238 = vld [vmem:[%s1953 + $0x178] sm:$0xff]
      %v4239 = vld [vmem:[%s1953 + $0x180] sm:$0xff]
      %v4240 = vld [vmem:[%s1953 + $0x188] sm:$0xff]
      %v4241 = vld [vmem:[%s1953 + $0x190] sm:$0xff]
      %v4242 = vld [vmem:[%s1953 + $0x198] sm:$0xff]
      %v4243 = vld [vmem:[%s1953 + $0x1a0] sm:$0xff]
      %v4244 = vld [vmem:[%s1953 + $0x1a8] sm:$0xff]
      %v4245 = vld [vmem:[%s1953 + $0x1b0] sm:$0xff]
      %v4246 = vld [vmem:[%s1953 + $0x1b8] sm:$0xff]
      %v4247 = vld [vmem:[%s1953 + $0x1c0] sm:$0xff]
      %v4248 = vld [vmem:[%s1953 + $0x1c8] sm:$0xff]
      %v4249 = vld [vmem:[%s1953 + $0x1d0] sm:$0xff]
      %v4250 = vld [vmem:[%s1953 + $0x1d8] sm:$0xff]
      %v4251 = vld [vmem:[%s1953 + $0x1e0] sm:$0xff]
      %v4252 = vld [vmem:[%s1953 + $0x1e8] sm:$0xff]
      %v4253 = vld [vmem:[%s1953 + $0x1f0] sm:$0xff]
      %v4254 = vld [vmem:[%s1953 + $0x1f8] sm:$0xff]
      %v4255 = vrot.slane %v2705, 3
      %v4256 = vrot.slane %v3703, 3
      %v4257 = vsel %vm2018, %v4255, %v4256
      %v4258 = vrot.slane %v2706, 3
      %v4259 = vrot.slane %v3704, 3
      %v4260 = vsel %vm2018, %v4258, %v4259
      %v4261 = vrot.slane %v2707, 3
      %v4262 = vrot.slane %v3705, 3
      %v4263 = vsel %vm2018, %v4261, %v4262
      %v4264 = vrot.slane %v2708, 3
      %v4265 = vrot.slane %v3706, 3
      %v4266 = vsel %vm2018, %v4264, %v4265
      %v4339 = vunpack.c.l.b16 %v4191
      %v4340 = vunpack.c.h.b16 %v4191
      %v4341 = vunpack.c.l.b16 %v4192
      %v4342 = vunpack.c.h.b16 %v4192
      %v4343 = vunpack.c.l.b16 %v4193
      %v4344 = vunpack.c.h.b16 %v4193
      %v4345 = vunpack.c.l.b16 %v4194
      %v4346 = vunpack.c.h.b16 %v4194
      %v4347 = vunpack.c.l.b16 %v4195
      %v4348 = vunpack.c.h.b16 %v4195
      %v4349 = vunpack.c.l.b16 %v4196
      %v4350 = vunpack.c.h.b16 %v4196
      %v4351 = vunpack.c.l.b16 %v4197
      %v4352 = vunpack.c.h.b16 %v4197
      %v4353 = vunpack.c.l.b16 %v4198
      %v4354 = vunpack.c.h.b16 %v4198
      %v4355 = vunpack.c.l.b16 %v4199
      %v4356 = vunpack.c.h.b16 %v4199
      %v4357 = vunpack.c.l.b16 %v4200
      %v4358 = vunpack.c.h.b16 %v4200
      %v4359 = vunpack.c.l.b16 %v4201
      %v4360 = vunpack.c.h.b16 %v4201
      %v4361 = vunpack.c.l.b16 %v4202
      %v4362 = vunpack.c.h.b16 %v4202
      %v4363 = vunpack.c.l.b16 %v4203
      %v4364 = vunpack.c.h.b16 %v4203
      %v4365 = vunpack.c.l.b16 %v4204
      %v4366 = vunpack.c.h.b16 %v4204
      %v4367 = vunpack.c.l.b16 %v4205
      %v4368 = vunpack.c.h.b16 %v4205
      %v4369 = vunpack.c.l.b16 %v4206
      %v4370 = vunpack.c.h.b16 %v4206
      %v4371 = vunpack.c.l.b16 %v4207
      %v4372 = vunpack.c.h.b16 %v4207
      %v4373 = vunpack.c.l.b16 %v4208
      %v4374 = vunpack.c.h.b16 %v4208
      %v4375 = vunpack.c.l.b16 %v4209
      %v4376 = vunpack.c.h.b16 %v4209
      %v4377 = vunpack.c.l.b16 %v4210
      %v4378 = vunpack.c.h.b16 %v4210
      %v4379 = vunpack.c.l.b16 %v4211
      %v4380 = vunpack.c.h.b16 %v4211
      %v4381 = vunpack.c.l.b16 %v4212
      %v4382 = vunpack.c.h.b16 %v4212
      %v4383 = vunpack.c.l.b16 %v4213
      %v4384 = vunpack.c.h.b16 %v4213
      %v4385 = vunpack.c.l.b16 %v4214
      %v4386 = vunpack.c.h.b16 %v4214
      %v4387 = vunpack.c.l.b16 %v4215
      %v4388 = vunpack.c.h.b16 %v4215
      %v4389 = vunpack.c.l.b16 %v4216
      %v4390 = vunpack.c.h.b16 %v4216
      %v4391 = vunpack.c.l.b16 %v4217
      %v4392 = vunpack.c.h.b16 %v4217
      %v4393 = vunpack.c.l.b16 %v4218
      %v4394 = vunpack.c.h.b16 %v4218
      %v4395 = vunpack.c.l.b16 %v4219
      %v4396 = vunpack.c.h.b16 %v4219
      %v4397 = vunpack.c.l.b16 %v4220
      %v4398 = vunpack.c.h.b16 %v4220
      %v4399 = vunpack.c.l.b16 %v4221
      %v4400 = vunpack.c.h.b16 %v4221
      %v4401 = vunpack.c.l.b16 %v4222
      %v4402 = vunpack.c.h.b16 %v4222
      %v4403 = vunpack.c.l.b16 %v4223
      %v4404 = vunpack.c.h.b16 %v4223
      %v4405 = vunpack.c.l.b16 %v4224
      %v4406 = vunpack.c.h.b16 %v4224
      %v4407 = vunpack.c.l.b16 %v4225
      %v4408 = vunpack.c.h.b16 %v4225
      %v4409 = vunpack.c.l.b16 %v4226
      %v4410 = vunpack.c.h.b16 %v4226
      %v4411 = vunpack.c.l.b16 %v4227
      %v4412 = vunpack.c.h.b16 %v4227
      %v4413 = vunpack.c.l.b16 %v4228
      %v4414 = vunpack.c.h.b16 %v4228
      %v4415 = vunpack.c.l.b16 %v4229
      %v4416 = vunpack.c.h.b16 %v4229
      %v4417 = vunpack.c.l.b16 %v4230
      %v4418 = vunpack.c.h.b16 %v4230
      %v4419 = vunpack.c.l.b16 %v4231
      %v4420 = vunpack.c.h.b16 %v4231
      %v4421 = vunpack.c.l.b16 %v4232
      %v4422 = vunpack.c.h.b16 %v4232
      %v4423 = vunpack.c.l.b16 %v4233
      %v4424 = vunpack.c.h.b16 %v4233
      %v4425 = vunpack.c.l.b16 %v4234
      %v4426 = vunpack.c.h.b16 %v4234
      %v4427 = vunpack.c.l.b16 %v4235
      %v4428 = vunpack.c.h.b16 %v4235
      %v4429 = vunpack.c.l.b16 %v4236
      %v4430 = vunpack.c.h.b16 %v4236
      %v4431 = vunpack.c.l.b16 %v4237
      %v4432 = vunpack.c.h.b16 %v4237
      %v4433 = vunpack.c.l.b16 %v4238
      %v4434 = vunpack.c.h.b16 %v4238
      %v4435 = vunpack.c.l.b16 %v4239
      %v4436 = vunpack.c.h.b16 %v4239
      %v4437 = vunpack.c.l.b16 %v4240
      %v4438 = vunpack.c.h.b16 %v4240
      %v4439 = vunpack.c.l.b16 %v4241
      %v4440 = vunpack.c.h.b16 %v4241
      %v4441 = vunpack.c.l.b16 %v4242
      %v4442 = vunpack.c.h.b16 %v4242
      %v4443 = vunpack.c.l.b16 %v4243
      %v4444 = vunpack.c.h.b16 %v4243
      %v4445 = vunpack.c.l.b16 %v4244
      %v4446 = vunpack.c.h.b16 %v4244
      %v4447 = vunpack.c.l.b16 %v4245
      %v4448 = vunpack.c.h.b16 %v4245
      %v4449 = vunpack.c.l.b16 %v4246
      %v4450 = vunpack.c.h.b16 %v4246
      %v4451 = vunpack.c.l.b16 %v4247
      %v4452 = vunpack.c.h.b16 %v4247
      %v4453 = vunpack.c.l.b16 %v4248
      %v4454 = vunpack.c.h.b16 %v4248
      %v4455 = vunpack.c.l.b16 %v4249
      %v4456 = vunpack.c.h.b16 %v4249
      %v4457 = vunpack.c.l.b16 %v4250
      %v4458 = vunpack.c.h.b16 %v4250
      %v4459 = vunpack.c.l.b16 %v4251
      %v4460 = vunpack.c.h.b16 %v4251
      %v4461 = vunpack.c.l.b16 %v4252
      %v4462 = vunpack.c.h.b16 %v4252
      %v4463 = vunpack.c.l.b16 %v4253
      %v4464 = vunpack.c.h.b16 %v4253
      %v4465 = vunpack.c.l.b16 %v4254
      %v4466 = vunpack.c.h.b16 %v4254
      %v4467 = vpack.c.b16 %v4341, %v4339
      %v4468 = vpack.c.b16 %v4342, %v4340
      %v4469 = vpack.c.b16 %v4345, %v4343
      %v4470 = vpack.c.b16 %v4346, %v4344
      %v4471 = vpack.c.b16 %v4349, %v4347
      %v4472 = vpack.c.b16 %v4350, %v4348
      %v4473 = vpack.c.b16 %v4353, %v4351
      %v4474 = vpack.c.b16 %v4354, %v4352
      %v4475 = vpack.c.b16 %v4357, %v4355
      %v4476 = vpack.c.b16 %v4358, %v4356
      %v4477 = vpack.c.b16 %v4361, %v4359
      %v4478 = vpack.c.b16 %v4362, %v4360
      %v4479 = vpack.c.b16 %v4365, %v4363
      %v4480 = vpack.c.b16 %v4366, %v4364
      %v4481 = vpack.c.b16 %v4369, %v4367
      %v4482 = vpack.c.b16 %v4370, %v4368
      %v4483 = vpack.c.b16 %v4373, %v4371
      %v4484 = vpack.c.b16 %v4374, %v4372
      %v4485 = vpack.c.b16 %v4377, %v4375
      %v4486 = vpack.c.b16 %v4378, %v4376
      %v4487 = vpack.c.b16 %v4381, %v4379
      %v4488 = vpack.c.b16 %v4382, %v4380
      %v4489 = vpack.c.b16 %v4385, %v4383
      %v4490 = vpack.c.b16 %v4386, %v4384
      %v4491 = vpack.c.b16 %v4389, %v4387
      %v4492 = vpack.c.b16 %v4390, %v4388
      %v4493 = vpack.c.b16 %v4393, %v4391
      %v4494 = vpack.c.b16 %v4394, %v4392
      %v4495 = vpack.c.b16 %v4397, %v4395
      %v4496 = vpack.c.b16 %v4398, %v4396
      %v4497 = vpack.c.b16 %v4401, %v4399
      %v4498 = vpack.c.b16 %v4402, %v4400
      %v4499 = vpack.c.b16 %v4405, %v4403
      %v4500 = vpack.c.b16 %v4406, %v4404
      %v4501 = vpack.c.b16 %v4409, %v4407
      %v4502 = vpack.c.b16 %v4410, %v4408
      %v4503 = vpack.c.b16 %v4413, %v4411
      %v4504 = vpack.c.b16 %v4414, %v4412
      %v4505 = vpack.c.b16 %v4417, %v4415
      %v4506 = vpack.c.b16 %v4418, %v4416
      %v4507 = vpack.c.b16 %v4421, %v4419
      %v4508 = vpack.c.b16 %v4422, %v4420
      %v4509 = vpack.c.b16 %v4425, %v4423
      %v4510 = vpack.c.b16 %v4426, %v4424
      %v4511 = vpack.c.b16 %v4429, %v4427
      %v4512 = vpack.c.b16 %v4430, %v4428
      %v4513 = vpack.c.b16 %v4433, %v4431
      %v4514 = vpack.c.b16 %v4434, %v4432
      %v4515 = vpack.c.b16 %v4437, %v4435
      %v4516 = vpack.c.b16 %v4438, %v4436
      %v4517 = vpack.c.b16 %v4441, %v4439
      %v4518 = vpack.c.b16 %v4442, %v4440
      %v4519 = vpack.c.b16 %v4445, %v4443
      %v4520 = vpack.c.b16 %v4446, %v4444
      %v4521 = vpack.c.b16 %v4449, %v4447
      %v4522 = vpack.c.b16 %v4450, %v4448
      %v4523 = vpack.c.b16 %v4453, %v4451
      %v4524 = vpack.c.b16 %v4454, %v4452
      %v4525 = vpack.c.b16 %v4457, %v4455
      %v4526 = vpack.c.b16 %v4458, %v4456
      %v4527 = vpack.c.b16 %v4461, %v4459
      %v4528 = vpack.c.b16 %v4462, %v4460
      %v4529 = vpack.c.b16 %v4465, %v4463
      %v4530 = vpack.c.b16 %v4466, %v4464
      %4595 = vmatprep.subr.bf16.mxu0 %v4468
      %4596 = vmatpush1.bf16.msra.mxu0 %v4467
      %4597 = vmatprep.subr.bf16.mxu0 %v4470
      %4598 = vmatpush1.bf16.msra.mxu0 %v4469
      %4599 = vmatprep.subr.bf16.mxu0 %v4472
      %4600 = vmatpush1.bf16.msra.mxu0 %v4471
      %4601 = vmatprep.subr.bf16.mxu0 %v4474
      %4602 = vmatpush1.bf16.msra.mxu0 %v4473
      %4603 = vmatprep.subr.bf16.mxu0 %v4476
      %4604 = vmatpush1.bf16.msra.mxu0 %v4475
      %4605 = vmatprep.subr.bf16.mxu0 %v4478
      %4606 = vmatpush1.bf16.msra.mxu0 %v4477
      %4607 = vmatprep.subr.bf16.mxu0 %v4480
      %4608 = vmatpush1.bf16.msra.mxu0 %v4479
      %4609 = vmatprep.subr.bf16.mxu0 %v4482
      %4610 = vmatpush1.bf16.msra.mxu0 %v4481
      %4611 = vmatprep.subr.bf16.mxu0 %v4484
      %4612 = vmatpush1.bf16.msra.mxu0 %v4483
      %4613 = vmatprep.subr.bf16.mxu0 %v4486
      %4614 = vmatpush1.bf16.msra.mxu0 %v4485
      %4615 = vmatprep.subr.bf16.mxu0 %v4488
      %4616 = vmatpush1.bf16.msra.mxu0 %v4487
      %4617 = vmatprep.subr.bf16.mxu0 %v4490
      %4618 = vmatpush1.bf16.msra.mxu0 %v4489
      %4619 = vmatprep.subr.bf16.mxu0 %v4492
      %4620 = vmatpush1.bf16.msra.mxu0 %v4491
      %4621 = vmatprep.subr.bf16.mxu0 %v4494
      %4622 = vmatpush1.bf16.msra.mxu0 %v4493
      %4623 = vmatprep.subr.bf16.mxu0 %v4496
      %4624 = vmatpush1.bf16.msra.mxu0 %v4495
      %4625 = vmatprep.subr.bf16.mxu0 %v4498
      %4626 = vmatpush1.bf16.msra.mxu0 %v4497
      %4627 = vmatprep.mubr.bf16.mxu0 %v4260
      %4628 = vmatmul.mubr.bf16.gmra.mrb[0].mxu0 %v4257
      %v4629 = vpop.f32.mrb[0].mxu0
      %v4630 = vadd.f32 0.0, %v4629
      %v4631 = vpop.f32.mrb[0].mxu0
      %v4632 = vadd.f32 0.0, %v4631
      %v4633 = vpop.f32.mrb[0].mxu0
      %v4634 = vadd.f32 0.0, %v4633
      %v4635 = vpop.f32.mrb[0].mxu0
      %v4636 = vadd.f32 0.0, %v4635
      %4637 = vmatprep.mubr.bf16.mxu0 %v4259
      %4638 = vmatmul.mubr.bf16.gmra.mrb[0].mxu0 %v4256
      %v4639 = vpop.f32.mrb[0].mxu0
      %v4640 = vadd.f32 0.0, %v4639
      %v4641 = vpop.f32.mrb[0].mxu0
      %v4642 = vadd.f32 0.0, %v4641
      %v4643 = vpop.f32.mrb[0].mxu0
      %v4644 = vpop.f32.mrb[0].mxu0
      %4645 = vdwg.mxu0
      %4646 = vmatprep.subr.bf16.mxu0 %v4500
      %4647 = vmatpush1.bf16.msra.mxu0 %v4499
      %4648 = vmatprep.subr.bf16.mxu0 %v4502
      %4649 = vmatpush1.bf16.msra.mxu0 %v4501
      %4650 = vmatprep.subr.bf16.mxu0 %v4504
      %4651 = vmatpush1.bf16.msra.mxu0 %v4503
      %4652 = vmatprep.subr.bf16.mxu0 %v4506
      %4653 = vmatpush1.bf16.msra.mxu0 %v4505
      %4654 = vmatprep.subr.bf16.mxu0 %v4508
      %4655 = vmatpush1.bf16.msra.mxu0 %v4507
      %4656 = vmatprep.subr.bf16.mxu0 %v4510
      %4657 = vmatpush1.bf16.msra.mxu0 %v4509
      %4658 = vmatprep.subr.bf16.mxu0 %v4512
      %4659 = vmatpush1.bf16.msra.mxu0 %v4511
      %4660 = vmatprep.subr.bf16.mxu0 %v4514
      %4661 = vmatpush1.bf16.msra.mxu0 %v4513
      %4662 = vmatprep.subr.bf16.mxu0 %v4516
      %4663 = vmatpush1.bf16.msra.mxu0 %v4515
      %4664 = vmatprep.subr.bf16.mxu0 %v4518
      %4665 = vmatpush1.bf16.msra.mxu0 %v4517
      %4666 = vmatprep.subr.bf16.mxu0 %v4520
      %4667 = vmatpush1.bf16.msra.mxu0 %v4519
      %4668 = vmatprep.subr.bf16.mxu0 %v4522
      %4669 = vmatpush1.bf16.msra.mxu0 %v4521
      %4670 = vmatprep.subr.bf16.mxu0 %v4524
      %4671 = vmatpush1.bf16.msra.mxu0 %v4523
      %4672 = vmatprep.subr.bf16.mxu0 %v4526
      %4673 = vmatpush1.bf16.msra.mxu0 %v4525
      %4674 = vmatprep.subr.bf16.mxu0 %v4528
      %4675 = vmatpush1.bf16.msra.mxu0 %v4527
      %4676 = vmatprep.subr.bf16.mxu0 %v4530
      %4677 = vmatpush1.bf16.msra.mxu0 %v4529
      %4678 = vmatprep.mubr.bf16.mxu0 %v4266
      %4679 = vmatmul.mubr.bf16.gmra.mrb[0].mxu0 %v4263
      %v4680 = vpop.f32.mrb[0].mxu0
      %v4681 = vadd.f32 %v4630, %v4680
      %v4682 = vpop.f32.mrb[0].mxu0
      %v4683 = vadd.f32 %v4632, %v4682
      %v4684 = vpop.f32.mrb[0].mxu0
      %v4685 = vadd.f32 %v4634, %v4684
      %v4686 = vpop.f32.mrb[0].mxu0
      %v4687 = vadd.f32 %v4636, %v4686
      %4688 = vmatprep.mubr.bf16.mxu0 %v4265
      %4689 = vmatmul.mubr.bf16.gmra.mrb[0].mxu0 %v4262
      %v4690 = vpop.f32.mrb[0].mxu0
      %v4691 = vadd.f32 %v4640, %v4690
      %v4692 = vpop.f32.mrb[0].mxu0
      %v4693 = vadd.f32 %v4642, %v4692
      %v4694 = vpop.f32.mrb[0].mxu0
      %v4695 = vpop.f32.mrb[0].mxu0
      %4696 = vdwg.mxu0
      %v4697 = vadd.f32 %v4185, %v4681
      %v4698 = vadd.f32 %v4186, %v4683
      %v4699 = vadd.f32 %v4187, %v4685
      %v4700 = vadd.f32 %v4188, %v4687
      %v4701 = vadd.f32 %v4189, %v4691
      %v4702 = vadd.f32 %v4190, %v4693
      %v4703 = vld [vmem:[%s2] sm:$0x3]
      %v4705 = vlaneseq
      %v4706 = vshrl.u32 %v4705, 7
      %v4707 = vsub.s32 0, %v4706
      %v4708 = vrot.slane %v4703, %v4707
      %v4709 = vlaneseq
      %v4710 = vshrl.u32 %v4709, 7
      %v4711 = vsub.s32 1, %v4710
      %v4712 = vrot.slane %v4703, %v4711
      %v4715 = vadd.f32 %v4697, %v4708
      %v4716 = vadd.f32 %v4698, %v4712
      %v4717 = vadd.f32 %v4699, %v4708
      %v4718 = vadd.f32 %v4700, %v4712
      %v4719 = vadd.f32 %v4701, %v4708
      %v4720 = vadd.f32 %v4702, %v4712
      %s4721 = scalar_lea.vmem %s244, 48
      %4722 = vst [vmem:[%s4721] sm:$0xff] %v4715
      %4723 = vst [vmem:[%s4721 + $0x8] sm:$0xff] %v4716
      %4724 = vst [vmem:[%s4721 + $0x10] sm:$0xff] %v4717
      %4725 = vst [vmem:[%s4721 + $0x18] sm:$0xff] %v4718
      %4726 = vst [vmem:[%s4721 + $0x20] sm:$0xf] %v4719
      %4727 = vst [vmem:[%s4721 + $0x28] sm:$0xf] %v4720
      %v4728 = vsel %vm2494, %v4715, 0.0
      %v4729 = vsel %vm2494, %v4716, 0.0
      %v4730 = vsel %vm2495, %v4717, 0.0
      %v4731 = vsel %vm2495, %v4718, 0.0
      %v4732 = vsel %vm2496, %v4719, 0.0
      %v4733 = vsel %vm2496, %v4720, 0.0
      %v4734 = vadd.f32 %v4728, %v4730
      %v4735 = vsel %vm2504, %v4732, 0.0
      %v4736 = vadd.f32 %v4734, %v4735
      %v4737 = vrot.slane %v4736, 4
      %v4738 = vadd.f32 %v4736, %v4737
      %v4739 = vrot.slane %v4738, 2
      %v4740 = vadd.f32 %v4738, %v4739
      %v4741 = vrot.slane %v4740, 1
      %v4742 = vadd.f32 %v4740, %v4741
      %v4743 = vadd.f32 %v4729, %v4731
      %v4744 = vsel %vm2504, %v4733, 0.0
      %v4745 = vadd.f32 %v4743, %v4744
      %v4746 = vrot.slane %v4745, 4
      %v4747 = vadd.f32 %v4745, %v4746
      %v4748 = vrot.slane %v4747, 2
      %v4749 = vadd.f32 %v4747, %v4748
      %v4750 = vrot.slane %v4749, 1
      %v4751 = vadd.f32 %v4749, %v4750
      %v4752 = vadd.f32 %v2522, %v4742
      %v4753 = vadd.f32 %v2523, %v4751
      %v4754 = vmul.f32 %v4728, %v4728
      %v4755 = vmul.f32 %v4729, %v4729
      %v4756 = vmul.f32 %v4730, %v4730
      %v4757 = vmul.f32 %v4731, %v4731
      %v4758 = vmul.f32 %v4732, %v4732
      %v4759 = vmul.f32 %v4733, %v4733
      %v4760 = vadd.f32 %v4754, %v4756
      %v4761 = vsel %vm2504, %v4758, 0.0
      %v4762 = vadd.f32 %v4760, %v4761
      %v4763 = vrot.slane %v4762, 4
      %v4764 = vadd.f32 %v4762, %v4763
      %v4765 = vrot.slane %v4764, 2
      %v4766 = vadd.f32 %v4764, %v4765
      %v4767 = vrot.slane %v4766, 1
      %v4768 = vadd.f32 %v4766, %v4767
      %v4769 = vadd.f32 %v4755, %v4757
      %v4770 = vsel %vm2504, %v4759, 0.0
      %v4771 = vadd.f32 %v4769, %v4770
      %v4772 = vrot.slane %v4771, 4
      %v4773 = vadd.f32 %v4771, %v4772
      %v4774 = vrot.slane %v4773, 2
      %v4775 = vadd.f32 %v4773, %v4774
      %v4776 = vrot.slane %v4775, 1
      %v4777 = vadd.f32 %v4775, %v4776
      %v4778 = vadd.f32 %v2548, %v4768
      %v4779 = vadd.f32 %v2549, %v4777
      %v4782 = vcombine.low %v4752, %v4753
      %v4784 = vunpack.c.l.s4 1966171168
      %v4785 = vunpack.c.0.s8 %v4784
      %v4786 = vlaneseq
      %v4787 = vshrl.u32 %v4786, 7
      %v4788 = vsub.s32 %v4785, %v4787
      %v4789 = vrot.slane %v4782, %v4788
      %v4791 = vunpack.c.l.s4 1966171168
      %v4792 = vunpack.c.0.s8 %v4791
      %v4793 = vlaneseq
      %v4794 = vshrl.u32 %v4793, 7
      %v4795 = vsub.s32 %v4792, %v4794
      %v4796 = vrot.slane %v4789, %v4795
      %v4798 = vlaneseq
      %vm4799 = vcmp.ge.s32.totalorder %v4798, 0
      %vm4800 = vcmp.lt.s32.totalorder %v4798, 256
      %vm4801 = vmand %vm4799, %vm4800
      %4802 = vst.msk [vmem:[%s249] sm:$0x3] %vm4801, %v4796
      %v4805 = vcombine.low %v4778, %v4779
      %v4807 = vunpack.c.l.s4 1966171168
      %v4808 = vunpack.c.0.s8 %v4807
      %v4809 = vlaneseq
      %v4810 = vshrl.u32 %v4809, 7
      %v4811 = vsub.s32 %v4808, %v4810
      %v4812 = vrot.slane %v4805, %v4811
      %v4814 = vunpack.c.l.s4 1966171168
      %v4815 = vunpack.c.0.s8 %v4814
      %v4816 = vlaneseq
      %v4817 = vshrl.u32 %v4816, 7
      %v4818 = vsub.s32 %v4815, %v4817
      %v4819 = vrot.slane %v4812, %v4818
      %4821 = vst.msk [vmem:[%s253] sm:$0x3] %vm4801, %v4819
      %s4822 = smul.u32 2, %s17
      %p4823 = scmp.lt.s32.totalorder %s4822, 3
      %s4824 = scalar_select %p4823, %s4822, 3
      %s4825 = smul.addr %s4824, 6
      %s4826 = smul.addr %s4825, 8
      %s4827 = scalar_lea.vmem %s3, %s4826
      %p4828 = scmp.lt.s32.totalorder %s17, 1
      %s4829 = scalar_select %p4828, %s17, 1
      %s4830 = smul.addr %s4829, 2
      %s4831 = scalar_lea.vmem %s4, %s4830
      %p4832 = scmp.lt.s32.totalorder %s17, 1
      %s4833 = scalar_select %p4832, %s17, 1
      %s4834 = smul.addr %s4833, 2
      %s4835 = scalar_lea.vmem %s5, %s4834
      // Predicated region
      $region33: #{discriminator_forward.5} parent=31 // pred_check
        %p4836 = pneg %p103
      $region34: #{discriminator_forward.5} parent=31 // pred_check_branch
        %4838 = sbr.rel (%p4836) target = $region36
      $region35: #{discriminator_forward.5} parent=31 // pred_region
        %s4839 = smul.u32 2, %s17
      $region36: #{discriminator_forward.5} parent=31 // pred_fallthru
        _
      // Predicated region
      $region37: #{discriminator_forward.5} parent=31 // pred_check
        %p4840 = pneg %p129
      $region38: #{discriminator_forward.5} parent=31 // pred_check_branch
        %4842 = sbr.rel (%p4840) target = $region40
      $region39: #{discriminator_forward.5} parent=31 // pred_region
        _
      $region40: #{discriminator_forward.5} parent=31 // pred_fallthru
        _
      // Predicated region
      $region41: #{discriminator_forward.5} parent=31 // pred_check
        %p4843 = pneg %p155
      $region42: #{discriminator_forward.5} parent=31 // pred_check_branch
        %4845 = sbr.rel (%p4843) target = $region44
      $region43: #{discriminator_forward.5} parent=31 // pred_region
        _
      $region44: #{discriminator_forward.5} parent=31 // pred_fallthru
        _
    $region32: #{discriminator_forward.5} parent=5 // pred_fallthru
      _
    %p4846 = scmp.le.s32.totalorder 2, %s12
    // Predicated region
    $region45: #{discriminator_forward.5} parent=5 // pred_check
      %p4847 = pneg %p4846
    $region46: #{discriminator_forward.5} parent=5 // pred_check_branch
      %4849 = sbr.rel (%p4847) target = $region48
    $region47: #{discriminator_forward.5} parent=5 // pred_region
      %s4850 = ssub.s32 %s12, 2
      // Predicated region
      $region49: #{discriminator_forward.5} parent=47 // pred_check
        %p4851 = pneg %p109
      $region50: #{discriminator_forward.5} parent=47 // pred_check_branch
        %4853 = sbr.rel (%p4851) target = $region52
      $region51: #{discriminator_forward.5} parent=47 // pred_region
        %s4854 = smul.u32 2, %s18
        %p4855 = scmp.lt.s32.totalorder %s4854, 3
        %s4856 = scalar_select %p4855, %s4854, 3
        %s4857 = smul.addr %s4856, 6
        %s4858 = smul.addr %s4857, 8
        %s4859 = scalar_lea.vmem %s3, %s4858
      $region52: #{discriminator_forward.5} parent=47 // pred_fallthru
        _
      // Predicated region
      $region53: #{discriminator_forward.5} parent=47 // pred_check
        %p4860 = pneg %p135
      $region54: #{discriminator_forward.5} parent=47 // pred_check_branch
        %4862 = sbr.rel (%p4860) target = $region56
      $region55: #{discriminator_forward.5} parent=47 // pred_region
        %p4863 = scmp.lt.s32.totalorder %s18, 1
        %s4864 = scalar_select %p4863, %s18, 1
        %s4865 = smul.addr %s4864, 2
        %s4866 = scalar_lea.vmem %s4, %s4865
      $region56: #{discriminator_forward.5} parent=47 // pred_fallthru
        _
      // Predicated region
      $region57: #{discriminator_forward.5} parent=47 // pred_check
        %p4867 = pneg %p161
      $region58: #{discriminator_forward.5} parent=47 // pred_check_branch
        %4869 = sbr.rel (%p4867) target = $region60
      $region59: #{discriminator_forward.5} parent=47 // pred_region
        %p4870 = scmp.lt.s32.totalorder %s18, 1
        %s4871 = scalar_select %p4870, %s18, 1
        %s4872 = smul.addr %s4871, 2
        %s4873 = scalar_lea.vmem %s5, %s4872
      $region60: #{discriminator_forward.5} parent=47 // pred_fallthru
        _
    $region48: #{discriminator_forward.5} parent=5 // pred_fallthru
      _
  $region6: #{discriminator_forward.5} parent=0 // loop_footer
    %s16 = sadd.s32 1, %s12
  $region7: #{discriminator_forward.5} parent=0 // loop_footer_branch
    %11 = sbr.rel target = $region3
  $region8: #{discriminator_forward.5} parent=0 // loop_exit
    _

</llo_original>
